<compile_context>
chip_gen: v7x
topology: tpu7x:2x2x1
jax: 0.10.0
libtpu: 0.0.40
codegen_flags: <defaults>
</compile_context>

<pallas_src>
import jax
import jax.numpy as jnp
from jax.experimental import pallas as pl
from jax.experimental.pallas import tpu as pltpu


# ----------------------------- Pallas kernel ------------------------------ #
def _up2_conv3x3_kernel(xt_ref, w_ref, b_ref, oe_ref, oo_ref):
    # xt_ref: (1, THi+2, W+2, Cin)  original-res rows for this tile with a 1-row /
    #         1-col replicated halo (replication == PyTorch bilinear edge clamp)
    # w_ref : (3, 3, Cin, Cout)     conv weights, HWIO
    # b_ref : (1, Cout)             bias
    # oe_ref: (1, THo, W, Cout)     conv output, even output columns
    # oo_ref: (1, THo, W, Cout)     conv output, odd  output columns
    thi = xt_ref.shape[1] - 2
    wp2 = xt_ref.shape[2]
    cin = xt_ref.shape[3]
    w_in = wp2 - 2
    tho = 2 * thi
    cout = b_ref.shape[1]

    t = pl.program_id(1)
    last_t = pl.num_programs(1) - 1

    x = xt_ref[0].astype(jnp.float32)                 # (THi+2, W+2, Cin)

    # ---- fused bilinear x2 along rows (fixed 0.25/0.75 taps on the VPU) ----
    a = x[:-1]                                        # local rows j   = 0..THi
    b = x[1:]                                         # local rows j+1 = 1..THi+1
    rows_even = 0.75 * a + 0.25 * b                   # padded-upsampled rows p = 0,2,...
    rows_odd = 0.25 * a + 0.75 * b                    # padded-upsampled rows p = 1,3,...
    # interleave rows: leading-dim stack + merge (lane/sublane dims untouched)
    u = jnp.stack([rows_even, rows_odd], axis=1).reshape(tho + 2, wp2, cin)

    # rows p=0 / p=THo+1 are the conv's zero padding, but only at true image edges
    ridx = jax.lax.broadcasted_iota(jnp.int32, (tho + 2, wp2, cin), 0)
    pad_top = jnp.logical_and(ridx == 0, t == 0)
    pad_bot = jnp.logical_and(ridx == tho + 1, t == last_t)
    u = jnp.where(jnp.logical_or(pad_top, pad_bot), 0.0, u)

    # ---- fused bilinear x2 along cols, kept as even/odd planes (no interleave) --
    ac = u[:, :-1]                                    # local cols m   = 0..W
    bc = u[:, 1:]                                     # local cols m+1 = 1..W+1
    cols_e = 0.75 * ac + 0.25 * bc                    # E[m] == padded-upsampled col 2m
    cols_o = 0.25 * ac + 0.75 * bc                    # O[m] == padded-upsampled col 2m+1
    # padded-upsampled col 0 (= E[0]) and col 2W+1 (= O[W]) are the conv zero pad
    m_idx = jax.lax.broadcasted_iota(jnp.int32, (tho + 2, w_in + 1, cin), 1)
    cols_e = jnp.where(m_idx == 0, 0.0, cols_e)
    cols_o = jnp.where(m_idx == w_in, 0.0, cols_o)

    # ---- 3x3 conv, decomposed by output-column parity (MXU matmuls) ----
    #   even output col 2s   taps padded cols (E[s],   O[s],   E[s+1]) for kw = 0,1,2
    #   odd  output col 2s+1 taps padded cols (O[s],   E[s+1], O[s+1]) for kw = 0,1,2
    acc_e = jnp.zeros((tho * w_in, cout), jnp.float32)
    acc_o = jnp.zeros((tho * w_in, cout), jnp.float32)
    for kh in range(3):                               # static unroll
        ek = cols_e[kh:kh + tho]                      # (THo, W+1, Cin)
        ok = cols_o[kh:kh + tho]
        e0 = ek[:, 0:w_in].reshape(tho * w_in, cin)
        e1 = ek[:, 1:w_in + 1].reshape(tho * w_in, cin)
        o0 = ok[:, 0:w_in].reshape(tho * w_in, cin)
        o1 = ok[:, 1:w_in + 1].reshape(tho * w_in, cin)
        acc_e += jnp.dot(e0, w_ref[kh, 0], preferred_element_type=jnp.float32)
        acc_e += jnp.dot(o0, w_ref[kh, 1], preferred_element_type=jnp.float32)
        acc_e += jnp.dot(e1, w_ref[kh, 2], preferred_element_type=jnp.float32)
        acc_o += jnp.dot(o0, w_ref[kh, 0], preferred_element_type=jnp.float32)
        acc_o += jnp.dot(e1, w_ref[kh, 1], preferred_element_type=jnp.float32)
        acc_o += jnp.dot(o1, w_ref[kh, 2], preferred_element_type=jnp.float32)

    bias = b_ref[...].astype(jnp.float32)             # (1, Cout)
    oe_ref[0] = (acc_e + bias).reshape(tho, w_in, cout).astype(oe_ref.dtype)
    oo_ref[0] = (acc_o + bias).reshape(tho, w_in, cout).astype(oo_ref.dtype)


# ------------------------------ tiling helper ------------------------------ #
def _pick_tile_rows(H, W, Cin, Cout, budget_bytes=16 * 1024 * 1024):
    """Largest original-resolution row tile that divides H, keeps the output tile
    8-row aligned, and keeps the per-step working set under a conservative budget
    (so double-buffered blocks fit comfortably even on v7x's 64 MiB VMEM)."""
    def est_bytes(thi):
        tho = 2 * thi
        inp = (thi + 2) * (W + 2) * Cin                       # input block
        outp = 2 * tho * W * Cout                             # two output blocks
        work = (5 * (tho + 2) * (W + 2) * Cin
                + 6 * tho * W * Cin + 2 * tho * W * Cout)     # in-kernel temporaries
        return 4 * (2 * inp + 2 * outp + work)                # f32, double-buffered
    divs = [d for d in range(4, H + 1, 4) if H % d == 0]
    fitting = [d for d in divs if est_bytes(d) <= budget_bytes]
    if fitting:
        return max(fitting)
    if divs:
        return min(divs)       # nothing fits the budget: use the smallest legal tile
    return H                   # H has no multiple-of-4 divisor: whole image per step


# ------------------------------ public wrapper ------------------------------ #
def upsample_forward(x_nchw, weight_oihw, bias, *, tile_rows=None):
    """Pallas equivalent of Upsample.forward: (N,Cin,H,W) -> (N,Cout,2H,2W)."""
    N, Cin, H, W = x_nchw.shape
    Cout = weight_oihw.shape[0]
    Ho, Wo = 2 * H, 2 * W

    thi = _pick_tile_rows(H, W, Cin, Cout) if tile_rows is None else int(tile_rows)
    if H % thi != 0 or (thi != H and (2 * thi) % 8 != 0):
        raise ValueError(f"tile_rows={thi} must divide H={H} with 2*tile_rows % 8 == 0")
    T = H // thi
    tho = 2 * thi

    # NCHW -> NHWC (channels on the lane dim); f32 compute.
    # TODO(synk): optionally cast activations/weights to bf16 on v6e/v7x (bf16-native
    # MXU) when ~1e-3 tolerance is acceptable.
    x = jnp.transpose(x_nchw, (0, 2, 3, 1)).astype(jnp.float32)        # (N,H,W,Cin)
    # 1-pixel replicated halo in ORIGINAL resolution (== the bilinear edge clamp);
    # the conv's zero padding is applied inside the kernel.
    xpad = jnp.pad(x, ((0, 0), (1, 1), (1, 1), (0, 0)), mode="edge")   # (N,H+2,W+2,Cin)
    # Overlapping row windows (only 2 halo rows per tile are duplicated), flattened
    # to (N*T, thi+2, W+2, Cin) so the kernel sees plain 4-D blocks.
    x_tiles = jnp.stack(
        [xpad[:, t * thi: t * thi + thi + 2] for t in range(T)], axis=1
    ).reshape(N * T, thi + 2, W + 2, Cin)

    w_hwio = jnp.transpose(weight_oihw, (2, 3, 1, 0)).astype(jnp.float32)  # (3,3,Cin,Cout)
    b2 = bias.reshape(1, Cout).astype(jnp.float32)

    out_e, out_o = pl.pallas_call(
        _up2_conv3x3_kernel,
        out_shape=(jax.ShapeDtypeStruct((N, Ho, W, Cout), jnp.float32),
                   jax.ShapeDtypeStruct((N, Ho, W, Cout), jnp.float32)),
        grid_spec=pltpu.PrefetchScalarGridSpec(
            num_scalar_prefetch=0,
            grid=(N, T),
            in_specs=[
                pl.BlockSpec((1, thi + 2, W + 2, Cin),
                             lambda n, t: (n * T + t, 0, 0, 0)),
                pl.BlockSpec((3, 3, Cin, Cout), lambda n, t: (0, 0, 0, 0)),
                pl.BlockSpec((1, Cout), lambda n, t: (0, 0)),
            ],
            out_specs=(
                pl.BlockSpec((1, tho, W, Cout), lambda n, t: (n, t, 0, 0)),
                pl.BlockSpec((1, tho, W, Cout), lambda n, t: (n, t, 0, 0)),
            ),
        ),
        compiler_params=pltpu.CompilerParams(
            dimension_semantics=("parallel", "parallel"),
            vmem_limit_bytes=48 * 1024 * 1024,
        ),
    )(x_tiles, w_hwio, b2)

    # Interleave even/odd output columns while doing the (already required)
    # NHWC -> NCHW conversion: one fused XLA copy, no extra HBM pass.
    out_nhwc = jnp.stack([out_e, out_o], axis=3).reshape(N, Ho, Wo, Cout)
    return jnp.transpose(out_nhwc, (0, 3, 1, 2))


# ------------------------------ pure-JAX reference -------------------------- #
def _bilinear_up2_ref(x):
    """Gather-based bilinear x2, PyTorch F.interpolate(align_corners=False) math."""
    N, H, W, C = x.shape

    def idx_weights(size):
        o = jnp.arange(2 * size, dtype=jnp.float32)
        src = jnp.maximum((o + 0.5) / 2.0 - 0.5, 0.0)       # PyTorch clamps negatives
        i0 = jnp.clip(jnp.floor(src).astype(jnp.int32), 0, size - 1)
        i1 = jnp.clip(i0 + 1, 0, size - 1)
        frac = src - i0.astype(jnp.float32)
        return i0, i1, frac

    h0, h1, fh = idx_weights(H)
    w0, w1, fw = idx_weights(W)
    xh = (x[:, h0] * (1.0 - fh)[None, :, None, None]
          + x[:, h1] * fh[None, :, None, None])
    return (xh[:, :, w0] * (1.0 - fw)[None, None, :, None]
            + xh[:, :, w1] * fw[None, None, :, None])


def _reference_forward(x_nchw, weight_oihw, bias):
    x = jnp.transpose(x_nchw, (0, 2, 3, 1)).astype(jnp.float32)
    up = _bilinear_up2_ref(x)
    w_hwio = jnp.transpose(weight_oihw, (2, 3, 1, 0)).astype(jnp.float32)
    out = jax.lax.conv_general_dilated(
        up, w_hwio, window_strides=(1, 1), padding="SAME",
        dimension_numbers=("NHWC", "HWIO", "NHWC"),
        precision=jax.lax.Precision.HIGHEST)
    out = out + bias[None, None, None, :]
    return jnp.transpose(out, (0, 3, 1, 2))


# --------------------------------- main ------------------------------------ #
if __name__ == "__main__":
    N, Cin, Cout, H, W = 2, 4, 8, 16, 16

    key = jax.random.PRNGKey(0)
    kx, kw, kb = jax.random.split(key, 3)
    x = jax.random.normal(kx, (N, Cin, H, W), dtype=jnp.float32)
    # deterministic "Conv2d(in_ch, out_ch, 3)" parameters (PyTorch OIHW layout)
    weight = 0.1 * jax.random.normal(kw, (Cout, Cin, 3, 3), dtype=jnp.float32)
    bias = 0.1 * jax.random.normal(kb, (Cout,), dtype=jnp.float32)

    ref = jax.block_until_ready(_reference_forward(x, weight, bias))

    # auto-picked row tile (whole image fits the VMEM budget at this toy size)
    out = jax.block_until_ready(upsample_forward(x, weight, bias))
    assert out.shape == (N, Cout, 2 * H, 2 * W), out.shape
    assert jnp.allclose(out, ref, atol=1e-4, rtol=1e-4), \
        float(jnp.max(jnp.abs(out - ref)))

    # explicitly tiled run (4 row tiles) to exercise the halo / multi-tile path
    out_t = jax.block_until_ready(upsample_forward(x, weight, bias, tile_rows=4))
    assert jnp.allclose(out_t, ref, atol=1e-4, rtol=1e-4), \
        float(jnp.max(jnp.abs(out_t - ref)))

    print("KERNEL_OK")
</pallas_src>

<mosaic_0001>
module attributes {stable_mosaic.version = 11 : i64} {
  func.func @_up2_conv3x3_kernel(%arg0: i32, %arg1: i32, %arg2: memref<1x18x18x4xf32, #tpu.memory_space<vmem>>, %arg3: memref<3x3x4x8xf32, #tpu.memory_space<vmem>>, %arg4: memref<1x8xf32, #tpu.memory_space<vmem>>, %arg5: memref<1x32x16x8xf32, #tpu.memory_space<vmem>>, %arg6: memref<1x32x16x8xf32, #tpu.memory_space<vmem>>) attributes {dimension_semantics = [#tpu.dimension_semantics<parallel>, #tpu.dimension_semantics<parallel>], iteration_bounds = array<i64: 2, 1>, scalar_prefetch = 0 : i64, scratch_operands = 0 : i64, tpu.core_type = #tpu.core_type<tc>, window_params = [{transform_indices = @transform_0, window_bounds = array<i64: 1, 18, 18, 4>}, {pipeline_mode = #tpu.pipeline_mode<synchronous>, transform_indices = @transform_1, window_bounds = array<i64: 3, 3, 4, 8>}, {pipeline_mode = #tpu.pipeline_mode<synchronous>, transform_indices = @transform_2, window_bounds = array<i64: 1, 8>}, {transform_indices = @transform_3, window_bounds = array<i64: 1, 32, 16, 8>}, {transform_indices = @transform_4, window_bounds = array<i64: 1, 32, 16, 8>}]} {
    %c0 = arith.constant 0 : index
    %c0_0 = arith.constant 0 : index
    %c0_1 = arith.constant 0 : index
    %c0_2 = arith.constant 0 : index
    %0 = vector.load %arg2[%c0, %c0_0, %c0_1, %c0_2] : memref<1x18x18x4xf32, #tpu.memory_space<vmem>>, vector<1x18x18x4xf32>
    %1 = vector.shape_cast %0 : vector<1x18x18x4xf32> to vector<18x18x4xf32>
    %2 = vector.extract_strided_slice %1 {offsets = [0, 0, 0], sizes = [17, 18, 4], strides = [1, 1, 1]} : vector<18x18x4xf32> to vector<17x18x4xf32>
    %3 = vector.extract_strided_slice %1 {offsets = [1, 0, 0], sizes = [17, 18, 4], strides = [1, 1, 1]} : vector<18x18x4xf32> to vector<17x18x4xf32>
    %cst = arith.constant 7.500000e-01 : f32
    %4 = vector.broadcast %cst : f32 to vector<17x18x4xf32>
    %5 = arith.mulf %4, %2 : vector<17x18x4xf32>
    %cst_3 = arith.constant 2.500000e-01 : f32
    %6 = vector.broadcast %cst_3 : f32 to vector<17x18x4xf32>
    %7 = arith.mulf %6, %3 : vector<17x18x4xf32>
    %8 = arith.addf %5, %7 : vector<17x18x4xf32>
    %cst_4 = arith.constant 2.500000e-01 : f32
    %9 = vector.broadcast %cst_4 : f32 to vector<17x18x4xf32>
    %10 = arith.mulf %9, %2 : vector<17x18x4xf32>
    %cst_5 = arith.constant 7.500000e-01 : f32
    %11 = vector.broadcast %cst_5 : f32 to vector<17x18x4xf32>
    %12 = arith.mulf %11, %3 : vector<17x18x4xf32>
    %13 = arith.addf %10, %12 : vector<17x18x4xf32>
    %14 = vector.shape_cast %8 : vector<17x18x4xf32> to vector<17x1x18x4xf32>
    %15 = vector.shape_cast %13 : vector<17x18x4xf32> to vector<17x1x18x4xf32>
    %16 = tpu.concatenate %14, %15 in 1 : vector<17x1x18x4xf32>, vector<17x1x18x4xf32> -> vector<17x2x18x4xf32>
    %17 = vector.shape_cast %16 : vector<17x2x18x4xf32> to vector<34x18x4xf32>
    %18 = tpu.iota {dimensions = array<i32: 0>} : vector<34x18x4xi32>
    %c0_i32 = arith.constant 0 : i32
    %19 = vector.broadcast %c0_i32 : i32 to vector<34x18x4xi32>
    %20 = arith.cmpi eq, %18, %19 : vector<34x18x4xi32>
    %c0_i32_6 = arith.constant 0 : i32
    %21 = arith.cmpi eq, %arg1, %c0_i32_6 : i32
    %22 = vector.broadcast %21 : i1 to vector<34x18x4xi1>
    %23 = arith.andi %20, %22 : vector<34x18x4xi1>
    %c33_i32 = arith.constant 33 : i32
    %24 = vector.broadcast %c33_i32 : i32 to vector<34x18x4xi32>
    %25 = arith.cmpi eq, %18, %24 : vector<34x18x4xi32>
    %c0_i32_7 = arith.constant 0 : i32
    %26 = arith.cmpi eq, %arg1, %c0_i32_7 : i32
    %27 = vector.broadcast %26 : i1 to vector<34x18x4xi1>
    %28 = arith.andi %25, %27 : vector<34x18x4xi1>
    %29 = arith.ori %23, %28 : vector<34x18x4xi1>
    %cst_8 = arith.constant 0.000000e+00 : f32
    %30 = vector.broadcast %cst_8 : f32 to vector<34x18x4xf32>
    %31 = arith.select %29, %30, %17 : vector<34x18x4xi1>, vector<34x18x4xf32>
    %32 = vector.extract_strided_slice %31 {offsets = [0, 0, 0], sizes = [34, 17, 4], strides = [1, 1, 1]} : vector<34x18x4xf32> to vector<34x17x4xf32>
    %33 = vector.extract_strided_slice %31 {offsets = [0, 1, 0], sizes = [34, 17, 4], strides = [1, 1, 1]} : vector<34x18x4xf32> to vector<34x17x4xf32>
    %cst_9 = arith.constant 7.500000e-01 : f32
    %34 = vector.broadcast %cst_9 : f32 to vector<34x17x4xf32>
    %35 = arith.mulf %34, %32 : vector<34x17x4xf32>
    %cst_10 = arith.constant 2.500000e-01 : f32
    %36 = vector.broadcast %cst_10 : f32 to vector<34x17x4xf32>
    %37 = arith.mulf %36, %33 : vector<34x17x4xf32>
    %38 = arith.addf %35, %37 : vector<34x17x4xf32>
    %cst_11 = arith.constant 2.500000e-01 : f32
    %39 = vector.broadcast %cst_11 : f32 to vector<34x17x4xf32>
    %40 = arith.mulf %39, %32 : vector<34x17x4xf32>
    %cst_12 = arith.constant 7.500000e-01 : f32
    %41 = vector.broadcast %cst_12 : f32 to vector<34x17x4xf32>
    %42 = arith.mulf %41, %33 : vector<34x17x4xf32>
    %43 = arith.addf %40, %42 : vector<34x17x4xf32>
    %44 = tpu.iota {dimensions = array<i32: 1>} : vector<34x17x4xi32>
    %c0_i32_13 = arith.constant 0 : i32
    %45 = vector.broadcast %c0_i32_13 : i32 to vector<34x17x4xi32>
    %46 = arith.cmpi eq, %44, %45 : vector<34x17x4xi32>
    %cst_14 = arith.constant 0.000000e+00 : f32
    %47 = vector.broadcast %cst_14 : f32 to vector<34x17x4xf32>
    %48 = arith.select %46, %47, %38 : vector<34x17x4xi1>, vector<34x17x4xf32>
    %c16_i32 = arith.constant 16 : i32
    %49 = vector.broadcast %c16_i32 : i32 to vector<34x17x4xi32>
    %50 = arith.cmpi eq, %44, %49 : vector<34x17x4xi32>
    %cst_15 = arith.constant 0.000000e+00 : f32
    %51 = vector.broadcast %cst_15 : f32 to vector<34x17x4xf32>
    %52 = arith.select %50, %51, %43 : vector<34x17x4xi1>, vector<34x17x4xf32>
    %cst_16 = arith.constant 0.000000e+00 : f32
    %53 = vector.broadcast %cst_16 : f32 to vector<512x8xf32>
    %cst_17 = arith.constant 0.000000e+00 : f32
    %54 = vector.broadcast %cst_17 : f32 to vector<512x8xf32>
    %55 = vector.extract_strided_slice %48 {offsets = [0, 0, 0], sizes = [32, 17, 4], strides = [1, 1, 1]} : vector<34x17x4xf32> to vector<32x17x4xf32>
    %56 = vector.extract_strided_slice %52 {offsets = [0, 0, 0], sizes = [32, 17, 4], strides = [1, 1, 1]} : vector<34x17x4xf32> to vector<32x17x4xf32>
    %57 = vector.extract_strided_slice %55 {offsets = [0, 0, 0], sizes = [32, 16, 4], strides = [1, 1, 1]} : vector<32x17x4xf32> to vector<32x16x4xf32>
    %58 = vector.shape_cast %57 : vector<32x16x4xf32> to vector<512x4xf32>
    %59 = vector.extract_strided_slice %55 {offsets = [0, 1, 0], sizes = [32, 16, 4], strides = [1, 1, 1]} : vector<32x17x4xf32> to vector<32x16x4xf32>
    %60 = vector.shape_cast %59 : vector<32x16x4xf32> to vector<512x4xf32>
    %61 = vector.extract_strided_slice %56 {offsets = [0, 0, 0], sizes = [32, 16, 4], strides = [1, 1, 1]} : vector<32x17x4xf32> to vector<32x16x4xf32>
    %62 = vector.shape_cast %61 : vector<32x16x4xf32> to vector<512x4xf32>
    %63 = vector.extract_strided_slice %56 {offsets = [0, 1, 0], sizes = [32, 16, 4], strides = [1, 1, 1]} : vector<32x17x4xf32> to vector<32x16x4xf32>
    %64 = vector.shape_cast %63 : vector<32x16x4xf32> to vector<512x4xf32>
    %c0_18 = arith.constant 0 : index
    %c0_19 = arith.constant 0 : index
    %c0_20 = arith.constant 0 : index
    %c0_21 = arith.constant 0 : index
    %65 = vector.load %arg3[%c0_18, %c0_19, %c0_20, %c0_21] : memref<3x3x4x8xf32, #tpu.memory_space<vmem>>, vector<1x1x4x8xf32>
    %66 = vector.shape_cast %65 : vector<1x1x4x8xf32> to vector<4x8xf32>
    %cst_22 = arith.constant dense<0.000000e+00> : vector<512x8xf32>
    %67 = tpu.matmul %58, %66, %cst_22 {dimension_numbers = #tpu.dot_dimension_numbers<[1], [0], [0], [1], [0, 0, 1, 1], [], []>} : vector<512x4xf32>, vector<4x8xf32>, vector<512x8xf32> -> vector<512x8xf32>
    %68 = arith.addf %53, %67 : vector<512x8xf32>
    %c0_23 = arith.constant 0 : index
    %c1 = arith.constant 1 : index
    %c0_24 = arith.constant 0 : index
    %c0_25 = arith.constant 0 : index
    %69 = vector.load %arg3[%c0_23, %c1, %c0_24, %c0_25] : memref<3x3x4x8xf32, #tpu.memory_space<vmem>>, vector<1x1x4x8xf32>
    %70 = vector.shape_cast %69 : vector<1x1x4x8xf32> to vector<4x8xf32>
    %cst_26 = arith.constant dense<0.000000e+00> : vector<512x8xf32>
    %71 = tpu.matmul %62, %70, %cst_26 {dimension_numbers = #tpu.dot_dimension_numbers<[1], [0], [0], [1], [0, 0, 1, 1], [], []>} : vector<512x4xf32>, vector<4x8xf32>, vector<512x8xf32> -> vector<512x8xf32>
    %72 = arith.addf %68, %71 : vector<512x8xf32>
    %c0_27 = arith.constant 0 : index
    %c2 = arith.constant 2 : index
    %c0_28 = arith.constant 0 : index
    %c0_29 = arith.constant 0 : index
    %73 = vector.load %arg3[%c0_27, %c2, %c0_28, %c0_29] : memref<3x3x4x8xf32, #tpu.memory_space<vmem>>, vector<1x1x4x8xf32>
    %74 = vector.shape_cast %73 : vector<1x1x4x8xf32> to vector<4x8xf32>
    %cst_30 = arith.constant dense<0.000000e+00> : vector<512x8xf32>
    %75 = tpu.matmul %60, %74, %cst_30 {dimension_numbers = #tpu.dot_dimension_numbers<[1], [0], [0], [1], [0, 0, 1, 1], [], []>} : vector<512x4xf32>, vector<4x8xf32>, vector<512x8xf32> -> vector<512x8xf32>
    %76 = arith.addf %72, %75 : vector<512x8xf32>
    %c0_31 = arith.constant 0 : index
    %c0_32 = arith.constant 0 : index
    %c0_33 = arith.constant 0 : index
    %c0_34 = arith.constant 0 : index
    %77 = vector.load %arg3[%c0_31, %c0_32, %c0_33, %c0_34] : memref<3x3x4x8xf32, #tpu.memory_space<vmem>>, vector<1x1x4x8xf32>
    %78 = vector.shape_cast %77 : vector<1x1x4x8xf32> to vector<4x8xf32>
    %cst_35 = arith.constant dense<0.000000e+00> : vector<512x8xf32>
    %79 = tpu.matmul %62, %78, %cst_35 {dimension_numbers = #tpu.dot_dimension_numbers<[1], [0], [0], [1], [0, 0, 1, 1], [], []>} : vector<512x4xf32>, vector<4x8xf32>, vector<512x8xf32> -> vector<512x8xf32>
    %80 = arith.addf %54, %79 : vector<512x8xf32>
    %c0_36 = arith.constant 0 : index
    %c1_37 = arith.constant 1 : index
    %c0_38 = arith.constant 0 : index
    %c0_39 = arith.constant 0 : index
    %81 = vector.load %arg3[%c0_36, %c1_37, %c0_38, %c0_39] : memref<3x3x4x8xf32, #tpu.memory_space<vmem>>, vector<1x1x4x8xf32>
    %82 = vector.shape_cast %81 : vector<1x1x4x8xf32> to vector<4x8xf32>
    %cst_40 = arith.constant dense<0.000000e+00> : vector<512x8xf32>
    %83 = tpu.matmul %60, %82, %cst_40 {dimension_numbers = #tpu.dot_dimension_numbers<[1], [0], [0], [1], [0, 0, 1, 1], [], []>} : vector<512x4xf32>, vector<4x8xf32>, vector<512x8xf32> -> vector<512x8xf32>
    %84 = arith.addf %80, %83 : vector<512x8xf32>
    %c0_41 = arith.constant 0 : index
    %c2_42 = arith.constant 2 : index
    %c0_43 = arith.constant 0 : index
    %c0_44 = arith.constant 0 : index
    %85 = vector.load %arg3[%c0_41, %c2_42, %c0_43, %c0_44] : memref<3x3x4x8xf32, #tpu.memory_space<vmem>>, vector<1x1x4x8xf32>
    %86 = vector.shape_cast %85 : vector<1x1x4x8xf32> to vector<4x8xf32>
    %cst_45 = arith.constant dense<0.000000e+00> : vector<512x8xf32>
    %87 = tpu.matmul %64, %86, %cst_45 {dimension_numbers = #tpu.dot_dimension_numbers<[1], [0], [0], [1], [0, 0, 1, 1], [], []>} : vector<512x4xf32>, vector<4x8xf32>, vector<512x8xf32> -> vector<512x8xf32>
    %88 = arith.addf %84, %87 : vector<512x8xf32>
    %89 = vector.extract_strided_slice %48 {offsets = [1, 0, 0], sizes = [32, 17, 4], strides = [1, 1, 1]} : vector<34x17x4xf32> to vector<32x17x4xf32>
    %90 = vector.extract_strided_slice %52 {offsets = [1, 0, 0], sizes = [32, 17, 4], strides = [1, 1, 1]} : vector<34x17x4xf32> to vector<32x17x4xf32>
    %91 = vector.extract_strided_slice %89 {offsets = [0, 0, 0], sizes = [32, 16, 4], strides = [1, 1, 1]} : vector<32x17x4xf32> to vector<32x16x4xf32>
    %92 = vector.shape_cast %91 : vector<32x16x4xf32> to vector<512x4xf32>
    %93 = vector.extract_strided_slice %89 {offsets = [0, 1, 0], sizes = [32, 16, 4], strides = [1, 1, 1]} : vector<32x17x4xf32> to vector<32x16x4xf32>
    %94 = vector.shape_cast %93 : vector<32x16x4xf32> to vector<512x4xf32>
    %95 = vector.extract_strided_slice %90 {offsets = [0, 0, 0], sizes = [32, 16, 4], strides = [1, 1, 1]} : vector<32x17x4xf32> to vector<32x16x4xf32>
    %96 = vector.shape_cast %95 : vector<32x16x4xf32> to vector<512x4xf32>
    %97 = vector.extract_strided_slice %90 {offsets = [0, 1, 0], sizes = [32, 16, 4], strides = [1, 1, 1]} : vector<32x17x4xf32> to vector<32x16x4xf32>
    %98 = vector.shape_cast %97 : vector<32x16x4xf32> to vector<512x4xf32>
    %c1_46 = arith.constant 1 : index
    %c0_47 = arith.constant 0 : index
    %c0_48 = arith.constant 0 : index
    %c0_49 = arith.constant 0 : index
    %99 = vector.load %arg3[%c1_46, %c0_47, %c0_48, %c0_49] : memref<3x3x4x8xf32, #tpu.memory_space<vmem>>, vector<1x1x4x8xf32>
    %100 = vector.shape_cast %99 : vector<1x1x4x8xf32> to vector<4x8xf32>
    %cst_50 = arith.constant dense<0.000000e+00> : vector<512x8xf32>
    %101 = tpu.matmul %92, %100, %cst_50 {dimension_numbers = #tpu.dot_dimension_numbers<[1], [0], [0], [1], [0, 0, 1, 1], [], []>} : vector<512x4xf32>, vector<4x8xf32>, vector<512x8xf32> -> vector<512x8xf32>
    %102 = arith.addf %76, %101 : vector<512x8xf32>
    %c1_51 = arith.constant 1 : index
    %c1_52 = arith.constant 1 : index
    %c0_53 = arith.constant 0 : index
    %c0_54 = arith.constant 0 : index
    %103 = vector.load %arg3[%c1_51, %c1_52, %c0_53, %c0_54] : memref<3x3x4x8xf32, #tpu.memory_space<vmem>>, vector<1x1x4x8xf32>
    %104 = vector.shape_cast %103 : vector<1x1x4x8xf32> to vector<4x8xf32>
    %cst_55 = arith.constant dense<0.000000e+00> : vector<512x8xf32>
    %105 = tpu.matmul %96, %104, %cst_55 {dimension_numbers = #tpu.dot_dimension_numbers<[1], [0], [0], [1], [0, 0, 1, 1], [], []>} : vector<512x4xf32>, vector<4x8xf32>, vector<512x8xf32> -> vector<512x8xf32>
    %106 = arith.addf %102, %105 : vector<512x8xf32>
    %c1_56 = arith.constant 1 : index
    %c2_57 = arith.constant 2 : index
    %c0_58 = arith.constant 0 : index
    %c0_59 = arith.constant 0 : index
    %107 = vector.load %arg3[%c1_56, %c2_57, %c0_58, %c0_59] : memref<3x3x4x8xf32, #tpu.memory_space<vmem>>, vector<1x1x4x8xf32>
    %108 = vector.shape_cast %107 : vector<1x1x4x8xf32> to vector<4x8xf32>
    %cst_60 = arith.constant dense<0.000000e+00> : vector<512x8xf32>
    %109 = tpu.matmul %94, %108, %cst_60 {dimension_numbers = #tpu.dot_dimension_numbers<[1], [0], [0], [1], [0, 0, 1, 1], [], []>} : vector<512x4xf32>, vector<4x8xf32>, vector<512x8xf32> -> vector<512x8xf32>
    %110 = arith.addf %106, %109 : vector<512x8xf32>
    %c1_61 = arith.constant 1 : index
    %c0_62 = arith.constant 0 : index
    %c0_63 = arith.constant 0 : index
    %c0_64 = arith.constant 0 : index
    %111 = vector.load %arg3[%c1_61, %c0_62, %c0_63, %c0_64] : memref<3x3x4x8xf32, #tpu.memory_space<vmem>>, vector<1x1x4x8xf32>
    %112 = vector.shape_cast %111 : vector<1x1x4x8xf32> to vector<4x8xf32>
    %cst_65 = arith.constant dense<0.000000e+00> : vector<512x8xf32>
    %113 = tpu.matmul %96, %112, %cst_65 {dimension_numbers = #tpu.dot_dimension_numbers<[1], [0], [0], [1], [0, 0, 1, 1], [], []>} : vector<512x4xf32>, vector<4x8xf32>, vector<512x8xf32> -> vector<512x8xf32>
    %114 = arith.addf %88, %113 : vector<512x8xf32>
    %c1_66 = arith.constant 1 : index
    %c1_67 = arith.constant 1 : index
    %c0_68 = arith.constant 0 : index
    %c0_69 = arith.constant 0 : index
    %115 = vector.load %arg3[%c1_66, %c1_67, %c0_68, %c0_69] : memref<3x3x4x8xf32, #tpu.memory_space<vmem>>, vector<1x1x4x8xf32>
    %116 = vector.shape_cast %115 : vector<1x1x4x8xf32> to vector<4x8xf32>
    %cst_70 = arith.constant dense<0.000000e+00> : vector<512x8xf32>
    %117 = tpu.matmul %94, %116, %cst_70 {dimension_numbers = #tpu.dot_dimension_numbers<[1], [0], [0], [1], [0, 0, 1, 1], [], []>} : vector<512x4xf32>, vector<4x8xf32>, vector<512x8xf32> -> vector<512x8xf32>
    %118 = arith.addf %114, %117 : vector<512x8xf32>
    %c1_71 = arith.constant 1 : index
    %c2_72 = arith.constant 2 : index
    %c0_73 = arith.constant 0 : index
    %c0_74 = arith.constant 0 : index
    %119 = vector.load %arg3[%c1_71, %c2_72, %c0_73, %c0_74] : memref<3x3x4x8xf32, #tpu.memory_space<vmem>>, vector<1x1x4x8xf32>
    %120 = vector.shape_cast %119 : vector<1x1x4x8xf32> to vector<4x8xf32>
    %cst_75 = arith.constant dense<0.000000e+00> : vector<512x8xf32>
    %121 = tpu.matmul %98, %120, %cst_75 {dimension_numbers = #tpu.dot_dimension_numbers<[1], [0], [0], [1], [0, 0, 1, 1], [], []>} : vector<512x4xf32>, vector<4x8xf32>, vector<512x8xf32> -> vector<512x8xf32>
    %122 = arith.addf %118, %121 : vector<512x8xf32>
    %123 = vector.extract_strided_slice %48 {offsets = [2, 0, 0], sizes = [32, 17, 4], strides = [1, 1, 1]} : vector<34x17x4xf32> to vector<32x17x4xf32>
    %124 = vector.extract_strided_slice %52 {offsets = [2, 0, 0], sizes = [32, 17, 4], strides = [1, 1, 1]} : vector<34x17x4xf32> to vector<32x17x4xf32>
    %125 = vector.extract_strided_slice %123 {offsets = [0, 0, 0], sizes = [32, 16, 4], strides = [1, 1, 1]} : vector<32x17x4xf32> to vector<32x16x4xf32>
    %126 = vector.shape_cast %125 : vector<32x16x4xf32> to vector<512x4xf32>
    %127 = vector.extract_strided_slice %123 {offsets = [0, 1, 0], sizes = [32, 16, 4], strides = [1, 1, 1]} : vector<32x17x4xf32> to vector<32x16x4xf32>
    %128 = vector.shape_cast %127 : vector<32x16x4xf32> to vector<512x4xf32>
    %129 = vector.extract_strided_slice %124 {offsets = [0, 0, 0], sizes = [32, 16, 4], strides = [1, 1, 1]} : vector<32x17x4xf32> to vector<32x16x4xf32>
    %130 = vector.shape_cast %129 : vector<32x16x4xf32> to vector<512x4xf32>
    %131 = vector.extract_strided_slice %124 {offsets = [0, 1, 0], sizes = [32, 16, 4], strides = [1, 1, 1]} : vector<32x17x4xf32> to vector<32x16x4xf32>
    %132 = vector.shape_cast %131 : vector<32x16x4xf32> to vector<512x4xf32>
    %c2_76 = arith.constant 2 : index
    %c0_77 = arith.constant 0 : index
    %c0_78 = arith.constant 0 : index
    %c0_79 = arith.constant 0 : index
    %133 = vector.load %arg3[%c2_76, %c0_77, %c0_78, %c0_79] : memref<3x3x4x8xf32, #tpu.memory_space<vmem>>, vector<1x1x4x8xf32>
    %134 = vector.shape_cast %133 : vector<1x1x4x8xf32> to vector<4x8xf32>
    %cst_80 = arith.constant dense<0.000000e+00> : vector<512x8xf32>
    %135 = tpu.matmul %126, %134, %cst_80 {dimension_numbers = #tpu.dot_dimension_numbers<[1], [0], [0], [1], [0, 0, 1, 1], [], []>} : vector<512x4xf32>, vector<4x8xf32>, vector<512x8xf32> -> vector<512x8xf32>
    %136 = arith.addf %110, %135 : vector<512x8xf32>
    %c2_81 = arith.constant 2 : index
    %c1_82 = arith.constant 1 : index
    %c0_83 = arith.constant 0 : index
    %c0_84 = arith.constant 0 : index
    %137 = vector.load %arg3[%c2_81, %c1_82, %c0_83, %c0_84] : memref<3x3x4x8xf32, #tpu.memory_space<vmem>>, vector<1x1x4x8xf32>
    %138 = vector.shape_cast %137 : vector<1x1x4x8xf32> to vector<4x8xf32>
    %cst_85 = arith.constant dense<0.000000e+00> : vector<512x8xf32>
    %139 = tpu.matmul %130, %138, %cst_85 {dimension_numbers = #tpu.dot_dimension_numbers<[1], [0], [0], [1], [0, 0, 1, 1], [], []>} : vector<512x4xf32>, vector<4x8xf32>, vector<512x8xf32> -> vector<512x8xf32>
    %140 = arith.addf %136, %139 : vector<512x8xf32>
    %c2_86 = arith.constant 2 : index
    %c2_87 = arith.constant 2 : index
    %c0_88 = arith.constant 0 : index
    %c0_89 = arith.constant 0 : index
    %141 = vector.load %arg3[%c2_86, %c2_87, %c0_88, %c0_89] : memref<3x3x4x8xf32, #tpu.memory_space<vmem>>, vector<1x1x4x8xf32>
    %142 = vector.shape_cast %141 : vector<1x1x4x8xf32> to vector<4x8xf32>
    %cst_90 = arith.constant dense<0.000000e+00> : vector<512x8xf32>
    %143 = tpu.matmul %128, %142, %cst_90 {dimension_numbers = #tpu.dot_dimension_numbers<[1], [0], [0], [1], [0, 0, 1, 1], [], []>} : vector<512x4xf32>, vector<4x8xf32>, vector<512x8xf32> -> vector<512x8xf32>
    %144 = arith.addf %140, %143 : vector<512x8xf32>
    %c2_91 = arith.constant 2 : index
    %c0_92 = arith.constant 0 : index
    %c0_93 = arith.constant 0 : index
    %c0_94 = arith.constant 0 : index
    %145 = vector.load %arg3[%c2_91, %c0_92, %c0_93, %c0_94] : memref<3x3x4x8xf32, #tpu.memory_space<vmem>>, vector<1x1x4x8xf32>
    %146 = vector.shape_cast %145 : vector<1x1x4x8xf32> to vector<4x8xf32>
    %cst_95 = arith.constant dense<0.000000e+00> : vector<512x8xf32>
    %147 = tpu.matmul %130, %146, %cst_95 {dimension_numbers = #tpu.dot_dimension_numbers<[1], [0], [0], [1], [0, 0, 1, 1], [], []>} : vector<512x4xf32>, vector<4x8xf32>, vector<512x8xf32> -> vector<512x8xf32>
    %148 = arith.addf %122, %147 : vector<512x8xf32>
    %c2_96 = arith.constant 2 : index
    %c1_97 = arith.constant 1 : index
    %c0_98 = arith.constant 0 : index
    %c0_99 = arith.constant 0 : index
    %149 = vector.load %arg3[%c2_96, %c1_97, %c0_98, %c0_99] : memref<3x3x4x8xf32, #tpu.memory_space<vmem>>, vector<1x1x4x8xf32>
    %150 = vector.shape_cast %149 : vector<1x1x4x8xf32> to vector<4x8xf32>
    %cst_100 = arith.constant dense<0.000000e+00> : vector<512x8xf32>
    %151 = tpu.matmul %128, %150, %cst_100 {dimension_numbers = #tpu.dot_dimension_numbers<[1], [0], [0], [1], [0, 0, 1, 1], [], []>} : vector<512x4xf32>, vector<4x8xf32>, vector<512x8xf32> -> vector<512x8xf32>
    %152 = arith.addf %148, %151 : vector<512x8xf32>
    %c2_101 = arith.constant 2 : index
    %c2_102 = arith.constant 2 : index
    %c0_103 = arith.constant 0 : index
    %c0_104 = arith.constant 0 : index
    %153 = vector.load %arg3[%c2_101, %c2_102, %c0_103, %c0_104] : memref<3x3x4x8xf32, #tpu.memory_space<vmem>>, vector<1x1x4x8xf32>
    %154 = vector.shape_cast %153 : vector<1x1x4x8xf32> to vector<4x8xf32>
    %cst_105 = arith.constant dense<0.000000e+00> : vector<512x8xf32>
    %155 = tpu.matmul %132, %154, %cst_105 {dimension_numbers = #tpu.dot_dimension_numbers<[1], [0], [0], [1], [0, 0, 1, 1], [], []>} : vector<512x4xf32>, vector<4x8xf32>, vector<512x8xf32> -> vector<512x8xf32>
    %156 = arith.addf %152, %155 : vector<512x8xf32>
    %c0_106 = arith.constant 0 : index
    %c0_107 = arith.constant 0 : index
    %157 = vector.load %arg4[%c0_106, %c0_107] : memref<1x8xf32, #tpu.memory_space<vmem>>, vector<1x8xf32>
    %158 = vector.broadcast %157 : vector<1x8xf32> to vector<512x8xf32>
    %159 = arith.addf %144, %158 : vector<512x8xf32>
    %160 = vector.shape_cast %159 : vector<512x8xf32> to vector<32x16x8xf32>
    %c0_108 = arith.constant 0 : index
    %c0_109 = arith.constant 0 : index
    %c0_110 = arith.constant 0 : index
    %c0_111 = arith.constant 0 : index
    %161 = vector.load %arg5[%c0_108, %c0_109, %c0_110, %c0_111] : memref<1x32x16x8xf32, #tpu.memory_space<vmem>>, vector<1x32x16x8xf32>
    %162 = vector.shape_cast %161 : vector<1x32x16x8xf32> to vector<32x16x8xf32>
    %163 = vector.shape_cast %160 : vector<32x16x8xf32> to vector<1x32x16x8xf32>
    tpu.vector_store %arg5[%c0_108, %c0_109, %c0_110, %c0_111], %163 {strides = array<i32>} : memref<1x32x16x8xf32, #tpu.memory_space<vmem>>, vector<1x32x16x8xf32>,
    %164 = vector.broadcast %157 : vector<1x8xf32> to vector<512x8xf32>
    %165 = arith.addf %156, %164 : vector<512x8xf32>
    %166 = vector.shape_cast %165 : vector<512x8xf32> to vector<32x16x8xf32>
    %c0_112 = arith.constant 0 : index
    %c0_113 = arith.constant 0 : index
    %c0_114 = arith.constant 0 : index
    %c0_115 = arith.constant 0 : index
    %167 = vector.load %arg6[%c0_112, %c0_113, %c0_114, %c0_115] : memref<1x32x16x8xf32, #tpu.memory_space<vmem>>, vector<1x32x16x8xf32>
    %168 = vector.shape_cast %167 : vector<1x32x16x8xf32> to vector<32x16x8xf32>
    %169 = vector.shape_cast %166 : vector<32x16x8xf32> to vector<1x32x16x8xf32>
    tpu.vector_store %arg6[%c0_112, %c0_113, %c0_114, %c0_115], %169 {strides = array<i32>} : memref<1x32x16x8xf32, #tpu.memory_space<vmem>>, vector<1x32x16x8xf32>,
    return
  }
  func.func @transform_0(%arg0: i32, %arg1: i32) -> (i32, i32, i32, i32) {
    %c1_i32 = arith.constant 1 : i32
    %0 = arith.muli %arg0, %c1_i32 : i32
    %1 = arith.addi %0, %arg1 : i32
    %c0_i32 = arith.constant 0 : i32
    %c0_i32_0 = arith.constant 0 : i32
    %c0_i32_1 = arith.constant 0 : i32
    %c0_i32_2 = arith.constant 0 : i32
    return %1, %c0_i32, %c0_i32_0, %c0_i32_1 : i32, i32, i32, i32
  }
  func.func @transform_1(%arg0: i32, %arg1: i32) -> (i32, i32, i32, i32) {
    %c0_i32 = arith.constant 0 : i32
    %c0_i32_0 = arith.constant 0 : i32
    %c0_i32_1 = arith.constant 0 : i32
    %c0_i32_2 = arith.constant 0 : i32
    %c0_i32_3 = arith.constant 0 : i32
    return %c0_i32, %c0_i32_0, %c0_i32_1, %c0_i32_2 : i32, i32, i32, i32
  }
  func.func @transform_2(%arg0: i32, %arg1: i32) -> (i32, i32) {
    %c0_i32 = arith.constant 0 : i32
    %c0_i32_0 = arith.constant 0 : i32
    %c0_i32_1 = arith.constant 0 : i32
    return %c0_i32, %c0_i32_0 : i32, i32
  }
  func.func @transform_3(%arg0: i32, %arg1: i32) -> (i32, i32, i32, i32) {
    %c0_i32 = arith.constant 0 : i32
    %c0_i32_0 = arith.constant 0 : i32
    %c0_i32_1 = arith.constant 0 : i32
    return %arg0, %arg1, %c0_i32, %c0_i32_0 : i32, i32, i32, i32
  }
  func.func @transform_4(%arg0: i32, %arg1: i32) -> (i32, i32, i32, i32) {
    %c0_i32 = arith.constant 0 : i32
    %c0_i32_0 = arith.constant 0 : i32
    %c0_i32_1 = arith.constant 0 : i32
    return %arg0, %arg1, %c0_i32, %c0_i32_0 : i32, i32, i32, i32
  }
}

</mosaic_0001>

<llo_original>
// kernel: tpu_custom_call.1
$region0: #{tpu_custom_call.1}
  #allocation0 [shape = 'u32[]', space=smem, size = 0x4, offset = 0x4, fixed_abs, tag = 'smem constant byte address 0x4 - core index']
  #allocation1 [shape = 'u32[144,128]{1,0:T(1,128)}', space=vmem, size = 0x12000, scoped, tag = 'internal scratch']
  %s0 = inlined_call_operand.vmem [shape: f32[2,18,18,4], index: 0, kind: input, shape index: {}]
  %s1 = inlined_call_operand.vmem [shape: f32[3,3,4,8], index: 1, kind: input, shape index: {}]
  %s2 = inlined_call_operand.vmem [shape: f32[1,8], index: 2, kind: input, shape index: {}]
  %s3 = inlined_call_operand.vmem [shape: f32[2,32,16,8], index: 3, kind: output, shape index: {0}]
  %s4 = inlined_call_operand.vmem [shape: f32[2,32,16,8], index: 4, kind: output, shape index: {1}]
  %5 = xla_tuple %s3, %s4
  %s6 = sld [smem:[#allocation0]]
  $region53: #{tpu_custom_call.1} parent=0
    _
  %s8 = ssub.s32 1, %s6
  %s9 = scalar_select 0, %s8, %s6
  loop: start=0, step=1, limit=4
  $region2: #{tpu_custom_call.1} parent=0 // loop_pre_header
    _
  $region3: #{tpu_custom_call.1} parent=0 // loop_header
    %s11 = sphi 0, %s15
    %p12 = scmp.ge.s32.totalorder %s11, 4
    %s18 = sphi 0, %s30
    %s19 = sphi 0, %s26
    %s20 = sphi 0, %s18
    %s21 = sphi 0, %s19
    %s22 = sphi 0, %s20
    %s23 = sphi 0, %s21
    %s35 = sphi 0, %s37
    %s38 = sphi 0, %s35
    %s39 = sphi 0, %s38
    %s55 = sphi 0, %s39
    %s59 = sphi 0, %s59
    %s61 = sphi 0, %s59
    %s62 = sphi 0, %s61
    %s76 = sphi 0, %s62
    %s80 = sphi 0, %s80
    %s82 = sphi 0, %s80
    %s83 = sphi 0, %s82
    %s97 = sphi 0, %s83
    %s105 = sphi 0, %s107
    %s108 = sphi 0, %s105
    %s109 = sphi 0, %s108
    %s125 = sphi 0, %s109
    %s133 = sphi 0, %s135
    %s136 = sphi 0, %s133
    %s137 = sphi 0, %s136
    %s153 = sphi 0, %s137
  $region4: #{tpu_custom_call.1} parent=0 // loop_header_branch
    %14 = sbr.rel (%p12) target = $region8
  $region5: #{tpu_custom_call.1} parent=0 // loop_body
    %s16 = ssub.s32 %s11, 1
    %s17 = ssub.s32 %s11, 2
    %s24 = sadd.s32 1, %s19
    %p25 = scmp.ge.s32.totalorder %s24, 1
    %s26 = scalar_select %p25, 0, %s24
    %s27 = sadd.s32 1, %s18
    %s28 = scalar_select %p25, %s27, %s18
    %p29 = scmp.ge.s32.totalorder %s28, 2
    %s30 = scalar_select %p29, 0, %s28
    %s31 = sadd.s32 %s18, %s19
    %s32 = sadd.s32 %s30, %s26
    %s33 = ssub.s32 %s31, %s32
    %p34 = scmp.eq.s32.totalorder %s33, 0
    %s36 = sadd.s32 %s35, 1
    %s37 = scalar_select %p34, %s35, %s36
    %p40 = pneg %p34
    %p41 = scmp.eq.s32.totalorder %s11, 1
    %p42 = por %p40, %p41
    %p43 = scmp.ne.s32.totalorder %s35, %s38
    %p44 = scmp.eq.s32.totalorder %s11, 0
    %p45 = por %p43, %p44
    %p46 = scmp.ne.s32.totalorder %s35, %s38
    %p47 = scmp.eq.s32.totalorder %s16, 1
    %p48 = por %p46, %p47
    %p49 = scmp.ne.s32.totalorder %s38, %s39
    %p50 = scmp.eq.s32.totalorder %s16, 0
    %p51 = por %p49, %p50
    %p52 = scmp.ne.s32.totalorder %s38, %s39
    %p53 = scmp.eq.s32.totalorder %s17, 1
    %p54 = por %p52, %p53
    %p56 = scmp.ne.s32.totalorder %s39, %s55
    %p57 = scmp.eq.s32.totalorder %s17, 0
    %p58 = por %p56, %p57
    %s60 = sadd.s32 %s59, 1
    %p63 = scmp.eq.s32.totalorder %s11, 1
    %p64 = scmp.ne.s32.totalorder %s59, %s61
    %p65 = scmp.eq.s32.totalorder %s11, 0
    %p66 = por %p64, %p65
    %p67 = scmp.ne.s32.totalorder %s59, %s61
    %p68 = scmp.eq.s32.totalorder %s16, 1
    %p69 = por %p67, %p68
    %p70 = scmp.ne.s32.totalorder %s61, %s62
    %p71 = scmp.eq.s32.totalorder %s16, 0
    %p72 = por %p70, %p71
    %p73 = scmp.ne.s32.totalorder %s61, %s62
    %p74 = scmp.eq.s32.totalorder %s17, 1
    %p75 = por %p73, %p74
    %p77 = scmp.ne.s32.totalorder %s62, %s76
    %p78 = scmp.eq.s32.totalorder %s17, 0
    %p79 = por %p77, %p78
    %s81 = sadd.s32 %s80, 1
    %p84 = scmp.eq.s32.totalorder %s11, 1
    %p85 = scmp.ne.s32.totalorder %s80, %s82
    %p86 = scmp.eq.s32.totalorder %s11, 0
    %p87 = por %p85, %p86
    %p88 = scmp.ne.s32.totalorder %s80, %s82
    %p89 = scmp.eq.s32.totalorder %s16, 1
    %p90 = por %p88, %p89
    %p91 = scmp.ne.s32.totalorder %s82, %s83
    %p92 = scmp.eq.s32.totalorder %s16, 0
    %p93 = por %p91, %p92
    %p94 = scmp.ne.s32.totalorder %s82, %s83
    %p95 = scmp.eq.s32.totalorder %s17, 1
    %p96 = por %p94, %p95
    %p98 = scmp.ne.s32.totalorder %s83, %s97
    %p99 = scmp.eq.s32.totalorder %s17, 0
    %p100 = por %p98, %p99
    %s101 = ssub.s32 %s18, %s30
    %s102 = ssub.s32 %s19, %s26
    %s103 = sor.u32 %s101, %s102
    %p104 = scmp.eq.s32.totalorder %s103, 0
    %s106 = sadd.s32 %s105, 1
    %s107 = scalar_select %p104, %s105, %s106
    %p110 = pneg %p104
    %p111 = scmp.eq.s32.totalorder %s11, 1
    %p112 = por %p110, %p111
    %p113 = scmp.ne.s32.totalorder %s105, %s108
    %p114 = scmp.eq.s32.totalorder %s11, 0
    %p115 = por %p113, %p114
    %p116 = scmp.ne.s32.totalorder %s105, %s108
    %p117 = scmp.eq.s32.totalorder %s16, 1
    %p118 = por %p116, %p117
    %p119 = scmp.ne.s32.totalorder %s108, %s109
    %p120 = scmp.eq.s32.totalorder %s16, 0
    %p121 = por %p119, %p120
    %p122 = scmp.ne.s32.totalorder %s108, %s109
    %p123 = scmp.eq.s32.totalorder %s17, 1
    %p124 = por %p122, %p123
    %p126 = scmp.ne.s32.totalorder %s109, %s125
    %p127 = scmp.eq.s32.totalorder %s17, 0
    %p128 = por %p126, %p127
    %s129 = ssub.s32 %s18, %s30
    %s130 = ssub.s32 %s19, %s26
    %s131 = sor.u32 %s129, %s130
    %p132 = scmp.eq.s32.totalorder %s131, 0
    %s134 = sadd.s32 %s133, 1
    %s135 = scalar_select %p132, %s133, %s134
    %p138 = pneg %p132
    %p139 = scmp.eq.s32.totalorder %s11, 1
    %p140 = por %p138, %p139
    %p141 = scmp.ne.s32.totalorder %s133, %s136
    %p142 = scmp.eq.s32.totalorder %s11, 0
    %p143 = por %p141, %p142
    %p144 = scmp.ne.s32.totalorder %s133, %s136
    %p145 = scmp.eq.s32.totalorder %s16, 1
    %p146 = por %p144, %p145
    %p147 = scmp.ne.s32.totalorder %s136, %s137
    %p148 = scmp.eq.s32.totalorder %s16, 0
    %p149 = por %p147, %p148
    %p150 = scmp.ne.s32.totalorder %s136, %s137
    %p151 = scmp.eq.s32.totalorder %s17, 1
    %p152 = por %p150, %p151
    %p154 = scmp.ne.s32.totalorder %s137, %s153
    %p155 = scmp.eq.s32.totalorder %s17, 0
    %p156 = por %p154, %p155
    %p157 = scmp.le.s32.totalorder 1, %s11
    %p158 = scmp.lt.s32.totalorder %s11, 3
    %p159 = pnand %p157, %p158
    %p160 = pneg %p159
    // Predicated region
    $region9: #{tpu_custom_call.1} parent=5 // pred_check
      _
    $region10: #{tpu_custom_call.1} parent=5 // pred_check_branch
      %162 = sbr.rel (%p159) target = $region12
    $region11: #{tpu_custom_call.1} parent=5 // pred_region
      %s163 = ssub.s32 %s11, 1
      // Predicated region
      $region13: #{tpu_custom_call.1} parent=11 // pred_check
        %p164 = pneg %p72
      $region14: #{tpu_custom_call.1} parent=11 // pred_check_branch
        %166 = sbr.rel (%p164) target = $region16
      $region15: #{tpu_custom_call.1} parent=11 // pred_region
        _
      $region16: #{tpu_custom_call.1} parent=11 // pred_fallthru
        _
      // Predicated region
      $region17: #{tpu_custom_call.1} parent=11 // pred_check
        %p167 = pneg %p93
      $region18: #{tpu_custom_call.1} parent=11 // pred_check_branch
        %169 = sbr.rel (%p167) target = $region20
      $region19: #{tpu_custom_call.1} parent=11 // pred_region
        _
      $region20: #{tpu_custom_call.1} parent=11 // pred_fallthru
        _
    $region12: #{tpu_custom_call.1} parent=5 // pred_fallthru
      _
    %p170 = scmp.lt.s32.totalorder %s11, 2
    // Predicated region
    $region21: #{tpu_custom_call.1} parent=5 // pred_check
      %p171 = pneg %p170
    $region22: #{tpu_custom_call.1} parent=5 // pred_check_branch
      %173 = sbr.rel (%p171) target = $region24
    $region23: #{tpu_custom_call.1} parent=5 // pred_region
      // Predicated region
      $region25: #{tpu_custom_call.1} parent=23 // pred_check
        %p174 = pneg %p45
      $region26: #{tpu_custom_call.1} parent=23 // pred_check_branch
        %176 = sbr.rel (%p174) target = $region28
      $region27: #{tpu_custom_call.1} parent=23 // pred_region
        %s177 = sadd.s32 %s18, %s19
        %p178 = scmp.lt.s32.totalorder %s177, 1
        %s179 = scalar_select %p178, %s177, 1
        %s180 = smul.addr %s179, 54
        %s181 = smul.addr %s180, 8
        %s182 = scalar_lea.vmem %s0, %s181
        %s183 = sadd.s32 %s18, %s19
      $region28: #{tpu_custom_call.1} parent=23 // pred_fallthru
        _
    $region24: #{tpu_custom_call.1} parent=5 // pred_fallthru
      _
    %p184 = scmp.le.s32.totalorder 1, %s11
    %p185 = scmp.lt.s32.totalorder %s11, 3
    %p186 = pnand %p184, %p185
    %p187 = pneg %p186
    // Predicated region
    $region29: #{tpu_custom_call.1} parent=5 // pred_check
      _
    $region30: #{tpu_custom_call.1} parent=5 // pred_check_branch
      %189 = sbr.rel (%p186) target = $region32
    $region31: #{tpu_custom_call.1} parent=5 // pred_region
      %s190 = ssub.s32 %s11, 1
      %s191 = sadd.s32 %s20, %s21
      %p192 = scmp.lt.s32.totalorder %s191, 1
      %s193 = scalar_select %p192, %s191, 1
      %s194 = smul.addr %s193, 54
      %s195 = smul.addr %s194, 8
      %s196 = scalar_lea.vmem %s0, %s195
      %p197 = pneg %p51
      %p198 = pneg %p48
      %p199 = pneg %p72
      %p200 = pneg %p69
      %p201 = pneg %p93
      %p202 = pneg %p90
      %p203 = pneg %p121
      %p204 = pneg %p118
      %s205 = smul.u32 32, %s21
      %p206 = scmp.lt.s32.totalorder %s20, 1
      %s207 = scalar_select %p206, %s20, 1
      %p208 = scmp.lt.s32.totalorder %s205, 31
      %s209 = scalar_select %p208, %s205, 31
      %s210 = smul.addr %s209, 2
      %s211 = smul.addr %s207, 64
      %s212 = sadd.s32 %s210, %s211
      %s213 = smul.addr %s212, 8
      %s214 = scalar_lea.vmem %s3, %s213
      %p215 = pneg %p149
      %p216 = pneg %p146
      %s217 = smul.u32 32, %s21
      %p218 = scmp.lt.s32.totalorder %s20, 1
      %s219 = scalar_select %p218, %s20, 1
      %p220 = scmp.lt.s32.totalorder %s217, 31
      %s221 = scalar_select %p220, %s217, 31
      %s222 = smul.addr %s221, 2
      %s223 = smul.addr %s219, 64
      %s224 = sadd.s32 %s222, %s223
      %s225 = smul.addr %s224, 8
      %s226 = scalar_lea.vmem %s4, %s225
      %s227 = sadd.s32 %s20, %s21
      %p228 = scmp.lt.s32.totalorder %s227, 1
      %s229 = scalar_select %p228, %s227, 1
      %s230 = smul.addr %s229, 54
      %s231 = smul.addr %s230, 8
      %s232 = scalar_lea.vmem %s0, %s231
      %s233 = sadd.s32 %s20, %s21
      %s234 = smul.u32 32, %s21
      %p235 = scmp.lt.s32.totalorder %s20, 1
      %s236 = scalar_select %p235, %s20, 1
      %p237 = scmp.lt.s32.totalorder %s234, 31
      %s238 = scalar_select %p237, %s234, 31
      %s239 = smul.addr %s238, 2
      %s240 = smul.addr %s236, 64
      %s241 = sadd.s32 %s239, %s240
      %s242 = smul.addr %s241, 8
      %s243 = scalar_lea.vmem %s3, %s242
      %s244 = smul.u32 32, %s21
      %s245 = smul.u32 32, %s21
      %p246 = scmp.lt.s32.totalorder %s20, 1
      %s247 = scalar_select %p246, %s20, 1
      %p248 = scmp.lt.s32.totalorder %s245, 31
      %s249 = scalar_select %p248, %s245, 31
      %s250 = smul.addr %s249, 2
      %s251 = smul.addr %s247, 64
      %s252 = sadd.s32 %s250, %s251
      %s253 = smul.addr %s252, 8
      %s254 = scalar_lea.vmem %s4, %s253
      %s255 = smul.u32 32, %s21
      %v256 = vld [vmem:[%s232] sm:$0xff]
      %v257 = vld [vmem:[%s232 + $0x8] sm:$0xff]
      %v258 = vld [vmem:[%s232 + $0x10] sm:$0x3]
      %v259 = vld [vmem:[%s232 + $0x18] sm:$0xff]
      %v260 = vld [vmem:[%s232 + $0x20] sm:$0xff]
      %v261 = vld [vmem:[%s232 + $0x28] sm:$0x3]
      %v262 = vld [vmem:[%s232 + $0x30] sm:$0xff]
      %v263 = vld [vmem:[%s232 + $0x38] sm:$0xff]
      %v264 = vld [vmem:[%s232 + $0x40] sm:$0x3]
      %v265 = vld [vmem:[%s232 + $0x48] sm:$0xff]
      %v266 = vld [vmem:[%s232 + $0x50] sm:$0xff]
      %v267 = vld [vmem:[%s232 + $0x58] sm:$0x3]
      %v268 = vld [vmem:[%s232 + $0x60] sm:$0xff]
      %v269 = vld [vmem:[%s232 + $0x68] sm:$0xff]
      %v270 = vld [vmem:[%s232 + $0x70] sm:$0x3]
      %v271 = vld [vmem:[%s232 + $0x78] sm:$0xff]
      %v272 = vld [vmem:[%s232 + $0x80] sm:$0xff]
      %v273 = vld [vmem:[%s232 + $0x88] sm:$0x3]
      %v274 = vld [vmem:[%s232 + $0x90] sm:$0xff]
      %v275 = vld [vmem:[%s232 + $0x98] sm:$0xff]
      %v276 = vld [vmem:[%s232 + $0xa0] sm:$0x3]
      %v277 = vld [vmem:[%s232 + $0xa8] sm:$0xff]
      %v278 = vld [vmem:[%s232 + $0xb0] sm:$0xff]
      %v279 = vld [vmem:[%s232 + $0xb8] sm:$0x3]
      %v280 = vld [vmem:[%s232 + $0xc0] sm:$0xff]
      %v281 = vld [vmem:[%s232 + $0xc8] sm:$0xff]
      %v282 = vld [vmem:[%s232 + $0xd0] sm:$0x3]
      %v283 = vld [vmem:[%s232 + $0xd8] sm:$0xff]
      %v284 = vld [vmem:[%s232 + $0xe0] sm:$0xff]
      %v285 = vld [vmem:[%s232 + $0xe8] sm:$0x3]
      %v286 = vld [vmem:[%s232 + $0xf0] sm:$0xff]
      %v287 = vld [vmem:[%s232 + $0xf8] sm:$0xff]
      %v288 = vld [vmem:[%s232 + $0x100] sm:$0x3]
      %v289 = vld [vmem:[%s232 + $0x108] sm:$0xff]
      %v290 = vld [vmem:[%s232 + $0x110] sm:$0xff]
      %v291 = vld [vmem:[%s232 + $0x118] sm:$0x3]
      %v292 = vld [vmem:[%s232 + $0x120] sm:$0xff]
      %v293 = vld [vmem:[%s232 + $0x128] sm:$0xff]
      %v294 = vld [vmem:[%s232 + $0x130] sm:$0x3]
      %v295 = vld [vmem:[%s232 + $0x138] sm:$0xff]
      %v296 = vld [vmem:[%s232 + $0x140] sm:$0xff]
      %v297 = vld [vmem:[%s232 + $0x148] sm:$0x3]
      %v298 = vld [vmem:[%s232 + $0x150] sm:$0xff]
      %v299 = vld [vmem:[%s232 + $0x158] sm:$0xff]
      %v300 = vld [vmem:[%s232 + $0x160] sm:$0x3]
      %v301 = vld [vmem:[%s232 + $0x168] sm:$0xff]
      %v302 = vld [vmem:[%s232 + $0x170] sm:$0xff]
      %v303 = vld [vmem:[%s232 + $0x178] sm:$0x3]
      %v304 = vld [vmem:[%s232 + $0x180] sm:$0xff]
      %v305 = vld [vmem:[%s232 + $0x188] sm:$0xff]
      %v306 = vld [vmem:[%s232 + $0x190] sm:$0x3]
      %v307 = vld [vmem:[%s232 + $0x198] sm:$0xff]
      %v308 = vld [vmem:[%s232 + $0x1a0] sm:$0xff]
      %v309 = vld [vmem:[%s232 + $0x1a8] sm:$0x3]
      %v310 = vmul.f32 %v256, 0.75
      %v311 = vmul.f32 %v257, 0.75
      %v312 = vmul.f32 %v258, 0.75
      %v313 = vmul.f32 %v259, 0.75
      %v314 = vmul.f32 %v260, 0.75
      %v315 = vmul.f32 %v261, 0.75
      %v316 = vmul.f32 %v262, 0.75
      %v317 = vmul.f32 %v263, 0.75
      %v318 = vmul.f32 %v264, 0.75
      %v319 = vmul.f32 %v265, 0.75
      %v320 = vmul.f32 %v266, 0.75
      %v321 = vmul.f32 %v267, 0.75
      %v322 = vmul.f32 %v268, 0.75
      %v323 = vmul.f32 %v269, 0.75
      %v324 = vmul.f32 %v270, 0.75
      %v325 = vmul.f32 %v271, 0.75
      %v326 = vmul.f32 %v272, 0.75
      %v327 = vmul.f32 %v273, 0.75
      %v328 = vmul.f32 %v274, 0.75
      %v329 = vmul.f32 %v275, 0.75
      %v330 = vmul.f32 %v276, 0.75
      %v331 = vmul.f32 %v277, 0.75
      %v332 = vmul.f32 %v278, 0.75
      %v333 = vmul.f32 %v279, 0.75
      %v334 = vmul.f32 %v280, 0.75
      %v335 = vmul.f32 %v281, 0.75
      %v336 = vmul.f32 %v282, 0.75
      %v337 = vmul.f32 %v283, 0.75
      %v338 = vmul.f32 %v284, 0.75
      %v339 = vmul.f32 %v285, 0.75
      %v340 = vmul.f32 %v286, 0.75
      %v341 = vmul.f32 %v287, 0.75
      %v342 = vmul.f32 %v288, 0.75
      %v343 = vmul.f32 %v289, 0.75
      %v344 = vmul.f32 %v290, 0.75
      %v345 = vmul.f32 %v291, 0.75
      %v346 = vmul.f32 %v292, 0.75
      %v347 = vmul.f32 %v293, 0.75
      %v348 = vmul.f32 %v294, 0.75
      %v349 = vmul.f32 %v295, 0.75
      %v350 = vmul.f32 %v296, 0.75
      %v351 = vmul.f32 %v297, 0.75
      %v352 = vmul.f32 %v298, 0.75
      %v353 = vmul.f32 %v299, 0.75
      %v354 = vmul.f32 %v300, 0.75
      %v355 = vmul.f32 %v301, 0.75
      %v356 = vmul.f32 %v302, 0.75
      %v357 = vmul.f32 %v303, 0.75
      %v358 = vmul.f32 %v304, 0.75
      %v359 = vmul.f32 %v305, 0.75
      %v360 = vmul.f32 %v306, 0.75
      %v361 = vmul.f32 %v259, 0.25
      %v362 = vmul.f32 %v260, 0.25
      %v363 = vmul.f32 %v261, 0.25
      %v364 = vmul.f32 %v262, 0.25
      %v365 = vmul.f32 %v263, 0.25
      %v366 = vmul.f32 %v264, 0.25
      %v367 = vmul.f32 %v265, 0.25
      %v368 = vmul.f32 %v266, 0.25
      %v369 = vmul.f32 %v267, 0.25
      %v370 = vmul.f32 %v268, 0.25
      %v371 = vmul.f32 %v269, 0.25
      %v372 = vmul.f32 %v270, 0.25
      %v373 = vmul.f32 %v271, 0.25
      %v374 = vmul.f32 %v272, 0.25
      %v375 = vmul.f32 %v273, 0.25
      %v376 = vmul.f32 %v274, 0.25
      %v377 = vmul.f32 %v275, 0.25
      %v378 = vmul.f32 %v276, 0.25
      %v379 = vmul.f32 %v277, 0.25
      %v380 = vmul.f32 %v278, 0.25
      %v381 = vmul.f32 %v279, 0.25
      %v382 = vmul.f32 %v280, 0.25
      %v383 = vmul.f32 %v281, 0.25
      %v384 = vmul.f32 %v282, 0.25
      %v385 = vmul.f32 %v283, 0.25
      %v386 = vmul.f32 %v284, 0.25
      %v387 = vmul.f32 %v285, 0.25
      %v388 = vmul.f32 %v286, 0.25
      %v389 = vmul.f32 %v287, 0.25
      %v390 = vmul.f32 %v288, 0.25
      %v391 = vmul.f32 %v289, 0.25
      %v392 = vmul.f32 %v290, 0.25
      %v393 = vmul.f32 %v291, 0.25
      %v394 = vmul.f32 %v292, 0.25
      %v395 = vmul.f32 %v293, 0.25
      %v396 = vmul.f32 %v294, 0.25
      %v397 = vmul.f32 %v295, 0.25
      %v398 = vmul.f32 %v296, 0.25
      %v399 = vmul.f32 %v297, 0.25
      %v400 = vmul.f32 %v298, 0.25
      %v401 = vmul.f32 %v299, 0.25
      %v402 = vmul.f32 %v300, 0.25
      %v403 = vmul.f32 %v301, 0.25
      %v404 = vmul.f32 %v302, 0.25
      %v405 = vmul.f32 %v303, 0.25
      %v406 = vmul.f32 %v304, 0.25
      %v407 = vmul.f32 %v305, 0.25
      %v408 = vmul.f32 %v306, 0.25
      %v409 = vmul.f32 %v307, 0.25
      %v410 = vmul.f32 %v308, 0.25
      %v411 = vmul.f32 %v309, 0.25
      %v412 = vadd.f32 %v310, %v361
      %v413 = vadd.f32 %v311, %v362
      %v414 = vadd.f32 %v312, %v363
      %v415 = vadd.f32 %v313, %v364
      %v416 = vadd.f32 %v314, %v365
      %v417 = vadd.f32 %v315, %v366
      %v418 = vadd.f32 %v316, %v367
      %v419 = vadd.f32 %v317, %v368
      %v420 = vadd.f32 %v318, %v369
      %v421 = vadd.f32 %v319, %v370
      %v422 = vadd.f32 %v320, %v371
      %v423 = vadd.f32 %v321, %v372
      %v424 = vadd.f32 %v322, %v373
      %v425 = vadd.f32 %v323, %v374
      %v426 = vadd.f32 %v324, %v375
      %v427 = vadd.f32 %v325, %v376
      %v428 = vadd.f32 %v326, %v377
      %v429 = vadd.f32 %v327, %v378
      %v430 = vadd.f32 %v328, %v379
      %v431 = vadd.f32 %v329, %v380
      %v432 = vadd.f32 %v330, %v381
      %v433 = vadd.f32 %v331, %v382
      %v434 = vadd.f32 %v332, %v383
      %v435 = vadd.f32 %v333, %v384
      %v436 = vadd.f32 %v334, %v385
      %v437 = vadd.f32 %v335, %v386
      %v438 = vadd.f32 %v336, %v387
      %v439 = vadd.f32 %v337, %v388
      %v440 = vadd.f32 %v338, %v389
      %v441 = vadd.f32 %v339, %v390
      %v442 = vadd.f32 %v340, %v391
      %v443 = vadd.f32 %v341, %v392
      %v444 = vadd.f32 %v342, %v393
      %v445 = vadd.f32 %v343, %v394
      %v446 = vadd.f32 %v344, %v395
      %v447 = vadd.f32 %v345, %v396
      %v448 = vadd.f32 %v346, %v397
      %v449 = vadd.f32 %v347, %v398
      %v450 = vadd.f32 %v348, %v399
      %v451 = vadd.f32 %v349, %v400
      %v452 = vadd.f32 %v350, %v401
      %v453 = vadd.f32 %v351, %v402
      %v454 = vadd.f32 %v352, %v403
      %v455 = vadd.f32 %v353, %v404
      %v456 = vadd.f32 %v354, %v405
      %v457 = vadd.f32 %v355, %v406
      %v458 = vadd.f32 %v356, %v407
      %v459 = vadd.f32 %v357, %v408
      %v460 = vadd.f32 %v358, %v409
      %v461 = vadd.f32 %v359, %v410
      %v462 = vadd.f32 %v360, %v411
      %v463 = vmul.f32 %v256, 0.25
      %v464 = vmul.f32 %v257, 0.25
      %v465 = vmul.f32 %v258, 0.25
      %v466 = vmul.f32 %v307, 0.75
      %v467 = vmul.f32 %v308, 0.75
      %v468 = vmul.f32 %v309, 0.75
      %v469 = vadd.f32 %v463, %v313
      %v470 = vadd.f32 %v464, %v314
      %v471 = vadd.f32 %v465, %v315
      %v472 = vadd.f32 %v361, %v316
      %v473 = vadd.f32 %v362, %v317
      %v474 = vadd.f32 %v363, %v318
      %v475 = vadd.f32 %v364, %v319
      %v476 = vadd.f32 %v365, %v320
      %v477 = vadd.f32 %v366, %v321
      %v478 = vadd.f32 %v367, %v322
      %v479 = vadd.f32 %v368, %v323
      %v480 = vadd.f32 %v369, %v324
      %v481 = vadd.f32 %v370, %v325
      %v482 = vadd.f32 %v371, %v326
      %v483 = vadd.f32 %v372, %v327
      %v484 = vadd.f32 %v373, %v328
      %v485 = vadd.f32 %v374, %v329
      %v486 = vadd.f32 %v375, %v330
      %v487 = vadd.f32 %v376, %v331
      %v488 = vadd.f32 %v377, %v332
      %v489 = vadd.f32 %v378, %v333
      %v490 = vadd.f32 %v379, %v334
      %v491 = vadd.f32 %v380, %v335
      %v492 = vadd.f32 %v381, %v336
      %v493 = vadd.f32 %v382, %v337
      %v494 = vadd.f32 %v383, %v338
      %v495 = vadd.f32 %v384, %v339
      %v496 = vadd.f32 %v385, %v340
      %v497 = vadd.f32 %v386, %v341
      %v498 = vadd.f32 %v387, %v342
      %v499 = vadd.f32 %v388, %v343
      %v500 = vadd.f32 %v389, %v344
      %v501 = vadd.f32 %v390, %v345
      %v502 = vadd.f32 %v391, %v346
      %v503 = vadd.f32 %v392, %v347
      %v504 = vadd.f32 %v393, %v348
      %v505 = vadd.f32 %v394, %v349
      %v506 = vadd.f32 %v395, %v350
      %v507 = vadd.f32 %v396, %v351
      %v508 = vadd.f32 %v397, %v352
      %v509 = vadd.f32 %v398, %v353
      %v510 = vadd.f32 %v399, %v354
      %v511 = vadd.f32 %v400, %v355
      %v512 = vadd.f32 %v401, %v356
      %v513 = vadd.f32 %v402, %v357
      %v514 = vadd.f32 %v403, %v358
      %v515 = vadd.f32 %v404, %v359
      %v516 = vadd.f32 %v405, %v360
      %v517 = vadd.f32 %v406, %v466
      %v518 = vadd.f32 %v407, %v467
      %v519 = vadd.f32 %v408, %v468
      %p520 = scmp.eq.s32.totalorder %s21, 0
      %s521 = scalar_select %p520, 1, 0
      %v522 = vstv %s521
      %vm523 = vcmp.eq.s32.totalorder %v522, 1
      %v524 = vsel %vm523, 0.0, %v412
      %v525 = vsel %vm523, 0.0, %v413
      %v526 = vsel %vm523, 0.0, %v414
      %v527 = vsel 0, 0.0, %v469
      %v528 = vsel 0, 0.0, %v470
      %v529 = vsel 0, 0.0, %v471
      %v530 = vsel 0, 0.0, %v415
      %v531 = vsel 0, 0.0, %v416
      %v532 = vsel 0, 0.0, %v417
      %v533 = vsel 0, 0.0, %v472
      %v534 = vsel 0, 0.0, %v473
      %v535 = vsel 0, 0.0, %v474
      %v536 = vsel 0, 0.0, %v418
      %v537 = vsel 0, 0.0, %v419
      %v538 = vsel 0, 0.0, %v420
      %v539 = vsel 0, 0.0, %v475
      %v540 = vsel 0, 0.0, %v476
      %v541 = vsel 0, 0.0, %v477
      %v542 = vsel 0, 0.0, %v421
      %v543 = vsel 0, 0.0, %v422
      %v544 = vsel 0, 0.0, %v423
      %v545 = vsel 0, 0.0, %v478
      %v546 = vsel 0, 0.0, %v479
      %v547 = vsel 0, 0.0, %v480
      %v548 = vsel 0, 0.0, %v424
      %v549 = vsel 0, 0.0, %v425
      %v550 = vsel 0, 0.0, %v426
      %v551 = vsel 0, 0.0, %v481
      %v552 = vsel 0, 0.0, %v482
      %v553 = vsel 0, 0.0, %v483
      %v554 = vsel 0, 0.0, %v427
      %v555 = vsel 0, 0.0, %v428
      %v556 = vsel 0, 0.0, %v429
      %v557 = vsel 0, 0.0, %v484
      %v558 = vsel 0, 0.0, %v485
      %v559 = vsel 0, 0.0, %v486
      %v560 = vsel 0, 0.0, %v430
      %v561 = vsel 0, 0.0, %v431
      %v562 = vsel 0, 0.0, %v432
      %v563 = vsel 0, 0.0, %v487
      %v564 = vsel 0, 0.0, %v488
      %v565 = vsel 0, 0.0, %v489
      %v566 = vsel 0, 0.0, %v433
      %v567 = vsel 0, 0.0, %v434
      %v568 = vsel 0, 0.0, %v435
      %v569 = vsel 0, 0.0, %v490
      %v570 = vsel 0, 0.0, %v491
      %v571 = vsel 0, 0.0, %v492
      %v572 = vsel 0, 0.0, %v436
      %v573 = vsel 0, 0.0, %v437
      %v574 = vsel 0, 0.0, %v438
      %v575 = vsel 0, 0.0, %v493
      %v576 = vsel 0, 0.0, %v494
      %v577 = vsel 0, 0.0, %v495
      %v578 = vsel 0, 0.0, %v439
      %v579 = vsel 0, 0.0, %v440
      %v580 = vsel 0, 0.0, %v441
      %v581 = vsel 0, 0.0, %v496
      %v582 = vsel 0, 0.0, %v497
      %v583 = vsel 0, 0.0, %v498
      %v584 = vsel 0, 0.0, %v442
      %v585 = vsel 0, 0.0, %v443
      %v586 = vsel 0, 0.0, %v444
      %v587 = vsel 0, 0.0, %v499
      %v588 = vsel 0, 0.0, %v500
      %v589 = vsel 0, 0.0, %v501
      %v590 = vsel 0, 0.0, %v445
      %v591 = vsel 0, 0.0, %v446
      %v592 = vsel 0, 0.0, %v447
      %v593 = vsel 0, 0.0, %v502
      %v594 = vsel 0, 0.0, %v503
      %v595 = vsel 0, 0.0, %v504
      %v596 = vsel 0, 0.0, %v448
      %v597 = vsel 0, 0.0, %v449
      %v598 = vsel 0, 0.0, %v450
      %v599 = vsel 0, 0.0, %v505
      %v600 = vsel 0, 0.0, %v506
      %v601 = vsel 0, 0.0, %v507
      %v602 = vsel 0, 0.0, %v451
      %v603 = vsel 0, 0.0, %v452
      %v604 = vsel 0, 0.0, %v453
      %v605 = vsel 0, 0.0, %v508
      %v606 = vsel 0, 0.0, %v509
      %v607 = vsel 0, 0.0, %v510
      %v608 = vsel 0, 0.0, %v454
      %v609 = vsel 0, 0.0, %v455
      %v610 = vsel 0, 0.0, %v456
      %v611 = vsel 0, 0.0, %v511
      %v612 = vsel 0, 0.0, %v512
      %v613 = vsel 0, 0.0, %v513
      %v614 = vsel 0, 0.0, %v457
      %v615 = vsel 0, 0.0, %v458
      %v616 = vsel 0, 0.0, %v459
      %v617 = vsel 0, 0.0, %v514
      %v618 = vsel 0, 0.0, %v515
      %v619 = vsel 0, 0.0, %v516
      %v620 = vsel 0, 0.0, %v460
      %v621 = vsel 0, 0.0, %v461
      %v622 = vsel 0, 0.0, %v462
      %v623 = vsel %vm523, 0.0, %v517
      %v624 = vsel %vm523, 0.0, %v518
      %v625 = vsel %vm523, 0.0, %v519
      %v626 = vmul.f32 %v524, 0.75
      %v627 = vmul.f32 %v525, 0.75
      %v628 = vmul.f32 %v526, 0.75
      %v629 = vmul.f32 %v527, 0.75
      %v630 = vmul.f32 %v528, 0.75
      %v631 = vmul.f32 %v529, 0.75
      %v632 = vmul.f32 %v530, 0.75
      %v633 = vmul.f32 %v531, 0.75
      %v634 = vmul.f32 %v532, 0.75
      %v635 = vmul.f32 %v533, 0.75
      %v636 = vmul.f32 %v534, 0.75
      %v637 = vmul.f32 %v535, 0.75
      %v638 = vmul.f32 %v536, 0.75
      %v639 = vmul.f32 %v537, 0.75
      %v640 = vmul.f32 %v538, 0.75
      %v641 = vmul.f32 %v539, 0.75
      %v642 = vmul.f32 %v540, 0.75
      %v643 = vmul.f32 %v541, 0.75
      %v644 = vmul.f32 %v542, 0.75
      %v645 = vmul.f32 %v543, 0.75
      %v646 = vmul.f32 %v544, 0.75
      %v647 = vmul.f32 %v545, 0.75
      %v648 = vmul.f32 %v546, 0.75
      %v649 = vmul.f32 %v547, 0.75
      %v650 = vmul.f32 %v548, 0.75
      %v651 = vmul.f32 %v549, 0.75
      %v652 = vmul.f32 %v550, 0.75
      %v653 = vmul.f32 %v551, 0.75
      %v654 = vmul.f32 %v552, 0.75
      %v655 = vmul.f32 %v553, 0.75
      %v656 = vmul.f32 %v554, 0.75
      %v657 = vmul.f32 %v555, 0.75
      %v658 = vmul.f32 %v556, 0.75
      %v659 = vmul.f32 %v557, 0.75
      %v660 = vmul.f32 %v558, 0.75
      %v661 = vmul.f32 %v559, 0.75
      %v662 = vmul.f32 %v560, 0.75
      %v663 = vmul.f32 %v561, 0.75
      %v664 = vmul.f32 %v562, 0.75
      %v665 = vmul.f32 %v563, 0.75
      %v666 = vmul.f32 %v564, 0.75
      %v667 = vmul.f32 %v565, 0.75
      %v668 = vmul.f32 %v566, 0.75
      %v669 = vmul.f32 %v567, 0.75
      %v670 = vmul.f32 %v568, 0.75
      %v671 = vmul.f32 %v569, 0.75
      %v672 = vmul.f32 %v570, 0.75
      %v673 = vmul.f32 %v571, 0.75
      %v674 = vmul.f32 %v572, 0.75
      %v675 = vmul.f32 %v573, 0.75
      %v676 = vmul.f32 %v574, 0.75
      %v677 = vmul.f32 %v575, 0.75
      %v678 = vmul.f32 %v576, 0.75
      %v679 = vmul.f32 %v577, 0.75
      %v680 = vmul.f32 %v578, 0.75
      %v681 = vmul.f32 %v579, 0.75
      %v682 = vmul.f32 %v580, 0.75
      %v683 = vmul.f32 %v581, 0.75
      %v684 = vmul.f32 %v582, 0.75
      %v685 = vmul.f32 %v583, 0.75
      %v686 = vmul.f32 %v584, 0.75
      %v687 = vmul.f32 %v585, 0.75
      %v688 = vmul.f32 %v586, 0.75
      %v689 = vmul.f32 %v587, 0.75
      %v690 = vmul.f32 %v588, 0.75
      %v691 = vmul.f32 %v589, 0.75
      %v692 = vmul.f32 %v590, 0.75
      %v693 = vmul.f32 %v591, 0.75
      %v694 = vmul.f32 %v592, 0.75
      %v695 = vmul.f32 %v593, 0.75
      %v696 = vmul.f32 %v594, 0.75
      %v697 = vmul.f32 %v595, 0.75
      %v698 = vmul.f32 %v596, 0.75
      %v699 = vmul.f32 %v597, 0.75
      %v700 = vmul.f32 %v598, 0.75
      %v701 = vmul.f32 %v599, 0.75
      %v702 = vmul.f32 %v600, 0.75
      %v703 = vmul.f32 %v601, 0.75
      %v704 = vmul.f32 %v602, 0.75
      %v705 = vmul.f32 %v603, 0.75
      %v706 = vmul.f32 %v604, 0.75
      %v707 = vmul.f32 %v605, 0.75
      %v708 = vmul.f32 %v606, 0.75
      %v709 = vmul.f32 %v607, 0.75
      %v710 = vmul.f32 %v608, 0.75
      %v711 = vmul.f32 %v609, 0.75
      %v712 = vmul.f32 %v610, 0.75
      %v713 = vmul.f32 %v611, 0.75
      %v714 = vmul.f32 %v612, 0.75
      %v715 = vmul.f32 %v613, 0.75
      %v716 = vmul.f32 %v614, 0.75
      %v717 = vmul.f32 %v615, 0.75
      %v718 = vmul.f32 %v616, 0.75
      %v719 = vmul.f32 %v617, 0.75
      %v720 = vmul.f32 %v618, 0.75
      %v721 = vmul.f32 %v619, 0.75
      %v722 = vmul.f32 %v620, 0.75
      %v723 = vmul.f32 %v621, 0.75
      %v724 = vmul.f32 %v622, 0.75
      %v725 = vmul.f32 %v623, 0.75
      %v726 = vmul.f32 %v624, 0.75
      %v727 = vmul.f32 %v625, 0.75
      %v728 = vmul.f32 %v524, 0.25
      %v729 = vmul.f32 %v525, 0.25
      %v730 = vmul.f32 %v526, 0.25
      %v731 = vmul.f32 %v527, 0.25
      %v732 = vmul.f32 %v528, 0.25
      %v733 = vmul.f32 %v529, 0.25
      %v734 = vmul.f32 %v530, 0.25
      %v735 = vmul.f32 %v531, 0.25
      %v736 = vmul.f32 %v532, 0.25
      %v737 = vmul.f32 %v533, 0.25
      %v738 = vmul.f32 %v534, 0.25
      %v739 = vmul.f32 %v535, 0.25
      %v740 = vmul.f32 %v536, 0.25
      %v741 = vmul.f32 %v537, 0.25
      %v742 = vmul.f32 %v538, 0.25
      %v743 = vmul.f32 %v539, 0.25
      %v744 = vmul.f32 %v540, 0.25
      %v745 = vmul.f32 %v541, 0.25
      %v746 = vmul.f32 %v542, 0.25
      %v747 = vmul.f32 %v543, 0.25
      %v748 = vmul.f32 %v544, 0.25
      %v749 = vmul.f32 %v545, 0.25
      %v750 = vmul.f32 %v546, 0.25
      %v751 = vmul.f32 %v547, 0.25
      %v752 = vmul.f32 %v548, 0.25
      %v753 = vmul.f32 %v549, 0.25
      %v754 = vmul.f32 %v550, 0.25
      %v755 = vmul.f32 %v551, 0.25
      %v756 = vmul.f32 %v552, 0.25
      %v757 = vmul.f32 %v553, 0.25
      %v758 = vmul.f32 %v554, 0.25
      %v759 = vmul.f32 %v555, 0.25
      %v760 = vmul.f32 %v556, 0.25
      %v761 = vmul.f32 %v557, 0.25
      %v762 = vmul.f32 %v558, 0.25
      %v763 = vmul.f32 %v559, 0.25
      %v764 = vmul.f32 %v560, 0.25
      %v765 = vmul.f32 %v561, 0.25
      %v766 = vmul.f32 %v562, 0.25
      %v767 = vmul.f32 %v563, 0.25
      %v768 = vmul.f32 %v564, 0.25
      %v769 = vmul.f32 %v565, 0.25
      %v770 = vmul.f32 %v566, 0.25
      %v771 = vmul.f32 %v567, 0.25
      %v772 = vmul.f32 %v568, 0.25
      %v773 = vmul.f32 %v569, 0.25
      %v774 = vmul.f32 %v570, 0.25
      %v775 = vmul.f32 %v571, 0.25
      %v776 = vmul.f32 %v572, 0.25
      %v777 = vmul.f32 %v573, 0.25
      %v778 = vmul.f32 %v574, 0.25
      %v779 = vmul.f32 %v575, 0.25
      %v780 = vmul.f32 %v576, 0.25
      %v781 = vmul.f32 %v577, 0.25
      %v782 = vmul.f32 %v578, 0.25
      %v783 = vmul.f32 %v579, 0.25
      %v784 = vmul.f32 %v580, 0.25
      %v785 = vmul.f32 %v581, 0.25
      %v786 = vmul.f32 %v582, 0.25
      %v787 = vmul.f32 %v583, 0.25
      %v788 = vmul.f32 %v584, 0.25
      %v789 = vmul.f32 %v585, 0.25
      %v790 = vmul.f32 %v586, 0.25
      %v791 = vmul.f32 %v587, 0.25
      %v792 = vmul.f32 %v588, 0.25
      %v793 = vmul.f32 %v589, 0.25
      %v794 = vmul.f32 %v590, 0.25
      %v795 = vmul.f32 %v591, 0.25
      %v796 = vmul.f32 %v592, 0.25
      %v797 = vmul.f32 %v593, 0.25
      %v798 = vmul.f32 %v594, 0.25
      %v799 = vmul.f32 %v595, 0.25
      %v800 = vmul.f32 %v596, 0.25
      %v801 = vmul.f32 %v597, 0.25
      %v802 = vmul.f32 %v598, 0.25
      %v803 = vmul.f32 %v599, 0.25
      %v804 = vmul.f32 %v600, 0.25
      %v805 = vmul.f32 %v601, 0.25
      %v806 = vmul.f32 %v602, 0.25
      %v807 = vmul.f32 %v603, 0.25
      %v808 = vmul.f32 %v604, 0.25
      %v809 = vmul.f32 %v605, 0.25
      %v810 = vmul.f32 %v606, 0.25
      %v811 = vmul.f32 %v607, 0.25
      %v812 = vmul.f32 %v608, 0.25
      %v813 = vmul.f32 %v609, 0.25
      %v814 = vmul.f32 %v610, 0.25
      %v815 = vmul.f32 %v611, 0.25
      %v816 = vmul.f32 %v612, 0.25
      %v817 = vmul.f32 %v613, 0.25
      %v818 = vmul.f32 %v614, 0.25
      %v819 = vmul.f32 %v615, 0.25
      %v820 = vmul.f32 %v616, 0.25
      %v821 = vmul.f32 %v617, 0.25
      %v822 = vmul.f32 %v618, 0.25
      %v823 = vmul.f32 %v619, 0.25
      %v824 = vmul.f32 %v620, 0.25
      %v825 = vmul.f32 %v621, 0.25
      %v826 = vmul.f32 %v622, 0.25
      %v827 = vmul.f32 %v623, 0.25
      %v828 = vmul.f32 %v624, 0.25
      %v829 = vmul.f32 %v625, 0.25
      %vm932 = vcmask 1046528
      %v933 = vrot.slane %v728, 1
      %v934 = vrot.slane %v729, 1
      %v935 = vsel %vm932, %v933, %v934
      %v936 = vrot.slane %v730, 1
      %v937 = vsel %vm932, %v934, %v936
      %v938 = vrot.slane %v731, 1
      %v939 = vrot.slane %v732, 1
      %v940 = vsel %vm932, %v938, %v939
      %v941 = vrot.slane %v733, 1
      %v942 = vsel %vm932, %v939, %v941
      %v943 = vrot.slane %v734, 1
      %v944 = vrot.slane %v735, 1
      %v945 = vsel %vm932, %v943, %v944
      %v946 = vrot.slane %v736, 1
      %v947 = vsel %vm932, %v944, %v946
      %v948 = vrot.slane %v737, 1
      %v949 = vrot.slane %v738, 1
      %v950 = vsel %vm932, %v948, %v949
      %v951 = vrot.slane %v739, 1
      %v952 = vsel %vm932, %v949, %v951
      %v953 = vrot.slane %v740, 1
      %v954 = vrot.slane %v741, 1
      %v955 = vsel %vm932, %v953, %v954
      %v956 = vrot.slane %v742, 1
      %v957 = vsel %vm932, %v954, %v956
      %v958 = vrot.slane %v743, 1
      %v959 = vrot.slane %v744, 1
      %v960 = vsel %vm932, %v958, %v959
      %v961 = vrot.slane %v745, 1
      %v962 = vsel %vm932, %v959, %v961
      %v963 = vrot.slane %v746, 1
      %v964 = vrot.slane %v747, 1
      %v965 = vsel %vm932, %v963, %v964
      %v966 = vrot.slane %v748, 1
      %v967 = vsel %vm932, %v964, %v966
      %v968 = vrot.slane %v749, 1
      %v969 = vrot.slane %v750, 1
      %v970 = vsel %vm932, %v968, %v969
      %v971 = vrot.slane %v751, 1
      %v972 = vsel %vm932, %v969, %v971
      %v973 = vrot.slane %v752, 1
      %v974 = vrot.slane %v753, 1
      %v975 = vsel %vm932, %v973, %v974
      %v976 = vrot.slane %v754, 1
      %v977 = vsel %vm932, %v974, %v976
      %v978 = vrot.slane %v755, 1
      %v979 = vrot.slane %v756, 1
      %v980 = vsel %vm932, %v978, %v979
      %v981 = vrot.slane %v757, 1
      %v982 = vsel %vm932, %v979, %v981
      %v983 = vrot.slane %v758, 1
      %v984 = vrot.slane %v759, 1
      %v985 = vsel %vm932, %v983, %v984
      %v986 = vrot.slane %v760, 1
      %v987 = vsel %vm932, %v984, %v986
      %v988 = vrot.slane %v761, 1
      %v989 = vrot.slane %v762, 1
      %v990 = vsel %vm932, %v988, %v989
      %v991 = vrot.slane %v763, 1
      %v992 = vsel %vm932, %v989, %v991
      %v993 = vrot.slane %v764, 1
      %v994 = vrot.slane %v765, 1
      %v995 = vsel %vm932, %v993, %v994
      %v996 = vrot.slane %v766, 1
      %v997 = vsel %vm932, %v994, %v996
      %v998 = vrot.slane %v767, 1
      %v999 = vrot.slane %v768, 1
      %v1000 = vsel %vm932, %v998, %v999
      %v1001 = vrot.slane %v769, 1
      %v1002 = vsel %vm932, %v999, %v1001
      %v1003 = vrot.slane %v770, 1
      %v1004 = vrot.slane %v771, 1
      %v1005 = vsel %vm932, %v1003, %v1004
      %v1006 = vrot.slane %v772, 1
      %v1007 = vsel %vm932, %v1004, %v1006
      %v1008 = vrot.slane %v773, 1
      %v1009 = vrot.slane %v774, 1
      %v1010 = vsel %vm932, %v1008, %v1009
      %v1011 = vrot.slane %v775, 1
      %v1012 = vsel %vm932, %v1009, %v1011
      %v1013 = vrot.slane %v776, 1
      %v1014 = vrot.slane %v777, 1
      %v1015 = vsel %vm932, %v1013, %v1014
      %v1016 = vrot.slane %v778, 1
      %v1017 = vsel %vm932, %v1014, %v1016
      %v1018 = vrot.slane %v779, 1
      %v1019 = vrot.slane %v780, 1
      %v1020 = vsel %vm932, %v1018, %v1019
      %v1021 = vrot.slane %v781, 1
      %v1022 = vsel %vm932, %v1019, %v1021
      %v1023 = vrot.slane %v782, 1
      %v1024 = vrot.slane %v783, 1
      %v1025 = vsel %vm932, %v1023, %v1024
      %v1026 = vrot.slane %v784, 1
      %v1027 = vsel %vm932, %v1024, %v1026
      %v1028 = vrot.slane %v785, 1
      %v1029 = vrot.slane %v786, 1
      %v1030 = vsel %vm932, %v1028, %v1029
      %v1031 = vrot.slane %v787, 1
      %v1032 = vsel %vm932, %v1029, %v1031
      %v1033 = vrot.slane %v788, 1
      %v1034 = vrot.slane %v789, 1
      %v1035 = vsel %vm932, %v1033, %v1034
      %v1036 = vrot.slane %v790, 1
      %v1037 = vsel %vm932, %v1034, %v1036
      %v1038 = vrot.slane %v791, 1
      %v1039 = vrot.slane %v792, 1
      %v1040 = vsel %vm932, %v1038, %v1039
      %v1041 = vrot.slane %v793, 1
      %v1042 = vsel %vm932, %v1039, %v1041
      %v1043 = vrot.slane %v794, 1
      %v1044 = vrot.slane %v795, 1
      %v1045 = vsel %vm932, %v1043, %v1044
      %v1046 = vrot.slane %v796, 1
      %v1047 = vsel %vm932, %v1044, %v1046
      %v1048 = vrot.slane %v797, 1
      %v1049 = vrot.slane %v798, 1
      %v1050 = vsel %vm932, %v1048, %v1049
      %v1051 = vrot.slane %v799, 1
      %v1052 = vsel %vm932, %v1049, %v1051
      %v1053 = vrot.slane %v800, 1
      %v1054 = vrot.slane %v801, 1
      %v1055 = vsel %vm932, %v1053, %v1054
      %v1056 = vrot.slane %v802, 1
      %v1057 = vsel %vm932, %v1054, %v1056
      %v1058 = vrot.slane %v803, 1
      %v1059 = vrot.slane %v804, 1
      %v1060 = vsel %vm932, %v1058, %v1059
      %v1061 = vrot.slane %v805, 1
      %v1062 = vsel %vm932, %v1059, %v1061
      %v1063 = vrot.slane %v806, 1
      %v1064 = vrot.slane %v807, 1
      %v1065 = vsel %vm932, %v1063, %v1064
      %v1066 = vrot.slane %v808, 1
      %v1067 = vsel %vm932, %v1064, %v1066
      %v1068 = vrot.slane %v809, 1
      %v1069 = vrot.slane %v810, 1
      %v1070 = vsel %vm932, %v1068, %v1069
      %v1071 = vrot.slane %v811, 1
      %v1072 = vsel %vm932, %v1069, %v1071
      %v1073 = vrot.slane %v812, 1
      %v1074 = vrot.slane %v813, 1
      %v1075 = vsel %vm932, %v1073, %v1074
      %v1076 = vrot.slane %v814, 1
      %v1077 = vsel %vm932, %v1074, %v1076
      %v1078 = vrot.slane %v815, 1
      %v1079 = vrot.slane %v816, 1
      %v1080 = vsel %vm932, %v1078, %v1079
      %v1081 = vrot.slane %v817, 1
      %v1082 = vsel %vm932, %v1079, %v1081
      %v1083 = vrot.slane %v818, 1
      %v1084 = vrot.slane %v819, 1
      %v1085 = vsel %vm932, %v1083, %v1084
      %v1086 = vrot.slane %v820, 1
      %v1087 = vsel %vm932, %v1084, %v1086
      %v1088 = vrot.slane %v821, 1
      %v1089 = vrot.slane %v822, 1
      %v1090 = vsel %vm932, %v1088, %v1089
      %v1091 = vrot.slane %v823, 1
      %v1092 = vsel %vm932, %v1089, %v1091
      %v1093 = vrot.slane %v824, 1
      %v1094 = vrot.slane %v825, 1
      %v1095 = vsel %vm932, %v1093, %v1094
      %v1096 = vrot.slane %v826, 1
      %v1097 = vsel %vm932, %v1094, %v1096
      %v1098 = vrot.slane %v827, 1
      %v1099 = vrot.slane %v828, 1
      %v1100 = vsel %vm932, %v1098, %v1099
      %v1101 = vrot.slane %v829, 1
      %v1102 = vsel %vm932, %v1099, %v1101
      %v1205 = vadd.f32 %v626, %v935
      %v1206 = vadd.f32 %v627, %v937
      %v1207 = vadd.f32 %v628, %v936
      %v1208 = vadd.f32 %v629, %v940
      %v1209 = vadd.f32 %v630, %v942
      %v1210 = vadd.f32 %v631, %v941
      %v1211 = vadd.f32 %v632, %v945
      %v1212 = vadd.f32 %v633, %v947
      %v1213 = vadd.f32 %v634, %v946
      %v1214 = vadd.f32 %v635, %v950
      %v1215 = vadd.f32 %v636, %v952
      %v1216 = vadd.f32 %v637, %v951
      %v1217 = vadd.f32 %v638, %v955
      %v1218 = vadd.f32 %v639, %v957
      %v1219 = vadd.f32 %v640, %v956
      %v1220 = vadd.f32 %v641, %v960
      %v1221 = vadd.f32 %v642, %v962
      %v1222 = vadd.f32 %v643, %v961
      %v1223 = vadd.f32 %v644, %v965
      %v1224 = vadd.f32 %v645, %v967
      %v1225 = vadd.f32 %v646, %v966
      %v1226 = vadd.f32 %v647, %v970
      %v1227 = vadd.f32 %v648, %v972
      %v1228 = vadd.f32 %v649, %v971
      %v1229 = vadd.f32 %v650, %v975
      %v1230 = vadd.f32 %v651, %v977
      %v1231 = vadd.f32 %v652, %v976
      %v1232 = vadd.f32 %v653, %v980
      %v1233 = vadd.f32 %v654, %v982
      %v1234 = vadd.f32 %v655, %v981
      %v1235 = vadd.f32 %v656, %v985
      %v1236 = vadd.f32 %v657, %v987
      %v1237 = vadd.f32 %v658, %v986
      %v1238 = vadd.f32 %v659, %v990
      %v1239 = vadd.f32 %v660, %v992
      %v1240 = vadd.f32 %v661, %v991
      %v1241 = vadd.f32 %v662, %v995
      %v1242 = vadd.f32 %v663, %v997
      %v1243 = vadd.f32 %v664, %v996
      %v1244 = vadd.f32 %v665, %v1000
      %v1245 = vadd.f32 %v666, %v1002
      %v1246 = vadd.f32 %v667, %v1001
      %v1247 = vadd.f32 %v668, %v1005
      %v1248 = vadd.f32 %v669, %v1007
      %v1249 = vadd.f32 %v670, %v1006
      %v1250 = vadd.f32 %v671, %v1010
      %v1251 = vadd.f32 %v672, %v1012
      %v1252 = vadd.f32 %v673, %v1011
      %v1253 = vadd.f32 %v674, %v1015
      %v1254 = vadd.f32 %v675, %v1017
      %v1255 = vadd.f32 %v676, %v1016
      %v1256 = vadd.f32 %v677, %v1020
      %v1257 = vadd.f32 %v678, %v1022
      %v1258 = vadd.f32 %v679, %v1021
      %v1259 = vadd.f32 %v680, %v1025
      %v1260 = vadd.f32 %v681, %v1027
      %v1261 = vadd.f32 %v682, %v1026
      %v1262 = vadd.f32 %v683, %v1030
      %v1263 = vadd.f32 %v684, %v1032
      %v1264 = vadd.f32 %v685, %v1031
      %v1265 = vadd.f32 %v686, %v1035
      %v1266 = vadd.f32 %v687, %v1037
      %v1267 = vadd.f32 %v688, %v1036
      %v1268 = vadd.f32 %v689, %v1040
      %v1269 = vadd.f32 %v690, %v1042
      %v1270 = vadd.f32 %v691, %v1041
      %v1271 = vadd.f32 %v692, %v1045
      %v1272 = vadd.f32 %v693, %v1047
      %v1273 = vadd.f32 %v694, %v1046
      %v1274 = vadd.f32 %v695, %v1050
      %v1275 = vadd.f32 %v696, %v1052
      %v1276 = vadd.f32 %v697, %v1051
      %v1277 = vadd.f32 %v698, %v1055
      %v1278 = vadd.f32 %v699, %v1057
      %v1279 = vadd.f32 %v700, %v1056
      %v1280 = vadd.f32 %v701, %v1060
      %v1281 = vadd.f32 %v702, %v1062
      %v1282 = vadd.f32 %v703, %v1061
      %v1283 = vadd.f32 %v704, %v1065
      %v1284 = vadd.f32 %v705, %v1067
      %v1285 = vadd.f32 %v706, %v1066
      %v1286 = vadd.f32 %v707, %v1070
      %v1287 = vadd.f32 %v708, %v1072
      %v1288 = vadd.f32 %v709, %v1071
      %v1289 = vadd.f32 %v710, %v1075
      %v1290 = vadd.f32 %v711, %v1077
      %v1291 = vadd.f32 %v712, %v1076
      %v1292 = vadd.f32 %v713, %v1080
      %v1293 = vadd.f32 %v714, %v1082
      %v1294 = vadd.f32 %v715, %v1081
      %v1295 = vadd.f32 %v716, %v1085
      %v1296 = vadd.f32 %v717, %v1087
      %v1297 = vadd.f32 %v718, %v1086
      %v1298 = vadd.f32 %v719, %v1090
      %v1299 = vadd.f32 %v720, %v1092
      %v1300 = vadd.f32 %v721, %v1091
      %v1301 = vadd.f32 %v722, %v1095
      %v1302 = vadd.f32 %v723, %v1097
      %v1303 = vadd.f32 %v724, %v1096
      %v1304 = vadd.f32 %v725, %v1100
      %v1305 = vadd.f32 %v726, %v1102
      %v1306 = vadd.f32 %v727, %v1101
      %v1409 = vrot.slane %v626, 1
      %v1410 = vrot.slane %v627, 1
      %v1411 = vsel %vm932, %v1409, %v1410
      %v1412 = vrot.slane %v628, 1
      %v1413 = vsel %vm932, %v1410, %v1412
      %v1414 = vrot.slane %v629, 1
      %v1415 = vrot.slane %v630, 1
      %v1416 = vsel %vm932, %v1414, %v1415
      %v1417 = vrot.slane %v631, 1
      %v1418 = vsel %vm932, %v1415, %v1417
      %v1419 = vrot.slane %v632, 1
      %v1420 = vrot.slane %v633, 1
      %v1421 = vsel %vm932, %v1419, %v1420
      %v1422 = vrot.slane %v634, 1
      %v1423 = vsel %vm932, %v1420, %v1422
      %v1424 = vrot.slane %v635, 1
      %v1425 = vrot.slane %v636, 1
      %v1426 = vsel %vm932, %v1424, %v1425
      %v1427 = vrot.slane %v637, 1
      %v1428 = vsel %vm932, %v1425, %v1427
      %v1429 = vrot.slane %v638, 1
      %v1430 = vrot.slane %v639, 1
      %v1431 = vsel %vm932, %v1429, %v1430
      %v1432 = vrot.slane %v640, 1
      %v1433 = vsel %vm932, %v1430, %v1432
      %v1434 = vrot.slane %v641, 1
      %v1435 = vrot.slane %v642, 1
      %v1436 = vsel %vm932, %v1434, %v1435
      %v1437 = vrot.slane %v643, 1
      %v1438 = vsel %vm932, %v1435, %v1437
      %v1439 = vrot.slane %v644, 1
      %v1440 = vrot.slane %v645, 1
      %v1441 = vsel %vm932, %v1439, %v1440
      %v1442 = vrot.slane %v646, 1
      %v1443 = vsel %vm932, %v1440, %v1442
      %v1444 = vrot.slane %v647, 1
      %v1445 = vrot.slane %v648, 1
      %v1446 = vsel %vm932, %v1444, %v1445
      %v1447 = vrot.slane %v649, 1
      %v1448 = vsel %vm932, %v1445, %v1447
      %v1449 = vrot.slane %v650, 1
      %v1450 = vrot.slane %v651, 1
      %v1451 = vsel %vm932, %v1449, %v1450
      %v1452 = vrot.slane %v652, 1
      %v1453 = vsel %vm932, %v1450, %v1452
      %v1454 = vrot.slane %v653, 1
      %v1455 = vrot.slane %v654, 1
      %v1456 = vsel %vm932, %v1454, %v1455
      %v1457 = vrot.slane %v655, 1
      %v1458 = vsel %vm932, %v1455, %v1457
      %v1459 = vrot.slane %v656, 1
      %v1460 = vrot.slane %v657, 1
      %v1461 = vsel %vm932, %v1459, %v1460
      %v1462 = vrot.slane %v658, 1
      %v1463 = vsel %vm932, %v1460, %v1462
      %v1464 = vrot.slane %v659, 1
      %v1465 = vrot.slane %v660, 1
      %v1466 = vsel %vm932, %v1464, %v1465
      %v1467 = vrot.slane %v661, 1
      %v1468 = vsel %vm932, %v1465, %v1467
      %v1469 = vrot.slane %v662, 1
      %v1470 = vrot.slane %v663, 1
      %v1471 = vsel %vm932, %v1469, %v1470
      %v1472 = vrot.slane %v664, 1
      %v1473 = vsel %vm932, %v1470, %v1472
      %v1474 = vrot.slane %v665, 1
      %v1475 = vrot.slane %v666, 1
      %v1476 = vsel %vm932, %v1474, %v1475
      %v1477 = vrot.slane %v667, 1
      %v1478 = vsel %vm932, %v1475, %v1477
      %v1479 = vrot.slane %v668, 1
      %v1480 = vrot.slane %v669, 1
      %v1481 = vsel %vm932, %v1479, %v1480
      %v1482 = vrot.slane %v670, 1
      %v1483 = vsel %vm932, %v1480, %v1482
      %v1484 = vrot.slane %v671, 1
      %v1485 = vrot.slane %v672, 1
      %v1486 = vsel %vm932, %v1484, %v1485
      %v1487 = vrot.slane %v673, 1
      %v1488 = vsel %vm932, %v1485, %v1487
      %v1489 = vrot.slane %v674, 1
      %v1490 = vrot.slane %v675, 1
      %v1491 = vsel %vm932, %v1489, %v1490
      %v1492 = vrot.slane %v676, 1
      %v1493 = vsel %vm932, %v1490, %v1492
      %v1494 = vrot.slane %v677, 1
      %v1495 = vrot.slane %v678, 1
      %v1496 = vsel %vm932, %v1494, %v1495
      %v1497 = vrot.slane %v679, 1
      %v1498 = vsel %vm932, %v1495, %v1497
      %v1499 = vrot.slane %v680, 1
      %v1500 = vrot.slane %v681, 1
      %v1501 = vsel %vm932, %v1499, %v1500
      %v1502 = vrot.slane %v682, 1
      %v1503 = vsel %vm932, %v1500, %v1502
      %v1504 = vrot.slane %v683, 1
      %v1505 = vrot.slane %v684, 1
      %v1506 = vsel %vm932, %v1504, %v1505
      %v1507 = vrot.slane %v685, 1
      %v1508 = vsel %vm932, %v1505, %v1507
      %v1509 = vrot.slane %v686, 1
      %v1510 = vrot.slane %v687, 1
      %v1511 = vsel %vm932, %v1509, %v1510
      %v1512 = vrot.slane %v688, 1
      %v1513 = vsel %vm932, %v1510, %v1512
      %v1514 = vrot.slane %v689, 1
      %v1515 = vrot.slane %v690, 1
      %v1516 = vsel %vm932, %v1514, %v1515
      %v1517 = vrot.slane %v691, 1
      %v1518 = vsel %vm932, %v1515, %v1517
      %v1519 = vrot.slane %v692, 1
      %v1520 = vrot.slane %v693, 1
      %v1521 = vsel %vm932, %v1519, %v1520
      %v1522 = vrot.slane %v694, 1
      %v1523 = vsel %vm932, %v1520, %v1522
      %v1524 = vrot.slane %v695, 1
      %v1525 = vrot.slane %v696, 1
      %v1526 = vsel %vm932, %v1524, %v1525
      %v1527 = vrot.slane %v697, 1
      %v1528 = vsel %vm932, %v1525, %v1527
      %v1529 = vrot.slane %v698, 1
      %v1530 = vrot.slane %v699, 1
      %v1531 = vsel %vm932, %v1529, %v1530
      %v1532 = vrot.slane %v700, 1
      %v1533 = vsel %vm932, %v1530, %v1532
      %v1534 = vrot.slane %v701, 1
      %v1535 = vrot.slane %v702, 1
      %v1536 = vsel %vm932, %v1534, %v1535
      %v1537 = vrot.slane %v703, 1
      %v1538 = vsel %vm932, %v1535, %v1537
      %v1539 = vrot.slane %v704, 1
      %v1540 = vrot.slane %v705, 1
      %v1541 = vsel %vm932, %v1539, %v1540
      %v1542 = vrot.slane %v706, 1
      %v1543 = vsel %vm932, %v1540, %v1542
      %v1544 = vrot.slane %v707, 1
      %v1545 = vrot.slane %v708, 1
      %v1546 = vsel %vm932, %v1544, %v1545
      %v1547 = vrot.slane %v709, 1
      %v1548 = vsel %vm932, %v1545, %v1547
      %v1549 = vrot.slane %v710, 1
      %v1550 = vrot.slane %v711, 1
      %v1551 = vsel %vm932, %v1549, %v1550
      %v1552 = vrot.slane %v712, 1
      %v1553 = vsel %vm932, %v1550, %v1552
      %v1554 = vrot.slane %v713, 1
      %v1555 = vrot.slane %v714, 1
      %v1556 = vsel %vm932, %v1554, %v1555
      %v1557 = vrot.slane %v715, 1
      %v1558 = vsel %vm932, %v1555, %v1557
      %v1559 = vrot.slane %v716, 1
      %v1560 = vrot.slane %v717, 1
      %v1561 = vsel %vm932, %v1559, %v1560
      %v1562 = vrot.slane %v718, 1
      %v1563 = vsel %vm932, %v1560, %v1562
      %v1564 = vrot.slane %v719, 1
      %v1565 = vrot.slane %v720, 1
      %v1566 = vsel %vm932, %v1564, %v1565
      %v1567 = vrot.slane %v721, 1
      %v1568 = vsel %vm932, %v1565, %v1567
      %v1569 = vrot.slane %v722, 1
      %v1570 = vrot.slane %v723, 1
      %v1571 = vsel %vm932, %v1569, %v1570
      %v1572 = vrot.slane %v724, 1
      %v1573 = vsel %vm932, %v1570, %v1572
      %v1574 = vrot.slane %v725, 1
      %v1575 = vrot.slane %v726, 1
      %v1576 = vsel %vm932, %v1574, %v1575
      %v1577 = vrot.slane %v727, 1
      %v1578 = vsel %vm932, %v1575, %v1577
      %v1681 = vadd.f32 %v728, %v1411
      %v1682 = vadd.f32 %v729, %v1413
      %v1683 = vadd.f32 %v730, %v1412
      %v1684 = vadd.f32 %v731, %v1416
      %v1685 = vadd.f32 %v732, %v1418
      %v1686 = vadd.f32 %v733, %v1417
      %v1687 = vadd.f32 %v734, %v1421
      %v1688 = vadd.f32 %v735, %v1423
      %v1689 = vadd.f32 %v736, %v1422
      %v1690 = vadd.f32 %v737, %v1426
      %v1691 = vadd.f32 %v738, %v1428
      %v1692 = vadd.f32 %v739, %v1427
      %v1693 = vadd.f32 %v740, %v1431
      %v1694 = vadd.f32 %v741, %v1433
      %v1695 = vadd.f32 %v742, %v1432
      %v1696 = vadd.f32 %v743, %v1436
      %v1697 = vadd.f32 %v744, %v1438
      %v1698 = vadd.f32 %v745, %v1437
      %v1699 = vadd.f32 %v746, %v1441
      %v1700 = vadd.f32 %v747, %v1443
      %v1701 = vadd.f32 %v748, %v1442
      %v1702 = vadd.f32 %v749, %v1446
      %v1703 = vadd.f32 %v750, %v1448
      %v1704 = vadd.f32 %v751, %v1447
      %v1705 = vadd.f32 %v752, %v1451
      %v1706 = vadd.f32 %v753, %v1453
      %v1707 = vadd.f32 %v754, %v1452
      %v1708 = vadd.f32 %v755, %v1456
      %v1709 = vadd.f32 %v756, %v1458
      %v1710 = vadd.f32 %v757, %v1457
      %v1711 = vadd.f32 %v758, %v1461
      %v1712 = vadd.f32 %v759, %v1463
      %v1713 = vadd.f32 %v760, %v1462
      %v1714 = vadd.f32 %v761, %v1466
      %v1715 = vadd.f32 %v762, %v1468
      %v1716 = vadd.f32 %v763, %v1467
      %v1717 = vadd.f32 %v764, %v1471
      %v1718 = vadd.f32 %v765, %v1473
      %v1719 = vadd.f32 %v766, %v1472
      %v1720 = vadd.f32 %v767, %v1476
      %v1721 = vadd.f32 %v768, %v1478
      %v1722 = vadd.f32 %v769, %v1477
      %v1723 = vadd.f32 %v770, %v1481
      %v1724 = vadd.f32 %v771, %v1483
      %v1725 = vadd.f32 %v772, %v1482
      %v1726 = vadd.f32 %v773, %v1486
      %v1727 = vadd.f32 %v774, %v1488
      %v1728 = vadd.f32 %v775, %v1487
      %v1729 = vadd.f32 %v776, %v1491
      %v1730 = vadd.f32 %v777, %v1493
      %v1731 = vadd.f32 %v778, %v1492
      %v1732 = vadd.f32 %v779, %v1496
      %v1733 = vadd.f32 %v780, %v1498
      %v1734 = vadd.f32 %v781, %v1497
      %v1735 = vadd.f32 %v782, %v1501
      %v1736 = vadd.f32 %v783, %v1503
      %v1737 = vadd.f32 %v784, %v1502
      %v1738 = vadd.f32 %v785, %v1506
      %v1739 = vadd.f32 %v786, %v1508
      %v1740 = vadd.f32 %v787, %v1507
      %v1741 = vadd.f32 %v788, %v1511
      %v1742 = vadd.f32 %v789, %v1513
      %v1743 = vadd.f32 %v790, %v1512
      %v1744 = vadd.f32 %v791, %v1516
      %v1745 = vadd.f32 %v792, %v1518
      %v1746 = vadd.f32 %v793, %v1517
      %v1747 = vadd.f32 %v794, %v1521
      %v1748 = vadd.f32 %v795, %v1523
      %v1749 = vadd.f32 %v796, %v1522
      %v1750 = vadd.f32 %v797, %v1526
      %v1751 = vadd.f32 %v798, %v1528
      %v1752 = vadd.f32 %v799, %v1527
      %v1753 = vadd.f32 %v800, %v1531
      %v1754 = vadd.f32 %v801, %v1533
      %v1755 = vadd.f32 %v802, %v1532
      %v1756 = vadd.f32 %v803, %v1536
      %v1757 = vadd.f32 %v804, %v1538
      %v1758 = vadd.f32 %v805, %v1537
      %v1759 = vadd.f32 %v806, %v1541
      %v1760 = vadd.f32 %v807, %v1543
      %v1761 = vadd.f32 %v808, %v1542
      %v1762 = vadd.f32 %v809, %v1546
      %v1763 = vadd.f32 %v810, %v1548
      %v1764 = vadd.f32 %v811, %v1547
      %v1765 = vadd.f32 %v812, %v1551
      %v1766 = vadd.f32 %v813, %v1553
      %v1767 = vadd.f32 %v814, %v1552
      %v1768 = vadd.f32 %v815, %v1556
      %v1769 = vadd.f32 %v816, %v1558
      %v1770 = vadd.f32 %v817, %v1557
      %v1771 = vadd.f32 %v818, %v1561
      %v1772 = vadd.f32 %v819, %v1563
      %v1773 = vadd.f32 %v820, %v1562
      %v1774 = vadd.f32 %v821, %v1566
      %v1775 = vadd.f32 %v822, %v1568
      %v1776 = vadd.f32 %v823, %v1567
      %v1777 = vadd.f32 %v824, %v1571
      %v1778 = vadd.f32 %v825, %v1573
      %v1779 = vadd.f32 %v826, %v1572
      %v1780 = vadd.f32 %v827, %v1576
      %v1781 = vadd.f32 %v828, %v1578
      %v1782 = vadd.f32 %v829, %v1577
      %v1783 = vlaneseq
      %v1784 = vshrl.u32 %v1783, 7
      %v1785 = vadd.s32 %v1784, 8
      %v1786 = vadd.s32 %v1784, 16
      %vm1787 = vcmp.eq.s32.totalorder %v1784, 0
      %vm1788 = vcmp.eq.s32.totalorder %v1785, 0
      %vm1789 = vcmp.eq.s32.totalorder %v1786, 0
      %v1790 = vsel %vm1787, 0.0, %v1205
      %v1791 = vsel %vm1788, 0.0, %v1206
      %v1792 = vsel %vm1789, 0.0, %v1207
      %v1793 = vsel %vm1787, 0.0, %v1208
      %v1794 = vsel %vm1788, 0.0, %v1209
      %v1795 = vsel %vm1789, 0.0, %v1210
      %v1796 = vsel %vm1787, 0.0, %v1211
      %v1797 = vsel %vm1788, 0.0, %v1212
      %v1798 = vsel %vm1789, 0.0, %v1213
      %v1799 = vsel %vm1787, 0.0, %v1214
      %v1800 = vsel %vm1788, 0.0, %v1215
      %v1801 = vsel %vm1789, 0.0, %v1216
      %v1802 = vsel %vm1787, 0.0, %v1217
      %v1803 = vsel %vm1788, 0.0, %v1218
      %v1804 = vsel %vm1789, 0.0, %v1219
      %v1805 = vsel %vm1787, 0.0, %v1220
      %v1806 = vsel %vm1788, 0.0, %v1221
      %v1807 = vsel %vm1789, 0.0, %v1222
      %v1808 = vsel %vm1787, 0.0, %v1223
      %v1809 = vsel %vm1788, 0.0, %v1224
      %v1810 = vsel %vm1789, 0.0, %v1225
      %v1811 = vsel %vm1787, 0.0, %v1226
      %v1812 = vsel %vm1788, 0.0, %v1227
      %v1813 = vsel %vm1789, 0.0, %v1228
      %v1814 = vsel %vm1787, 0.0, %v1229
      %v1815 = vsel %vm1788, 0.0, %v1230
      %v1816 = vsel %vm1789, 0.0, %v1231
      %v1817 = vsel %vm1787, 0.0, %v1232
      %v1818 = vsel %vm1788, 0.0, %v1233
      %v1819 = vsel %vm1789, 0.0, %v1234
      %v1820 = vsel %vm1787, 0.0, %v1235
      %v1821 = vsel %vm1788, 0.0, %v1236
      %v1822 = vsel %vm1789, 0.0, %v1237
      %v1823 = vsel %vm1787, 0.0, %v1238
      %v1824 = vsel %vm1788, 0.0, %v1239
      %v1825 = vsel %vm1789, 0.0, %v1240
      %v1826 = vsel %vm1787, 0.0, %v1241
      %v1827 = vsel %vm1788, 0.0, %v1242
      %v1828 = vsel %vm1789, 0.0, %v1243
      %v1829 = vsel %vm1787, 0.0, %v1244
      %v1830 = vsel %vm1788, 0.0, %v1245
      %v1831 = vsel %vm1789, 0.0, %v1246
      %v1832 = vsel %vm1787, 0.0, %v1247
      %v1833 = vsel %vm1788, 0.0, %v1248
      %v1834 = vsel %vm1789, 0.0, %v1249
      %v1835 = vsel %vm1787, 0.0, %v1250
      %v1836 = vsel %vm1788, 0.0, %v1251
      %v1837 = vsel %vm1789, 0.0, %v1252
      %v1838 = vsel %vm1787, 0.0, %v1253
      %v1839 = vsel %vm1788, 0.0, %v1254
      %v1840 = vsel %vm1789, 0.0, %v1255
      %v1841 = vsel %vm1787, 0.0, %v1256
      %v1842 = vsel %vm1788, 0.0, %v1257
      %v1843 = vsel %vm1789, 0.0, %v1258
      %v1844 = vsel %vm1787, 0.0, %v1259
      %v1845 = vsel %vm1788, 0.0, %v1260
      %v1846 = vsel %vm1789, 0.0, %v1261
      %v1847 = vsel %vm1787, 0.0, %v1262
      %v1848 = vsel %vm1788, 0.0, %v1263
      %v1849 = vsel %vm1789, 0.0, %v1264
      %v1850 = vsel %vm1787, 0.0, %v1265
      %v1851 = vsel %vm1788, 0.0, %v1266
      %v1852 = vsel %vm1789, 0.0, %v1267
      %v1853 = vsel %vm1787, 0.0, %v1268
      %v1854 = vsel %vm1788, 0.0, %v1269
      %v1855 = vsel %vm1789, 0.0, %v1270
      %v1856 = vsel %vm1787, 0.0, %v1271
      %v1857 = vsel %vm1788, 0.0, %v1272
      %v1858 = vsel %vm1789, 0.0, %v1273
      %v1859 = vsel %vm1787, 0.0, %v1274
      %v1860 = vsel %vm1788, 0.0, %v1275
      %v1861 = vsel %vm1789, 0.0, %v1276
      %v1862 = vsel %vm1787, 0.0, %v1277
      %v1863 = vsel %vm1788, 0.0, %v1278
      %v1864 = vsel %vm1789, 0.0, %v1279
      %v1865 = vsel %vm1787, 0.0, %v1280
      %v1866 = vsel %vm1788, 0.0, %v1281
      %v1867 = vsel %vm1789, 0.0, %v1282
      %v1868 = vsel %vm1787, 0.0, %v1283
      %v1869 = vsel %vm1788, 0.0, %v1284
      %v1870 = vsel %vm1789, 0.0, %v1285
      %v1871 = vsel %vm1787, 0.0, %v1286
      %v1872 = vsel %vm1788, 0.0, %v1287
      %v1873 = vsel %vm1789, 0.0, %v1288
      %v1874 = vsel %vm1787, 0.0, %v1289
      %v1875 = vsel %vm1788, 0.0, %v1290
      %v1876 = vsel %vm1789, 0.0, %v1291
      %v1877 = vsel %vm1787, 0.0, %v1292
      %v1878 = vsel %vm1788, 0.0, %v1293
      %v1879 = vsel %vm1789, 0.0, %v1294
      %v1880 = vsel %vm1787, 0.0, %v1295
      %v1881 = vsel %vm1788, 0.0, %v1296
      %v1882 = vsel %vm1789, 0.0, %v1297
      %v1883 = vsel %vm1787, 0.0, %v1298
      %v1884 = vsel %vm1788, 0.0, %v1299
      %v1885 = vsel %vm1789, 0.0, %v1300
      %v1886 = vsel %vm1787, 0.0, %v1301
      %v1887 = vsel %vm1788, 0.0, %v1302
      %v1888 = vsel %vm1789, 0.0, %v1303
      %v1889 = vsel %vm1787, 0.0, %v1304
      %v1890 = vsel %vm1788, 0.0, %v1305
      %v1891 = vsel %vm1789, 0.0, %v1306
      %vm1892 = vcmp.eq.s32.totalorder %v1784, 16
      %vm1893 = vcmp.eq.s32.totalorder %v1785, 16
      %vm1894 = vcmp.eq.s32.totalorder %v1786, 16
      %v1895 = vsel %vm1892, 0.0, %v1681
      %v1896 = vsel %vm1893, 0.0, %v1682
      %v1897 = vsel %vm1894, 0.0, %v1683
      %v1898 = vsel %vm1892, 0.0, %v1684
      %v1899 = vsel %vm1893, 0.0, %v1685
      %v1900 = vsel %vm1894, 0.0, %v1686
      %v1901 = vsel %vm1892, 0.0, %v1687
      %v1902 = vsel %vm1893, 0.0, %v1688
      %v1903 = vsel %vm1894, 0.0, %v1689
      %v1904 = vsel %vm1892, 0.0, %v1690
      %v1905 = vsel %vm1893, 0.0, %v1691
      %v1906 = vsel %vm1894, 0.0, %v1692
      %v1907 = vsel %vm1892, 0.0, %v1693
      %v1908 = vsel %vm1893, 0.0, %v1694
      %v1909 = vsel %vm1894, 0.0, %v1695
      %v1910 = vsel %vm1892, 0.0, %v1696
      %v1911 = vsel %vm1893, 0.0, %v1697
      %v1912 = vsel %vm1894, 0.0, %v1698
      %v1913 = vsel %vm1892, 0.0, %v1699
      %v1914 = vsel %vm1893, 0.0, %v1700
      %v1915 = vsel %vm1894, 0.0, %v1701
      %v1916 = vsel %vm1892, 0.0, %v1702
      %v1917 = vsel %vm1893, 0.0, %v1703
      %v1918 = vsel %vm1894, 0.0, %v1704
      %v1919 = vsel %vm1892, 0.0, %v1705
      %v1920 = vsel %vm1893, 0.0, %v1706
      %v1921 = vsel %vm1894, 0.0, %v1707
      %v1922 = vsel %vm1892, 0.0, %v1708
      %v1923 = vsel %vm1893, 0.0, %v1709
      %v1924 = vsel %vm1894, 0.0, %v1710
      %v1925 = vsel %vm1892, 0.0, %v1711
      %v1926 = vsel %vm1893, 0.0, %v1712
      %v1927 = vsel %vm1894, 0.0, %v1713
      %v1928 = vsel %vm1892, 0.0, %v1714
      %v1929 = vsel %vm1893, 0.0, %v1715
      %v1930 = vsel %vm1894, 0.0, %v1716
      %v1931 = vsel %vm1892, 0.0, %v1717
      %v1932 = vsel %vm1893, 0.0, %v1718
      %v1933 = vsel %vm1894, 0.0, %v1719
      %v1934 = vsel %vm1892, 0.0, %v1720
      %v1935 = vsel %vm1893, 0.0, %v1721
      %v1936 = vsel %vm1894, 0.0, %v1722
      %v1937 = vsel %vm1892, 0.0, %v1723
      %v1938 = vsel %vm1893, 0.0, %v1724
      %v1939 = vsel %vm1894, 0.0, %v1725
      %v1940 = vsel %vm1892, 0.0, %v1726
      %v1941 = vsel %vm1893, 0.0, %v1727
      %v1942 = vsel %vm1894, 0.0, %v1728
      %v1943 = vsel %vm1892, 0.0, %v1729
      %v1944 = vsel %vm1893, 0.0, %v1730
      %v1945 = vsel %vm1894, 0.0, %v1731
      %v1946 = vsel %vm1892, 0.0, %v1732
      %v1947 = vsel %vm1893, 0.0, %v1733
      %v1948 = vsel %vm1894, 0.0, %v1734
      %v1949 = vsel %vm1892, 0.0, %v1735
      %v1950 = vsel %vm1893, 0.0, %v1736
      %v1951 = vsel %vm1894, 0.0, %v1737
      %v1952 = vsel %vm1892, 0.0, %v1738
      %v1953 = vsel %vm1893, 0.0, %v1739
      %v1954 = vsel %vm1894, 0.0, %v1740
      %v1955 = vsel %vm1892, 0.0, %v1741
      %v1956 = vsel %vm1893, 0.0, %v1742
      %v1957 = vsel %vm1894, 0.0, %v1743
      %v1958 = vsel %vm1892, 0.0, %v1744
      %v1959 = vsel %vm1893, 0.0, %v1745
      %v1960 = vsel %vm1894, 0.0, %v1746
      %v1961 = vsel %vm1892, 0.0, %v1747
      %v1962 = vsel %vm1893, 0.0, %v1748
      %v1963 = vsel %vm1894, 0.0, %v1749
      %v1964 = vsel %vm1892, 0.0, %v1750
      %v1965 = vsel %vm1893, 0.0, %v1751
      %v1966 = vsel %vm1894, 0.0, %v1752
      %v1967 = vsel %vm1892, 0.0, %v1753
      %v1968 = vsel %vm1893, 0.0, %v1754
      %v1969 = vsel %vm1894, 0.0, %v1755
      %v1970 = vsel %vm1892, 0.0, %v1756
      %v1971 = vsel %vm1893, 0.0, %v1757
      %v1972 = vsel %vm1894, 0.0, %v1758
      %v1973 = vsel %vm1892, 0.0, %v1759
      %v1974 = vsel %vm1893, 0.0, %v1760
      %v1975 = vsel %vm1894, 0.0, %v1761
      %v1976 = vsel %vm1892, 0.0, %v1762
      %v1977 = vsel %vm1893, 0.0, %v1763
      %v1978 = vsel %vm1894, 0.0, %v1764
      %v1979 = vsel %vm1892, 0.0, %v1765
      %v1980 = vsel %vm1893, 0.0, %v1766
      %v1981 = vsel %vm1894, 0.0, %v1767
      %v1982 = vsel %vm1892, 0.0, %v1768
      %v1983 = vsel %vm1893, 0.0, %v1769
      %v1984 = vsel %vm1894, 0.0, %v1770
      %v1985 = vsel %vm1892, 0.0, %v1771
      %v1986 = vsel %vm1893, 0.0, %v1772
      %v1987 = vsel %vm1894, 0.0, %v1773
      %v1988 = vsel %vm1892, 0.0, %v1774
      %v1989 = vsel %vm1893, 0.0, %v1775
      %v1990 = vsel %vm1894, 0.0, %v1776
      %v1991 = vsel %vm1892, 0.0, %v1777
      %v1992 = vsel %vm1893, 0.0, %v1778
      %v1993 = vsel %vm1894, 0.0, %v1779
      %v1994 = vsel %vm1892, 0.0, %v1780
      %v1995 = vsel %vm1893, 0.0, %v1781
      %v1996 = vsel %vm1894, 0.0, %v1782
      %v2093 = vrot.slane %v1790, 1
      %v2094 = vrot.slane %v1791, 1
      %v2095 = vsel %vm932, %v2093, %v2094
      %v2096 = vrot.slane %v1792, 1
      %v2097 = vsel %vm932, %v2094, %v2096
      %v2098 = vrot.slane %v1793, 1
      %v2099 = vrot.slane %v1794, 1
      %v2100 = vsel %vm932, %v2098, %v2099
      %v2101 = vrot.slane %v1795, 1
      %v2102 = vsel %vm932, %v2099, %v2101
      %v2103 = vrot.slane %v1796, 1
      %v2104 = vrot.slane %v1797, 1
      %v2105 = vsel %vm932, %v2103, %v2104
      %v2106 = vrot.slane %v1798, 1
      %v2107 = vsel %vm932, %v2104, %v2106
      %v2108 = vrot.slane %v1799, 1
      %v2109 = vrot.slane %v1800, 1
      %v2110 = vsel %vm932, %v2108, %v2109
      %v2111 = vrot.slane %v1801, 1
      %v2112 = vsel %vm932, %v2109, %v2111
      %v2113 = vrot.slane %v1802, 1
      %v2114 = vrot.slane %v1803, 1
      %v2115 = vsel %vm932, %v2113, %v2114
      %v2116 = vrot.slane %v1804, 1
      %v2117 = vsel %vm932, %v2114, %v2116
      %v2118 = vrot.slane %v1805, 1
      %v2119 = vrot.slane %v1806, 1
      %v2120 = vsel %vm932, %v2118, %v2119
      %v2121 = vrot.slane %v1807, 1
      %v2122 = vsel %vm932, %v2119, %v2121
      %v2123 = vrot.slane %v1808, 1
      %v2124 = vrot.slane %v1809, 1
      %v2125 = vsel %vm932, %v2123, %v2124
      %v2126 = vrot.slane %v1810, 1
      %v2127 = vsel %vm932, %v2124, %v2126
      %v2128 = vrot.slane %v1811, 1
      %v2129 = vrot.slane %v1812, 1
      %v2130 = vsel %vm932, %v2128, %v2129
      %v2131 = vrot.slane %v1813, 1
      %v2132 = vsel %vm932, %v2129, %v2131
      %v2133 = vrot.slane %v1814, 1
      %v2134 = vrot.slane %v1815, 1
      %v2135 = vsel %vm932, %v2133, %v2134
      %v2136 = vrot.slane %v1816, 1
      %v2137 = vsel %vm932, %v2134, %v2136
      %v2138 = vrot.slane %v1817, 1
      %v2139 = vrot.slane %v1818, 1
      %v2140 = vsel %vm932, %v2138, %v2139
      %v2141 = vrot.slane %v1819, 1
      %v2142 = vsel %vm932, %v2139, %v2141
      %v2143 = vrot.slane %v1820, 1
      %v2144 = vrot.slane %v1821, 1
      %v2145 = vsel %vm932, %v2143, %v2144
      %v2146 = vrot.slane %v1822, 1
      %v2147 = vsel %vm932, %v2144, %v2146
      %v2148 = vrot.slane %v1823, 1
      %v2149 = vrot.slane %v1824, 1
      %v2150 = vsel %vm932, %v2148, %v2149
      %v2151 = vrot.slane %v1825, 1
      %v2152 = vsel %vm932, %v2149, %v2151
      %v2153 = vrot.slane %v1826, 1
      %v2154 = vrot.slane %v1827, 1
      %v2155 = vsel %vm932, %v2153, %v2154
      %v2156 = vrot.slane %v1828, 1
      %v2157 = vsel %vm932, %v2154, %v2156
      %v2158 = vrot.slane %v1829, 1
      %v2159 = vrot.slane %v1830, 1
      %v2160 = vsel %vm932, %v2158, %v2159
      %v2161 = vrot.slane %v1831, 1
      %v2162 = vsel %vm932, %v2159, %v2161
      %v2163 = vrot.slane %v1832, 1
      %v2164 = vrot.slane %v1833, 1
      %v2165 = vsel %vm932, %v2163, %v2164
      %v2166 = vrot.slane %v1834, 1
      %v2167 = vsel %vm932, %v2164, %v2166
      %v2168 = vrot.slane %v1835, 1
      %v2169 = vrot.slane %v1836, 1
      %v2170 = vsel %vm932, %v2168, %v2169
      %v2171 = vrot.slane %v1837, 1
      %v2172 = vsel %vm932, %v2169, %v2171
      %v2173 = vrot.slane %v1838, 1
      %v2174 = vrot.slane %v1839, 1
      %v2175 = vsel %vm932, %v2173, %v2174
      %v2176 = vrot.slane %v1840, 1
      %v2177 = vsel %vm932, %v2174, %v2176
      %v2178 = vrot.slane %v1841, 1
      %v2179 = vrot.slane %v1842, 1
      %v2180 = vsel %vm932, %v2178, %v2179
      %v2181 = vrot.slane %v1843, 1
      %v2182 = vsel %vm932, %v2179, %v2181
      %v2183 = vrot.slane %v1844, 1
      %v2184 = vrot.slane %v1845, 1
      %v2185 = vsel %vm932, %v2183, %v2184
      %v2186 = vrot.slane %v1846, 1
      %v2187 = vsel %vm932, %v2184, %v2186
      %v2188 = vrot.slane %v1847, 1
      %v2189 = vrot.slane %v1848, 1
      %v2190 = vsel %vm932, %v2188, %v2189
      %v2191 = vrot.slane %v1849, 1
      %v2192 = vsel %vm932, %v2189, %v2191
      %v2193 = vrot.slane %v1850, 1
      %v2194 = vrot.slane %v1851, 1
      %v2195 = vsel %vm932, %v2193, %v2194
      %v2196 = vrot.slane %v1852, 1
      %v2197 = vsel %vm932, %v2194, %v2196
      %v2198 = vrot.slane %v1853, 1
      %v2199 = vrot.slane %v1854, 1
      %v2200 = vsel %vm932, %v2198, %v2199
      %v2201 = vrot.slane %v1855, 1
      %v2202 = vsel %vm932, %v2199, %v2201
      %v2203 = vrot.slane %v1856, 1
      %v2204 = vrot.slane %v1857, 1
      %v2205 = vsel %vm932, %v2203, %v2204
      %v2206 = vrot.slane %v1858, 1
      %v2207 = vsel %vm932, %v2204, %v2206
      %v2208 = vrot.slane %v1859, 1
      %v2209 = vrot.slane %v1860, 1
      %v2210 = vsel %vm932, %v2208, %v2209
      %v2211 = vrot.slane %v1861, 1
      %v2212 = vsel %vm932, %v2209, %v2211
      %v2213 = vrot.slane %v1862, 1
      %v2214 = vrot.slane %v1863, 1
      %v2215 = vsel %vm932, %v2213, %v2214
      %v2216 = vrot.slane %v1864, 1
      %v2217 = vsel %vm932, %v2214, %v2216
      %v2218 = vrot.slane %v1865, 1
      %v2219 = vrot.slane %v1866, 1
      %v2220 = vsel %vm932, %v2218, %v2219
      %v2221 = vrot.slane %v1867, 1
      %v2222 = vsel %vm932, %v2219, %v2221
      %v2223 = vrot.slane %v1868, 1
      %v2224 = vrot.slane %v1869, 1
      %v2225 = vsel %vm932, %v2223, %v2224
      %v2226 = vrot.slane %v1870, 1
      %v2227 = vsel %vm932, %v2224, %v2226
      %v2228 = vrot.slane %v1871, 1
      %v2229 = vrot.slane %v1872, 1
      %v2230 = vsel %vm932, %v2228, %v2229
      %v2231 = vrot.slane %v1873, 1
      %v2232 = vsel %vm932, %v2229, %v2231
      %v2233 = vrot.slane %v1874, 1
      %v2234 = vrot.slane %v1875, 1
      %v2235 = vsel %vm932, %v2233, %v2234
      %v2236 = vrot.slane %v1876, 1
      %v2237 = vsel %vm932, %v2234, %v2236
      %v2238 = vrot.slane %v1877, 1
      %v2239 = vrot.slane %v1878, 1
      %v2240 = vsel %vm932, %v2238, %v2239
      %v2241 = vrot.slane %v1879, 1
      %v2242 = vsel %vm932, %v2239, %v2241
      %v2243 = vrot.slane %v1880, 1
      %v2244 = vrot.slane %v1881, 1
      %v2245 = vsel %vm932, %v2243, %v2244
      %v2246 = vrot.slane %v1882, 1
      %v2247 = vsel %vm932, %v2244, %v2246
      %v2248 = vrot.slane %v1883, 1
      %v2249 = vrot.slane %v1884, 1
      %v2250 = vsel %vm932, %v2248, %v2249
      %v2251 = vrot.slane %v1885, 1
      %v2252 = vsel %vm932, %v2249, %v2251
      %v2349 = vrot.slane %v1895, 1
      %v2350 = vrot.slane %v1896, 1
      %v2351 = vsel %vm932, %v2349, %v2350
      %v2352 = vrot.slane %v1897, 1
      %v2353 = vsel %vm932, %v2350, %v2352
      %v2354 = vrot.slane %v1898, 1
      %v2355 = vrot.slane %v1899, 1
      %v2356 = vsel %vm932, %v2354, %v2355
      %v2357 = vrot.slane %v1900, 1
      %v2358 = vsel %vm932, %v2355, %v2357
      %v2359 = vrot.slane %v1901, 1
      %v2360 = vrot.slane %v1902, 1
      %v2361 = vsel %vm932, %v2359, %v2360
      %v2362 = vrot.slane %v1903, 1
      %v2363 = vsel %vm932, %v2360, %v2362
      %v2364 = vrot.slane %v1904, 1
      %v2365 = vrot.slane %v1905, 1
      %v2366 = vsel %vm932, %v2364, %v2365
      %v2367 = vrot.slane %v1906, 1
      %v2368 = vsel %vm932, %v2365, %v2367
      %v2369 = vrot.slane %v1907, 1
      %v2370 = vrot.slane %v1908, 1
      %v2371 = vsel %vm932, %v2369, %v2370
      %v2372 = vrot.slane %v1909, 1
      %v2373 = vsel %vm932, %v2370, %v2372
      %v2374 = vrot.slane %v1910, 1
      %v2375 = vrot.slane %v1911, 1
      %v2376 = vsel %vm932, %v2374, %v2375
      %v2377 = vrot.slane %v1912, 1
      %v2378 = vsel %vm932, %v2375, %v2377
      %v2379 = vrot.slane %v1913, 1
      %v2380 = vrot.slane %v1914, 1
      %v2381 = vsel %vm932, %v2379, %v2380
      %v2382 = vrot.slane %v1915, 1
      %v2383 = vsel %vm932, %v2380, %v2382
      %v2384 = vrot.slane %v1916, 1
      %v2385 = vrot.slane %v1917, 1
      %v2386 = vsel %vm932, %v2384, %v2385
      %v2387 = vrot.slane %v1918, 1
      %v2388 = vsel %vm932, %v2385, %v2387
      %v2389 = vrot.slane %v1919, 1
      %v2390 = vrot.slane %v1920, 1
      %v2391 = vsel %vm932, %v2389, %v2390
      %v2392 = vrot.slane %v1921, 1
      %v2393 = vsel %vm932, %v2390, %v2392
      %v2394 = vrot.slane %v1922, 1
      %v2395 = vrot.slane %v1923, 1
      %v2396 = vsel %vm932, %v2394, %v2395
      %v2397 = vrot.slane %v1924, 1
      %v2398 = vsel %vm932, %v2395, %v2397
      %v2399 = vrot.slane %v1925, 1
      %v2400 = vrot.slane %v1926, 1
      %v2401 = vsel %vm932, %v2399, %v2400
      %v2402 = vrot.slane %v1927, 1
      %v2403 = vsel %vm932, %v2400, %v2402
      %v2404 = vrot.slane %v1928, 1
      %v2405 = vrot.slane %v1929, 1
      %v2406 = vsel %vm932, %v2404, %v2405
      %v2407 = vrot.slane %v1930, 1
      %v2408 = vsel %vm932, %v2405, %v2407
      %v2409 = vrot.slane %v1931, 1
      %v2410 = vrot.slane %v1932, 1
      %v2411 = vsel %vm932, %v2409, %v2410
      %v2412 = vrot.slane %v1933, 1
      %v2413 = vsel %vm932, %v2410, %v2412
      %v2414 = vrot.slane %v1934, 1
      %v2415 = vrot.slane %v1935, 1
      %v2416 = vsel %vm932, %v2414, %v2415
      %v2417 = vrot.slane %v1936, 1
      %v2418 = vsel %vm932, %v2415, %v2417
      %v2419 = vrot.slane %v1937, 1
      %v2420 = vrot.slane %v1938, 1
      %v2421 = vsel %vm932, %v2419, %v2420
      %v2422 = vrot.slane %v1939, 1
      %v2423 = vsel %vm932, %v2420, %v2422
      %v2424 = vrot.slane %v1940, 1
      %v2425 = vrot.slane %v1941, 1
      %v2426 = vsel %vm932, %v2424, %v2425
      %v2427 = vrot.slane %v1942, 1
      %v2428 = vsel %vm932, %v2425, %v2427
      %v2429 = vrot.slane %v1943, 1
      %v2430 = vrot.slane %v1944, 1
      %v2431 = vsel %vm932, %v2429, %v2430
      %v2432 = vrot.slane %v1945, 1
      %v2433 = vsel %vm932, %v2430, %v2432
      %v2434 = vrot.slane %v1946, 1
      %v2435 = vrot.slane %v1947, 1
      %v2436 = vsel %vm932, %v2434, %v2435
      %v2437 = vrot.slane %v1948, 1
      %v2438 = vsel %vm932, %v2435, %v2437
      %v2439 = vrot.slane %v1949, 1
      %v2440 = vrot.slane %v1950, 1
      %v2441 = vsel %vm932, %v2439, %v2440
      %v2442 = vrot.slane %v1951, 1
      %v2443 = vsel %vm932, %v2440, %v2442
      %v2444 = vrot.slane %v1952, 1
      %v2445 = vrot.slane %v1953, 1
      %v2446 = vsel %vm932, %v2444, %v2445
      %v2447 = vrot.slane %v1954, 1
      %v2448 = vsel %vm932, %v2445, %v2447
      %v2449 = vrot.slane %v1955, 1
      %v2450 = vrot.slane %v1956, 1
      %v2451 = vsel %vm932, %v2449, %v2450
      %v2452 = vrot.slane %v1957, 1
      %v2453 = vsel %vm932, %v2450, %v2452
      %v2454 = vrot.slane %v1958, 1
      %v2455 = vrot.slane %v1959, 1
      %v2456 = vsel %vm932, %v2454, %v2455
      %v2457 = vrot.slane %v1960, 1
      %v2458 = vsel %vm932, %v2455, %v2457
      %v2459 = vrot.slane %v1961, 1
      %v2460 = vrot.slane %v1962, 1
      %v2461 = vsel %vm932, %v2459, %v2460
      %v2462 = vrot.slane %v1963, 1
      %v2463 = vsel %vm932, %v2460, %v2462
      %v2464 = vrot.slane %v1964, 1
      %v2465 = vrot.slane %v1965, 1
      %v2466 = vsel %vm932, %v2464, %v2465
      %v2467 = vrot.slane %v1966, 1
      %v2468 = vsel %vm932, %v2465, %v2467
      %v2469 = vrot.slane %v1967, 1
      %v2470 = vrot.slane %v1968, 1
      %v2471 = vsel %vm932, %v2469, %v2470
      %v2472 = vrot.slane %v1969, 1
      %v2473 = vsel %vm932, %v2470, %v2472
      %v2474 = vrot.slane %v1970, 1
      %v2475 = vrot.slane %v1971, 1
      %v2476 = vsel %vm932, %v2474, %v2475
      %v2477 = vrot.slane %v1972, 1
      %v2478 = vsel %vm932, %v2475, %v2477
      %v2479 = vrot.slane %v1973, 1
      %v2480 = vrot.slane %v1974, 1
      %v2481 = vsel %vm932, %v2479, %v2480
      %v2482 = vrot.slane %v1975, 1
      %v2483 = vsel %vm932, %v2480, %v2482
      %v2484 = vrot.slane %v1976, 1
      %v2485 = vrot.slane %v1977, 1
      %v2486 = vsel %vm932, %v2484, %v2485
      %v2487 = vrot.slane %v1978, 1
      %v2488 = vsel %vm932, %v2485, %v2487
      %v2489 = vrot.slane %v1979, 1
      %v2490 = vrot.slane %v1980, 1
      %v2491 = vsel %vm932, %v2489, %v2490
      %v2492 = vrot.slane %v1981, 1
      %v2493 = vsel %vm932, %v2490, %v2492
      %v2494 = vrot.slane %v1982, 1
      %v2495 = vrot.slane %v1983, 1
      %v2496 = vsel %vm932, %v2494, %v2495
      %v2497 = vrot.slane %v1984, 1
      %v2498 = vsel %vm932, %v2495, %v2497
      %v2499 = vrot.slane %v1985, 1
      %v2500 = vrot.slane %v1986, 1
      %v2501 = vsel %vm932, %v2499, %v2500
      %v2502 = vrot.slane %v1987, 1
      %v2503 = vsel %vm932, %v2500, %v2502
      %v2504 = vrot.slane %v1988, 1
      %v2505 = vrot.slane %v1989, 1
      %v2506 = vsel %vm932, %v2504, %v2505
      %v2507 = vrot.slane %v1990, 1
      %v2508 = vsel %vm932, %v2505, %v2507
      %v2509 = vld [vmem:[%s1] sm:$0xf]
      %s2510 = scalar_lea.vmem %s1, 4
      %v2511 = vld [vmem:[%s2510] sm:$0xf]
      %vm2512 = vcmask 31744
      %v2513 = vsel %vm2512, %v1895, 0
      %v2515 = vsel %vm2512, %v1896, 0
      %v2517 = vsel %vm2512, %v1898, 0
      %v2519 = vsel %vm2512, %v1899, 0
      %v2521 = vsel %vm2512, %v1901, 0
      %v2523 = vsel %vm2512, %v1902, 0
      %v2525 = vsel %vm2512, %v1904, 0
      %v2527 = vsel %vm2512, %v1905, 0
      %v2529 = vsel %vm2512, %v1907, 0
      %v2531 = vsel %vm2512, %v1908, 0
      %v2533 = vsel %vm2512, %v1910, 0
      %v2535 = vsel %vm2512, %v1911, 0
      %v2537 = vsel %vm2512, %v1913, 0
      %v2539 = vsel %vm2512, %v1914, 0
      %v2541 = vsel %vm2512, %v1916, 0
      %v2543 = vsel %vm2512, %v1917, 0
      %v2545 = vsel %vm2512, %v1919, 0
      %v2547 = vsel %vm2512, %v1920, 0
      %v2549 = vsel %vm2512, %v1922, 0
      %v2551 = vsel %vm2512, %v1923, 0
      %v2553 = vsel %vm2512, %v1925, 0
      %v2555 = vsel %vm2512, %v1926, 0
      %v2557 = vsel %vm2512, %v1928, 0
      %v2559 = vsel %vm2512, %v1929, 0
      %v2561 = vsel %vm2512, %v1931, 0
      %v2563 = vsel %vm2512, %v1932, 0
      %v2565 = vsel %vm2512, %v1934, 0
      %v2567 = vsel %vm2512, %v1935, 0
      %v2569 = vsel %vm2512, %v1937, 0
      %v2571 = vsel %vm2512, %v1938, 0
      %v2573 = vsel %vm2512, %v1940, 0
      %v2575 = vsel %vm2512, %v1941, 0
      %v2577 = vsel %vm2512, %v1943, 0
      %v2579 = vsel %vm2512, %v1944, 0
      %v2581 = vsel %vm2512, %v1946, 0
      %v2583 = vsel %vm2512, %v1947, 0
      %v2585 = vsel %vm2512, %v1949, 0
      %v2587 = vsel %vm2512, %v1950, 0
      %v2589 = vsel %vm2512, %v1952, 0
      %v2591 = vsel %vm2512, %v1953, 0
      %v2593 = vsel %vm2512, %v1955, 0
      %v2595 = vsel %vm2512, %v1956, 0
      %v2597 = vsel %vm2512, %v1958, 0
      %v2599 = vsel %vm2512, %v1959, 0
      %v2601 = vsel %vm2512, %v1961, 0
      %v2603 = vsel %vm2512, %v1962, 0
      %v2605 = vsel %vm2512, %v1964, 0
      %v2607 = vsel %vm2512, %v1965, 0
      %v2609 = vsel %vm2512, %v1967, 0
      %v2611 = vsel %vm2512, %v1968, 0
      %v2613 = vsel %vm2512, %v1970, 0
      %v2615 = vsel %vm2512, %v1971, 0
      %v2617 = vsel %vm2512, %v1973, 0
      %v2619 = vsel %vm2512, %v1974, 0
      %v2621 = vsel %vm2512, %v1976, 0
      %v2623 = vsel %vm2512, %v1977, 0
      %v2625 = vsel %vm2512, %v1979, 0
      %v2627 = vsel %vm2512, %v1980, 0
      %v2629 = vsel %vm2512, %v1982, 0
      %v2631 = vsel %vm2512, %v1983, 0
      %v2633 = vsel %vm2512, %v1985, 0
      %v2635 = vsel %vm2512, %v1986, 0
      %v2637 = vsel %vm2512, %v1988, 0
      %v2639 = vsel %vm2512, %v1989, 0
      %vm2641 = vcmask 1043456
      %v2643 = vsel %vm2641, %v2511, 0
      %2645 = vmatprep.subr.mxu0 0.0
      %2646 = vmatpush1.msra.mxu0 %v2643
      %2647 = vmatprep.subr.mxu0 0.0
      %2648 = vmatpush1.msra.mxu0 0.0
      %2649 = vmatprep.subr.mxu0 0.0
      %2650 = vmatpush1.msra.mxu0 0.0
      %2651 = vmatprep.subr.mxu0 0.0
      %2652 = vmatpush1.msra.mxu0 0.0
      %2653 = vmatprep.subr.mxu0 0.0
      %2654 = vmatpush1.msra.mxu0 0.0
      %2655 = vmatprep.subr.mxu0 0.0
      %2656 = vmatpush1.msra.mxu0 0.0
      %2657 = vmatprep.subr.mxu0 0.0
      %2658 = vmatpush1.msra.mxu0 0.0
      %2659 = vmatprep.subr.mxu0 0.0
      %2660 = vmatpush1.msra.mxu0 0.0
      %2661 = vmatprep.subr.mxu0 0.0
      %2662 = vmatpush1.msra.mxu0 0.0
      %2663 = vmatprep.subr.mxu0 0.0
      %2664 = vmatpush1.msra.mxu0 0.0
      %2665 = vmatprep.subr.mxu0 0.0
      %2666 = vmatpush1.msra.mxu0 0.0
      %2667 = vmatprep.subr.mxu0 0.0
      %2668 = vmatpush1.msra.mxu0 0.0
      %2669 = vmatprep.subr.mxu0 0.0
      %2670 = vmatpush1.msra.mxu0 0.0
      %2671 = vmatprep.subr.mxu0 0.0
      %2672 = vmatpush1.msra.mxu0 0.0
      %2673 = vmatprep.subr.mxu0 0.0
      %2674 = vmatpush1.msra.mxu0 0.0
      %2675 = vmatprep.subr.mxu0 0.0
      %2676 = vmatpush1.msra.mxu0 0.0
      %2677 = vmatprep.subr.mxu0 0.0
      %2678 = vmatpush1.msra.mxu0 0.0
      %2679 = vmatprep.subr.mxu0 0.0
      %2680 = vmatpush1.msra.mxu0 0.0
      %2681 = vmatprep.subr.mxu0 0.0
      %2682 = vmatpush1.msra.mxu0 0.0
      %2683 = vmatprep.subr.mxu0 0.0
      %2684 = vmatpush1.msra.mxu0 0.0
      %2685 = vmatprep.subr.mxu0 0.0
      %2686 = vmatpush1.msra.mxu0 0.0
      %2687 = vmatprep.subr.mxu0 0.0
      %2688 = vmatpush1.msra.mxu0 0.0
      %2689 = vmatprep.subr.mxu0 0.0
      %2690 = vmatpush1.msra.mxu0 0.0
      %2691 = vmatprep.subr.mxu0 0.0
      %2692 = vmatpush1.msra.mxu0 0.0
      %2693 = vmatprep.subr.mxu0 0.0
      %2694 = vmatpush1.msra.mxu0 0.0
      %2695 = vmatprep.subr.mxu0 0.0
      %2696 = vmatpush1.msra.mxu0 0.0
      %2697 = vmatprep.subr.mxu0 0.0
      %2698 = vmatpush1.msra.mxu0 0.0
      %2699 = vmatprep.subr.mxu0 0.0
      %2700 = vmatpush1.msra.mxu0 0.0
      %2701 = vmatprep.subr.mxu0 0.0
      %2702 = vmatpush1.msra.mxu0 0.0
      %2703 = vmatprep.subr.mxu0 0.0
      %2704 = vmatpush1.msra.mxu0 0.0
      %2705 = vmatprep.subr.mxu0 0.0
      %2706 = vmatpush1.msra.mxu0 0.0
      %2707 = vmatprep.subr.mxu0 0.0
      %2708 = vmatpush1.msra.mxu0 0.0
      %2709 = vmatprep.mubr.f32.mxu0 0.0
      %2710 = vmatmul.mubr.f32.gmra.mrb[0].mxu0 %v2513
      %v2711 = vpop.f32.mrb[0].mxu0
      %v2712 = vadd.f32 0.0, %v2711
      %v2713 = vpop.f32.mrb[0].mxu0
      %2714 = vmatprep.mubr.f32.mxu0 0.0
      %2715 = vmatmul.mubr.f32.gmra.mrb[0].mxu0 %v2515
      %v2716 = vpop.f32.mrb[0].mxu0
      %v2717 = vadd.f32 0.0, %v2716
      %v2718 = vpop.f32.mrb[0].mxu0
      %2719 = vmatprep.mubr.f32.mxu0 0.0
      %2720 = vmatmul.mubr.f32.gmra.mrb[0].mxu0 %v2517
      %v2721 = vpop.f32.mrb[0].mxu0
      %v2722 = vadd.f32 0.0, %v2721
      %v2723 = vpop.f32.mrb[0].mxu0
      %2724 = vmatprep.mubr.f32.mxu0 0.0
      %2725 = vmatmul.mubr.f32.gmra.mrb[0].mxu0 %v2519
      %v2726 = vpop.f32.mrb[0].mxu0
      %v2727 = vadd.f32 0.0, %v2726
      %v2728 = vpop.f32.mrb[0].mxu0
      %2729 = vmatprep.mubr.f32.mxu0 0.0
      %2730 = vmatmul.mubr.f32.gmra.mrb[0].mxu0 %v2521
      %v2731 = vpop.f32.mrb[0].mxu0
      %v2732 = vadd.f32 0.0, %v2731
      %v2733 = vpop.f32.mrb[0].mxu0
      %2734 = vmatprep.mubr.f32.mxu0 0.0
      %2735 = vmatmul.mubr.f32.gmra.mrb[0].mxu0 %v2523
      %v2736 = vpop.f32.mrb[0].mxu0
      %v2737 = vadd.f32 0.0, %v2736
      %v2738 = vpop.f32.mrb[0].mxu0
      %2739 = vmatprep.mubr.f32.mxu0 0.0
      %2740 = vmatmul.mubr.f32.gmra.mrb[0].mxu0 %v2525
      %v2741 = vpop.f32.mrb[0].mxu0
      %v2742 = vadd.f32 0.0, %v2741
      %v2743 = vpop.f32.mrb[0].mxu0
      %2744 = vmatprep.mubr.f32.mxu0 0.0
      %2745 = vmatmul.mubr.f32.gmra.mrb[0].mxu0 %v2527
      %v2746 = vpop.f32.mrb[0].mxu0
      %v2747 = vadd.f32 0.0, %v2746
      %v2748 = vpop.f32.mrb[0].mxu0
      %2749 = vmatprep.mubr.f32.mxu0 0.0
      %2750 = vmatmul.mubr.f32.gmra.mrb[0].mxu0 %v2529
      %v2751 = vpop.f32.mrb[0].mxu0
      %v2752 = vadd.f32 0.0, %v2751
      %v2753 = vpop.f32.mrb[0].mxu0
      %2754 = vmatprep.mubr.f32.mxu0 0.0
      %2755 = vmatmul.mubr.f32.gmra.mrb[0].mxu0 %v2531
      %v2756 = vpop.f32.mrb[0].mxu0
      %v2757 = vadd.f32 0.0, %v2756
      %v2758 = vpop.f32.mrb[0].mxu0
      %2759 = vmatprep.mubr.f32.mxu0 0.0
      %2760 = vmatmul.mubr.f32.gmra.mrb[0].mxu0 %v2533
      %v2761 = vpop.f32.mrb[0].mxu0
      %v2762 = vadd.f32 0.0, %v2761
      %v2763 = vpop.f32.mrb[0].mxu0
      %2764 = vmatprep.mubr.f32.mxu0 0.0
      %2765 = vmatmul.mubr.f32.gmra.mrb[0].mxu0 %v2535
      %v2766 = vpop.f32.mrb[0].mxu0
      %v2767 = vadd.f32 0.0, %v2766
      %v2768 = vpop.f32.mrb[0].mxu0
      %2769 = vmatprep.mubr.f32.mxu0 0.0
      %2770 = vmatmul.mubr.f32.gmra.mrb[0].mxu0 %v2537
      %v2771 = vpop.f32.mrb[0].mxu0
      %v2772 = vadd.f32 0.0, %v2771
      %v2773 = vpop.f32.mrb[0].mxu0
      %2774 = vmatprep.mubr.f32.mxu0 0.0
      %2775 = vmatmul.mubr.f32.gmra.mrb[0].mxu0 %v2539
      %v2776 = vpop.f32.mrb[0].mxu0
      %v2777 = vadd.f32 0.0, %v2776
      %v2778 = vpop.f32.mrb[0].mxu0
      %2779 = vmatprep.mubr.f32.mxu0 0.0
      %2780 = vmatmul.mubr.f32.gmra.mrb[0].mxu0 %v2541
      %v2781 = vpop.f32.mrb[0].mxu0
      %v2782 = vadd.f32 0.0, %v2781
      %v2783 = vpop.f32.mrb[0].mxu0
      %2784 = vmatprep.mubr.f32.mxu0 0.0
      %2785 = vmatmul.mubr.f32.gmra.mrb[0].mxu0 %v2543
      %v2786 = vpop.f32.mrb[0].mxu0
      %v2787 = vadd.f32 0.0, %v2786
      %v2788 = vpop.f32.mrb[0].mxu0
      %2789 = vmatprep.mubr.f32.mxu0 0.0
      %2790 = vmatmul.mubr.f32.gmra.mrb[0].mxu0 %v2545
      %v2791 = vpop.f32.mrb[0].mxu0
      %v2792 = vadd.f32 0.0, %v2791
      %v2793 = vpop.f32.mrb[0].mxu0
      %2794 = vmatprep.mubr.f32.mxu0 0.0
      %2795 = vmatmul.mubr.f32.gmra.mrb[0].mxu0 %v2547
      %v2796 = vpop.f32.mrb[0].mxu0
      %v2797 = vadd.f32 0.0, %v2796
      %v2798 = vpop.f32.mrb[0].mxu0
      %2799 = vmatprep.mubr.f32.mxu0 0.0
      %2800 = vmatmul.mubr.f32.gmra.mrb[0].mxu0 %v2549
      %v2801 = vpop.f32.mrb[0].mxu0
      %v2802 = vadd.f32 0.0, %v2801
      %v2803 = vpop.f32.mrb[0].mxu0
      %2804 = vmatprep.mubr.f32.mxu0 0.0
      %2805 = vmatmul.mubr.f32.gmra.mrb[0].mxu0 %v2551
      %v2806 = vpop.f32.mrb[0].mxu0
      %v2807 = vadd.f32 0.0, %v2806
      %v2808 = vpop.f32.mrb[0].mxu0
      %2809 = vmatprep.mubr.f32.mxu0 0.0
      %2810 = vmatmul.mubr.f32.gmra.mrb[0].mxu0 %v2553
      %v2811 = vpop.f32.mrb[0].mxu0
      %v2812 = vadd.f32 0.0, %v2811
      %v2813 = vpop.f32.mrb[0].mxu0
      %2814 = vmatprep.mubr.f32.mxu0 0.0
      %2815 = vmatmul.mubr.f32.gmra.mrb[0].mxu0 %v2555
      %v2816 = vpop.f32.mrb[0].mxu0
      %v2817 = vadd.f32 0.0, %v2816
      %v2818 = vpop.f32.mrb[0].mxu0
      %2819 = vmatprep.mubr.f32.mxu0 0.0
      %2820 = vmatmul.mubr.f32.gmra.mrb[0].mxu0 %v2557
      %v2821 = vpop.f32.mrb[0].mxu0
      %v2822 = vadd.f32 0.0, %v2821
      %v2823 = vpop.f32.mrb[0].mxu0
      %2824 = vmatprep.mubr.f32.mxu0 0.0
      %2825 = vmatmul.mubr.f32.gmra.mrb[0].mxu0 %v2559
      %v2826 = vpop.f32.mrb[0].mxu0
      %v2827 = vadd.f32 0.0, %v2826
      %v2828 = vpop.f32.mrb[0].mxu0
      %2829 = vmatprep.mubr.f32.mxu0 0.0
      %2830 = vmatmul.mubr.f32.gmra.mrb[0].mxu0 %v2561
      %v2831 = vpop.f32.mrb[0].mxu0
      %v2832 = vadd.f32 0.0, %v2831
      %v2833 = vpop.f32.mrb[0].mxu0
      %2834 = vmatprep.mubr.f32.mxu0 0.0
      %2835 = vmatmul.mubr.f32.gmra.mrb[0].mxu0 %v2563
      %v2836 = vpop.f32.mrb[0].mxu0
      %v2837 = vadd.f32 0.0, %v2836
      %v2838 = vpop.f32.mrb[0].mxu0
      %2839 = vmatprep.mubr.f32.mxu0 0.0
      %2840 = vmatmul.mubr.f32.gmra.mrb[0].mxu0 %v2565
      %v2841 = vpop.f32.mrb[0].mxu0
      %v2842 = vadd.f32 0.0, %v2841
      %v2843 = vpop.f32.mrb[0].mxu0
      %2844 = vmatprep.mubr.f32.mxu0 0.0
      %2845 = vmatmul.mubr.f32.gmra.mrb[0].mxu0 %v2567
      %v2846 = vpop.f32.mrb[0].mxu0
      %v2847 = vadd.f32 0.0, %v2846
      %v2848 = vpop.f32.mrb[0].mxu0
      %2849 = vmatprep.mubr.f32.mxu0 0.0
      %2850 = vmatmul.mubr.f32.gmra.mrb[0].mxu0 %v2569
      %v2851 = vpop.f32.mrb[0].mxu0
      %v2852 = vadd.f32 0.0, %v2851
      %v2853 = vpop.f32.mrb[0].mxu0
      %2854 = vmatprep.mubr.f32.mxu0 0.0
      %2855 = vmatmul.mubr.f32.gmra.mrb[0].mxu0 %v2571
      %v2856 = vpop.f32.mrb[0].mxu0
      %v2857 = vadd.f32 0.0, %v2856
      %v2858 = vpop.f32.mrb[0].mxu0
      %2859 = vmatprep.mubr.f32.mxu0 0.0
      %2860 = vmatmul.mubr.f32.gmra.mrb[0].mxu0 %v2573
      %v2861 = vpop.f32.mrb[0].mxu0
      %v2862 = vadd.f32 0.0, %v2861
      %v2863 = vpop.f32.mrb[0].mxu0
      %2864 = vmatprep.mubr.f32.mxu0 0.0
      %2865 = vmatmul.mubr.f32.gmra.mrb[0].mxu0 %v2575
      %v2866 = vpop.f32.mrb[0].mxu0
      %v2867 = vadd.f32 0.0, %v2866
      %v2868 = vpop.f32.mrb[0].mxu0
      %2869 = vmatprep.mubr.f32.mxu0 0.0
      %2870 = vmatmul.mubr.f32.gmra.mrb[0].mxu0 %v2577
      %v2871 = vpop.f32.mrb[0].mxu0
      %v2872 = vadd.f32 0.0, %v2871
      %v2873 = vpop.f32.mrb[0].mxu0
      %2874 = vmatprep.mubr.f32.mxu0 0.0
      %2875 = vmatmul.mubr.f32.gmra.mrb[0].mxu0 %v2579
      %v2876 = vpop.f32.mrb[0].mxu0
      %v2877 = vadd.f32 0.0, %v2876
      %v2878 = vpop.f32.mrb[0].mxu0
      %2879 = vmatprep.mubr.f32.mxu0 0.0
      %2880 = vmatmul.mubr.f32.gmra.mrb[0].mxu0 %v2581
      %v2881 = vpop.f32.mrb[0].mxu0
      %v2882 = vadd.f32 0.0, %v2881
      %v2883 = vpop.f32.mrb[0].mxu0
      %2884 = vmatprep.mubr.f32.mxu0 0.0
      %2885 = vmatmul.mubr.f32.gmra.mrb[0].mxu0 %v2583
      %v2886 = vpop.f32.mrb[0].mxu0
      %v2887 = vadd.f32 0.0, %v2886
      %v2888 = vpop.f32.mrb[0].mxu0
      %2889 = vmatprep.mubr.f32.mxu0 0.0
      %2890 = vmatmul.mubr.f32.gmra.mrb[0].mxu0 %v2585
      %v2891 = vpop.f32.mrb[0].mxu0
      %v2892 = vadd.f32 0.0, %v2891
      %v2893 = vpop.f32.mrb[0].mxu0
      %2894 = vmatprep.mubr.f32.mxu0 0.0
      %2895 = vmatmul.mubr.f32.gmra.mrb[0].mxu0 %v2587
      %v2896 = vpop.f32.mrb[0].mxu0
      %v2897 = vadd.f32 0.0, %v2896
      %v2898 = vpop.f32.mrb[0].mxu0
      %2899 = vmatprep.mubr.f32.mxu0 0.0
      %2900 = vmatmul.mubr.f32.gmra.mrb[0].mxu0 %v2589
      %v2901 = vpop.f32.mrb[0].mxu0
      %v2902 = vadd.f32 0.0, %v2901
      %v2903 = vpop.f32.mrb[0].mxu0
      %2904 = vmatprep.mubr.f32.mxu0 0.0
      %2905 = vmatmul.mubr.f32.gmra.mrb[0].mxu0 %v2591
      %v2906 = vpop.f32.mrb[0].mxu0
      %v2907 = vadd.f32 0.0, %v2906
      %v2908 = vpop.f32.mrb[0].mxu0
      %2909 = vmatprep.mubr.f32.mxu0 0.0
      %2910 = vmatmul.mubr.f32.gmra.mrb[0].mxu0 %v2593
      %v2911 = vpop.f32.mrb[0].mxu0
      %v2912 = vadd.f32 0.0, %v2911
      %v2913 = vpop.f32.mrb[0].mxu0
      %2914 = vmatprep.mubr.f32.mxu0 0.0
      %2915 = vmatmul.mubr.f32.gmra.mrb[0].mxu0 %v2595
      %v2916 = vpop.f32.mrb[0].mxu0
      %v2917 = vadd.f32 0.0, %v2916
      %v2918 = vpop.f32.mrb[0].mxu0
      %2919 = vmatprep.mubr.f32.mxu0 0.0
      %2920 = vmatmul.mubr.f32.gmra.mrb[0].mxu0 %v2597
      %v2921 = vpop.f32.mrb[0].mxu0
      %v2922 = vadd.f32 0.0, %v2921
      %v2923 = vpop.f32.mrb[0].mxu0
      %2924 = vmatprep.mubr.f32.mxu0 0.0
      %2925 = vmatmul.mubr.f32.gmra.mrb[0].mxu0 %v2599
      %v2926 = vpop.f32.mrb[0].mxu0
      %v2927 = vadd.f32 0.0, %v2926
      %v2928 = vpop.f32.mrb[0].mxu0
      %2929 = vmatprep.mubr.f32.mxu0 0.0
      %2930 = vmatmul.mubr.f32.gmra.mrb[0].mxu0 %v2601
      %v2931 = vpop.f32.mrb[0].mxu0
      %v2932 = vadd.f32 0.0, %v2931
      %v2933 = vpop.f32.mrb[0].mxu0
      %2934 = vmatprep.mubr.f32.mxu0 0.0
      %2935 = vmatmul.mubr.f32.gmra.mrb[0].mxu0 %v2603
      %v2936 = vpop.f32.mrb[0].mxu0
      %v2937 = vadd.f32 0.0, %v2936
      %v2938 = vpop.f32.mrb[0].mxu0
      %2939 = vmatprep.mubr.f32.mxu0 0.0
      %2940 = vmatmul.mubr.f32.gmra.mrb[0].mxu0 %v2605
      %v2941 = vpop.f32.mrb[0].mxu0
      %v2942 = vadd.f32 0.0, %v2941
      %v2943 = vpop.f32.mrb[0].mxu0
      %2944 = vmatprep.mubr.f32.mxu0 0.0
      %2945 = vmatmul.mubr.f32.gmra.mrb[0].mxu0 %v2607
      %v2946 = vpop.f32.mrb[0].mxu0
      %v2947 = vadd.f32 0.0, %v2946
      %v2948 = vpop.f32.mrb[0].mxu0
      %2949 = vmatprep.mubr.f32.mxu0 0.0
      %2950 = vmatmul.mubr.f32.gmra.mrb[0].mxu0 %v2609
      %v2951 = vpop.f32.mrb[0].mxu0
      %v2952 = vadd.f32 0.0, %v2951
      %v2953 = vpop.f32.mrb[0].mxu0
      %2954 = vmatprep.mubr.f32.mxu0 0.0
      %2955 = vmatmul.mubr.f32.gmra.mrb[0].mxu0 %v2611
      %v2956 = vpop.f32.mrb[0].mxu0
      %v2957 = vadd.f32 0.0, %v2956
      %v2958 = vpop.f32.mrb[0].mxu0
      %2959 = vmatprep.mubr.f32.mxu0 0.0
      %2960 = vmatmul.mubr.f32.gmra.mrb[0].mxu0 %v2613
      %v2961 = vpop.f32.mrb[0].mxu0
      %v2962 = vadd.f32 0.0, %v2961
      %v2963 = vpop.f32.mrb[0].mxu0
      %2964 = vmatprep.mubr.f32.mxu0 0.0
      %2965 = vmatmul.mubr.f32.gmra.mrb[0].mxu0 %v2615
      %v2966 = vpop.f32.mrb[0].mxu0
      %v2967 = vadd.f32 0.0, %v2966
      %v2968 = vpop.f32.mrb[0].mxu0
      %2969 = vmatprep.mubr.f32.mxu0 0.0
      %2970 = vmatmul.mubr.f32.gmra.mrb[0].mxu0 %v2617
      %v2971 = vpop.f32.mrb[0].mxu0
      %v2972 = vadd.f32 0.0, %v2971
      %v2973 = vpop.f32.mrb[0].mxu0
      %2974 = vmatprep.mubr.f32.mxu0 0.0
      %2975 = vmatmul.mubr.f32.gmra.mrb[0].mxu0 %v2619
      %v2976 = vpop.f32.mrb[0].mxu0
      %v2977 = vadd.f32 0.0, %v2976
      %v2978 = vpop.f32.mrb[0].mxu0
      %2979 = vmatprep.mubr.f32.mxu0 0.0
      %2980 = vmatmul.mubr.f32.gmra.mrb[0].mxu0 %v2621
      %v2981 = vpop.f32.mrb[0].mxu0
      %v2982 = vadd.f32 0.0, %v2981
      %v2983 = vpop.f32.mrb[0].mxu0
      %2984 = vmatprep.mubr.f32.mxu0 0.0
      %2985 = vmatmul.mubr.f32.gmra.mrb[0].mxu0 %v2623
      %v2986 = vpop.f32.mrb[0].mxu0
      %v2987 = vadd.f32 0.0, %v2986
      %v2988 = vpop.f32.mrb[0].mxu0
      %2989 = vmatprep.mubr.f32.mxu0 0.0
      %2990 = vmatmul.mubr.f32.gmra.mrb[0].mxu0 %v2625
      %v2991 = vpop.f32.mrb[0].mxu0
      %v2992 = vadd.f32 0.0, %v2991
      %v2993 = vpop.f32.mrb[0].mxu0
      %2994 = vmatprep.mubr.f32.mxu0 0.0
      %2995 = vmatmul.mubr.f32.gmra.mrb[0].mxu0 %v2627
      %v2996 = vpop.f32.mrb[0].mxu0
      %v2997 = vadd.f32 0.0, %v2996
      %v2998 = vpop.f32.mrb[0].mxu0
      %2999 = vmatprep.mubr.f32.mxu0 0.0
      %3000 = vmatmul.mubr.f32.gmra.mrb[0].mxu0 %v2629
      %v3001 = vpop.f32.mrb[0].mxu0
      %v3002 = vadd.f32 0.0, %v3001
      %v3003 = vpop.f32.mrb[0].mxu0
      %3004 = vmatprep.mubr.f32.mxu0 0.0
      %3005 = vmatmul.mubr.f32.gmra.mrb[0].mxu0 %v2631
      %v3006 = vpop.f32.mrb[0].mxu0
      %v3007 = vadd.f32 0.0, %v3006
      %v3008 = vpop.f32.mrb[0].mxu0
      %3009 = vmatprep.mubr.f32.mxu0 0.0
      %3010 = vmatmul.mubr.f32.gmra.mrb[0].mxu0 %v2633
      %v3011 = vpop.f32.mrb[0].mxu0
      %v3012 = vadd.f32 0.0, %v3011
      %v3013 = vpop.f32.mrb[0].mxu0
      %3014 = vmatprep.mubr.f32.mxu0 0.0
      %3015 = vmatmul.mubr.f32.gmra.mrb[0].mxu0 %v2635
      %v3016 = vpop.f32.mrb[0].mxu0
      %v3017 = vadd.f32 0.0, %v3016
      %v3018 = vpop.f32.mrb[0].mxu0
      %3019 = vmatprep.mubr.f32.mxu0 0.0
      %3020 = vmatmul.mubr.f32.gmra.mrb[0].mxu0 %v2637
      %v3021 = vpop.f32.mrb[0].mxu0
      %v3022 = vadd.f32 0.0, %v3021
      %v3023 = vpop.f32.mrb[0].mxu0
      %3024 = vmatprep.mubr.f32.mxu0 0.0
      %3025 = vmatmul.mubr.f32.gmra.mrb[0].mxu0 %v2639
      %v3026 = vpop.f32.mrb[0].mxu0
      %v3027 = vadd.f32 0.0, %v3026
      %v3028 = vpop.f32.mrb[0].mxu0
      %3029 = vdwg.mxu0
      %v3030 = vsel %vm2512, %v1790, 0
      %v3032 = vsel %vm2512, %v1791, 0
      %v3034 = vsel %vm2512, %v1793, 0
      %v3036 = vsel %vm2512, %v1794, 0
      %v3038 = vsel %vm2512, %v1796, 0
      %v3040 = vsel %vm2512, %v1797, 0
      %v3042 = vsel %vm2512, %v1799, 0
      %v3044 = vsel %vm2512, %v1800, 0
      %v3046 = vsel %vm2512, %v1802, 0
      %v3048 = vsel %vm2512, %v1803, 0
      %v3050 = vsel %vm2512, %v1805, 0
      %v3052 = vsel %vm2512, %v1806, 0
      %v3054 = vsel %vm2512, %v1808, 0
      %v3056 = vsel %vm2512, %v1809, 0
      %v3058 = vsel %vm2512, %v1811, 0
      %v3060 = vsel %vm2512, %v1812, 0
      %v3062 = vsel %vm2512, %v1814, 0
      %v3064 = vsel %vm2512, %v1815, 0
      %v3066 = vsel %vm2512, %v1817, 0
      %v3068 = vsel %vm2512, %v1818, 0
      %v3070 = vsel %vm2512, %v1820, 0
      %v3072 = vsel %vm2512, %v1821, 0
      %v3074 = vsel %vm2512, %v1823, 0
      %v3076 = vsel %vm2512, %v1824, 0
      %v3078 = vsel %vm2512, %v1826, 0
      %v3080 = vsel %vm2512, %v1827, 0
      %v3082 = vsel %vm2512, %v1829, 0
      %v3084 = vsel %vm2512, %v1830, 0
      %v3086 = vsel %vm2512, %v1832, 0
      %v3088 = vsel %vm2512, %v1833, 0
      %v3090 = vsel %vm2512, %v1835, 0
      %v3092 = vsel %vm2512, %v1836, 0
      %v3094 = vsel %vm2512, %v1838, 0
      %v3096 = vsel %vm2512, %v1839, 0
      %v3098 = vsel %vm2512, %v1841, 0
      %v3100 = vsel %vm2512, %v1842, 0
      %v3102 = vsel %vm2512, %v1844, 0
      %v3104 = vsel %vm2512, %v1845, 0
      %v3106 = vsel %vm2512, %v1847, 0
      %v3108 = vsel %vm2512, %v1848, 0
      %v3110 = vsel %vm2512, %v1850, 0
      %v3112 = vsel %vm2512, %v1851, 0
      %v3114 = vsel %vm2512, %v1853, 0
      %v3116 = vsel %vm2512, %v1854, 0
      %v3118 = vsel %vm2512, %v1856, 0
      %v3120 = vsel %vm2512, %v1857, 0
      %v3122 = vsel %vm2512, %v1859, 0
      %v3124 = vsel %vm2512, %v1860, 0
      %v3126 = vsel %vm2512, %v1862, 0
      %v3128 = vsel %vm2512, %v1863, 0
      %v3130 = vsel %vm2512, %v1865, 0
      %v3132 = vsel %vm2512, %v1866, 0
      %v3134 = vsel %vm2512, %v1868, 0
      %v3136 = vsel %vm2512, %v1869, 0
      %v3138 = vsel %vm2512, %v1871, 0
      %v3140 = vsel %vm2512, %v1872, 0
      %v3142 = vsel %vm2512, %v1874, 0
      %v3144 = vsel %vm2512, %v1875, 0
      %v3146 = vsel %vm2512, %v1877, 0
      %v3148 = vsel %vm2512, %v1878, 0
      %v3150 = vsel %vm2512, %v1880, 0
      %v3152 = vsel %vm2512, %v1881, 0
      %v3154 = vsel %vm2512, %v1883, 0
      %v3156 = vsel %vm2512, %v1884, 0
      %v3159 = vsel %vm2641, %v2509, 0
      %3161 = vmatprep.subr.mxu0 0.0
      %3162 = vmatpush1.msra.mxu0 %v3159
      %3163 = vmatprep.subr.mxu0 0.0
      %3164 = vmatpush1.msra.mxu0 0.0
      %3165 = vmatprep.subr.mxu0 0.0
      %3166 = vmatpush1.msra.mxu0 0.0
      %3167 = vmatprep.subr.mxu0 0.0
      %3168 = vmatpush1.msra.mxu0 0.0
      %3169 = vmatprep.subr.mxu0 0.0
      %3170 = vmatpush1.msra.mxu0 0.0
      %3171 = vmatprep.subr.mxu0 0.0
      %3172 = vmatpush1.msra.mxu0 0.0
      %3173 = vmatprep.subr.mxu0 0.0
      %3174 = vmatpush1.msra.mxu0 0.0
      %3175 = vmatprep.subr.mxu0 0.0
      %3176 = vmatpush1.msra.mxu0 0.0
      %3177 = vmatprep.subr.mxu0 0.0
      %3178 = vmatpush1.msra.mxu0 0.0
      %3179 = vmatprep.subr.mxu0 0.0
      %3180 = vmatpush1.msra.mxu0 0.0
      %3181 = vmatprep.subr.mxu0 0.0
      %3182 = vmatpush1.msra.mxu0 0.0
      %3183 = vmatprep.subr.mxu0 0.0
      %3184 = vmatpush1.msra.mxu0 0.0
      %3185 = vmatprep.subr.mxu0 0.0
      %3186 = vmatpush1.msra.mxu0 0.0
      %3187 = vmatprep.subr.mxu0 0.0
      %3188 = vmatpush1.msra.mxu0 0.0
      %3189 = vmatprep.subr.mxu0 0.0
      %3190 = vmatpush1.msra.mxu0 0.0
      %3191 = vmatprep.subr.mxu0 0.0
      %3192 = vmatpush1.msra.mxu0 0.0
      %3193 = vmatprep.subr.mxu0 0.0
      %3194 = vmatpush1.msra.mxu0 0.0
      %3195 = vmatprep.subr.mxu0 0.0
      %3196 = vmatpush1.msra.mxu0 0.0
      %3197 = vmatprep.subr.mxu0 0.0
      %3198 = vmatpush1.msra.mxu0 0.0
      %3199 = vmatprep.subr.mxu0 0.0
      %3200 = vmatpush1.msra.mxu0 0.0
      %3201 = vmatprep.subr.mxu0 0.0
      %3202 = vmatpush1.msra.mxu0 0.0
      %3203 = vmatprep.subr.mxu0 0.0
      %3204 = vmatpush1.msra.mxu0 0.0
      %3205 = vmatprep.subr.mxu0 0.0
      %3206 = vmatpush1.msra.mxu0 0.0
      %3207 = vmatprep.subr.mxu0 0.0
      %3208 = vmatpush1.msra.mxu0 0.0
      %3209 = vmatprep.subr.mxu0 0.0
      %3210 = vmatpush1.msra.mxu0 0.0
      %3211 = vmatprep.subr.mxu0 0.0
      %3212 = vmatpush1.msra.mxu0 0.0
      %3213 = vmatprep.subr.mxu0 0.0
      %3214 = vmatpush1.msra.mxu0 0.0
      %3215 = vmatprep.subr.mxu0 0.0
      %3216 = vmatpush1.msra.mxu0 0.0
      %3217 = vmatprep.subr.mxu0 0.0
      %3218 = vmatpush1.msra.mxu0 0.0
      %3219 = vmatprep.subr.mxu0 0.0
      %3220 = vmatpush1.msra.mxu0 0.0
      %3221 = vmatprep.subr.mxu0 0.0
      %3222 = vmatpush1.msra.mxu0 0.0
      %3223 = vmatprep.subr.mxu0 0.0
      %3224 = vmatpush1.msra.mxu0 0.0
      %3225 = vmatprep.mubr.f32.mxu0 0.0
      %3226 = vmatmul.mubr.f32.gmra.mrb[0].mxu0 %v3030
      %v3227 = vpop.f32.mrb[0].mxu0
      %v3228 = vadd.f32 %v2712, %v3227
      %v3229 = vpop.f32.mrb[0].mxu0
      %3230 = vmatprep.mubr.f32.mxu0 0.0
      %3231 = vmatmul.mubr.f32.gmra.mrb[0].mxu0 %v3032
      %v3232 = vpop.f32.mrb[0].mxu0
      %v3233 = vadd.f32 %v2717, %v3232
      %v3234 = vpop.f32.mrb[0].mxu0
      %3235 = vmatprep.mubr.f32.mxu0 0.0
      %3236 = vmatmul.mubr.f32.gmra.mrb[0].mxu0 %v3034
      %v3237 = vpop.f32.mrb[0].mxu0
      %v3238 = vadd.f32 %v2722, %v3237
      %v3239 = vpop.f32.mrb[0].mxu0
      %3240 = vmatprep.mubr.f32.mxu0 0.0
      %3241 = vmatmul.mubr.f32.gmra.mrb[0].mxu0 %v3036
      %v3242 = vpop.f32.mrb[0].mxu0
      %v3243 = vadd.f32 %v2727, %v3242
      %v3244 = vpop.f32.mrb[0].mxu0
      %3245 = vmatprep.mubr.f32.mxu0 0.0
      %3246 = vmatmul.mubr.f32.gmra.mrb[0].mxu0 %v3038
      %v3247 = vpop.f32.mrb[0].mxu0
      %v3248 = vadd.f32 %v2732, %v3247
      %v3249 = vpop.f32.mrb[0].mxu0
      %3250 = vmatprep.mubr.f32.mxu0 0.0
      %3251 = vmatmul.mubr.f32.gmra.mrb[0].mxu0 %v3040
      %v3252 = vpop.f32.mrb[0].mxu0
      %v3253 = vadd.f32 %v2737, %v3252
      %v3254 = vpop.f32.mrb[0].mxu0
      %3255 = vmatprep.mubr.f32.mxu0 0.0
      %3256 = vmatmul.mubr.f32.gmra.mrb[0].mxu0 %v3042
      %v3257 = vpop.f32.mrb[0].mxu0
      %v3258 = vadd.f32 %v2742, %v3257
      %v3259 = vpop.f32.mrb[0].mxu0
      %3260 = vmatprep.mubr.f32.mxu0 0.0
      %3261 = vmatmul.mubr.f32.gmra.mrb[0].mxu0 %v3044
      %v3262 = vpop.f32.mrb[0].mxu0
      %v3263 = vadd.f32 %v2747, %v3262
      %v3264 = vpop.f32.mrb[0].mxu0
      %3265 = vmatprep.mubr.f32.mxu0 0.0
      %3266 = vmatmul.mubr.f32.gmra.mrb[0].mxu0 %v3046
      %v3267 = vpop.f32.mrb[0].mxu0
      %v3268 = vadd.f32 %v2752, %v3267
      %v3269 = vpop.f32.mrb[0].mxu0
      %3270 = vmatprep.mubr.f32.mxu0 0.0
      %3271 = vmatmul.mubr.f32.gmra.mrb[0].mxu0 %v3048
      %v3272 = vpop.f32.mrb[0].mxu0
      %v3273 = vadd.f32 %v2757, %v3272
      %v3274 = vpop.f32.mrb[0].mxu0
      %3275 = vmatprep.mubr.f32.mxu0 0.0
      %3276 = vmatmul.mubr.f32.gmra.mrb[0].mxu0 %v3050
      %v3277 = vpop.f32.mrb[0].mxu0
      %v3278 = vadd.f32 %v2762, %v3277
      %v3279 = vpop.f32.mrb[0].mxu0
      %3280 = vmatprep.mubr.f32.mxu0 0.0
      %3281 = vmatmul.mubr.f32.gmra.mrb[0].mxu0 %v3052
      %v3282 = vpop.f32.mrb[0].mxu0
      %v3283 = vadd.f32 %v2767, %v3282
      %v3284 = vpop.f32.mrb[0].mxu0
      %3285 = vmatprep.mubr.f32.mxu0 0.0
      %3286 = vmatmul.mubr.f32.gmra.mrb[0].mxu0 %v3054
      %v3287 = vpop.f32.mrb[0].mxu0
      %v3288 = vadd.f32 %v2772, %v3287
      %v3289 = vpop.f32.mrb[0].mxu0
      %3290 = vmatprep.mubr.f32.mxu0 0.0
      %3291 = vmatmul.mubr.f32.gmra.mrb[0].mxu0 %v3056
      %v3292 = vpop.f32.mrb[0].mxu0
      %v3293 = vadd.f32 %v2777, %v3292
      %v3294 = vpop.f32.mrb[0].mxu0
      %3295 = vmatprep.mubr.f32.mxu0 0.0
      %3296 = vmatmul.mubr.f32.gmra.mrb[0].mxu0 %v3058
      %v3297 = vpop.f32.mrb[0].mxu0
      %v3298 = vadd.f32 %v2782, %v3297
      %v3299 = vpop.f32.mrb[0].mxu0
      %3300 = vmatprep.mubr.f32.mxu0 0.0
      %3301 = vmatmul.mubr.f32.gmra.mrb[0].mxu0 %v3060
      %v3302 = vpop.f32.mrb[0].mxu0
      %v3303 = vadd.f32 %v2787, %v3302
      %v3304 = vpop.f32.mrb[0].mxu0
      %3305 = vmatprep.mubr.f32.mxu0 0.0
      %3306 = vmatmul.mubr.f32.gmra.mrb[0].mxu0 %v3062
      %v3307 = vpop.f32.mrb[0].mxu0
      %v3308 = vadd.f32 %v2792, %v3307
      %v3309 = vpop.f32.mrb[0].mxu0
      %3310 = vmatprep.mubr.f32.mxu0 0.0
      %3311 = vmatmul.mubr.f32.gmra.mrb[0].mxu0 %v3064
      %v3312 = vpop.f32.mrb[0].mxu0
      %v3313 = vadd.f32 %v2797, %v3312
      %v3314 = vpop.f32.mrb[0].mxu0
      %3315 = vmatprep.mubr.f32.mxu0 0.0
      %3316 = vmatmul.mubr.f32.gmra.mrb[0].mxu0 %v3066
      %v3317 = vpop.f32.mrb[0].mxu0
      %v3318 = vadd.f32 %v2802, %v3317
      %v3319 = vpop.f32.mrb[0].mxu0
      %3320 = vmatprep.mubr.f32.mxu0 0.0
      %3321 = vmatmul.mubr.f32.gmra.mrb[0].mxu0 %v3068
      %v3322 = vpop.f32.mrb[0].mxu0
      %v3323 = vadd.f32 %v2807, %v3322
      %v3324 = vpop.f32.mrb[0].mxu0
      %3325 = vmatprep.mubr.f32.mxu0 0.0
      %3326 = vmatmul.mubr.f32.gmra.mrb[0].mxu0 %v3070
      %v3327 = vpop.f32.mrb[0].mxu0
      %v3328 = vadd.f32 %v2812, %v3327
      %v3329 = vpop.f32.mrb[0].mxu0
      %3330 = vmatprep.mubr.f32.mxu0 0.0
      %3331 = vmatmul.mubr.f32.gmra.mrb[0].mxu0 %v3072
      %v3332 = vpop.f32.mrb[0].mxu0
      %v3333 = vadd.f32 %v2817, %v3332
      %v3334 = vpop.f32.mrb[0].mxu0
      %3335 = vmatprep.mubr.f32.mxu0 0.0
      %3336 = vmatmul.mubr.f32.gmra.mrb[0].mxu0 %v3074
      %v3337 = vpop.f32.mrb[0].mxu0
      %v3338 = vadd.f32 %v2822, %v3337
      %v3339 = vpop.f32.mrb[0].mxu0
      %3340 = vmatprep.mubr.f32.mxu0 0.0
      %3341 = vmatmul.mubr.f32.gmra.mrb[0].mxu0 %v3076
      %v3342 = vpop.f32.mrb[0].mxu0
      %v3343 = vadd.f32 %v2827, %v3342
      %v3344 = vpop.f32.mrb[0].mxu0
      %3345 = vmatprep.mubr.f32.mxu0 0.0
      %3346 = vmatmul.mubr.f32.gmra.mrb[0].mxu0 %v3078
      %v3347 = vpop.f32.mrb[0].mxu0
      %v3348 = vadd.f32 %v2832, %v3347
      %v3349 = vpop.f32.mrb[0].mxu0
      %3350 = vmatprep.mubr.f32.mxu0 0.0
      %3351 = vmatmul.mubr.f32.gmra.mrb[0].mxu0 %v3080
      %v3352 = vpop.f32.mrb[0].mxu0
      %v3353 = vadd.f32 %v2837, %v3352
      %v3354 = vpop.f32.mrb[0].mxu0
      %3355 = vmatprep.mubr.f32.mxu0 0.0
      %3356 = vmatmul.mubr.f32.gmra.mrb[0].mxu0 %v3082
      %v3357 = vpop.f32.mrb[0].mxu0
      %v3358 = vadd.f32 %v2842, %v3357
      %v3359 = vpop.f32.mrb[0].mxu0
      %3360 = vmatprep.mubr.f32.mxu0 0.0
      %3361 = vmatmul.mubr.f32.gmra.mrb[0].mxu0 %v3084
      %v3362 = vpop.f32.mrb[0].mxu0
      %v3363 = vadd.f32 %v2847, %v3362
      %v3364 = vpop.f32.mrb[0].mxu0
      %3365 = vmatprep.mubr.f32.mxu0 0.0
      %3366 = vmatmul.mubr.f32.gmra.mrb[0].mxu0 %v3086
      %v3367 = vpop.f32.mrb[0].mxu0
      %v3368 = vadd.f32 %v2852, %v3367
      %v3369 = vpop.f32.mrb[0].mxu0
      %3370 = vmatprep.mubr.f32.mxu0 0.0
      %3371 = vmatmul.mubr.f32.gmra.mrb[0].mxu0 %v3088
      %v3372 = vpop.f32.mrb[0].mxu0
      %v3373 = vadd.f32 %v2857, %v3372
      %v3374 = vpop.f32.mrb[0].mxu0
      %3375 = vmatprep.mubr.f32.mxu0 0.0
      %3376 = vmatmul.mubr.f32.gmra.mrb[0].mxu0 %v3090
      %v3377 = vpop.f32.mrb[0].mxu0
      %v3378 = vadd.f32 %v2862, %v3377
      %v3379 = vpop.f32.mrb[0].mxu0
      %3380 = vmatprep.mubr.f32.mxu0 0.0
      %3381 = vmatmul.mubr.f32.gmra.mrb[0].mxu0 %v3092
      %v3382 = vpop.f32.mrb[0].mxu0
      %v3383 = vadd.f32 %v2867, %v3382
      %v3384 = vpop.f32.mrb[0].mxu0
      %3385 = vmatprep.mubr.f32.mxu0 0.0
      %3386 = vmatmul.mubr.f32.gmra.mrb[0].mxu0 %v3094
      %v3387 = vpop.f32.mrb[0].mxu0
      %v3388 = vadd.f32 %v2872, %v3387
      %v3389 = vpop.f32.mrb[0].mxu0
      %3390 = vmatprep.mubr.f32.mxu0 0.0
      %3391 = vmatmul.mubr.f32.gmra.mrb[0].mxu0 %v3096
      %v3392 = vpop.f32.mrb[0].mxu0
      %v3393 = vadd.f32 %v2877, %v3392
      %v3394 = vpop.f32.mrb[0].mxu0
      %3395 = vmatprep.mubr.f32.mxu0 0.0
      %3396 = vmatmul.mubr.f32.gmra.mrb[0].mxu0 %v3098
      %v3397 = vpop.f32.mrb[0].mxu0
      %v3398 = vadd.f32 %v2882, %v3397
      %v3399 = vpop.f32.mrb[0].mxu0
      %3400 = vmatprep.mubr.f32.mxu0 0.0
      %3401 = vmatmul.mubr.f32.gmra.mrb[0].mxu0 %v3100
      %v3402 = vpop.f32.mrb[0].mxu0
      %v3403 = vadd.f32 %v2887, %v3402
      %v3404 = vpop.f32.mrb[0].mxu0
      %3405 = vmatprep.mubr.f32.mxu0 0.0
      %3406 = vmatmul.mubr.f32.gmra.mrb[0].mxu0 %v3102
      %v3407 = vpop.f32.mrb[0].mxu0
      %v3408 = vadd.f32 %v2892, %v3407
      %v3409 = vpop.f32.mrb[0].mxu0
      %3410 = vmatprep.mubr.f32.mxu0 0.0
      %3411 = vmatmul.mubr.f32.gmra.mrb[0].mxu0 %v3104
      %v3412 = vpop.f32.mrb[0].mxu0
      %v3413 = vadd.f32 %v2897, %v3412
      %v3414 = vpop.f32.mrb[0].mxu0
      %3415 = vmatprep.mubr.f32.mxu0 0.0
      %3416 = vmatmul.mubr.f32.gmra.mrb[0].mxu0 %v3106
      %v3417 = vpop.f32.mrb[0].mxu0
      %v3418 = vadd.f32 %v2902, %v3417
      %v3419 = vpop.f32.mrb[0].mxu0
      %3420 = vmatprep.mubr.f32.mxu0 0.0
      %3421 = vmatmul.mubr.f32.gmra.mrb[0].mxu0 %v3108
      %v3422 = vpop.f32.mrb[0].mxu0
      %v3423 = vadd.f32 %v2907, %v3422
      %v3424 = vpop.f32.mrb[0].mxu0
      %3425 = vmatprep.mubr.f32.mxu0 0.0
      %3426 = vmatmul.mubr.f32.gmra.mrb[0].mxu0 %v3110
      %v3427 = vpop.f32.mrb[0].mxu0
      %v3428 = vadd.f32 %v2912, %v3427
      %v3429 = vpop.f32.mrb[0].mxu0
      %3430 = vmatprep.mubr.f32.mxu0 0.0
      %3431 = vmatmul.mubr.f32.gmra.mrb[0].mxu0 %v3112
      %v3432 = vpop.f32.mrb[0].mxu0
      %v3433 = vadd.f32 %v2917, %v3432
      %v3434 = vpop.f32.mrb[0].mxu0
      %3435 = vmatprep.mubr.f32.mxu0 0.0
      %3436 = vmatmul.mubr.f32.gmra.mrb[0].mxu0 %v3114
      %v3437 = vpop.f32.mrb[0].mxu0
      %v3438 = vadd.f32 %v2922, %v3437
      %v3439 = vpop.f32.mrb[0].mxu0
      %3440 = vmatprep.mubr.f32.mxu0 0.0
      %3441 = vmatmul.mubr.f32.gmra.mrb[0].mxu0 %v3116
      %v3442 = vpop.f32.mrb[0].mxu0
      %v3443 = vadd.f32 %v2927, %v3442
      %v3444 = vpop.f32.mrb[0].mxu0
      %3445 = vmatprep.mubr.f32.mxu0 0.0
      %3446 = vmatmul.mubr.f32.gmra.mrb[0].mxu0 %v3118
      %v3447 = vpop.f32.mrb[0].mxu0
      %v3448 = vadd.f32 %v2932, %v3447
      %v3449 = vpop.f32.mrb[0].mxu0
      %3450 = vmatprep.mubr.f32.mxu0 0.0
      %3451 = vmatmul.mubr.f32.gmra.mrb[0].mxu0 %v3120
      %v3452 = vpop.f32.mrb[0].mxu0
      %v3453 = vadd.f32 %v2937, %v3452
      %v3454 = vpop.f32.mrb[0].mxu0
      %3455 = vmatprep.mubr.f32.mxu0 0.0
      %3456 = vmatmul.mubr.f32.gmra.mrb[0].mxu0 %v3122
      %v3457 = vpop.f32.mrb[0].mxu0
      %v3458 = vadd.f32 %v2942, %v3457
      %v3459 = vpop.f32.mrb[0].mxu0
      %3460 = vmatprep.mubr.f32.mxu0 0.0
      %3461 = vmatmul.mubr.f32.gmra.mrb[0].mxu0 %v3124
      %v3462 = vpop.f32.mrb[0].mxu0
      %v3463 = vadd.f32 %v2947, %v3462
      %v3464 = vpop.f32.mrb[0].mxu0
      %3465 = vmatprep.mubr.f32.mxu0 0.0
      %3466 = vmatmul.mubr.f32.gmra.mrb[0].mxu0 %v3126
      %v3467 = vpop.f32.mrb[0].mxu0
      %v3468 = vadd.f32 %v2952, %v3467
      %v3469 = vpop.f32.mrb[0].mxu0
      %3470 = vmatprep.mubr.f32.mxu0 0.0
      %3471 = vmatmul.mubr.f32.gmra.mrb[0].mxu0 %v3128
      %v3472 = vpop.f32.mrb[0].mxu0
      %v3473 = vadd.f32 %v2957, %v3472
      %v3474 = vpop.f32.mrb[0].mxu0
      %3475 = vmatprep.mubr.f32.mxu0 0.0
      %3476 = vmatmul.mubr.f32.gmra.mrb[0].mxu0 %v3130
      %v3477 = vpop.f32.mrb[0].mxu0
      %v3478 = vadd.f32 %v2962, %v3477
      %v3479 = vpop.f32.mrb[0].mxu0
      %3480 = vmatprep.mubr.f32.mxu0 0.0
      %3481 = vmatmul.mubr.f32.gmra.mrb[0].mxu0 %v3132
      %v3482 = vpop.f32.mrb[0].mxu0
      %v3483 = vadd.f32 %v2967, %v3482
      %v3484 = vpop.f32.mrb[0].mxu0
      %3485 = vmatprep.mubr.f32.mxu0 0.0
      %3486 = vmatmul.mubr.f32.gmra.mrb[0].mxu0 %v3134
      %v3487 = vpop.f32.mrb[0].mxu0
      %v3488 = vadd.f32 %v2972, %v3487
      %v3489 = vpop.f32.mrb[0].mxu0
      %3490 = vmatprep.mubr.f32.mxu0 0.0
      %3491 = vmatmul.mubr.f32.gmra.mrb[0].mxu0 %v3136
      %v3492 = vpop.f32.mrb[0].mxu0
      %v3493 = vadd.f32 %v2977, %v3492
      %v3494 = vpop.f32.mrb[0].mxu0
      %3495 = vmatprep.mubr.f32.mxu0 0.0
      %3496 = vmatmul.mubr.f32.gmra.mrb[0].mxu0 %v3138
      %v3497 = vpop.f32.mrb[0].mxu0
      %v3498 = vadd.f32 %v2982, %v3497
      %v3499 = vpop.f32.mrb[0].mxu0
      %3500 = vmatprep.mubr.f32.mxu0 0.0
      %3501 = vmatmul.mubr.f32.gmra.mrb[0].mxu0 %v3140
      %v3502 = vpop.f32.mrb[0].mxu0
      %v3503 = vadd.f32 %v2987, %v3502
      %v3504 = vpop.f32.mrb[0].mxu0
      %3505 = vmatprep.mubr.f32.mxu0 0.0
      %3506 = vmatmul.mubr.f32.gmra.mrb[0].mxu0 %v3142
      %v3507 = vpop.f32.mrb[0].mxu0
      %v3508 = vadd.f32 %v2992, %v3507
      %v3509 = vpop.f32.mrb[0].mxu0
      %3510 = vmatprep.mubr.f32.mxu0 0.0
      %3511 = vmatmul.mubr.f32.gmra.mrb[0].mxu0 %v3144
      %v3512 = vpop.f32.mrb[0].mxu0
      %v3513 = vadd.f32 %v2997, %v3512
      %v3514 = vpop.f32.mrb[0].mxu0
      %3515 = vmatprep.mubr.f32.mxu0 0.0
      %3516 = vmatmul.mubr.f32.gmra.mrb[0].mxu0 %v3146
      %v3517 = vpop.f32.mrb[0].mxu0
      %v3518 = vadd.f32 %v3002, %v3517
      %v3519 = vpop.f32.mrb[0].mxu0
      %3520 = vmatprep.mubr.f32.mxu0 0.0
      %3521 = vmatmul.mubr.f32.gmra.mrb[0].mxu0 %v3148
      %v3522 = vpop.f32.mrb[0].mxu0
      %v3523 = vadd.f32 %v3007, %v3522
      %v3524 = vpop.f32.mrb[0].mxu0
      %3525 = vmatprep.mubr.f32.mxu0 0.0
      %3526 = vmatmul.mubr.f32.gmra.mrb[0].mxu0 %v3150
      %v3527 = vpop.f32.mrb[0].mxu0
      %v3528 = vadd.f32 %v3012, %v3527
      %v3529 = vpop.f32.mrb[0].mxu0
      %3530 = vmatprep.mubr.f32.mxu0 0.0
      %3531 = vmatmul.mubr.f32.gmra.mrb[0].mxu0 %v3152
      %v3532 = vpop.f32.mrb[0].mxu0
      %v3533 = vadd.f32 %v3017, %v3532
      %v3534 = vpop.f32.mrb[0].mxu0
      %3535 = vmatprep.mubr.f32.mxu0 0.0
      %3536 = vmatmul.mubr.f32.gmra.mrb[0].mxu0 %v3154
      %v3537 = vpop.f32.mrb[0].mxu0
      %v3538 = vadd.f32 %v3022, %v3537
      %v3539 = vpop.f32.mrb[0].mxu0
      %3540 = vmatprep.mubr.f32.mxu0 0.0
      %3541 = vmatmul.mubr.f32.gmra.mrb[0].mxu0 %v3156
      %v3542 = vpop.f32.mrb[0].mxu0
      %v3543 = vadd.f32 %v3027, %v3542
      %v3544 = vpop.f32.mrb[0].mxu0
      %3545 = vdwg.mxu0
      %s3546 = scalar_lea.vmem %s1, 8
      %v3547 = vld [vmem:[%s3546] sm:$0xf]
      %v3548 = vsel %vm2512, %v2095, 0
      %v3550 = vsel %vm2512, %v2097, 0
      %v3552 = vsel %vm2512, %v2100, 0
      %v3554 = vsel %vm2512, %v2102, 0
      %v3556 = vsel %vm2512, %v2105, 0
      %v3558 = vsel %vm2512, %v2107, 0
      %v3560 = vsel %vm2512, %v2110, 0
      %v3562 = vsel %vm2512, %v2112, 0
      %v3564 = vsel %vm2512, %v2115, 0
      %v3566 = vsel %vm2512, %v2117, 0
      %v3568 = vsel %vm2512, %v2120, 0
      %v3570 = vsel %vm2512, %v2122, 0
      %v3572 = vsel %vm2512, %v2125, 0
      %v3574 = vsel %vm2512, %v2127, 0
      %v3576 = vsel %vm2512, %v2130, 0
      %v3578 = vsel %vm2512, %v2132, 0
      %v3580 = vsel %vm2512, %v2135, 0
      %v3582 = vsel %vm2512, %v2137, 0
      %v3584 = vsel %vm2512, %v2140, 0
      %v3586 = vsel %vm2512, %v2142, 0
      %v3588 = vsel %vm2512, %v2145, 0
      %v3590 = vsel %vm2512, %v2147, 0
      %v3592 = vsel %vm2512, %v2150, 0
      %v3594 = vsel %vm2512, %v2152, 0
      %v3596 = vsel %vm2512, %v2155, 0
      %v3598 = vsel %vm2512, %v2157, 0
      %v3600 = vsel %vm2512, %v2160, 0
      %v3602 = vsel %vm2512, %v2162, 0
      %v3604 = vsel %vm2512, %v2165, 0
      %v3606 = vsel %vm2512, %v2167, 0
      %v3608 = vsel %vm2512, %v2170, 0
      %v3610 = vsel %vm2512, %v2172, 0
      %v3612 = vsel %vm2512, %v2175, 0
      %v3614 = vsel %vm2512, %v2177, 0
      %v3616 = vsel %vm2512, %v2180, 0
      %v3618 = vsel %vm2512, %v2182, 0
      %v3620 = vsel %vm2512, %v2185, 0
      %v3622 = vsel %vm2512, %v2187, 0
      %v3624 = vsel %vm2512, %v2190, 0
      %v3626 = vsel %vm2512, %v2192, 0
      %v3628 = vsel %vm2512, %v2195, 0
      %v3630 = vsel %vm2512, %v2197, 0
      %v3632 = vsel %vm2512, %v2200, 0
      %v3634 = vsel %vm2512, %v2202, 0
      %v3636 = vsel %vm2512, %v2205, 0
      %v3638 = vsel %vm2512, %v2207, 0
      %v3640 = vsel %vm2512, %v2210, 0
      %v3642 = vsel %vm2512, %v2212, 0
      %v3644 = vsel %vm2512, %v2215, 0
      %v3646 = vsel %vm2512, %v2217, 0
      %v3648 = vsel %vm2512, %v2220, 0
      %v3650 = vsel %vm2512, %v2222, 0
      %v3652 = vsel %vm2512, %v2225, 0
      %v3654 = vsel %vm2512, %v2227, 0
      %v3656 = vsel %vm2512, %v2230, 0
      %v3658 = vsel %vm2512, %v2232, 0
      %v3660 = vsel %vm2512, %v2235, 0
      %v3662 = vsel %vm2512, %v2237, 0
      %v3664 = vsel %vm2512, %v2240, 0
      %v3666 = vsel %vm2512, %v2242, 0
      %v3668 = vsel %vm2512, %v2245, 0
      %v3670 = vsel %vm2512, %v2247, 0
      %v3672 = vsel %vm2512, %v2250, 0
      %v3674 = vsel %vm2512, %v2252, 0
      %v3677 = vsel %vm2641, %v3547, 0
      %3679 = vmatprep.subr.mxu0 0.0
      %3680 = vmatpush1.msra.mxu0 %v3677
      %3681 = vmatprep.subr.mxu0 0.0
      %3682 = vmatpush1.msra.mxu0 0.0
      %3683 = vmatprep.subr.mxu0 0.0
      %3684 = vmatpush1.msra.mxu0 0.0
      %3685 = vmatprep.subr.mxu0 0.0
      %3686 = vmatpush1.msra.mxu0 0.0
      %3687 = vmatprep.subr.mxu0 0.0
      %3688 = vmatpush1.msra.mxu0 0.0
      %3689 = vmatprep.subr.mxu0 0.0
      %3690 = vmatpush1.msra.mxu0 0.0
      %3691 = vmatprep.subr.mxu0 0.0
      %3692 = vmatpush1.msra.mxu0 0.0
      %3693 = vmatprep.subr.mxu0 0.0
      %3694 = vmatpush1.msra.mxu0 0.0
      %3695 = vmatprep.subr.mxu0 0.0
      %3696 = vmatpush1.msra.mxu0 0.0
      %3697 = vmatprep.subr.mxu0 0.0
      %3698 = vmatpush1.msra.mxu0 0.0
      %3699 = vmatprep.subr.mxu0 0.0
      %3700 = vmatpush1.msra.mxu0 0.0
      %3701 = vmatprep.subr.mxu0 0.0
      %3702 = vmatpush1.msra.mxu0 0.0
      %3703 = vmatprep.subr.mxu0 0.0
      %3704 = vmatpush1.msra.mxu0 0.0
      %3705 = vmatprep.subr.mxu0 0.0
      %3706 = vmatpush1.msra.mxu0 0.0
      %3707 = vmatprep.subr.mxu0 0.0
      %3708 = vmatpush1.msra.mxu0 0.0
      %3709 = vmatprep.subr.mxu0 0.0
      %3710 = vmatpush1.msra.mxu0 0.0
      %3711 = vmatprep.subr.mxu0 0.0
      %3712 = vmatpush1.msra.mxu0 0.0
      %3713 = vmatprep.subr.mxu0 0.0
      %3714 = vmatpush1.msra.mxu0 0.0
      %3715 = vmatprep.subr.mxu0 0.0
      %3716 = vmatpush1.msra.mxu0 0.0
      %3717 = vmatprep.subr.mxu0 0.0
      %3718 = vmatpush1.msra.mxu0 0.0
      %3719 = vmatprep.subr.mxu0 0.0
      %3720 = vmatpush1.msra.mxu0 0.0
      %3721 = vmatprep.subr.mxu0 0.0
      %3722 = vmatpush1.msra.mxu0 0.0
      %3723 = vmatprep.subr.mxu0 0.0
      %3724 = vmatpush1.msra.mxu0 0.0
      %3725 = vmatprep.subr.mxu0 0.0
      %3726 = vmatpush1.msra.mxu0 0.0
      %3727 = vmatprep.subr.mxu0 0.0
      %3728 = vmatpush1.msra.mxu0 0.0
      %3729 = vmatprep.subr.mxu0 0.0
      %3730 = vmatpush1.msra.mxu0 0.0
      %3731 = vmatprep.subr.mxu0 0.0
      %3732 = vmatpush1.msra.mxu0 0.0
      %3733 = vmatprep.subr.mxu0 0.0
      %3734 = vmatpush1.msra.mxu0 0.0
      %3735 = vmatprep.subr.mxu0 0.0
      %3736 = vmatpush1.msra.mxu0 0.0
      %3737 = vmatprep.subr.mxu0 0.0
      %3738 = vmatpush1.msra.mxu0 0.0
      %3739 = vmatprep.subr.mxu0 0.0
      %3740 = vmatpush1.msra.mxu0 0.0
      %3741 = vmatprep.subr.mxu0 0.0
      %3742 = vmatpush1.msra.mxu0 0.0
      %3743 = vmatprep.mubr.f32.mxu0 0.0
      %3744 = vmatmul.mubr.f32.gmra.mrb[0].mxu0 %v3548
      %v3745 = vpop.f32.mrb[0].mxu0
      %v3746 = vadd.f32 0.0, %v3745
      %v3747 = vpop.f32.mrb[0].mxu0
      %3748 = vmatprep.mubr.f32.mxu0 0.0
      %3749 = vmatmul.mubr.f32.gmra.mrb[0].mxu0 %v3550
      %v3750 = vpop.f32.mrb[0].mxu0
      %v3751 = vadd.f32 0.0, %v3750
      %v3752 = vpop.f32.mrb[0].mxu0
      %3753 = vmatprep.mubr.f32.mxu0 0.0
      %3754 = vmatmul.mubr.f32.gmra.mrb[0].mxu0 %v3552
      %v3755 = vpop.f32.mrb[0].mxu0
      %v3756 = vadd.f32 0.0, %v3755
      %v3757 = vpop.f32.mrb[0].mxu0
      %3758 = vmatprep.mubr.f32.mxu0 0.0
      %3759 = vmatmul.mubr.f32.gmra.mrb[0].mxu0 %v3554
      %v3760 = vpop.f32.mrb[0].mxu0
      %v3761 = vadd.f32 0.0, %v3760
      %v3762 = vpop.f32.mrb[0].mxu0
      %3763 = vmatprep.mubr.f32.mxu0 0.0
      %3764 = vmatmul.mubr.f32.gmra.mrb[0].mxu0 %v3556
      %v3765 = vpop.f32.mrb[0].mxu0
      %v3766 = vadd.f32 0.0, %v3765
      %v3767 = vpop.f32.mrb[0].mxu0
      %3768 = vmatprep.mubr.f32.mxu0 0.0
      %3769 = vmatmul.mubr.f32.gmra.mrb[0].mxu0 %v3558
      %v3770 = vpop.f32.mrb[0].mxu0
      %v3771 = vadd.f32 0.0, %v3770
      %v3772 = vpop.f32.mrb[0].mxu0
      %3773 = vmatprep.mubr.f32.mxu0 0.0
      %3774 = vmatmul.mubr.f32.gmra.mrb[0].mxu0 %v3560
      %v3775 = vpop.f32.mrb[0].mxu0
      %v3776 = vadd.f32 0.0, %v3775
      %v3777 = vpop.f32.mrb[0].mxu0
      %3778 = vmatprep.mubr.f32.mxu0 0.0
      %3779 = vmatmul.mubr.f32.gmra.mrb[0].mxu0 %v3562
      %v3780 = vpop.f32.mrb[0].mxu0
      %v3781 = vadd.f32 0.0, %v3780
      %v3782 = vpop.f32.mrb[0].mxu0
      %3783 = vmatprep.mubr.f32.mxu0 0.0
      %3784 = vmatmul.mubr.f32.gmra.mrb[0].mxu0 %v3564
      %v3785 = vpop.f32.mrb[0].mxu0
      %v3786 = vadd.f32 0.0, %v3785
      %v3787 = vpop.f32.mrb[0].mxu0
      %3788 = vmatprep.mubr.f32.mxu0 0.0
      %3789 = vmatmul.mubr.f32.gmra.mrb[0].mxu0 %v3566
      %v3790 = vpop.f32.mrb[0].mxu0
      %v3791 = vadd.f32 0.0, %v3790
      %v3792 = vpop.f32.mrb[0].mxu0
      %3793 = vmatprep.mubr.f32.mxu0 0.0
      %3794 = vmatmul.mubr.f32.gmra.mrb[0].mxu0 %v3568
      %v3795 = vpop.f32.mrb[0].mxu0
      %v3796 = vadd.f32 0.0, %v3795
      %v3797 = vpop.f32.mrb[0].mxu0
      %3798 = vmatprep.mubr.f32.mxu0 0.0
      %3799 = vmatmul.mubr.f32.gmra.mrb[0].mxu0 %v3570
      %v3800 = vpop.f32.mrb[0].mxu0
      %v3801 = vadd.f32 0.0, %v3800
      %v3802 = vpop.f32.mrb[0].mxu0
      %3803 = vmatprep.mubr.f32.mxu0 0.0
      %3804 = vmatmul.mubr.f32.gmra.mrb[0].mxu0 %v3572
      %v3805 = vpop.f32.mrb[0].mxu0
      %v3806 = vadd.f32 0.0, %v3805
      %v3807 = vpop.f32.mrb[0].mxu0
      %3808 = vmatprep.mubr.f32.mxu0 0.0
      %3809 = vmatmul.mubr.f32.gmra.mrb[0].mxu0 %v3574
      %v3810 = vpop.f32.mrb[0].mxu0
      %v3811 = vadd.f32 0.0, %v3810
      %v3812 = vpop.f32.mrb[0].mxu0
      %3813 = vmatprep.mubr.f32.mxu0 0.0
      %3814 = vmatmul.mubr.f32.gmra.mrb[0].mxu0 %v3576
      %v3815 = vpop.f32.mrb[0].mxu0
      %v3816 = vadd.f32 0.0, %v3815
      %v3817 = vpop.f32.mrb[0].mxu0
      %3818 = vmatprep.mubr.f32.mxu0 0.0
      %3819 = vmatmul.mubr.f32.gmra.mrb[0].mxu0 %v3578
      %v3820 = vpop.f32.mrb[0].mxu0
      %v3821 = vadd.f32 0.0, %v3820
      %v3822 = vpop.f32.mrb[0].mxu0
      %3823 = vmatprep.mubr.f32.mxu0 0.0
      %3824 = vmatmul.mubr.f32.gmra.mrb[0].mxu0 %v3580
      %v3825 = vpop.f32.mrb[0].mxu0
      %v3826 = vadd.f32 0.0, %v3825
      %v3827 = vpop.f32.mrb[0].mxu0
      %3828 = vmatprep.mubr.f32.mxu0 0.0
      %3829 = vmatmul.mubr.f32.gmra.mrb[0].mxu0 %v3582
      %v3830 = vpop.f32.mrb[0].mxu0
      %v3831 = vadd.f32 0.0, %v3830
      %v3832 = vpop.f32.mrb[0].mxu0
      %3833 = vmatprep.mubr.f32.mxu0 0.0
      %3834 = vmatmul.mubr.f32.gmra.mrb[0].mxu0 %v3584
      %v3835 = vpop.f32.mrb[0].mxu0
      %v3836 = vadd.f32 0.0, %v3835
      %v3837 = vpop.f32.mrb[0].mxu0
      %3838 = vmatprep.mubr.f32.mxu0 0.0
      %3839 = vmatmul.mubr.f32.gmra.mrb[0].mxu0 %v3586
      %v3840 = vpop.f32.mrb[0].mxu0
      %v3841 = vadd.f32 0.0, %v3840
      %v3842 = vpop.f32.mrb[0].mxu0
      %3843 = vmatprep.mubr.f32.mxu0 0.0
      %3844 = vmatmul.mubr.f32.gmra.mrb[0].mxu0 %v3588
      %v3845 = vpop.f32.mrb[0].mxu0
      %v3846 = vadd.f32 0.0, %v3845
      %v3847 = vpop.f32.mrb[0].mxu0
      %3848 = vmatprep.mubr.f32.mxu0 0.0
      %3849 = vmatmul.mubr.f32.gmra.mrb[0].mxu0 %v3590
      %v3850 = vpop.f32.mrb[0].mxu0
      %v3851 = vadd.f32 0.0, %v3850
      %v3852 = vpop.f32.mrb[0].mxu0
      %3853 = vmatprep.mubr.f32.mxu0 0.0
      %3854 = vmatmul.mubr.f32.gmra.mrb[0].mxu0 %v3592
      %v3855 = vpop.f32.mrb[0].mxu0
      %v3856 = vadd.f32 0.0, %v3855
      %v3857 = vpop.f32.mrb[0].mxu0
      %3858 = vmatprep.mubr.f32.mxu0 0.0
      %3859 = vmatmul.mubr.f32.gmra.mrb[0].mxu0 %v3594
      %v3860 = vpop.f32.mrb[0].mxu0
      %v3861 = vadd.f32 0.0, %v3860
      %v3862 = vpop.f32.mrb[0].mxu0
      %3863 = vmatprep.mubr.f32.mxu0 0.0
      %3864 = vmatmul.mubr.f32.gmra.mrb[0].mxu0 %v3596
      %v3865 = vpop.f32.mrb[0].mxu0
      %v3866 = vadd.f32 0.0, %v3865
      %v3867 = vpop.f32.mrb[0].mxu0
      %3868 = vmatprep.mubr.f32.mxu0 0.0
      %3869 = vmatmul.mubr.f32.gmra.mrb[0].mxu0 %v3598
      %v3870 = vpop.f32.mrb[0].mxu0
      %v3871 = vadd.f32 0.0, %v3870
      %v3872 = vpop.f32.mrb[0].mxu0
      %3873 = vmatprep.mubr.f32.mxu0 0.0
      %3874 = vmatmul.mubr.f32.gmra.mrb[0].mxu0 %v3600
      %v3875 = vpop.f32.mrb[0].mxu0
      %v3876 = vadd.f32 0.0, %v3875
      %v3877 = vpop.f32.mrb[0].mxu0
      %3878 = vmatprep.mubr.f32.mxu0 0.0
      %3879 = vmatmul.mubr.f32.gmra.mrb[0].mxu0 %v3602
      %v3880 = vpop.f32.mrb[0].mxu0
      %v3881 = vadd.f32 0.0, %v3880
      %v3882 = vpop.f32.mrb[0].mxu0
      %3883 = vmatprep.mubr.f32.mxu0 0.0
      %3884 = vmatmul.mubr.f32.gmra.mrb[0].mxu0 %v3604
      %v3885 = vpop.f32.mrb[0].mxu0
      %v3886 = vadd.f32 0.0, %v3885
      %v3887 = vpop.f32.mrb[0].mxu0
      %3888 = vmatprep.mubr.f32.mxu0 0.0
      %3889 = vmatmul.mubr.f32.gmra.mrb[0].mxu0 %v3606
      %v3890 = vpop.f32.mrb[0].mxu0
      %v3891 = vadd.f32 0.0, %v3890
      %v3892 = vpop.f32.mrb[0].mxu0
      %3893 = vmatprep.mubr.f32.mxu0 0.0
      %3894 = vmatmul.mubr.f32.gmra.mrb[0].mxu0 %v3608
      %v3895 = vpop.f32.mrb[0].mxu0
      %v3896 = vadd.f32 0.0, %v3895
      %v3897 = vpop.f32.mrb[0].mxu0
      %3898 = vmatprep.mubr.f32.mxu0 0.0
      %3899 = vmatmul.mubr.f32.gmra.mrb[0].mxu0 %v3610
      %v3900 = vpop.f32.mrb[0].mxu0
      %v3901 = vadd.f32 0.0, %v3900
      %v3902 = vpop.f32.mrb[0].mxu0
      %3903 = vmatprep.mubr.f32.mxu0 0.0
      %3904 = vmatmul.mubr.f32.gmra.mrb[0].mxu0 %v3612
      %v3905 = vpop.f32.mrb[0].mxu0
      %v3906 = vadd.f32 0.0, %v3905
      %v3907 = vpop.f32.mrb[0].mxu0
      %3908 = vmatprep.mubr.f32.mxu0 0.0
      %3909 = vmatmul.mubr.f32.gmra.mrb[0].mxu0 %v3614
      %v3910 = vpop.f32.mrb[0].mxu0
      %v3911 = vadd.f32 0.0, %v3910
      %v3912 = vpop.f32.mrb[0].mxu0
      %3913 = vmatprep.mubr.f32.mxu0 0.0
      %3914 = vmatmul.mubr.f32.gmra.mrb[0].mxu0 %v3616
      %v3915 = vpop.f32.mrb[0].mxu0
      %v3916 = vadd.f32 0.0, %v3915
      %v3917 = vpop.f32.mrb[0].mxu0
      %3918 = vmatprep.mubr.f32.mxu0 0.0
      %3919 = vmatmul.mubr.f32.gmra.mrb[0].mxu0 %v3618
      %v3920 = vpop.f32.mrb[0].mxu0
      %v3921 = vadd.f32 0.0, %v3920
      %v3922 = vpop.f32.mrb[0].mxu0
      %3923 = vmatprep.mubr.f32.mxu0 0.0
      %3924 = vmatmul.mubr.f32.gmra.mrb[0].mxu0 %v3620
      %v3925 = vpop.f32.mrb[0].mxu0
      %v3926 = vadd.f32 0.0, %v3925
      %v3927 = vpop.f32.mrb[0].mxu0
      %3928 = vmatprep.mubr.f32.mxu0 0.0
      %3929 = vmatmul.mubr.f32.gmra.mrb[0].mxu0 %v3622
      %v3930 = vpop.f32.mrb[0].mxu0
      %v3931 = vadd.f32 0.0, %v3930
      %v3932 = vpop.f32.mrb[0].mxu0
      %3933 = vmatprep.mubr.f32.mxu0 0.0
      %3934 = vmatmul.mubr.f32.gmra.mrb[0].mxu0 %v3624
      %v3935 = vpop.f32.mrb[0].mxu0
      %v3936 = vadd.f32 0.0, %v3935
      %v3937 = vpop.f32.mrb[0].mxu0
      %3938 = vmatprep.mubr.f32.mxu0 0.0
      %3939 = vmatmul.mubr.f32.gmra.mrb[0].mxu0 %v3626
      %v3940 = vpop.f32.mrb[0].mxu0
      %v3941 = vadd.f32 0.0, %v3940
      %v3942 = vpop.f32.mrb[0].mxu0
      %3943 = vmatprep.mubr.f32.mxu0 0.0
      %3944 = vmatmul.mubr.f32.gmra.mrb[0].mxu0 %v3628
      %v3945 = vpop.f32.mrb[0].mxu0
      %v3946 = vadd.f32 0.0, %v3945
      %v3947 = vpop.f32.mrb[0].mxu0
      %3948 = vmatprep.mubr.f32.mxu0 0.0
      %3949 = vmatmul.mubr.f32.gmra.mrb[0].mxu0 %v3630
      %v3950 = vpop.f32.mrb[0].mxu0
      %v3951 = vadd.f32 0.0, %v3950
      %v3952 = vpop.f32.mrb[0].mxu0
      %3953 = vmatprep.mubr.f32.mxu0 0.0
      %3954 = vmatmul.mubr.f32.gmra.mrb[0].mxu0 %v3632
      %v3955 = vpop.f32.mrb[0].mxu0
      %v3956 = vadd.f32 0.0, %v3955
      %v3957 = vpop.f32.mrb[0].mxu0
      %3958 = vmatprep.mubr.f32.mxu0 0.0
      %3959 = vmatmul.mubr.f32.gmra.mrb[0].mxu0 %v3634
      %v3960 = vpop.f32.mrb[0].mxu0
      %v3961 = vadd.f32 0.0, %v3960
      %v3962 = vpop.f32.mrb[0].mxu0
      %3963 = vmatprep.mubr.f32.mxu0 0.0
      %3964 = vmatmul.mubr.f32.gmra.mrb[0].mxu0 %v3636
      %v3965 = vpop.f32.mrb[0].mxu0
      %v3966 = vadd.f32 0.0, %v3965
      %v3967 = vpop.f32.mrb[0].mxu0
      %3968 = vmatprep.mubr.f32.mxu0 0.0
      %3969 = vmatmul.mubr.f32.gmra.mrb[0].mxu0 %v3638
      %v3970 = vpop.f32.mrb[0].mxu0
      %v3971 = vadd.f32 0.0, %v3970
      %v3972 = vpop.f32.mrb[0].mxu0
      %3973 = vmatprep.mubr.f32.mxu0 0.0
      %3974 = vmatmul.mubr.f32.gmra.mrb[0].mxu0 %v3640
      %v3975 = vpop.f32.mrb[0].mxu0
      %v3976 = vadd.f32 0.0, %v3975
      %v3977 = vpop.f32.mrb[0].mxu0
      %3978 = vmatprep.mubr.f32.mxu0 0.0
      %3979 = vmatmul.mubr.f32.gmra.mrb[0].mxu0 %v3642
      %v3980 = vpop.f32.mrb[0].mxu0
      %v3981 = vadd.f32 0.0, %v3980
      %v3982 = vpop.f32.mrb[0].mxu0
      %3983 = vmatprep.mubr.f32.mxu0 0.0
      %3984 = vmatmul.mubr.f32.gmra.mrb[0].mxu0 %v3644
      %v3985 = vpop.f32.mrb[0].mxu0
      %v3986 = vadd.f32 0.0, %v3985
      %v3987 = vpop.f32.mrb[0].mxu0
      %3988 = vmatprep.mubr.f32.mxu0 0.0
      %3989 = vmatmul.mubr.f32.gmra.mrb[0].mxu0 %v3646
      %v3990 = vpop.f32.mrb[0].mxu0
      %v3991 = vadd.f32 0.0, %v3990
      %v3992 = vpop.f32.mrb[0].mxu0
      %3993 = vmatprep.mubr.f32.mxu0 0.0
      %3994 = vmatmul.mubr.f32.gmra.mrb[0].mxu0 %v3648
      %v3995 = vpop.f32.mrb[0].mxu0
      %v3996 = vadd.f32 0.0, %v3995
      %v3997 = vpop.f32.mrb[0].mxu0
      %3998 = vmatprep.mubr.f32.mxu0 0.0
      %3999 = vmatmul.mubr.f32.gmra.mrb[0].mxu0 %v3650
      %v4000 = vpop.f32.mrb[0].mxu0
      %v4001 = vadd.f32 0.0, %v4000
      %v4002 = vpop.f32.mrb[0].mxu0
      %4003 = vmatprep.mubr.f32.mxu0 0.0
      %4004 = vmatmul.mubr.f32.gmra.mrb[0].mxu0 %v3652
      %v4005 = vpop.f32.mrb[0].mxu0
      %v4006 = vadd.f32 0.0, %v4005
      %v4007 = vpop.f32.mrb[0].mxu0
      %4008 = vmatprep.mubr.f32.mxu0 0.0
      %4009 = vmatmul.mubr.f32.gmra.mrb[0].mxu0 %v3654
      %v4010 = vpop.f32.mrb[0].mxu0
      %v4011 = vadd.f32 0.0, %v4010
      %v4012 = vpop.f32.mrb[0].mxu0
      %4013 = vmatprep.mubr.f32.mxu0 0.0
      %4014 = vmatmul.mubr.f32.gmra.mrb[0].mxu0 %v3656
      %v4015 = vpop.f32.mrb[0].mxu0
      %v4016 = vadd.f32 0.0, %v4015
      %v4017 = vpop.f32.mrb[0].mxu0
      %4018 = vmatprep.mubr.f32.mxu0 0.0
      %4019 = vmatmul.mubr.f32.gmra.mrb[0].mxu0 %v3658
      %v4020 = vpop.f32.mrb[0].mxu0
      %v4021 = vadd.f32 0.0, %v4020
      %v4022 = vpop.f32.mrb[0].mxu0
      %4023 = vmatprep.mubr.f32.mxu0 0.0
      %4024 = vmatmul.mubr.f32.gmra.mrb[0].mxu0 %v3660
      %v4025 = vpop.f32.mrb[0].mxu0
      %v4026 = vadd.f32 0.0, %v4025
      %v4027 = vpop.f32.mrb[0].mxu0
      %4028 = vmatprep.mubr.f32.mxu0 0.0
      %4029 = vmatmul.mubr.f32.gmra.mrb[0].mxu0 %v3662
      %v4030 = vpop.f32.mrb[0].mxu0
      %v4031 = vadd.f32 0.0, %v4030
      %v4032 = vpop.f32.mrb[0].mxu0
      %4033 = vmatprep.mubr.f32.mxu0 0.0
      %4034 = vmatmul.mubr.f32.gmra.mrb[0].mxu0 %v3664
      %v4035 = vpop.f32.mrb[0].mxu0
      %v4036 = vadd.f32 0.0, %v4035
      %v4037 = vpop.f32.mrb[0].mxu0
      %4038 = vmatprep.mubr.f32.mxu0 0.0
      %4039 = vmatmul.mubr.f32.gmra.mrb[0].mxu0 %v3666
      %v4040 = vpop.f32.mrb[0].mxu0
      %v4041 = vadd.f32 0.0, %v4040
      %v4042 = vpop.f32.mrb[0].mxu0
      %4043 = vmatprep.mubr.f32.mxu0 0.0
      %4044 = vmatmul.mubr.f32.gmra.mrb[0].mxu0 %v3668
      %v4045 = vpop.f32.mrb[0].mxu0
      %v4046 = vadd.f32 0.0, %v4045
      %v4047 = vpop.f32.mrb[0].mxu0
      %4048 = vmatprep.mubr.f32.mxu0 0.0
      %4049 = vmatmul.mubr.f32.gmra.mrb[0].mxu0 %v3670
      %v4050 = vpop.f32.mrb[0].mxu0
      %v4051 = vadd.f32 0.0, %v4050
      %v4052 = vpop.f32.mrb[0].mxu0
      %4053 = vmatprep.mubr.f32.mxu0 0.0
      %4054 = vmatmul.mubr.f32.gmra.mrb[0].mxu0 %v3672
      %v4055 = vpop.f32.mrb[0].mxu0
      %v4056 = vadd.f32 0.0, %v4055
      %v4057 = vpop.f32.mrb[0].mxu0
      %4058 = vmatprep.mubr.f32.mxu0 0.0
      %4059 = vmatmul.mubr.f32.gmra.mrb[0].mxu0 %v3674
      %v4060 = vpop.f32.mrb[0].mxu0
      %v4061 = vadd.f32 0.0, %v4060
      %v4062 = vpop.f32.mrb[0].mxu0
      %4063 = vdwg.mxu0
      %v4064 = vadd.f32 %v3228, %v3746
      %v4065 = vadd.f32 %v3233, %v3751
      %v4066 = vadd.f32 %v3238, %v3756
      %v4067 = vadd.f32 %v3243, %v3761
      %v4068 = vadd.f32 %v3248, %v3766
      %v4069 = vadd.f32 %v3253, %v3771
      %v4070 = vadd.f32 %v3258, %v3776
      %v4071 = vadd.f32 %v3263, %v3781
      %v4072 = vadd.f32 %v3268, %v3786
      %v4073 = vadd.f32 %v3273, %v3791
      %v4074 = vadd.f32 %v3278, %v3796
      %v4075 = vadd.f32 %v3283, %v3801
      %v4076 = vadd.f32 %v3288, %v3806
      %v4077 = vadd.f32 %v3293, %v3811
      %v4078 = vadd.f32 %v3298, %v3816
      %v4079 = vadd.f32 %v3303, %v3821
      %v4080 = vadd.f32 %v3308, %v3826
      %v4081 = vadd.f32 %v3313, %v3831
      %v4082 = vadd.f32 %v3318, %v3836
      %v4083 = vadd.f32 %v3323, %v3841
      %v4084 = vadd.f32 %v3328, %v3846
      %v4085 = vadd.f32 %v3333, %v3851
      %v4086 = vadd.f32 %v3338, %v3856
      %v4087 = vadd.f32 %v3343, %v3861
      %v4088 = vadd.f32 %v3348, %v3866
      %v4089 = vadd.f32 %v3353, %v3871
      %v4090 = vadd.f32 %v3358, %v3876
      %v4091 = vadd.f32 %v3363, %v3881
      %v4092 = vadd.f32 %v3368, %v3886
      %v4093 = vadd.f32 %v3373, %v3891
      %v4094 = vadd.f32 %v3378, %v3896
      %v4095 = vadd.f32 %v3383, %v3901
      %v4096 = vadd.f32 %v3388, %v3906
      %v4097 = vadd.f32 %v3393, %v3911
      %v4098 = vadd.f32 %v3398, %v3916
      %v4099 = vadd.f32 %v3403, %v3921
      %v4100 = vadd.f32 %v3408, %v3926
      %v4101 = vadd.f32 %v3413, %v3931
      %v4102 = vadd.f32 %v3418, %v3936
      %v4103 = vadd.f32 %v3423, %v3941
      %v4104 = vadd.f32 %v3428, %v3946
      %v4105 = vadd.f32 %v3433, %v3951
      %v4106 = vadd.f32 %v3438, %v3956
      %v4107 = vadd.f32 %v3443, %v3961
      %v4108 = vadd.f32 %v3448, %v3966
      %v4109 = vadd.f32 %v3453, %v3971
      %v4110 = vadd.f32 %v3458, %v3976
      %v4111 = vadd.f32 %v3463, %v3981
      %v4112 = vadd.f32 %v3468, %v3986
      %v4113 = vadd.f32 %v3473, %v3991
      %v4114 = vadd.f32 %v3478, %v3996
      %v4115 = vadd.f32 %v3483, %v4001
      %v4116 = vadd.f32 %v3488, %v4006
      %v4117 = vadd.f32 %v3493, %v4011
      %v4118 = vadd.f32 %v3498, %v4016
      %v4119 = vadd.f32 %v3503, %v4021
      %v4120 = vadd.f32 %v3508, %v4026
      %v4121 = vadd.f32 %v3513, %v4031
      %v4122 = vadd.f32 %v3518, %v4036
      %v4123 = vadd.f32 %v3523, %v4041
      %v4124 = vadd.f32 %v3528, %v4046
      %v4125 = vadd.f32 %v3533, %v4051
      %v4126 = vadd.f32 %v3538, %v4056
      %v4127 = vadd.f32 %v3543, %v4061
      %4128 = vmatprep.subr.mxu0 0.0
      %4129 = vmatpush1.msra.mxu0 %v2643
      %4130 = vmatprep.subr.mxu0 0.0
      %4131 = vmatpush1.msra.mxu0 0.0
      %4132 = vmatprep.subr.mxu0 0.0
      %4133 = vmatpush1.msra.mxu0 0.0
      %4134 = vmatprep.subr.mxu0 0.0
      %4135 = vmatpush1.msra.mxu0 0.0
      %4136 = vmatprep.subr.mxu0 0.0
      %4137 = vmatpush1.msra.mxu0 0.0
      %4138 = vmatprep.subr.mxu0 0.0
      %4139 = vmatpush1.msra.mxu0 0.0
      %4140 = vmatprep.subr.mxu0 0.0
      %4141 = vmatpush1.msra.mxu0 0.0
      %4142 = vmatprep.subr.mxu0 0.0
      %4143 = vmatpush1.msra.mxu0 0.0
      %4144 = vmatprep.subr.mxu0 0.0
      %4145 = vmatpush1.msra.mxu0 0.0
      %4146 = vmatprep.subr.mxu0 0.0
      %4147 = vmatpush1.msra.mxu0 0.0
      %4148 = vmatprep.subr.mxu0 0.0
      %4149 = vmatpush1.msra.mxu0 0.0
      %4150 = vmatprep.subr.mxu0 0.0
      %4151 = vmatpush1.msra.mxu0 0.0
      %4152 = vmatprep.subr.mxu0 0.0
      %4153 = vmatpush1.msra.mxu0 0.0
      %4154 = vmatprep.subr.mxu0 0.0
      %4155 = vmatpush1.msra.mxu0 0.0
      %4156 = vmatprep.subr.mxu0 0.0
      %4157 = vmatpush1.msra.mxu0 0.0
      %4158 = vmatprep.subr.mxu0 0.0
      %4159 = vmatpush1.msra.mxu0 0.0
      %4160 = vmatprep.subr.mxu0 0.0
      %4161 = vmatpush1.msra.mxu0 0.0
      %4162 = vmatprep.subr.mxu0 0.0
      %4163 = vmatpush1.msra.mxu0 0.0
      %4164 = vmatprep.subr.mxu0 0.0
      %4165 = vmatpush1.msra.mxu0 0.0
      %4166 = vmatprep.subr.mxu0 0.0
      %4167 = vmatpush1.msra.mxu0 0.0
      %4168 = vmatprep.subr.mxu0 0.0
      %4169 = vmatpush1.msra.mxu0 0.0
      %4170 = vmatprep.subr.mxu0 0.0
      %4171 = vmatpush1.msra.mxu0 0.0
      %4172 = vmatprep.subr.mxu0 0.0
      %4173 = vmatpush1.msra.mxu0 0.0
      %4174 = vmatprep.subr.mxu0 0.0
      %4175 = vmatpush1.msra.mxu0 0.0
      %4176 = vmatprep.subr.mxu0 0.0
      %4177 = vmatpush1.msra.mxu0 0.0
      %4178 = vmatprep.subr.mxu0 0.0
      %4179 = vmatpush1.msra.mxu0 0.0
      %4180 = vmatprep.subr.mxu0 0.0
      %4181 = vmatpush1.msra.mxu0 0.0
      %4182 = vmatprep.subr.mxu0 0.0
      %4183 = vmatpush1.msra.mxu0 0.0
      %4184 = vmatprep.subr.mxu0 0.0
      %4185 = vmatpush1.msra.mxu0 0.0
      %4186 = vmatprep.subr.mxu0 0.0
      %4187 = vmatpush1.msra.mxu0 0.0
      %4188 = vmatprep.subr.mxu0 0.0
      %4189 = vmatpush1.msra.mxu0 0.0
      %4190 = vmatprep.subr.mxu0 0.0
      %4191 = vmatpush1.msra.mxu0 0.0
      %4192 = vmatprep.mubr.f32.mxu0 0.0
      %4193 = vmatmul.mubr.f32.gmra.mrb[0].mxu0 %v3548
      %v4194 = vpop.f32.mrb[0].mxu0
      %v4195 = vadd.f32 0.0, %v4194
      %v4196 = vpop.f32.mrb[0].mxu0
      %4197 = vmatprep.mubr.f32.mxu0 0.0
      %4198 = vmatmul.mubr.f32.gmra.mrb[0].mxu0 %v3550
      %v4199 = vpop.f32.mrb[0].mxu0
      %v4200 = vadd.f32 0.0, %v4199
      %v4201 = vpop.f32.mrb[0].mxu0
      %4202 = vmatprep.mubr.f32.mxu0 0.0
      %4203 = vmatmul.mubr.f32.gmra.mrb[0].mxu0 %v3552
      %v4204 = vpop.f32.mrb[0].mxu0
      %v4205 = vadd.f32 0.0, %v4204
      %v4206 = vpop.f32.mrb[0].mxu0
      %4207 = vmatprep.mubr.f32.mxu0 0.0
      %4208 = vmatmul.mubr.f32.gmra.mrb[0].mxu0 %v3554
      %v4209 = vpop.f32.mrb[0].mxu0
      %v4210 = vadd.f32 0.0, %v4209
      %v4211 = vpop.f32.mrb[0].mxu0
      %4212 = vmatprep.mubr.f32.mxu0 0.0
      %4213 = vmatmul.mubr.f32.gmra.mrb[0].mxu0 %v3556
      %v4214 = vpop.f32.mrb[0].mxu0
      %v4215 = vadd.f32 0.0, %v4214
      %v4216 = vpop.f32.mrb[0].mxu0
      %4217 = vmatprep.mubr.f32.mxu0 0.0
      %4218 = vmatmul.mubr.f32.gmra.mrb[0].mxu0 %v3558
      %v4219 = vpop.f32.mrb[0].mxu0
      %v4220 = vadd.f32 0.0, %v4219
      %v4221 = vpop.f32.mrb[0].mxu0
      %4222 = vmatprep.mubr.f32.mxu0 0.0
      %4223 = vmatmul.mubr.f32.gmra.mrb[0].mxu0 %v3560
      %v4224 = vpop.f32.mrb[0].mxu0
      %v4225 = vadd.f32 0.0, %v4224
      %v4226 = vpop.f32.mrb[0].mxu0
      %4227 = vmatprep.mubr.f32.mxu0 0.0
      %4228 = vmatmul.mubr.f32.gmra.mrb[0].mxu0 %v3562
      %v4229 = vpop.f32.mrb[0].mxu0
      %v4230 = vadd.f32 0.0, %v4229
      %v4231 = vpop.f32.mrb[0].mxu0
      %4232 = vmatprep.mubr.f32.mxu0 0.0
      %4233 = vmatmul.mubr.f32.gmra.mrb[0].mxu0 %v3564
      %v4234 = vpop.f32.mrb[0].mxu0
      %v4235 = vadd.f32 0.0, %v4234
      %v4236 = vpop.f32.mrb[0].mxu0
      %4237 = vmatprep.mubr.f32.mxu0 0.0
      %4238 = vmatmul.mubr.f32.gmra.mrb[0].mxu0 %v3566
      %v4239 = vpop.f32.mrb[0].mxu0
      %v4240 = vadd.f32 0.0, %v4239
      %v4241 = vpop.f32.mrb[0].mxu0
      %4242 = vmatprep.mubr.f32.mxu0 0.0
      %4243 = vmatmul.mubr.f32.gmra.mrb[0].mxu0 %v3568
      %v4244 = vpop.f32.mrb[0].mxu0
      %v4245 = vadd.f32 0.0, %v4244
      %v4246 = vpop.f32.mrb[0].mxu0
      %4247 = vmatprep.mubr.f32.mxu0 0.0
      %4248 = vmatmul.mubr.f32.gmra.mrb[0].mxu0 %v3570
      %v4249 = vpop.f32.mrb[0].mxu0
      %v4250 = vadd.f32 0.0, %v4249
      %v4251 = vpop.f32.mrb[0].mxu0
      %4252 = vmatprep.mubr.f32.mxu0 0.0
      %4253 = vmatmul.mubr.f32.gmra.mrb[0].mxu0 %v3572
      %v4254 = vpop.f32.mrb[0].mxu0
      %v4255 = vadd.f32 0.0, %v4254
      %v4256 = vpop.f32.mrb[0].mxu0
      %4257 = vmatprep.mubr.f32.mxu0 0.0
      %4258 = vmatmul.mubr.f32.gmra.mrb[0].mxu0 %v3574
      %v4259 = vpop.f32.mrb[0].mxu0
      %v4260 = vadd.f32 0.0, %v4259
      %v4261 = vpop.f32.mrb[0].mxu0
      %4262 = vmatprep.mubr.f32.mxu0 0.0
      %4263 = vmatmul.mubr.f32.gmra.mrb[0].mxu0 %v3576
      %v4264 = vpop.f32.mrb[0].mxu0
      %v4265 = vadd.f32 0.0, %v4264
      %v4266 = vpop.f32.mrb[0].mxu0
      %4267 = vmatprep.mubr.f32.mxu0 0.0
      %4268 = vmatmul.mubr.f32.gmra.mrb[0].mxu0 %v3578
      %v4269 = vpop.f32.mrb[0].mxu0
      %v4270 = vadd.f32 0.0, %v4269
      %v4271 = vpop.f32.mrb[0].mxu0
      %4272 = vmatprep.mubr.f32.mxu0 0.0
      %4273 = vmatmul.mubr.f32.gmra.mrb[0].mxu0 %v3580
      %v4274 = vpop.f32.mrb[0].mxu0
      %v4275 = vadd.f32 0.0, %v4274
      %v4276 = vpop.f32.mrb[0].mxu0
      %4277 = vmatprep.mubr.f32.mxu0 0.0
      %4278 = vmatmul.mubr.f32.gmra.mrb[0].mxu0 %v3582
      %v4279 = vpop.f32.mrb[0].mxu0
      %v4280 = vadd.f32 0.0, %v4279
      %v4281 = vpop.f32.mrb[0].mxu0
      %4282 = vmatprep.mubr.f32.mxu0 0.0
      %4283 = vmatmul.mubr.f32.gmra.mrb[0].mxu0 %v3584
      %v4284 = vpop.f32.mrb[0].mxu0
      %v4285 = vadd.f32 0.0, %v4284
      %v4286 = vpop.f32.mrb[0].mxu0
      %4287 = vmatprep.mubr.f32.mxu0 0.0
      %4288 = vmatmul.mubr.f32.gmra.mrb[0].mxu0 %v3586
      %v4289 = vpop.f32.mrb[0].mxu0
      %v4290 = vadd.f32 0.0, %v4289
      %v4291 = vpop.f32.mrb[0].mxu0
      %4292 = vmatprep.mubr.f32.mxu0 0.0
      %4293 = vmatmul.mubr.f32.gmra.mrb[0].mxu0 %v3588
      %v4294 = vpop.f32.mrb[0].mxu0
      %v4295 = vadd.f32 0.0, %v4294
      %v4296 = vpop.f32.mrb[0].mxu0
      %4297 = vmatprep.mubr.f32.mxu0 0.0
      %4298 = vmatmul.mubr.f32.gmra.mrb[0].mxu0 %v3590
      %v4299 = vpop.f32.mrb[0].mxu0
      %v4300 = vadd.f32 0.0, %v4299
      %v4301 = vpop.f32.mrb[0].mxu0
      %4302 = vmatprep.mubr.f32.mxu0 0.0
      %4303 = vmatmul.mubr.f32.gmra.mrb[0].mxu0 %v3592
      %v4304 = vpop.f32.mrb[0].mxu0
      %v4305 = vadd.f32 0.0, %v4304
      %v4306 = vpop.f32.mrb[0].mxu0
      %4307 = vmatprep.mubr.f32.mxu0 0.0
      %4308 = vmatmul.mubr.f32.gmra.mrb[0].mxu0 %v3594
      %v4309 = vpop.f32.mrb[0].mxu0
      %v4310 = vadd.f32 0.0, %v4309
      %v4311 = vpop.f32.mrb[0].mxu0
      %4312 = vmatprep.mubr.f32.mxu0 0.0
      %4313 = vmatmul.mubr.f32.gmra.mrb[0].mxu0 %v3596
      %v4314 = vpop.f32.mrb[0].mxu0
      %v4315 = vadd.f32 0.0, %v4314
      %v4316 = vpop.f32.mrb[0].mxu0
      %4317 = vmatprep.mubr.f32.mxu0 0.0
      %4318 = vmatmul.mubr.f32.gmra.mrb[0].mxu0 %v3598
      %v4319 = vpop.f32.mrb[0].mxu0
      %v4320 = vadd.f32 0.0, %v4319
      %v4321 = vpop.f32.mrb[0].mxu0
      %4322 = vmatprep.mubr.f32.mxu0 0.0
      %4323 = vmatmul.mubr.f32.gmra.mrb[0].mxu0 %v3600
      %v4324 = vpop.f32.mrb[0].mxu0
      %v4325 = vadd.f32 0.0, %v4324
      %v4326 = vpop.f32.mrb[0].mxu0
      %4327 = vmatprep.mubr.f32.mxu0 0.0
      %4328 = vmatmul.mubr.f32.gmra.mrb[0].mxu0 %v3602
      %v4329 = vpop.f32.mrb[0].mxu0
      %v4330 = vadd.f32 0.0, %v4329
      %v4331 = vpop.f32.mrb[0].mxu0
      %4332 = vmatprep.mubr.f32.mxu0 0.0
      %4333 = vmatmul.mubr.f32.gmra.mrb[0].mxu0 %v3604
      %v4334 = vpop.f32.mrb[0].mxu0
      %v4335 = vadd.f32 0.0, %v4334
      %v4336 = vpop.f32.mrb[0].mxu0
      %4337 = vmatprep.mubr.f32.mxu0 0.0
      %4338 = vmatmul.mubr.f32.gmra.mrb[0].mxu0 %v3606
      %v4339 = vpop.f32.mrb[0].mxu0
      %v4340 = vadd.f32 0.0, %v4339
      %v4341 = vpop.f32.mrb[0].mxu0
      %4342 = vmatprep.mubr.f32.mxu0 0.0
      %4343 = vmatmul.mubr.f32.gmra.mrb[0].mxu0 %v3608
      %v4344 = vpop.f32.mrb[0].mxu0
      %v4345 = vadd.f32 0.0, %v4344
      %v4346 = vpop.f32.mrb[0].mxu0
      %4347 = vmatprep.mubr.f32.mxu0 0.0
      %4348 = vmatmul.mubr.f32.gmra.mrb[0].mxu0 %v3610
      %v4349 = vpop.f32.mrb[0].mxu0
      %v4350 = vadd.f32 0.0, %v4349
      %v4351 = vpop.f32.mrb[0].mxu0
      %4352 = vmatprep.mubr.f32.mxu0 0.0
      %4353 = vmatmul.mubr.f32.gmra.mrb[0].mxu0 %v3612
      %v4354 = vpop.f32.mrb[0].mxu0
      %v4355 = vadd.f32 0.0, %v4354
      %v4356 = vpop.f32.mrb[0].mxu0
      %4357 = vmatprep.mubr.f32.mxu0 0.0
      %4358 = vmatmul.mubr.f32.gmra.mrb[0].mxu0 %v3614
      %v4359 = vpop.f32.mrb[0].mxu0
      %v4360 = vadd.f32 0.0, %v4359
      %v4361 = vpop.f32.mrb[0].mxu0
      %4362 = vmatprep.mubr.f32.mxu0 0.0
      %4363 = vmatmul.mubr.f32.gmra.mrb[0].mxu0 %v3616
      %v4364 = vpop.f32.mrb[0].mxu0
      %v4365 = vadd.f32 0.0, %v4364
      %v4366 = vpop.f32.mrb[0].mxu0
      %4367 = vmatprep.mubr.f32.mxu0 0.0
      %4368 = vmatmul.mubr.f32.gmra.mrb[0].mxu0 %v3618
      %v4369 = vpop.f32.mrb[0].mxu0
      %v4370 = vadd.f32 0.0, %v4369
      %v4371 = vpop.f32.mrb[0].mxu0
      %4372 = vmatprep.mubr.f32.mxu0 0.0
      %4373 = vmatmul.mubr.f32.gmra.mrb[0].mxu0 %v3620
      %v4374 = vpop.f32.mrb[0].mxu0
      %v4375 = vadd.f32 0.0, %v4374
      %v4376 = vpop.f32.mrb[0].mxu0
      %4377 = vmatprep.mubr.f32.mxu0 0.0
      %4378 = vmatmul.mubr.f32.gmra.mrb[0].mxu0 %v3622
      %v4379 = vpop.f32.mrb[0].mxu0
      %v4380 = vadd.f32 0.0, %v4379
      %v4381 = vpop.f32.mrb[0].mxu0
      %4382 = vmatprep.mubr.f32.mxu0 0.0
      %4383 = vmatmul.mubr.f32.gmra.mrb[0].mxu0 %v3624
      %v4384 = vpop.f32.mrb[0].mxu0
      %v4385 = vadd.f32 0.0, %v4384
      %v4386 = vpop.f32.mrb[0].mxu0
      %4387 = vmatprep.mubr.f32.mxu0 0.0
      %4388 = vmatmul.mubr.f32.gmra.mrb[0].mxu0 %v3626
      %v4389 = vpop.f32.mrb[0].mxu0
      %v4390 = vadd.f32 0.0, %v4389
      %v4391 = vpop.f32.mrb[0].mxu0
      %4392 = vmatprep.mubr.f32.mxu0 0.0
      %4393 = vmatmul.mubr.f32.gmra.mrb[0].mxu0 %v3628
      %v4394 = vpop.f32.mrb[0].mxu0
      %v4395 = vadd.f32 0.0, %v4394
      %v4396 = vpop.f32.mrb[0].mxu0
      %4397 = vmatprep.mubr.f32.mxu0 0.0
      %4398 = vmatmul.mubr.f32.gmra.mrb[0].mxu0 %v3630
      %v4399 = vpop.f32.mrb[0].mxu0
      %v4400 = vadd.f32 0.0, %v4399
      %v4401 = vpop.f32.mrb[0].mxu0
      %4402 = vmatprep.mubr.f32.mxu0 0.0
      %4403 = vmatmul.mubr.f32.gmra.mrb[0].mxu0 %v3632
      %v4404 = vpop.f32.mrb[0].mxu0
      %v4405 = vadd.f32 0.0, %v4404
      %v4406 = vpop.f32.mrb[0].mxu0
      %4407 = vmatprep.mubr.f32.mxu0 0.0
      %4408 = vmatmul.mubr.f32.gmra.mrb[0].mxu0 %v3634
      %v4409 = vpop.f32.mrb[0].mxu0
      %v4410 = vadd.f32 0.0, %v4409
      %v4411 = vpop.f32.mrb[0].mxu0
      %4412 = vmatprep.mubr.f32.mxu0 0.0
      %4413 = vmatmul.mubr.f32.gmra.mrb[0].mxu0 %v3636
      %v4414 = vpop.f32.mrb[0].mxu0
      %v4415 = vadd.f32 0.0, %v4414
      %v4416 = vpop.f32.mrb[0].mxu0
      %4417 = vmatprep.mubr.f32.mxu0 0.0
      %4418 = vmatmul.mubr.f32.gmra.mrb[0].mxu0 %v3638
      %v4419 = vpop.f32.mrb[0].mxu0
      %v4420 = vadd.f32 0.0, %v4419
      %v4421 = vpop.f32.mrb[0].mxu0
      %4422 = vmatprep.mubr.f32.mxu0 0.0
      %4423 = vmatmul.mubr.f32.gmra.mrb[0].mxu0 %v3640
      %v4424 = vpop.f32.mrb[0].mxu0
      %v4425 = vadd.f32 0.0, %v4424
      %v4426 = vpop.f32.mrb[0].mxu0
      %4427 = vmatprep.mubr.f32.mxu0 0.0
      %4428 = vmatmul.mubr.f32.gmra.mrb[0].mxu0 %v3642
      %v4429 = vpop.f32.mrb[0].mxu0
      %v4430 = vadd.f32 0.0, %v4429
      %v4431 = vpop.f32.mrb[0].mxu0
      %4432 = vmatprep.mubr.f32.mxu0 0.0
      %4433 = vmatmul.mubr.f32.gmra.mrb[0].mxu0 %v3644
      %v4434 = vpop.f32.mrb[0].mxu0
      %v4435 = vadd.f32 0.0, %v4434
      %v4436 = vpop.f32.mrb[0].mxu0
      %4437 = vmatprep.mubr.f32.mxu0 0.0
      %4438 = vmatmul.mubr.f32.gmra.mrb[0].mxu0 %v3646
      %v4439 = vpop.f32.mrb[0].mxu0
      %v4440 = vadd.f32 0.0, %v4439
      %v4441 = vpop.f32.mrb[0].mxu0
      %4442 = vmatprep.mubr.f32.mxu0 0.0
      %4443 = vmatmul.mubr.f32.gmra.mrb[0].mxu0 %v3648
      %v4444 = vpop.f32.mrb[0].mxu0
      %v4445 = vadd.f32 0.0, %v4444
      %v4446 = vpop.f32.mrb[0].mxu0
      %4447 = vmatprep.mubr.f32.mxu0 0.0
      %4448 = vmatmul.mubr.f32.gmra.mrb[0].mxu0 %v3650
      %v4449 = vpop.f32.mrb[0].mxu0
      %v4450 = vadd.f32 0.0, %v4449
      %v4451 = vpop.f32.mrb[0].mxu0
      %4452 = vmatprep.mubr.f32.mxu0 0.0
      %4453 = vmatmul.mubr.f32.gmra.mrb[0].mxu0 %v3652
      %v4454 = vpop.f32.mrb[0].mxu0
      %v4455 = vadd.f32 0.0, %v4454
      %v4456 = vpop.f32.mrb[0].mxu0
      %4457 = vmatprep.mubr.f32.mxu0 0.0
      %4458 = vmatmul.mubr.f32.gmra.mrb[0].mxu0 %v3654
      %v4459 = vpop.f32.mrb[0].mxu0
      %v4460 = vadd.f32 0.0, %v4459
      %v4461 = vpop.f32.mrb[0].mxu0
      %4462 = vmatprep.mubr.f32.mxu0 0.0
      %4463 = vmatmul.mubr.f32.gmra.mrb[0].mxu0 %v3656
      %v4464 = vpop.f32.mrb[0].mxu0
      %v4465 = vadd.f32 0.0, %v4464
      %v4466 = vpop.f32.mrb[0].mxu0
      %4467 = vmatprep.mubr.f32.mxu0 0.0
      %4468 = vmatmul.mubr.f32.gmra.mrb[0].mxu0 %v3658
      %v4469 = vpop.f32.mrb[0].mxu0
      %v4470 = vadd.f32 0.0, %v4469
      %v4471 = vpop.f32.mrb[0].mxu0
      %4472 = vmatprep.mubr.f32.mxu0 0.0
      %4473 = vmatmul.mubr.f32.gmra.mrb[0].mxu0 %v3660
      %v4474 = vpop.f32.mrb[0].mxu0
      %v4475 = vadd.f32 0.0, %v4474
      %v4476 = vpop.f32.mrb[0].mxu0
      %4477 = vmatprep.mubr.f32.mxu0 0.0
      %4478 = vmatmul.mubr.f32.gmra.mrb[0].mxu0 %v3662
      %v4479 = vpop.f32.mrb[0].mxu0
      %v4480 = vadd.f32 0.0, %v4479
      %v4481 = vpop.f32.mrb[0].mxu0
      %4482 = vmatprep.mubr.f32.mxu0 0.0
      %4483 = vmatmul.mubr.f32.gmra.mrb[0].mxu0 %v3664
      %v4484 = vpop.f32.mrb[0].mxu0
      %v4485 = vadd.f32 0.0, %v4484
      %v4486 = vpop.f32.mrb[0].mxu0
      %4487 = vmatprep.mubr.f32.mxu0 0.0
      %4488 = vmatmul.mubr.f32.gmra.mrb[0].mxu0 %v3666
      %v4489 = vpop.f32.mrb[0].mxu0
      %v4490 = vadd.f32 0.0, %v4489
      %v4491 = vpop.f32.mrb[0].mxu0
      %4492 = vmatprep.mubr.f32.mxu0 0.0
      %4493 = vmatmul.mubr.f32.gmra.mrb[0].mxu0 %v3668
      %v4494 = vpop.f32.mrb[0].mxu0
      %v4495 = vadd.f32 0.0, %v4494
      %v4496 = vpop.f32.mrb[0].mxu0
      %4497 = vmatprep.mubr.f32.mxu0 0.0
      %4498 = vmatmul.mubr.f32.gmra.mrb[0].mxu0 %v3670
      %v4499 = vpop.f32.mrb[0].mxu0
      %v4500 = vadd.f32 0.0, %v4499
      %v4501 = vpop.f32.mrb[0].mxu0
      %4502 = vmatprep.mubr.f32.mxu0 0.0
      %4503 = vmatmul.mubr.f32.gmra.mrb[0].mxu0 %v3672
      %v4504 = vpop.f32.mrb[0].mxu0
      %v4505 = vadd.f32 0.0, %v4504
      %v4506 = vpop.f32.mrb[0].mxu0
      %4507 = vmatprep.mubr.f32.mxu0 0.0
      %4508 = vmatmul.mubr.f32.gmra.mrb[0].mxu0 %v3674
      %v4509 = vpop.f32.mrb[0].mxu0
      %v4510 = vadd.f32 0.0, %v4509
      %v4511 = vpop.f32.mrb[0].mxu0
      %4512 = vdwg.mxu0
      %4513 = vmatprep.subr.mxu0 0.0
      %4514 = vmatpush1.msra.mxu0 %v3159
      %4515 = vmatprep.subr.mxu0 0.0
      %4516 = vmatpush1.msra.mxu0 0.0
      %4517 = vmatprep.subr.mxu0 0.0
      %4518 = vmatpush1.msra.mxu0 0.0
      %4519 = vmatprep.subr.mxu0 0.0
      %4520 = vmatpush1.msra.mxu0 0.0
      %4521 = vmatprep.subr.mxu0 0.0
      %4522 = vmatpush1.msra.mxu0 0.0
      %4523 = vmatprep.subr.mxu0 0.0
      %4524 = vmatpush1.msra.mxu0 0.0
      %4525 = vmatprep.subr.mxu0 0.0
      %4526 = vmatpush1.msra.mxu0 0.0
      %4527 = vmatprep.subr.mxu0 0.0
      %4528 = vmatpush1.msra.mxu0 0.0
      %4529 = vmatprep.subr.mxu0 0.0
      %4530 = vmatpush1.msra.mxu0 0.0
      %4531 = vmatprep.subr.mxu0 0.0
      %4532 = vmatpush1.msra.mxu0 0.0
      %4533 = vmatprep.subr.mxu0 0.0
      %4534 = vmatpush1.msra.mxu0 0.0
      %4535 = vmatprep.subr.mxu0 0.0
      %4536 = vmatpush1.msra.mxu0 0.0
      %4537 = vmatprep.subr.mxu0 0.0
      %4538 = vmatpush1.msra.mxu0 0.0
      %4539 = vmatprep.subr.mxu0 0.0
      %4540 = vmatpush1.msra.mxu0 0.0
      %4541 = vmatprep.subr.mxu0 0.0
      %4542 = vmatpush1.msra.mxu0 0.0
      %4543 = vmatprep.subr.mxu0 0.0
      %4544 = vmatpush1.msra.mxu0 0.0
      %4545 = vmatprep.subr.mxu0 0.0
      %4546 = vmatpush1.msra.mxu0 0.0
      %4547 = vmatprep.subr.mxu0 0.0
      %4548 = vmatpush1.msra.mxu0 0.0
      %4549 = vmatprep.subr.mxu0 0.0
      %4550 = vmatpush1.msra.mxu0 0.0
      %4551 = vmatprep.subr.mxu0 0.0
      %4552 = vmatpush1.msra.mxu0 0.0
      %4553 = vmatprep.subr.mxu0 0.0
      %4554 = vmatpush1.msra.mxu0 0.0
      %4555 = vmatprep.subr.mxu0 0.0
      %4556 = vmatpush1.msra.mxu0 0.0
      %4557 = vmatprep.subr.mxu0 0.0
      %4558 = vmatpush1.msra.mxu0 0.0
      %4559 = vmatprep.subr.mxu0 0.0
      %4560 = vmatpush1.msra.mxu0 0.0
      %4561 = vmatprep.subr.mxu0 0.0
      %4562 = vmatpush1.msra.mxu0 0.0
      %4563 = vmatprep.subr.mxu0 0.0
      %4564 = vmatpush1.msra.mxu0 0.0
      %4565 = vmatprep.subr.mxu0 0.0
      %4566 = vmatpush1.msra.mxu0 0.0
      %4567 = vmatprep.subr.mxu0 0.0
      %4568 = vmatpush1.msra.mxu0 0.0
      %4569 = vmatprep.subr.mxu0 0.0
      %4570 = vmatpush1.msra.mxu0 0.0
      %4571 = vmatprep.subr.mxu0 0.0
      %4572 = vmatpush1.msra.mxu0 0.0
      %4573 = vmatprep.subr.mxu0 0.0
      %4574 = vmatpush1.msra.mxu0 0.0
      %4575 = vmatprep.subr.mxu0 0.0
      %4576 = vmatpush1.msra.mxu0 0.0
      %4577 = vmatprep.mubr.f32.mxu0 0.0
      %4578 = vmatmul.mubr.f32.gmra.mrb[0].mxu0 %v2513
      %v4579 = vpop.f32.mrb[0].mxu0
      %v4580 = vadd.f32 %v4195, %v4579
      %v4581 = vpop.f32.mrb[0].mxu0
      %4582 = vmatprep.mubr.f32.mxu0 0.0
      %4583 = vmatmul.mubr.f32.gmra.mrb[0].mxu0 %v2515
      %v4584 = vpop.f32.mrb[0].mxu0
      %v4585 = vadd.f32 %v4200, %v4584
      %v4586 = vpop.f32.mrb[0].mxu0
      %4587 = vmatprep.mubr.f32.mxu0 0.0
      %4588 = vmatmul.mubr.f32.gmra.mrb[0].mxu0 %v2517
      %v4589 = vpop.f32.mrb[0].mxu0
      %v4590 = vadd.f32 %v4205, %v4589
      %v4591 = vpop.f32.mrb[0].mxu0
      %4592 = vmatprep.mubr.f32.mxu0 0.0
      %4593 = vmatmul.mubr.f32.gmra.mrb[0].mxu0 %v2519
      %v4594 = vpop.f32.mrb[0].mxu0
      %v4595 = vadd.f32 %v4210, %v4594
      %v4596 = vpop.f32.mrb[0].mxu0
      %4597 = vmatprep.mubr.f32.mxu0 0.0
      %4598 = vmatmul.mubr.f32.gmra.mrb[0].mxu0 %v2521
      %v4599 = vpop.f32.mrb[0].mxu0
      %v4600 = vadd.f32 %v4215, %v4599
      %v4601 = vpop.f32.mrb[0].mxu0
      %4602 = vmatprep.mubr.f32.mxu0 0.0
      %4603 = vmatmul.mubr.f32.gmra.mrb[0].mxu0 %v2523
      %v4604 = vpop.f32.mrb[0].mxu0
      %v4605 = vadd.f32 %v4220, %v4604
      %v4606 = vpop.f32.mrb[0].mxu0
      %4607 = vmatprep.mubr.f32.mxu0 0.0
      %4608 = vmatmul.mubr.f32.gmra.mrb[0].mxu0 %v2525
      %v4609 = vpop.f32.mrb[0].mxu0
      %v4610 = vadd.f32 %v4225, %v4609
      %v4611 = vpop.f32.mrb[0].mxu0
      %4612 = vmatprep.mubr.f32.mxu0 0.0
      %4613 = vmatmul.mubr.f32.gmra.mrb[0].mxu0 %v2527
      %v4614 = vpop.f32.mrb[0].mxu0
      %v4615 = vadd.f32 %v4230, %v4614
      %v4616 = vpop.f32.mrb[0].mxu0
      %4617 = vmatprep.mubr.f32.mxu0 0.0
      %4618 = vmatmul.mubr.f32.gmra.mrb[0].mxu0 %v2529
      %v4619 = vpop.f32.mrb[0].mxu0
      %v4620 = vadd.f32 %v4235, %v4619
      %v4621 = vpop.f32.mrb[0].mxu0
      %4622 = vmatprep.mubr.f32.mxu0 0.0
      %4623 = vmatmul.mubr.f32.gmra.mrb[0].mxu0 %v2531
      %v4624 = vpop.f32.mrb[0].mxu0
      %v4625 = vadd.f32 %v4240, %v4624
      %v4626 = vpop.f32.mrb[0].mxu0
      %4627 = vmatprep.mubr.f32.mxu0 0.0
      %4628 = vmatmul.mubr.f32.gmra.mrb[0].mxu0 %v2533
      %v4629 = vpop.f32.mrb[0].mxu0
      %v4630 = vadd.f32 %v4245, %v4629
      %v4631 = vpop.f32.mrb[0].mxu0
      %4632 = vmatprep.mubr.f32.mxu0 0.0
      %4633 = vmatmul.mubr.f32.gmra.mrb[0].mxu0 %v2535
      %v4634 = vpop.f32.mrb[0].mxu0
      %v4635 = vadd.f32 %v4250, %v4634
      %v4636 = vpop.f32.mrb[0].mxu0
      %4637 = vmatprep.mubr.f32.mxu0 0.0
      %4638 = vmatmul.mubr.f32.gmra.mrb[0].mxu0 %v2537
      %v4639 = vpop.f32.mrb[0].mxu0
      %v4640 = vadd.f32 %v4255, %v4639
      %v4641 = vpop.f32.mrb[0].mxu0
      %4642 = vmatprep.mubr.f32.mxu0 0.0
      %4643 = vmatmul.mubr.f32.gmra.mrb[0].mxu0 %v2539
      %v4644 = vpop.f32.mrb[0].mxu0
      %v4645 = vadd.f32 %v4260, %v4644
      %v4646 = vpop.f32.mrb[0].mxu0
      %4647 = vmatprep.mubr.f32.mxu0 0.0
      %4648 = vmatmul.mubr.f32.gmra.mrb[0].mxu0 %v2541
      %v4649 = vpop.f32.mrb[0].mxu0
      %v4650 = vadd.f32 %v4265, %v4649
      %v4651 = vpop.f32.mrb[0].mxu0
      %4652 = vmatprep.mubr.f32.mxu0 0.0
      %4653 = vmatmul.mubr.f32.gmra.mrb[0].mxu0 %v2543
      %v4654 = vpop.f32.mrb[0].mxu0
      %v4655 = vadd.f32 %v4270, %v4654
      %v4656 = vpop.f32.mrb[0].mxu0
      %4657 = vmatprep.mubr.f32.mxu0 0.0
      %4658 = vmatmul.mubr.f32.gmra.mrb[0].mxu0 %v2545
      %v4659 = vpop.f32.mrb[0].mxu0
      %v4660 = vadd.f32 %v4275, %v4659
      %v4661 = vpop.f32.mrb[0].mxu0
      %4662 = vmatprep.mubr.f32.mxu0 0.0
      %4663 = vmatmul.mubr.f32.gmra.mrb[0].mxu0 %v2547
      %v4664 = vpop.f32.mrb[0].mxu0
      %v4665 = vadd.f32 %v4280, %v4664
      %v4666 = vpop.f32.mrb[0].mxu0
      %4667 = vmatprep.mubr.f32.mxu0 0.0
      %4668 = vmatmul.mubr.f32.gmra.mrb[0].mxu0 %v2549
      %v4669 = vpop.f32.mrb[0].mxu0
      %v4670 = vadd.f32 %v4285, %v4669
      %v4671 = vpop.f32.mrb[0].mxu0
      %4672 = vmatprep.mubr.f32.mxu0 0.0
      %4673 = vmatmul.mubr.f32.gmra.mrb[0].mxu0 %v2551
      %v4674 = vpop.f32.mrb[0].mxu0
      %v4675 = vadd.f32 %v4290, %v4674
      %v4676 = vpop.f32.mrb[0].mxu0
      %4677 = vmatprep.mubr.f32.mxu0 0.0
      %4678 = vmatmul.mubr.f32.gmra.mrb[0].mxu0 %v2553
      %v4679 = vpop.f32.mrb[0].mxu0
      %v4680 = vadd.f32 %v4295, %v4679
      %v4681 = vpop.f32.mrb[0].mxu0
      %4682 = vmatprep.mubr.f32.mxu0 0.0
      %4683 = vmatmul.mubr.f32.gmra.mrb[0].mxu0 %v2555
      %v4684 = vpop.f32.mrb[0].mxu0
      %v4685 = vadd.f32 %v4300, %v4684
      %v4686 = vpop.f32.mrb[0].mxu0
      %4687 = vmatprep.mubr.f32.mxu0 0.0
      %4688 = vmatmul.mubr.f32.gmra.mrb[0].mxu0 %v2557
      %v4689 = vpop.f32.mrb[0].mxu0
      %v4690 = vadd.f32 %v4305, %v4689
      %v4691 = vpop.f32.mrb[0].mxu0
      %4692 = vmatprep.mubr.f32.mxu0 0.0
      %4693 = vmatmul.mubr.f32.gmra.mrb[0].mxu0 %v2559
      %v4694 = vpop.f32.mrb[0].mxu0
      %v4695 = vadd.f32 %v4310, %v4694
      %v4696 = vpop.f32.mrb[0].mxu0
      %4697 = vmatprep.mubr.f32.mxu0 0.0
      %4698 = vmatmul.mubr.f32.gmra.mrb[0].mxu0 %v2561
      %v4699 = vpop.f32.mrb[0].mxu0
      %v4700 = vadd.f32 %v4315, %v4699
      %v4701 = vpop.f32.mrb[0].mxu0
      %4702 = vmatprep.mubr.f32.mxu0 0.0
      %4703 = vmatmul.mubr.f32.gmra.mrb[0].mxu0 %v2563
      %v4704 = vpop.f32.mrb[0].mxu0
      %v4705 = vadd.f32 %v4320, %v4704
      %v4706 = vpop.f32.mrb[0].mxu0
      %4707 = vmatprep.mubr.f32.mxu0 0.0
      %4708 = vmatmul.mubr.f32.gmra.mrb[0].mxu0 %v2565
      %v4709 = vpop.f32.mrb[0].mxu0
      %v4710 = vadd.f32 %v4325, %v4709
      %v4711 = vpop.f32.mrb[0].mxu0
      %4712 = vmatprep.mubr.f32.mxu0 0.0
      %4713 = vmatmul.mubr.f32.gmra.mrb[0].mxu0 %v2567
      %v4714 = vpop.f32.mrb[0].mxu0
      %v4715 = vadd.f32 %v4330, %v4714
      %v4716 = vpop.f32.mrb[0].mxu0
      %4717 = vmatprep.mubr.f32.mxu0 0.0
      %4718 = vmatmul.mubr.f32.gmra.mrb[0].mxu0 %v2569
      %v4719 = vpop.f32.mrb[0].mxu0
      %v4720 = vadd.f32 %v4335, %v4719
      %v4721 = vpop.f32.mrb[0].mxu0
      %4722 = vmatprep.mubr.f32.mxu0 0.0
      %4723 = vmatmul.mubr.f32.gmra.mrb[0].mxu0 %v2571
      %v4724 = vpop.f32.mrb[0].mxu0
      %v4725 = vadd.f32 %v4340, %v4724
      %v4726 = vpop.f32.mrb[0].mxu0
      %4727 = vmatprep.mubr.f32.mxu0 0.0
      %4728 = vmatmul.mubr.f32.gmra.mrb[0].mxu0 %v2573
      %v4729 = vpop.f32.mrb[0].mxu0
      %v4730 = vadd.f32 %v4345, %v4729
      %v4731 = vpop.f32.mrb[0].mxu0
      %4732 = vmatprep.mubr.f32.mxu0 0.0
      %4733 = vmatmul.mubr.f32.gmra.mrb[0].mxu0 %v2575
      %v4734 = vpop.f32.mrb[0].mxu0
      %v4735 = vadd.f32 %v4350, %v4734
      %v4736 = vpop.f32.mrb[0].mxu0
      %4737 = vmatprep.mubr.f32.mxu0 0.0
      %4738 = vmatmul.mubr.f32.gmra.mrb[0].mxu0 %v2577
      %v4739 = vpop.f32.mrb[0].mxu0
      %v4740 = vadd.f32 %v4355, %v4739
      %v4741 = vpop.f32.mrb[0].mxu0
      %4742 = vmatprep.mubr.f32.mxu0 0.0
      %4743 = vmatmul.mubr.f32.gmra.mrb[0].mxu0 %v2579
      %v4744 = vpop.f32.mrb[0].mxu0
      %v4745 = vadd.f32 %v4360, %v4744
      %v4746 = vpop.f32.mrb[0].mxu0
      %4747 = vmatprep.mubr.f32.mxu0 0.0
      %4748 = vmatmul.mubr.f32.gmra.mrb[0].mxu0 %v2581
      %v4749 = vpop.f32.mrb[0].mxu0
      %v4750 = vadd.f32 %v4365, %v4749
      %v4751 = vpop.f32.mrb[0].mxu0
      %4752 = vmatprep.mubr.f32.mxu0 0.0
      %4753 = vmatmul.mubr.f32.gmra.mrb[0].mxu0 %v2583
      %v4754 = vpop.f32.mrb[0].mxu0
      %v4755 = vadd.f32 %v4370, %v4754
      %v4756 = vpop.f32.mrb[0].mxu0
      %4757 = vmatprep.mubr.f32.mxu0 0.0
      %4758 = vmatmul.mubr.f32.gmra.mrb[0].mxu0 %v2585
      %v4759 = vpop.f32.mrb[0].mxu0
      %v4760 = vadd.f32 %v4375, %v4759
      %v4761 = vpop.f32.mrb[0].mxu0
      %4762 = vmatprep.mubr.f32.mxu0 0.0
      %4763 = vmatmul.mubr.f32.gmra.mrb[0].mxu0 %v2587
      %v4764 = vpop.f32.mrb[0].mxu0
      %v4765 = vadd.f32 %v4380, %v4764
      %v4766 = vpop.f32.mrb[0].mxu0
      %4767 = vmatprep.mubr.f32.mxu0 0.0
      %4768 = vmatmul.mubr.f32.gmra.mrb[0].mxu0 %v2589
      %v4769 = vpop.f32.mrb[0].mxu0
      %v4770 = vadd.f32 %v4385, %v4769
      %v4771 = vpop.f32.mrb[0].mxu0
      %4772 = vmatprep.mubr.f32.mxu0 0.0
      %4773 = vmatmul.mubr.f32.gmra.mrb[0].mxu0 %v2591
      %v4774 = vpop.f32.mrb[0].mxu0
      %v4775 = vadd.f32 %v4390, %v4774
      %v4776 = vpop.f32.mrb[0].mxu0
      %4777 = vmatprep.mubr.f32.mxu0 0.0
      %4778 = vmatmul.mubr.f32.gmra.mrb[0].mxu0 %v2593
      %v4779 = vpop.f32.mrb[0].mxu0
      %v4780 = vadd.f32 %v4395, %v4779
      %v4781 = vpop.f32.mrb[0].mxu0
      %4782 = vmatprep.mubr.f32.mxu0 0.0
      %4783 = vmatmul.mubr.f32.gmra.mrb[0].mxu0 %v2595
      %v4784 = vpop.f32.mrb[0].mxu0
      %v4785 = vadd.f32 %v4400, %v4784
      %v4786 = vpop.f32.mrb[0].mxu0
      %4787 = vmatprep.mubr.f32.mxu0 0.0
      %4788 = vmatmul.mubr.f32.gmra.mrb[0].mxu0 %v2597
      %v4789 = vpop.f32.mrb[0].mxu0
      %v4790 = vadd.f32 %v4405, %v4789
      %v4791 = vpop.f32.mrb[0].mxu0
      %4792 = vmatprep.mubr.f32.mxu0 0.0
      %4793 = vmatmul.mubr.f32.gmra.mrb[0].mxu0 %v2599
      %v4794 = vpop.f32.mrb[0].mxu0
      %v4795 = vadd.f32 %v4410, %v4794
      %v4796 = vpop.f32.mrb[0].mxu0
      %4797 = vmatprep.mubr.f32.mxu0 0.0
      %4798 = vmatmul.mubr.f32.gmra.mrb[0].mxu0 %v2601
      %v4799 = vpop.f32.mrb[0].mxu0
      %v4800 = vadd.f32 %v4415, %v4799
      %v4801 = vpop.f32.mrb[0].mxu0
      %4802 = vmatprep.mubr.f32.mxu0 0.0
      %4803 = vmatmul.mubr.f32.gmra.mrb[0].mxu0 %v2603
      %v4804 = vpop.f32.mrb[0].mxu0
      %v4805 = vadd.f32 %v4420, %v4804
      %v4806 = vpop.f32.mrb[0].mxu0
      %4807 = vmatprep.mubr.f32.mxu0 0.0
      %4808 = vmatmul.mubr.f32.gmra.mrb[0].mxu0 %v2605
      %v4809 = vpop.f32.mrb[0].mxu0
      %v4810 = vadd.f32 %v4425, %v4809
      %v4811 = vpop.f32.mrb[0].mxu0
      %4812 = vmatprep.mubr.f32.mxu0 0.0
      %4813 = vmatmul.mubr.f32.gmra.mrb[0].mxu0 %v2607
      %v4814 = vpop.f32.mrb[0].mxu0
      %v4815 = vadd.f32 %v4430, %v4814
      %v4816 = vpop.f32.mrb[0].mxu0
      %4817 = vmatprep.mubr.f32.mxu0 0.0
      %4818 = vmatmul.mubr.f32.gmra.mrb[0].mxu0 %v2609
      %v4819 = vpop.f32.mrb[0].mxu0
      %v4820 = vadd.f32 %v4435, %v4819
      %v4821 = vpop.f32.mrb[0].mxu0
      %4822 = vmatprep.mubr.f32.mxu0 0.0
      %4823 = vmatmul.mubr.f32.gmra.mrb[0].mxu0 %v2611
      %v4824 = vpop.f32.mrb[0].mxu0
      %v4825 = vadd.f32 %v4440, %v4824
      %v4826 = vpop.f32.mrb[0].mxu0
      %4827 = vmatprep.mubr.f32.mxu0 0.0
      %4828 = vmatmul.mubr.f32.gmra.mrb[0].mxu0 %v2613
      %v4829 = vpop.f32.mrb[0].mxu0
      %v4830 = vadd.f32 %v4445, %v4829
      %v4831 = vpop.f32.mrb[0].mxu0
      %4832 = vmatprep.mubr.f32.mxu0 0.0
      %4833 = vmatmul.mubr.f32.gmra.mrb[0].mxu0 %v2615
      %v4834 = vpop.f32.mrb[0].mxu0
      %v4835 = vadd.f32 %v4450, %v4834
      %v4836 = vpop.f32.mrb[0].mxu0
      %4837 = vmatprep.mubr.f32.mxu0 0.0
      %4838 = vmatmul.mubr.f32.gmra.mrb[0].mxu0 %v2617
      %v4839 = vpop.f32.mrb[0].mxu0
      %v4840 = vadd.f32 %v4455, %v4839
      %v4841 = vpop.f32.mrb[0].mxu0
      %4842 = vmatprep.mubr.f32.mxu0 0.0
      %4843 = vmatmul.mubr.f32.gmra.mrb[0].mxu0 %v2619
      %v4844 = vpop.f32.mrb[0].mxu0
      %v4845 = vadd.f32 %v4460, %v4844
      %v4846 = vpop.f32.mrb[0].mxu0
      %4847 = vmatprep.mubr.f32.mxu0 0.0
      %4848 = vmatmul.mubr.f32.gmra.mrb[0].mxu0 %v2621
      %v4849 = vpop.f32.mrb[0].mxu0
      %v4850 = vadd.f32 %v4465, %v4849
      %v4851 = vpop.f32.mrb[0].mxu0
      %4852 = vmatprep.mubr.f32.mxu0 0.0
      %4853 = vmatmul.mubr.f32.gmra.mrb[0].mxu0 %v2623
      %v4854 = vpop.f32.mrb[0].mxu0
      %v4855 = vadd.f32 %v4470, %v4854
      %v4856 = vpop.f32.mrb[0].mxu0
      %4857 = vmatprep.mubr.f32.mxu0 0.0
      %4858 = vmatmul.mubr.f32.gmra.mrb[0].mxu0 %v2625
      %v4859 = vpop.f32.mrb[0].mxu0
      %v4860 = vadd.f32 %v4475, %v4859
      %v4861 = vpop.f32.mrb[0].mxu0
      %4862 = vmatprep.mubr.f32.mxu0 0.0
      %4863 = vmatmul.mubr.f32.gmra.mrb[0].mxu0 %v2627
      %v4864 = vpop.f32.mrb[0].mxu0
      %v4865 = vadd.f32 %v4480, %v4864
      %v4866 = vpop.f32.mrb[0].mxu0
      %4867 = vmatprep.mubr.f32.mxu0 0.0
      %4868 = vmatmul.mubr.f32.gmra.mrb[0].mxu0 %v2629
      %v4869 = vpop.f32.mrb[0].mxu0
      %v4870 = vadd.f32 %v4485, %v4869
      %v4871 = vpop.f32.mrb[0].mxu0
      %4872 = vmatprep.mubr.f32.mxu0 0.0
      %4873 = vmatmul.mubr.f32.gmra.mrb[0].mxu0 %v2631
      %v4874 = vpop.f32.mrb[0].mxu0
      %v4875 = vadd.f32 %v4490, %v4874
      %v4876 = vpop.f32.mrb[0].mxu0
      %4877 = vmatprep.mubr.f32.mxu0 0.0
      %4878 = vmatmul.mubr.f32.gmra.mrb[0].mxu0 %v2633
      %v4879 = vpop.f32.mrb[0].mxu0
      %v4880 = vadd.f32 %v4495, %v4879
      %v4881 = vpop.f32.mrb[0].mxu0
      %4882 = vmatprep.mubr.f32.mxu0 0.0
      %4883 = vmatmul.mubr.f32.gmra.mrb[0].mxu0 %v2635
      %v4884 = vpop.f32.mrb[0].mxu0
      %v4885 = vadd.f32 %v4500, %v4884
      %v4886 = vpop.f32.mrb[0].mxu0
      %4887 = vmatprep.mubr.f32.mxu0 0.0
      %4888 = vmatmul.mubr.f32.gmra.mrb[0].mxu0 %v2637
      %v4889 = vpop.f32.mrb[0].mxu0
      %v4890 = vadd.f32 %v4505, %v4889
      %v4891 = vpop.f32.mrb[0].mxu0
      %4892 = vmatprep.mubr.f32.mxu0 0.0
      %4893 = vmatmul.mubr.f32.gmra.mrb[0].mxu0 %v2639
      %v4894 = vpop.f32.mrb[0].mxu0
      %v4895 = vadd.f32 %v4510, %v4894
      %v4896 = vpop.f32.mrb[0].mxu0
      %4897 = vdwg.mxu0
      %v4898 = vsel %vm2512, %v2351, 0
      %v4900 = vsel %vm2512, %v2353, 0
      %v4902 = vsel %vm2512, %v2356, 0
      %v4904 = vsel %vm2512, %v2358, 0
      %v4906 = vsel %vm2512, %v2361, 0
      %v4908 = vsel %vm2512, %v2363, 0
      %v4910 = vsel %vm2512, %v2366, 0
      %v4912 = vsel %vm2512, %v2368, 0
      %v4914 = vsel %vm2512, %v2371, 0
      %v4916 = vsel %vm2512, %v2373, 0
      %v4918 = vsel %vm2512, %v2376, 0
      %v4920 = vsel %vm2512, %v2378, 0
      %v4922 = vsel %vm2512, %v2381, 0
      %v4924 = vsel %vm2512, %v2383, 0
      %v4926 = vsel %vm2512, %v2386, 0
      %v4928 = vsel %vm2512, %v2388, 0
      %v4930 = vsel %vm2512, %v2391, 0
      %v4932 = vsel %vm2512, %v2393, 0
      %v4934 = vsel %vm2512, %v2396, 0
      %v4936 = vsel %vm2512, %v2398, 0
      %v4938 = vsel %vm2512, %v2401, 0
      %v4940 = vsel %vm2512, %v2403, 0
      %v4942 = vsel %vm2512, %v2406, 0
      %v4944 = vsel %vm2512, %v2408, 0
      %v4946 = vsel %vm2512, %v2411, 0
      %v4948 = vsel %vm2512, %v2413, 0
      %v4950 = vsel %vm2512, %v2416, 0
      %v4952 = vsel %vm2512, %v2418, 0
      %v4954 = vsel %vm2512, %v2421, 0
      %v4956 = vsel %vm2512, %v2423, 0
      %v4958 = vsel %vm2512, %v2426, 0
      %v4960 = vsel %vm2512, %v2428, 0
      %v4962 = vsel %vm2512, %v2431, 0
      %v4964 = vsel %vm2512, %v2433, 0
      %v4966 = vsel %vm2512, %v2436, 0
      %v4968 = vsel %vm2512, %v2438, 0
      %v4970 = vsel %vm2512, %v2441, 0
      %v4972 = vsel %vm2512, %v2443, 0
      %v4974 = vsel %vm2512, %v2446, 0
      %v4976 = vsel %vm2512, %v2448, 0
      %v4978 = vsel %vm2512, %v2451, 0
      %v4980 = vsel %vm2512, %v2453, 0
      %v4982 = vsel %vm2512, %v2456, 0
      %v4984 = vsel %vm2512, %v2458, 0
      %v4986 = vsel %vm2512, %v2461, 0
      %v4988 = vsel %vm2512, %v2463, 0
      %v4990 = vsel %vm2512, %v2466, 0
      %v4992 = vsel %vm2512, %v2468, 0
      %v4994 = vsel %vm2512, %v2471, 0
      %v4996 = vsel %vm2512, %v2473, 0
      %v4998 = vsel %vm2512, %v2476, 0
      %v5000 = vsel %vm2512, %v2478, 0
      %v5002 = vsel %vm2512, %v2481, 0
      %v5004 = vsel %vm2512, %v2483, 0
      %v5006 = vsel %vm2512, %v2486, 0
      %v5008 = vsel %vm2512, %v2488, 0
      %v5010 = vsel %vm2512, %v2491, 0
      %v5012 = vsel %vm2512, %v2493, 0
      %v5014 = vsel %vm2512, %v2496, 0
      %v5016 = vsel %vm2512, %v2498, 0
      %v5018 = vsel %vm2512, %v2501, 0
      %v5020 = vsel %vm2512, %v2503, 0
      %v5022 = vsel %vm2512, %v2506, 0
      %v5024 = vsel %vm2512, %v2508, 0
      %5026 = vmatprep.subr.mxu0 0.0
      %5027 = vmatpush1.msra.mxu0 %v3677
      %5028 = vmatprep.subr.mxu0 0.0
      %5029 = vmatpush1.msra.mxu0 0.0
      %5030 = vmatprep.subr.mxu0 0.0
      %5031 = vmatpush1.msra.mxu0 0.0
      %5032 = vmatprep.subr.mxu0 0.0
      %5033 = vmatpush1.msra.mxu0 0.0
      %5034 = vmatprep.subr.mxu0 0.0
      %5035 = vmatpush1.msra.mxu0 0.0
      %5036 = vmatprep.subr.mxu0 0.0
      %5037 = vmatpush1.msra.mxu0 0.0
      %5038 = vmatprep.subr.mxu0 0.0
      %5039 = vmatpush1.msra.mxu0 0.0
      %5040 = vmatprep.subr.mxu0 0.0
      %5041 = vmatpush1.msra.mxu0 0.0
      %5042 = vmatprep.subr.mxu0 0.0
      %5043 = vmatpush1.msra.mxu0 0.0
      %5044 = vmatprep.subr.mxu0 0.0
      %5045 = vmatpush1.msra.mxu0 0.0
      %5046 = vmatprep.subr.mxu0 0.0
      %5047 = vmatpush1.msra.mxu0 0.0
      %5048 = vmatprep.subr.mxu0 0.0
      %5049 = vmatpush1.msra.mxu0 0.0
      %5050 = vmatprep.subr.mxu0 0.0
      %5051 = vmatpush1.msra.mxu0 0.0
      %5052 = vmatprep.subr.mxu0 0.0
      %5053 = vmatpush1.msra.mxu0 0.0
      %5054 = vmatprep.subr.mxu0 0.0
      %5055 = vmatpush1.msra.mxu0 0.0
      %5056 = vmatprep.subr.mxu0 0.0
      %5057 = vmatpush1.msra.mxu0 0.0
      %5058 = vmatprep.subr.mxu0 0.0
      %5059 = vmatpush1.msra.mxu0 0.0
      %5060 = vmatprep.subr.mxu0 0.0
      %5061 = vmatpush1.msra.mxu0 0.0
      %5062 = vmatprep.subr.mxu0 0.0
      %5063 = vmatpush1.msra.mxu0 0.0
      %5064 = vmatprep.subr.mxu0 0.0
      %5065 = vmatpush1.msra.mxu0 0.0
      %5066 = vmatprep.subr.mxu0 0.0
      %5067 = vmatpush1.msra.mxu0 0.0
      %5068 = vmatprep.subr.mxu0 0.0
      %5069 = vmatpush1.msra.mxu0 0.0
      %5070 = vmatprep.subr.mxu0 0.0
      %5071 = vmatpush1.msra.mxu0 0.0
      %5072 = vmatprep.subr.mxu0 0.0
      %5073 = vmatpush1.msra.mxu0 0.0
      %5074 = vmatprep.subr.mxu0 0.0
      %5075 = vmatpush1.msra.mxu0 0.0
      %5076 = vmatprep.subr.mxu0 0.0
      %5077 = vmatpush1.msra.mxu0 0.0
      %5078 = vmatprep.subr.mxu0 0.0
      %5079 = vmatpush1.msra.mxu0 0.0
      %5080 = vmatprep.subr.mxu0 0.0
      %5081 = vmatpush1.msra.mxu0 0.0
      %5082 = vmatprep.subr.mxu0 0.0
      %5083 = vmatpush1.msra.mxu0 0.0
      %5084 = vmatprep.subr.mxu0 0.0
      %5085 = vmatpush1.msra.mxu0 0.0
      %5086 = vmatprep.subr.mxu0 0.0
      %5087 = vmatpush1.msra.mxu0 0.0
      %5088 = vmatprep.subr.mxu0 0.0
      %5089 = vmatpush1.msra.mxu0 0.0
      %5090 = vmatprep.mubr.f32.mxu0 0.0
      %5091 = vmatmul.mubr.f32.gmra.mrb[0].mxu0 %v4898
      %v5092 = vpop.f32.mrb[0].mxu0
      %v5093 = vadd.f32 0.0, %v5092
      %v5094 = vpop.f32.mrb[0].mxu0
      %5095 = vmatprep.mubr.f32.mxu0 0.0
      %5096 = vmatmul.mubr.f32.gmra.mrb[0].mxu0 %v4900
      %v5097 = vpop.f32.mrb[0].mxu0
      %v5098 = vadd.f32 0.0, %v5097
      %v5099 = vpop.f32.mrb[0].mxu0
      %5100 = vmatprep.mubr.f32.mxu0 0.0
      %5101 = vmatmul.mubr.f32.gmra.mrb[0].mxu0 %v4902
      %v5102 = vpop.f32.mrb[0].mxu0
      %v5103 = vadd.f32 0.0, %v5102
      %v5104 = vpop.f32.mrb[0].mxu0
      %5105 = vmatprep.mubr.f32.mxu0 0.0
      %5106 = vmatmul.mubr.f32.gmra.mrb[0].mxu0 %v4904
      %v5107 = vpop.f32.mrb[0].mxu0
      %v5108 = vadd.f32 0.0, %v5107
      %v5109 = vpop.f32.mrb[0].mxu0
      %5110 = vmatprep.mubr.f32.mxu0 0.0
      %5111 = vmatmul.mubr.f32.gmra.mrb[0].mxu0 %v4906
      %v5112 = vpop.f32.mrb[0].mxu0
      %v5113 = vadd.f32 0.0, %v5112
      %v5114 = vpop.f32.mrb[0].mxu0
      %5115 = vmatprep.mubr.f32.mxu0 0.0
      %5116 = vmatmul.mubr.f32.gmra.mrb[0].mxu0 %v4908
      %v5117 = vpop.f32.mrb[0].mxu0
      %v5118 = vadd.f32 0.0, %v5117
      %v5119 = vpop.f32.mrb[0].mxu0
      %5120 = vmatprep.mubr.f32.mxu0 0.0
      %5121 = vmatmul.mubr.f32.gmra.mrb[0].mxu0 %v4910
      %v5122 = vpop.f32.mrb[0].mxu0
      %v5123 = vadd.f32 0.0, %v5122
      %v5124 = vpop.f32.mrb[0].mxu0
      %5125 = vmatprep.mubr.f32.mxu0 0.0
      %5126 = vmatmul.mubr.f32.gmra.mrb[0].mxu0 %v4912
      %v5127 = vpop.f32.mrb[0].mxu0
      %v5128 = vadd.f32 0.0, %v5127
      %v5129 = vpop.f32.mrb[0].mxu0
      %5130 = vmatprep.mubr.f32.mxu0 0.0
      %5131 = vmatmul.mubr.f32.gmra.mrb[0].mxu0 %v4914
      %v5132 = vpop.f32.mrb[0].mxu0
      %v5133 = vadd.f32 0.0, %v5132
      %v5134 = vpop.f32.mrb[0].mxu0
      %5135 = vmatprep.mubr.f32.mxu0 0.0
      %5136 = vmatmul.mubr.f32.gmra.mrb[0].mxu0 %v4916
      %v5137 = vpop.f32.mrb[0].mxu0
      %v5138 = vadd.f32 0.0, %v5137
      %v5139 = vpop.f32.mrb[0].mxu0
      %5140 = vmatprep.mubr.f32.mxu0 0.0
      %5141 = vmatmul.mubr.f32.gmra.mrb[0].mxu0 %v4918
      %v5142 = vpop.f32.mrb[0].mxu0
      %v5143 = vadd.f32 0.0, %v5142
      %v5144 = vpop.f32.mrb[0].mxu0
      %5145 = vmatprep.mubr.f32.mxu0 0.0
      %5146 = vmatmul.mubr.f32.gmra.mrb[0].mxu0 %v4920
      %v5147 = vpop.f32.mrb[0].mxu0
      %v5148 = vadd.f32 0.0, %v5147
      %v5149 = vpop.f32.mrb[0].mxu0
      %5150 = vmatprep.mubr.f32.mxu0 0.0
      %5151 = vmatmul.mubr.f32.gmra.mrb[0].mxu0 %v4922
      %v5152 = vpop.f32.mrb[0].mxu0
      %v5153 = vadd.f32 0.0, %v5152
      %v5154 = vpop.f32.mrb[0].mxu0
      %5155 = vmatprep.mubr.f32.mxu0 0.0
      %5156 = vmatmul.mubr.f32.gmra.mrb[0].mxu0 %v4924
      %v5157 = vpop.f32.mrb[0].mxu0
      %v5158 = vadd.f32 0.0, %v5157
      %v5159 = vpop.f32.mrb[0].mxu0
      %5160 = vmatprep.mubr.f32.mxu0 0.0
      %5161 = vmatmul.mubr.f32.gmra.mrb[0].mxu0 %v4926
      %v5162 = vpop.f32.mrb[0].mxu0
      %v5163 = vadd.f32 0.0, %v5162
      %v5164 = vpop.f32.mrb[0].mxu0
      %5165 = vmatprep.mubr.f32.mxu0 0.0
      %5166 = vmatmul.mubr.f32.gmra.mrb[0].mxu0 %v4928
      %v5167 = vpop.f32.mrb[0].mxu0
      %v5168 = vadd.f32 0.0, %v5167
      %v5169 = vpop.f32.mrb[0].mxu0
      %5170 = vmatprep.mubr.f32.mxu0 0.0
      %5171 = vmatmul.mubr.f32.gmra.mrb[0].mxu0 %v4930
      %v5172 = vpop.f32.mrb[0].mxu0
      %v5173 = vadd.f32 0.0, %v5172
      %v5174 = vpop.f32.mrb[0].mxu0
      %5175 = vmatprep.mubr.f32.mxu0 0.0
      %5176 = vmatmul.mubr.f32.gmra.mrb[0].mxu0 %v4932
      %v5177 = vpop.f32.mrb[0].mxu0
      %v5178 = vadd.f32 0.0, %v5177
      %v5179 = vpop.f32.mrb[0].mxu0
      %5180 = vmatprep.mubr.f32.mxu0 0.0
      %5181 = vmatmul.mubr.f32.gmra.mrb[0].mxu0 %v4934
      %v5182 = vpop.f32.mrb[0].mxu0
      %v5183 = vadd.f32 0.0, %v5182
      %v5184 = vpop.f32.mrb[0].mxu0
      %5185 = vmatprep.mubr.f32.mxu0 0.0
      %5186 = vmatmul.mubr.f32.gmra.mrb[0].mxu0 %v4936
      %v5187 = vpop.f32.mrb[0].mxu0
      %v5188 = vadd.f32 0.0, %v5187
      %v5189 = vpop.f32.mrb[0].mxu0
      %5190 = vmatprep.mubr.f32.mxu0 0.0
      %5191 = vmatmul.mubr.f32.gmra.mrb[0].mxu0 %v4938
      %v5192 = vpop.f32.mrb[0].mxu0
      %v5193 = vadd.f32 0.0, %v5192
      %v5194 = vpop.f32.mrb[0].mxu0
      %5195 = vmatprep.mubr.f32.mxu0 0.0
      %5196 = vmatmul.mubr.f32.gmra.mrb[0].mxu0 %v4940
      %v5197 = vpop.f32.mrb[0].mxu0
      %v5198 = vadd.f32 0.0, %v5197
      %v5199 = vpop.f32.mrb[0].mxu0
      %5200 = vmatprep.mubr.f32.mxu0 0.0
      %5201 = vmatmul.mubr.f32.gmra.mrb[0].mxu0 %v4942
      %v5202 = vpop.f32.mrb[0].mxu0
      %v5203 = vadd.f32 0.0, %v5202
      %v5204 = vpop.f32.mrb[0].mxu0
      %5205 = vmatprep.mubr.f32.mxu0 0.0
      %5206 = vmatmul.mubr.f32.gmra.mrb[0].mxu0 %v4944
      %v5207 = vpop.f32.mrb[0].mxu0
      %v5208 = vadd.f32 0.0, %v5207
      %v5209 = vpop.f32.mrb[0].mxu0
      %5210 = vmatprep.mubr.f32.mxu0 0.0
      %5211 = vmatmul.mubr.f32.gmra.mrb[0].mxu0 %v4946
      %v5212 = vpop.f32.mrb[0].mxu0
      %v5213 = vadd.f32 0.0, %v5212
      %v5214 = vpop.f32.mrb[0].mxu0
      %5215 = vmatprep.mubr.f32.mxu0 0.0
      %5216 = vmatmul.mubr.f32.gmra.mrb[0].mxu0 %v4948
      %v5217 = vpop.f32.mrb[0].mxu0
      %v5218 = vadd.f32 0.0, %v5217
      %v5219 = vpop.f32.mrb[0].mxu0
      %5220 = vmatprep.mubr.f32.mxu0 0.0
      %5221 = vmatmul.mubr.f32.gmra.mrb[0].mxu0 %v4950
      %v5222 = vpop.f32.mrb[0].mxu0
      %v5223 = vadd.f32 0.0, %v5222
      %v5224 = vpop.f32.mrb[0].mxu0
      %5225 = vmatprep.mubr.f32.mxu0 0.0
      %5226 = vmatmul.mubr.f32.gmra.mrb[0].mxu0 %v4952
      %v5227 = vpop.f32.mrb[0].mxu0
      %v5228 = vadd.f32 0.0, %v5227
      %v5229 = vpop.f32.mrb[0].mxu0
      %5230 = vmatprep.mubr.f32.mxu0 0.0
      %5231 = vmatmul.mubr.f32.gmra.mrb[0].mxu0 %v4954
      %v5232 = vpop.f32.mrb[0].mxu0
      %v5233 = vadd.f32 0.0, %v5232
      %v5234 = vpop.f32.mrb[0].mxu0
      %5235 = vmatprep.mubr.f32.mxu0 0.0
      %5236 = vmatmul.mubr.f32.gmra.mrb[0].mxu0 %v4956
      %v5237 = vpop.f32.mrb[0].mxu0
      %v5238 = vadd.f32 0.0, %v5237
      %v5239 = vpop.f32.mrb[0].mxu0
      %5240 = vmatprep.mubr.f32.mxu0 0.0
      %5241 = vmatmul.mubr.f32.gmra.mrb[0].mxu0 %v4958
      %v5242 = vpop.f32.mrb[0].mxu0
      %v5243 = vadd.f32 0.0, %v5242
      %v5244 = vpop.f32.mrb[0].mxu0
      %5245 = vmatprep.mubr.f32.mxu0 0.0
      %5246 = vmatmul.mubr.f32.gmra.mrb[0].mxu0 %v4960
      %v5247 = vpop.f32.mrb[0].mxu0
      %v5248 = vadd.f32 0.0, %v5247
      %v5249 = vpop.f32.mrb[0].mxu0
      %5250 = vmatprep.mubr.f32.mxu0 0.0
      %5251 = vmatmul.mubr.f32.gmra.mrb[0].mxu0 %v4962
      %v5252 = vpop.f32.mrb[0].mxu0
      %v5253 = vadd.f32 0.0, %v5252
      %v5254 = vpop.f32.mrb[0].mxu0
      %5255 = vmatprep.mubr.f32.mxu0 0.0
      %5256 = vmatmul.mubr.f32.gmra.mrb[0].mxu0 %v4964
      %v5257 = vpop.f32.mrb[0].mxu0
      %v5258 = vadd.f32 0.0, %v5257
      %v5259 = vpop.f32.mrb[0].mxu0
      %5260 = vmatprep.mubr.f32.mxu0 0.0
      %5261 = vmatmul.mubr.f32.gmra.mrb[0].mxu0 %v4966
      %v5262 = vpop.f32.mrb[0].mxu0
      %v5263 = vadd.f32 0.0, %v5262
      %v5264 = vpop.f32.mrb[0].mxu0
      %5265 = vmatprep.mubr.f32.mxu0 0.0
      %5266 = vmatmul.mubr.f32.gmra.mrb[0].mxu0 %v4968
      %v5267 = vpop.f32.mrb[0].mxu0
      %v5268 = vadd.f32 0.0, %v5267
      %v5269 = vpop.f32.mrb[0].mxu0
      %5270 = vmatprep.mubr.f32.mxu0 0.0
      %5271 = vmatmul.mubr.f32.gmra.mrb[0].mxu0 %v4970
      %v5272 = vpop.f32.mrb[0].mxu0
      %v5273 = vadd.f32 0.0, %v5272
      %v5274 = vpop.f32.mrb[0].mxu0
      %5275 = vmatprep.mubr.f32.mxu0 0.0
      %5276 = vmatmul.mubr.f32.gmra.mrb[0].mxu0 %v4972
      %v5277 = vpop.f32.mrb[0].mxu0
      %v5278 = vadd.f32 0.0, %v5277
      %v5279 = vpop.f32.mrb[0].mxu0
      %5280 = vmatprep.mubr.f32.mxu0 0.0
      %5281 = vmatmul.mubr.f32.gmra.mrb[0].mxu0 %v4974
      %v5282 = vpop.f32.mrb[0].mxu0
      %v5283 = vadd.f32 0.0, %v5282
      %v5284 = vpop.f32.mrb[0].mxu0
      %5285 = vmatprep.mubr.f32.mxu0 0.0
      %5286 = vmatmul.mubr.f32.gmra.mrb[0].mxu0 %v4976
      %v5287 = vpop.f32.mrb[0].mxu0
      %v5288 = vadd.f32 0.0, %v5287
      %v5289 = vpop.f32.mrb[0].mxu0
      %5290 = vmatprep.mubr.f32.mxu0 0.0
      %5291 = vmatmul.mubr.f32.gmra.mrb[0].mxu0 %v4978
      %v5292 = vpop.f32.mrb[0].mxu0
      %v5293 = vadd.f32 0.0, %v5292
      %v5294 = vpop.f32.mrb[0].mxu0
      %5295 = vmatprep.mubr.f32.mxu0 0.0
      %5296 = vmatmul.mubr.f32.gmra.mrb[0].mxu0 %v4980
      %v5297 = vpop.f32.mrb[0].mxu0
      %v5298 = vadd.f32 0.0, %v5297
      %v5299 = vpop.f32.mrb[0].mxu0
      %5300 = vmatprep.mubr.f32.mxu0 0.0
      %5301 = vmatmul.mubr.f32.gmra.mrb[0].mxu0 %v4982
      %v5302 = vpop.f32.mrb[0].mxu0
      %v5303 = vadd.f32 0.0, %v5302
      %v5304 = vpop.f32.mrb[0].mxu0
      %5305 = vmatprep.mubr.f32.mxu0 0.0
      %5306 = vmatmul.mubr.f32.gmra.mrb[0].mxu0 %v4984
      %v5307 = vpop.f32.mrb[0].mxu0
      %v5308 = vadd.f32 0.0, %v5307
      %v5309 = vpop.f32.mrb[0].mxu0
      %5310 = vmatprep.mubr.f32.mxu0 0.0
      %5311 = vmatmul.mubr.f32.gmra.mrb[0].mxu0 %v4986
      %v5312 = vpop.f32.mrb[0].mxu0
      %v5313 = vadd.f32 0.0, %v5312
      %v5314 = vpop.f32.mrb[0].mxu0
      %5315 = vmatprep.mubr.f32.mxu0 0.0
      %5316 = vmatmul.mubr.f32.gmra.mrb[0].mxu0 %v4988
      %v5317 = vpop.f32.mrb[0].mxu0
      %v5318 = vadd.f32 0.0, %v5317
      %v5319 = vpop.f32.mrb[0].mxu0
      %5320 = vmatprep.mubr.f32.mxu0 0.0
      %5321 = vmatmul.mubr.f32.gmra.mrb[0].mxu0 %v4990
      %v5322 = vpop.f32.mrb[0].mxu0
      %v5323 = vadd.f32 0.0, %v5322
      %v5324 = vpop.f32.mrb[0].mxu0
      %5325 = vmatprep.mubr.f32.mxu0 0.0
      %5326 = vmatmul.mubr.f32.gmra.mrb[0].mxu0 %v4992
      %v5327 = vpop.f32.mrb[0].mxu0
      %v5328 = vadd.f32 0.0, %v5327
      %v5329 = vpop.f32.mrb[0].mxu0
      %5330 = vmatprep.mubr.f32.mxu0 0.0
      %5331 = vmatmul.mubr.f32.gmra.mrb[0].mxu0 %v4994
      %v5332 = vpop.f32.mrb[0].mxu0
      %v5333 = vadd.f32 0.0, %v5332
      %v5334 = vpop.f32.mrb[0].mxu0
      %5335 = vmatprep.mubr.f32.mxu0 0.0
      %5336 = vmatmul.mubr.f32.gmra.mrb[0].mxu0 %v4996
      %v5337 = vpop.f32.mrb[0].mxu0
      %v5338 = vadd.f32 0.0, %v5337
      %v5339 = vpop.f32.mrb[0].mxu0
      %5340 = vmatprep.mubr.f32.mxu0 0.0
      %5341 = vmatmul.mubr.f32.gmra.mrb[0].mxu0 %v4998
      %v5342 = vpop.f32.mrb[0].mxu0
      %v5343 = vadd.f32 0.0, %v5342
      %v5344 = vpop.f32.mrb[0].mxu0
      %5345 = vmatprep.mubr.f32.mxu0 0.0
      %5346 = vmatmul.mubr.f32.gmra.mrb[0].mxu0 %v5000
      %v5347 = vpop.f32.mrb[0].mxu0
      %v5348 = vadd.f32 0.0, %v5347
      %v5349 = vpop.f32.mrb[0].mxu0
      %5350 = vmatprep.mubr.f32.mxu0 0.0
      %5351 = vmatmul.mubr.f32.gmra.mrb[0].mxu0 %v5002
      %v5352 = vpop.f32.mrb[0].mxu0
      %v5353 = vadd.f32 0.0, %v5352
      %v5354 = vpop.f32.mrb[0].mxu0
      %5355 = vmatprep.mubr.f32.mxu0 0.0
      %5356 = vmatmul.mubr.f32.gmra.mrb[0].mxu0 %v5004
      %v5357 = vpop.f32.mrb[0].mxu0
      %v5358 = vadd.f32 0.0, %v5357
      %v5359 = vpop.f32.mrb[0].mxu0
      %5360 = vmatprep.mubr.f32.mxu0 0.0
      %5361 = vmatmul.mubr.f32.gmra.mrb[0].mxu0 %v5006
      %v5362 = vpop.f32.mrb[0].mxu0
      %v5363 = vadd.f32 0.0, %v5362
      %v5364 = vpop.f32.mrb[0].mxu0
      %5365 = vmatprep.mubr.f32.mxu0 0.0
      %5366 = vmatmul.mubr.f32.gmra.mrb[0].mxu0 %v5008
      %v5367 = vpop.f32.mrb[0].mxu0
      %v5368 = vadd.f32 0.0, %v5367
      %v5369 = vpop.f32.mrb[0].mxu0
      %5370 = vmatprep.mubr.f32.mxu0 0.0
      %5371 = vmatmul.mubr.f32.gmra.mrb[0].mxu0 %v5010
      %v5372 = vpop.f32.mrb[0].mxu0
      %v5373 = vadd.f32 0.0, %v5372
      %v5374 = vpop.f32.mrb[0].mxu0
      %5375 = vmatprep.mubr.f32.mxu0 0.0
      %5376 = vmatmul.mubr.f32.gmra.mrb[0].mxu0 %v5012
      %v5377 = vpop.f32.mrb[0].mxu0
      %v5378 = vadd.f32 0.0, %v5377
      %v5379 = vpop.f32.mrb[0].mxu0
      %5380 = vmatprep.mubr.f32.mxu0 0.0
      %5381 = vmatmul.mubr.f32.gmra.mrb[0].mxu0 %v5014
      %v5382 = vpop.f32.mrb[0].mxu0
      %v5383 = vadd.f32 0.0, %v5382
      %v5384 = vpop.f32.mrb[0].mxu0
      %5385 = vmatprep.mubr.f32.mxu0 0.0
      %5386 = vmatmul.mubr.f32.gmra.mrb[0].mxu0 %v5016
      %v5387 = vpop.f32.mrb[0].mxu0
      %v5388 = vadd.f32 0.0, %v5387
      %v5389 = vpop.f32.mrb[0].mxu0
      %5390 = vmatprep.mubr.f32.mxu0 0.0
      %5391 = vmatmul.mubr.f32.gmra.mrb[0].mxu0 %v5018
      %v5392 = vpop.f32.mrb[0].mxu0
      %v5393 = vadd.f32 0.0, %v5392
      %v5394 = vpop.f32.mrb[0].mxu0
      %5395 = vmatprep.mubr.f32.mxu0 0.0
      %5396 = vmatmul.mubr.f32.gmra.mrb[0].mxu0 %v5020
      %v5397 = vpop.f32.mrb[0].mxu0
      %v5398 = vadd.f32 0.0, %v5397
      %v5399 = vpop.f32.mrb[0].mxu0
      %5400 = vmatprep.mubr.f32.mxu0 0.0
      %5401 = vmatmul.mubr.f32.gmra.mrb[0].mxu0 %v5022
      %v5402 = vpop.f32.mrb[0].mxu0
      %v5403 = vadd.f32 0.0, %v5402
      %v5404 = vpop.f32.mrb[0].mxu0
      %5405 = vmatprep.mubr.f32.mxu0 0.0
      %5406 = vmatmul.mubr.f32.gmra.mrb[0].mxu0 %v5024
      %v5407 = vpop.f32.mrb[0].mxu0
      %v5408 = vadd.f32 0.0, %v5407
      %v5409 = vpop.f32.mrb[0].mxu0
      %5410 = vdwg.mxu0
      %v5411 = vadd.f32 %v4580, %v5093
      %v5412 = vadd.f32 %v4585, %v5098
      %v5413 = vadd.f32 %v4590, %v5103
      %v5414 = vadd.f32 %v4595, %v5108
      %v5415 = vadd.f32 %v4600, %v5113
      %v5416 = vadd.f32 %v4605, %v5118
      %v5417 = vadd.f32 %v4610, %v5123
      %v5418 = vadd.f32 %v4615, %v5128
      %v5419 = vadd.f32 %v4620, %v5133
      %v5420 = vadd.f32 %v4625, %v5138
      %v5421 = vadd.f32 %v4630, %v5143
      %v5422 = vadd.f32 %v4635, %v5148
      %v5423 = vadd.f32 %v4640, %v5153
      %v5424 = vadd.f32 %v4645, %v5158
      %v5425 = vadd.f32 %v4650, %v5163
      %v5426 = vadd.f32 %v4655, %v5168
      %v5427 = vadd.f32 %v4660, %v5173
      %v5428 = vadd.f32 %v4665, %v5178
      %v5429 = vadd.f32 %v4670, %v5183
      %v5430 = vadd.f32 %v4675, %v5188
      %v5431 = vadd.f32 %v4680, %v5193
      %v5432 = vadd.f32 %v4685, %v5198
      %v5433 = vadd.f32 %v4690, %v5203
      %v5434 = vadd.f32 %v4695, %v5208
      %v5435 = vadd.f32 %v4700, %v5213
      %v5436 = vadd.f32 %v4705, %v5218
      %v5437 = vadd.f32 %v4710, %v5223
      %v5438 = vadd.f32 %v4715, %v5228
      %v5439 = vadd.f32 %v4720, %v5233
      %v5440 = vadd.f32 %v4725, %v5238
      %v5441 = vadd.f32 %v4730, %v5243
      %v5442 = vadd.f32 %v4735, %v5248
      %v5443 = vadd.f32 %v4740, %v5253
      %v5444 = vadd.f32 %v4745, %v5258
      %v5445 = vadd.f32 %v4750, %v5263
      %v5446 = vadd.f32 %v4755, %v5268
      %v5447 = vadd.f32 %v4760, %v5273
      %v5448 = vadd.f32 %v4765, %v5278
      %v5449 = vadd.f32 %v4770, %v5283
      %v5450 = vadd.f32 %v4775, %v5288
      %v5451 = vadd.f32 %v4780, %v5293
      %v5452 = vadd.f32 %v4785, %v5298
      %v5453 = vadd.f32 %v4790, %v5303
      %v5454 = vadd.f32 %v4795, %v5308
      %v5455 = vadd.f32 %v4800, %v5313
      %v5456 = vadd.f32 %v4805, %v5318
      %v5457 = vadd.f32 %v4810, %v5323
      %v5458 = vadd.f32 %v4815, %v5328
      %v5459 = vadd.f32 %v4820, %v5333
      %v5460 = vadd.f32 %v4825, %v5338
      %v5461 = vadd.f32 %v4830, %v5343
      %v5462 = vadd.f32 %v4835, %v5348
      %v5463 = vadd.f32 %v4840, %v5353
      %v5464 = vadd.f32 %v4845, %v5358
      %v5465 = vadd.f32 %v4850, %v5363
      %v5466 = vadd.f32 %v4855, %v5368
      %v5467 = vadd.f32 %v4860, %v5373
      %v5468 = vadd.f32 %v4865, %v5378
      %v5469 = vadd.f32 %v4870, %v5383
      %v5470 = vadd.f32 %v4875, %v5388
      %v5471 = vadd.f32 %v4880, %v5393
      %v5472 = vadd.f32 %v4885, %v5398
      %v5473 = vadd.f32 %v4890, %v5403
      %v5474 = vadd.f32 %v4895, %v5408
      %v5478 = vrot.slane %v1886, 1
      %v5479 = vrot.slane %v1887, 1
      %v5480 = vsel %vm932, %v5478, %v5479
      %v5481 = vrot.slane %v1888, 1
      %v5482 = vsel %vm932, %v5479, %v5481
      %v5486 = vrot.slane %v1991, 1
      %v5487 = vrot.slane %v1992, 1
      %v5488 = vsel %vm932, %v5486, %v5487
      %v5489 = vrot.slane %v1993, 1
      %v5490 = vsel %vm932, %v5487, %v5489
      %s5491 = scalar_lea.vmem %s1, 12
      %v5492 = vld [vmem:[%s5491] sm:$0xf]
      %v5493 = vsel %vm2512, %v1886, 0
      %v5495 = vsel %vm2512, %v1887, 0
      %v5498 = vsel %vm2641, %v5492, 0
      %5500 = vmatprep.subr.mxu0 0.0
      %5501 = vmatpush1.msra.mxu0 %v5498
      %5502 = vmatprep.subr.mxu0 0.0
      %5503 = vmatpush1.msra.mxu0 0.0
      %5504 = vmatprep.subr.mxu0 0.0
      %5505 = vmatpush1.msra.mxu0 0.0
      %5506 = vmatprep.subr.mxu0 0.0
      %5507 = vmatpush1.msra.mxu0 0.0
      %5508 = vmatprep.subr.mxu0 0.0
      %5509 = vmatpush1.msra.mxu0 0.0
      %5510 = vmatprep.subr.mxu0 0.0
      %5511 = vmatpush1.msra.mxu0 0.0
      %5512 = vmatprep.subr.mxu0 0.0
      %5513 = vmatpush1.msra.mxu0 0.0
      %5514 = vmatprep.subr.mxu0 0.0
      %5515 = vmatpush1.msra.mxu0 0.0
      %5516 = vmatprep.subr.mxu0 0.0
      %5517 = vmatpush1.msra.mxu0 0.0
      %5518 = vmatprep.subr.mxu0 0.0
      %5519 = vmatpush1.msra.mxu0 0.0
      %5520 = vmatprep.subr.mxu0 0.0
      %5521 = vmatpush1.msra.mxu0 0.0
      %5522 = vmatprep.subr.mxu0 0.0
      %5523 = vmatpush1.msra.mxu0 0.0
      %5524 = vmatprep.subr.mxu0 0.0
      %5525 = vmatpush1.msra.mxu0 0.0
      %5526 = vmatprep.subr.mxu0 0.0
      %5527 = vmatpush1.msra.mxu0 0.0
      %5528 = vmatprep.subr.mxu0 0.0
      %5529 = vmatpush1.msra.mxu0 0.0
      %5530 = vmatprep.subr.mxu0 0.0
      %5531 = vmatpush1.msra.mxu0 0.0
      %5532 = vmatprep.subr.mxu0 0.0
      %5533 = vmatpush1.msra.mxu0 0.0
      %5534 = vmatprep.subr.mxu0 0.0
      %5535 = vmatpush1.msra.mxu0 0.0
      %5536 = vmatprep.subr.mxu0 0.0
      %5537 = vmatpush1.msra.mxu0 0.0
      %5538 = vmatprep.subr.mxu0 0.0
      %5539 = vmatpush1.msra.mxu0 0.0
      %5540 = vmatprep.subr.mxu0 0.0
      %5541 = vmatpush1.msra.mxu0 0.0
      %5542 = vmatprep.subr.mxu0 0.0
      %5543 = vmatpush1.msra.mxu0 0.0
      %5544 = vmatprep.subr.mxu0 0.0
      %5545 = vmatpush1.msra.mxu0 0.0
      %5546 = vmatprep.subr.mxu0 0.0
      %5547 = vmatpush1.msra.mxu0 0.0
      %5548 = vmatprep.subr.mxu0 0.0
      %5549 = vmatpush1.msra.mxu0 0.0
      %5550 = vmatprep.subr.mxu0 0.0
      %5551 = vmatpush1.msra.mxu0 0.0
      %5552 = vmatprep.subr.mxu0 0.0
      %5553 = vmatpush1.msra.mxu0 0.0
      %5554 = vmatprep.subr.mxu0 0.0
      %5555 = vmatpush1.msra.mxu0 0.0
      %5556 = vmatprep.subr.mxu0 0.0
      %5557 = vmatpush1.msra.mxu0 0.0
      %5558 = vmatprep.subr.mxu0 0.0
      %5559 = vmatpush1.msra.mxu0 0.0
      %5560 = vmatprep.subr.mxu0 0.0
      %5561 = vmatpush1.msra.mxu0 0.0
      %5562 = vmatprep.subr.mxu0 0.0
      %5563 = vmatpush1.msra.mxu0 0.0
      %5564 = vmatprep.mubr.f32.mxu0 0.0
      %5565 = vmatmul.mubr.f32.gmra.mrb[0].mxu0 %v3034
      %v5566 = vpop.f32.mrb[0].mxu0
      %v5567 = vadd.f32 0.0, %v5566
      %v5568 = vpop.f32.mrb[0].mxu0
      %5569 = vmatprep.mubr.f32.mxu0 0.0
      %5570 = vmatmul.mubr.f32.gmra.mrb[0].mxu0 %v3036
      %v5571 = vpop.f32.mrb[0].mxu0
      %v5572 = vadd.f32 0.0, %v5571
      %v5573 = vpop.f32.mrb[0].mxu0
      %5574 = vmatprep.mubr.f32.mxu0 0.0
      %5575 = vmatmul.mubr.f32.gmra.mrb[0].mxu0 %v3038
      %v5576 = vpop.f32.mrb[0].mxu0
      %v5577 = vadd.f32 0.0, %v5576
      %v5578 = vpop.f32.mrb[0].mxu0
      %5579 = vmatprep.mubr.f32.mxu0 0.0
      %5580 = vmatmul.mubr.f32.gmra.mrb[0].mxu0 %v3040
      %v5581 = vpop.f32.mrb[0].mxu0
      %v5582 = vadd.f32 0.0, %v5581
      %v5583 = vpop.f32.mrb[0].mxu0
      %5584 = vmatprep.mubr.f32.mxu0 0.0
      %5585 = vmatmul.mubr.f32.gmra.mrb[0].mxu0 %v3042
      %v5586 = vpop.f32.mrb[0].mxu0
      %v5587 = vadd.f32 0.0, %v5586
      %v5588 = vpop.f32.mrb[0].mxu0
      %5589 = vmatprep.mubr.f32.mxu0 0.0
      %5590 = vmatmul.mubr.f32.gmra.mrb[0].mxu0 %v3044
      %v5591 = vpop.f32.mrb[0].mxu0
      %v5592 = vadd.f32 0.0, %v5591
      %v5593 = vpop.f32.mrb[0].mxu0
      %5594 = vmatprep.mubr.f32.mxu0 0.0
      %5595 = vmatmul.mubr.f32.gmra.mrb[0].mxu0 %v3046
      %v5596 = vpop.f32.mrb[0].mxu0
      %v5597 = vadd.f32 0.0, %v5596
      %v5598 = vpop.f32.mrb[0].mxu0
      %5599 = vmatprep.mubr.f32.mxu0 0.0
      %5600 = vmatmul.mubr.f32.gmra.mrb[0].mxu0 %v3048
      %v5601 = vpop.f32.mrb[0].mxu0
      %v5602 = vadd.f32 0.0, %v5601
      %v5603 = vpop.f32.mrb[0].mxu0
      %5604 = vmatprep.mubr.f32.mxu0 0.0
      %5605 = vmatmul.mubr.f32.gmra.mrb[0].mxu0 %v3050
      %v5606 = vpop.f32.mrb[0].mxu0
      %v5607 = vadd.f32 0.0, %v5606
      %v5608 = vpop.f32.mrb[0].mxu0
      %5609 = vmatprep.mubr.f32.mxu0 0.0
      %5610 = vmatmul.mubr.f32.gmra.mrb[0].mxu0 %v3052
      %v5611 = vpop.f32.mrb[0].mxu0
      %v5612 = vadd.f32 0.0, %v5611
      %v5613 = vpop.f32.mrb[0].mxu0
      %5614 = vmatprep.mubr.f32.mxu0 0.0
      %5615 = vmatmul.mubr.f32.gmra.mrb[0].mxu0 %v3054
      %v5616 = vpop.f32.mrb[0].mxu0
      %v5617 = vadd.f32 0.0, %v5616
      %v5618 = vpop.f32.mrb[0].mxu0
      %5619 = vmatprep.mubr.f32.mxu0 0.0
      %5620 = vmatmul.mubr.f32.gmra.mrb[0].mxu0 %v3056
      %v5621 = vpop.f32.mrb[0].mxu0
      %v5622 = vadd.f32 0.0, %v5621
      %v5623 = vpop.f32.mrb[0].mxu0
      %5624 = vmatprep.mubr.f32.mxu0 0.0
      %5625 = vmatmul.mubr.f32.gmra.mrb[0].mxu0 %v3058
      %v5626 = vpop.f32.mrb[0].mxu0
      %v5627 = vadd.f32 0.0, %v5626
      %v5628 = vpop.f32.mrb[0].mxu0
      %5629 = vmatprep.mubr.f32.mxu0 0.0
      %5630 = vmatmul.mubr.f32.gmra.mrb[0].mxu0 %v3060
      %v5631 = vpop.f32.mrb[0].mxu0
      %v5632 = vadd.f32 0.0, %v5631
      %v5633 = vpop.f32.mrb[0].mxu0
      %5634 = vmatprep.mubr.f32.mxu0 0.0
      %5635 = vmatmul.mubr.f32.gmra.mrb[0].mxu0 %v3062
      %v5636 = vpop.f32.mrb[0].mxu0
      %v5637 = vadd.f32 0.0, %v5636
      %v5638 = vpop.f32.mrb[0].mxu0
      %5639 = vmatprep.mubr.f32.mxu0 0.0
      %5640 = vmatmul.mubr.f32.gmra.mrb[0].mxu0 %v3064
      %v5641 = vpop.f32.mrb[0].mxu0
      %v5642 = vadd.f32 0.0, %v5641
      %v5643 = vpop.f32.mrb[0].mxu0
      %5644 = vmatprep.mubr.f32.mxu0 0.0
      %5645 = vmatmul.mubr.f32.gmra.mrb[0].mxu0 %v3066
      %v5646 = vpop.f32.mrb[0].mxu0
      %v5647 = vadd.f32 0.0, %v5646
      %v5648 = vpop.f32.mrb[0].mxu0
      %5649 = vmatprep.mubr.f32.mxu0 0.0
      %5650 = vmatmul.mubr.f32.gmra.mrb[0].mxu0 %v3068
      %v5651 = vpop.f32.mrb[0].mxu0
      %v5652 = vadd.f32 0.0, %v5651
      %v5653 = vpop.f32.mrb[0].mxu0
      %5654 = vmatprep.mubr.f32.mxu0 0.0
      %5655 = vmatmul.mubr.f32.gmra.mrb[0].mxu0 %v3070
      %v5656 = vpop.f32.mrb[0].mxu0
      %v5657 = vadd.f32 0.0, %v5656
      %v5658 = vpop.f32.mrb[0].mxu0
      %5659 = vmatprep.mubr.f32.mxu0 0.0
      %5660 = vmatmul.mubr.f32.gmra.mrb[0].mxu0 %v3072
      %v5661 = vpop.f32.mrb[0].mxu0
      %v5662 = vadd.f32 0.0, %v5661
      %v5663 = vpop.f32.mrb[0].mxu0
      %5664 = vmatprep.mubr.f32.mxu0 0.0
      %5665 = vmatmul.mubr.f32.gmra.mrb[0].mxu0 %v3074
      %v5666 = vpop.f32.mrb[0].mxu0
      %v5667 = vadd.f32 0.0, %v5666
      %v5668 = vpop.f32.mrb[0].mxu0
      %5669 = vmatprep.mubr.f32.mxu0 0.0
      %5670 = vmatmul.mubr.f32.gmra.mrb[0].mxu0 %v3076
      %v5671 = vpop.f32.mrb[0].mxu0
      %v5672 = vadd.f32 0.0, %v5671
      %v5673 = vpop.f32.mrb[0].mxu0
      %5674 = vmatprep.mubr.f32.mxu0 0.0
      %5675 = vmatmul.mubr.f32.gmra.mrb[0].mxu0 %v3078
      %v5676 = vpop.f32.mrb[0].mxu0
      %v5677 = vadd.f32 0.0, %v5676
      %v5678 = vpop.f32.mrb[0].mxu0
      %5679 = vmatprep.mubr.f32.mxu0 0.0
      %5680 = vmatmul.mubr.f32.gmra.mrb[0].mxu0 %v3080
      %v5681 = vpop.f32.mrb[0].mxu0
      %v5682 = vadd.f32 0.0, %v5681
      %v5683 = vpop.f32.mrb[0].mxu0
      %5684 = vmatprep.mubr.f32.mxu0 0.0
      %5685 = vmatmul.mubr.f32.gmra.mrb[0].mxu0 %v3082
      %v5686 = vpop.f32.mrb[0].mxu0
      %v5687 = vadd.f32 0.0, %v5686
      %v5688 = vpop.f32.mrb[0].mxu0
      %5689 = vmatprep.mubr.f32.mxu0 0.0
      %5690 = vmatmul.mubr.f32.gmra.mrb[0].mxu0 %v3084
      %v5691 = vpop.f32.mrb[0].mxu0
      %v5692 = vadd.f32 0.0, %v5691
      %v5693 = vpop.f32.mrb[0].mxu0
      %5694 = vmatprep.mubr.f32.mxu0 0.0
      %5695 = vmatmul.mubr.f32.gmra.mrb[0].mxu0 %v3086
      %v5696 = vpop.f32.mrb[0].mxu0
      %v5697 = vadd.f32 0.0, %v5696
      %v5698 = vpop.f32.mrb[0].mxu0
      %5699 = vmatprep.mubr.f32.mxu0 0.0
      %5700 = vmatmul.mubr.f32.gmra.mrb[0].mxu0 %v3088
      %v5701 = vpop.f32.mrb[0].mxu0
      %v5702 = vadd.f32 0.0, %v5701
      %v5703 = vpop.f32.mrb[0].mxu0
      %5704 = vmatprep.mubr.f32.mxu0 0.0
      %5705 = vmatmul.mubr.f32.gmra.mrb[0].mxu0 %v3090
      %v5706 = vpop.f32.mrb[0].mxu0
      %v5707 = vadd.f32 0.0, %v5706
      %v5708 = vpop.f32.mrb[0].mxu0
      %5709 = vmatprep.mubr.f32.mxu0 0.0
      %5710 = vmatmul.mubr.f32.gmra.mrb[0].mxu0 %v3092
      %v5711 = vpop.f32.mrb[0].mxu0
      %v5712 = vadd.f32 0.0, %v5711
      %v5713 = vpop.f32.mrb[0].mxu0
      %5714 = vmatprep.mubr.f32.mxu0 0.0
      %5715 = vmatmul.mubr.f32.gmra.mrb[0].mxu0 %v3094
      %v5716 = vpop.f32.mrb[0].mxu0
      %v5717 = vadd.f32 0.0, %v5716
      %v5718 = vpop.f32.mrb[0].mxu0
      %5719 = vmatprep.mubr.f32.mxu0 0.0
      %5720 = vmatmul.mubr.f32.gmra.mrb[0].mxu0 %v3096
      %v5721 = vpop.f32.mrb[0].mxu0
      %v5722 = vadd.f32 0.0, %v5721
      %v5723 = vpop.f32.mrb[0].mxu0
      %5724 = vmatprep.mubr.f32.mxu0 0.0
      %5725 = vmatmul.mubr.f32.gmra.mrb[0].mxu0 %v3098
      %v5726 = vpop.f32.mrb[0].mxu0
      %v5727 = vadd.f32 0.0, %v5726
      %v5728 = vpop.f32.mrb[0].mxu0
      %5729 = vmatprep.mubr.f32.mxu0 0.0
      %5730 = vmatmul.mubr.f32.gmra.mrb[0].mxu0 %v3100
      %v5731 = vpop.f32.mrb[0].mxu0
      %v5732 = vadd.f32 0.0, %v5731
      %v5733 = vpop.f32.mrb[0].mxu0
      %5734 = vmatprep.mubr.f32.mxu0 0.0
      %5735 = vmatmul.mubr.f32.gmra.mrb[0].mxu0 %v3102
      %v5736 = vpop.f32.mrb[0].mxu0
      %v5737 = vadd.f32 0.0, %v5736
      %v5738 = vpop.f32.mrb[0].mxu0
      %5739 = vmatprep.mubr.f32.mxu0 0.0
      %5740 = vmatmul.mubr.f32.gmra.mrb[0].mxu0 %v3104
      %v5741 = vpop.f32.mrb[0].mxu0
      %v5742 = vadd.f32 0.0, %v5741
      %v5743 = vpop.f32.mrb[0].mxu0
      %5744 = vmatprep.mubr.f32.mxu0 0.0
      %5745 = vmatmul.mubr.f32.gmra.mrb[0].mxu0 %v3106
      %v5746 = vpop.f32.mrb[0].mxu0
      %v5747 = vadd.f32 0.0, %v5746
      %v5748 = vpop.f32.mrb[0].mxu0
      %5749 = vmatprep.mubr.f32.mxu0 0.0
      %5750 = vmatmul.mubr.f32.gmra.mrb[0].mxu0 %v3108
      %v5751 = vpop.f32.mrb[0].mxu0
      %v5752 = vadd.f32 0.0, %v5751
      %v5753 = vpop.f32.mrb[0].mxu0
      %5754 = vmatprep.mubr.f32.mxu0 0.0
      %5755 = vmatmul.mubr.f32.gmra.mrb[0].mxu0 %v3110
      %v5756 = vpop.f32.mrb[0].mxu0
      %v5757 = vadd.f32 0.0, %v5756
      %v5758 = vpop.f32.mrb[0].mxu0
      %5759 = vmatprep.mubr.f32.mxu0 0.0
      %5760 = vmatmul.mubr.f32.gmra.mrb[0].mxu0 %v3112
      %v5761 = vpop.f32.mrb[0].mxu0
      %v5762 = vadd.f32 0.0, %v5761
      %v5763 = vpop.f32.mrb[0].mxu0
      %5764 = vmatprep.mubr.f32.mxu0 0.0
      %5765 = vmatmul.mubr.f32.gmra.mrb[0].mxu0 %v3114
      %v5766 = vpop.f32.mrb[0].mxu0
      %v5767 = vadd.f32 0.0, %v5766
      %v5768 = vpop.f32.mrb[0].mxu0
      %5769 = vmatprep.mubr.f32.mxu0 0.0
      %5770 = vmatmul.mubr.f32.gmra.mrb[0].mxu0 %v3116
      %v5771 = vpop.f32.mrb[0].mxu0
      %v5772 = vadd.f32 0.0, %v5771
      %v5773 = vpop.f32.mrb[0].mxu0
      %5774 = vmatprep.mubr.f32.mxu0 0.0
      %5775 = vmatmul.mubr.f32.gmra.mrb[0].mxu0 %v3118
      %v5776 = vpop.f32.mrb[0].mxu0
      %v5777 = vadd.f32 0.0, %v5776
      %v5778 = vpop.f32.mrb[0].mxu0
      %5779 = vmatprep.mubr.f32.mxu0 0.0
      %5780 = vmatmul.mubr.f32.gmra.mrb[0].mxu0 %v3120
      %v5781 = vpop.f32.mrb[0].mxu0
      %v5782 = vadd.f32 0.0, %v5781
      %v5783 = vpop.f32.mrb[0].mxu0
      %5784 = vmatprep.mubr.f32.mxu0 0.0
      %5785 = vmatmul.mubr.f32.gmra.mrb[0].mxu0 %v3122
      %v5786 = vpop.f32.mrb[0].mxu0
      %v5787 = vadd.f32 0.0, %v5786
      %v5788 = vpop.f32.mrb[0].mxu0
      %5789 = vmatprep.mubr.f32.mxu0 0.0
      %5790 = vmatmul.mubr.f32.gmra.mrb[0].mxu0 %v3124
      %v5791 = vpop.f32.mrb[0].mxu0
      %v5792 = vadd.f32 0.0, %v5791
      %v5793 = vpop.f32.mrb[0].mxu0
      %5794 = vmatprep.mubr.f32.mxu0 0.0
      %5795 = vmatmul.mubr.f32.gmra.mrb[0].mxu0 %v3126
      %v5796 = vpop.f32.mrb[0].mxu0
      %v5797 = vadd.f32 0.0, %v5796
      %v5798 = vpop.f32.mrb[0].mxu0
      %5799 = vmatprep.mubr.f32.mxu0 0.0
      %5800 = vmatmul.mubr.f32.gmra.mrb[0].mxu0 %v3128
      %v5801 = vpop.f32.mrb[0].mxu0
      %v5802 = vadd.f32 0.0, %v5801
      %v5803 = vpop.f32.mrb[0].mxu0
      %5804 = vmatprep.mubr.f32.mxu0 0.0
      %5805 = vmatmul.mubr.f32.gmra.mrb[0].mxu0 %v3130
      %v5806 = vpop.f32.mrb[0].mxu0
      %v5807 = vadd.f32 0.0, %v5806
      %v5808 = vpop.f32.mrb[0].mxu0
      %5809 = vmatprep.mubr.f32.mxu0 0.0
      %5810 = vmatmul.mubr.f32.gmra.mrb[0].mxu0 %v3132
      %v5811 = vpop.f32.mrb[0].mxu0
      %v5812 = vadd.f32 0.0, %v5811
      %v5813 = vpop.f32.mrb[0].mxu0
      %5814 = vmatprep.mubr.f32.mxu0 0.0
      %5815 = vmatmul.mubr.f32.gmra.mrb[0].mxu0 %v3134
      %v5816 = vpop.f32.mrb[0].mxu0
      %v5817 = vadd.f32 0.0, %v5816
      %v5818 = vpop.f32.mrb[0].mxu0
      %5819 = vmatprep.mubr.f32.mxu0 0.0
      %5820 = vmatmul.mubr.f32.gmra.mrb[0].mxu0 %v3136
      %v5821 = vpop.f32.mrb[0].mxu0
      %v5822 = vadd.f32 0.0, %v5821
      %v5823 = vpop.f32.mrb[0].mxu0
      %5824 = vmatprep.mubr.f32.mxu0 0.0
      %5825 = vmatmul.mubr.f32.gmra.mrb[0].mxu0 %v3138
      %v5826 = vpop.f32.mrb[0].mxu0
      %v5827 = vadd.f32 0.0, %v5826
      %v5828 = vpop.f32.mrb[0].mxu0
      %5829 = vmatprep.mubr.f32.mxu0 0.0
      %5830 = vmatmul.mubr.f32.gmra.mrb[0].mxu0 %v3140
      %v5831 = vpop.f32.mrb[0].mxu0
      %v5832 = vadd.f32 0.0, %v5831
      %v5833 = vpop.f32.mrb[0].mxu0
      %5834 = vmatprep.mubr.f32.mxu0 0.0
      %5835 = vmatmul.mubr.f32.gmra.mrb[0].mxu0 %v3142
      %v5836 = vpop.f32.mrb[0].mxu0
      %v5837 = vadd.f32 0.0, %v5836
      %v5838 = vpop.f32.mrb[0].mxu0
      %5839 = vmatprep.mubr.f32.mxu0 0.0
      %5840 = vmatmul.mubr.f32.gmra.mrb[0].mxu0 %v3144
      %v5841 = vpop.f32.mrb[0].mxu0
      %v5842 = vadd.f32 0.0, %v5841
      %v5843 = vpop.f32.mrb[0].mxu0
      %5844 = vmatprep.mubr.f32.mxu0 0.0
      %5845 = vmatmul.mubr.f32.gmra.mrb[0].mxu0 %v3146
      %v5846 = vpop.f32.mrb[0].mxu0
      %v5847 = vadd.f32 0.0, %v5846
      %v5848 = vpop.f32.mrb[0].mxu0
      %5849 = vmatprep.mubr.f32.mxu0 0.0
      %5850 = vmatmul.mubr.f32.gmra.mrb[0].mxu0 %v3148
      %v5851 = vpop.f32.mrb[0].mxu0
      %v5852 = vadd.f32 0.0, %v5851
      %v5853 = vpop.f32.mrb[0].mxu0
      %5854 = vmatprep.mubr.f32.mxu0 0.0
      %5855 = vmatmul.mubr.f32.gmra.mrb[0].mxu0 %v3150
      %v5856 = vpop.f32.mrb[0].mxu0
      %v5857 = vadd.f32 0.0, %v5856
      %v5858 = vpop.f32.mrb[0].mxu0
      %5859 = vmatprep.mubr.f32.mxu0 0.0
      %5860 = vmatmul.mubr.f32.gmra.mrb[0].mxu0 %v3152
      %v5861 = vpop.f32.mrb[0].mxu0
      %v5862 = vadd.f32 0.0, %v5861
      %v5863 = vpop.f32.mrb[0].mxu0
      %5864 = vmatprep.mubr.f32.mxu0 0.0
      %5865 = vmatmul.mubr.f32.gmra.mrb[0].mxu0 %v3154
      %v5866 = vpop.f32.mrb[0].mxu0
      %v5867 = vadd.f32 0.0, %v5866
      %v5868 = vpop.f32.mrb[0].mxu0
      %5869 = vmatprep.mubr.f32.mxu0 0.0
      %5870 = vmatmul.mubr.f32.gmra.mrb[0].mxu0 %v3156
      %v5871 = vpop.f32.mrb[0].mxu0
      %v5872 = vadd.f32 0.0, %v5871
      %v5873 = vpop.f32.mrb[0].mxu0
      %5874 = vmatprep.mubr.f32.mxu0 0.0
      %5875 = vmatmul.mubr.f32.gmra.mrb[0].mxu0 %v5493
      %v5876 = vpop.f32.mrb[0].mxu0
      %v5877 = vadd.f32 0.0, %v5876
      %v5878 = vpop.f32.mrb[0].mxu0
      %5879 = vmatprep.mubr.f32.mxu0 0.0
      %5880 = vmatmul.mubr.f32.gmra.mrb[0].mxu0 %v5495
      %v5881 = vpop.f32.mrb[0].mxu0
      %v5882 = vadd.f32 0.0, %v5881
      %v5883 = vpop.f32.mrb[0].mxu0
      %5884 = vdwg.mxu0
      %v5885 = vadd.f32 %v4064, %v5567
      %v5886 = vadd.f32 %v4065, %v5572
      %v5887 = vadd.f32 %v4066, %v5577
      %v5888 = vadd.f32 %v4067, %v5582
      %v5889 = vadd.f32 %v4068, %v5587
      %v5890 = vadd.f32 %v4069, %v5592
      %v5891 = vadd.f32 %v4070, %v5597
      %v5892 = vadd.f32 %v4071, %v5602
      %v5893 = vadd.f32 %v4072, %v5607
      %v5894 = vadd.f32 %v4073, %v5612
      %v5895 = vadd.f32 %v4074, %v5617
      %v5896 = vadd.f32 %v4075, %v5622
      %v5897 = vadd.f32 %v4076, %v5627
      %v5898 = vadd.f32 %v4077, %v5632
      %v5899 = vadd.f32 %v4078, %v5637
      %v5900 = vadd.f32 %v4079, %v5642
      %v5901 = vadd.f32 %v4080, %v5647
      %v5902 = vadd.f32 %v4081, %v5652
      %v5903 = vadd.f32 %v4082, %v5657
      %v5904 = vadd.f32 %v4083, %v5662
      %v5905 = vadd.f32 %v4084, %v5667
      %v5906 = vadd.f32 %v4085, %v5672
      %v5907 = vadd.f32 %v4086, %v5677
      %v5908 = vadd.f32 %v4087, %v5682
      %v5909 = vadd.f32 %v4088, %v5687
      %v5910 = vadd.f32 %v4089, %v5692
      %v5911 = vadd.f32 %v4090, %v5697
      %v5912 = vadd.f32 %v4091, %v5702
      %v5913 = vadd.f32 %v4092, %v5707
      %v5914 = vadd.f32 %v4093, %v5712
      %v5915 = vadd.f32 %v4094, %v5717
      %v5916 = vadd.f32 %v4095, %v5722
      %v5917 = vadd.f32 %v4096, %v5727
      %v5918 = vadd.f32 %v4097, %v5732
      %v5919 = vadd.f32 %v4098, %v5737
      %v5920 = vadd.f32 %v4099, %v5742
      %v5921 = vadd.f32 %v4100, %v5747
      %v5922 = vadd.f32 %v4101, %v5752
      %v5923 = vadd.f32 %v4102, %v5757
      %v5924 = vadd.f32 %v4103, %v5762
      %v5925 = vadd.f32 %v4104, %v5767
      %v5926 = vadd.f32 %v4105, %v5772
      %v5927 = vadd.f32 %v4106, %v5777
      %v5928 = vadd.f32 %v4107, %v5782
      %v5929 = vadd.f32 %v4108, %v5787
      %v5930 = vadd.f32 %v4109, %v5792
      %v5931 = vadd.f32 %v4110, %v5797
      %v5932 = vadd.f32 %v4111, %v5802
      %v5933 = vadd.f32 %v4112, %v5807
      %v5934 = vadd.f32 %v4113, %v5812
      %v5935 = vadd.f32 %v4114, %v5817
      %v5936 = vadd.f32 %v4115, %v5822
      %v5937 = vadd.f32 %v4116, %v5827
      %v5938 = vadd.f32 %v4117, %v5832
      %v5939 = vadd.f32 %v4118, %v5837
      %v5940 = vadd.f32 %v4119, %v5842
      %v5941 = vadd.f32 %v4120, %v5847
      %v5942 = vadd.f32 %v4121, %v5852
      %v5943 = vadd.f32 %v4122, %v5857
      %v5944 = vadd.f32 %v4123, %v5862
      %v5945 = vadd.f32 %v4124, %v5867
      %v5946 = vadd.f32 %v4125, %v5872
      %v5947 = vadd.f32 %v4126, %v5877
      %v5948 = vadd.f32 %v4127, %v5882
      %s5949 = scalar_lea.vmem %s1, 16
      %v5950 = vld [vmem:[%s5949] sm:$0xf]
      %v5951 = vsel %vm2512, %v1991, 0
      %v5953 = vsel %vm2512, %v1992, 0
      %v5956 = vsel %vm2641, %v5950, 0
      %5958 = vmatprep.subr.mxu0 0.0
      %5959 = vmatpush1.msra.mxu0 %v5956
      %5960 = vmatprep.subr.mxu0 0.0
      %5961 = vmatpush1.msra.mxu0 0.0
      %5962 = vmatprep.subr.mxu0 0.0
      %5963 = vmatpush1.msra.mxu0 0.0
      %5964 = vmatprep.subr.mxu0 0.0
      %5965 = vmatpush1.msra.mxu0 0.0
      %5966 = vmatprep.subr.mxu0 0.0
      %5967 = vmatpush1.msra.mxu0 0.0
      %5968 = vmatprep.subr.mxu0 0.0
      %5969 = vmatpush1.msra.mxu0 0.0
      %5970 = vmatprep.subr.mxu0 0.0
      %5971 = vmatpush1.msra.mxu0 0.0
      %5972 = vmatprep.subr.mxu0 0.0
      %5973 = vmatpush1.msra.mxu0 0.0
      %5974 = vmatprep.subr.mxu0 0.0
      %5975 = vmatpush1.msra.mxu0 0.0
      %5976 = vmatprep.subr.mxu0 0.0
      %5977 = vmatpush1.msra.mxu0 0.0
      %5978 = vmatprep.subr.mxu0 0.0
      %5979 = vmatpush1.msra.mxu0 0.0
      %5980 = vmatprep.subr.mxu0 0.0
      %5981 = vmatpush1.msra.mxu0 0.0
      %5982 = vmatprep.subr.mxu0 0.0
      %5983 = vmatpush1.msra.mxu0 0.0
      %5984 = vmatprep.subr.mxu0 0.0
      %5985 = vmatpush1.msra.mxu0 0.0
      %5986 = vmatprep.subr.mxu0 0.0
      %5987 = vmatpush1.msra.mxu0 0.0
      %5988 = vmatprep.subr.mxu0 0.0
      %5989 = vmatpush1.msra.mxu0 0.0
      %5990 = vmatprep.subr.mxu0 0.0
      %5991 = vmatpush1.msra.mxu0 0.0
      %5992 = vmatprep.subr.mxu0 0.0
      %5993 = vmatpush1.msra.mxu0 0.0
      %5994 = vmatprep.subr.mxu0 0.0
      %5995 = vmatpush1.msra.mxu0 0.0
      %5996 = vmatprep.subr.mxu0 0.0
      %5997 = vmatpush1.msra.mxu0 0.0
      %5998 = vmatprep.subr.mxu0 0.0
      %5999 = vmatpush1.msra.mxu0 0.0
      %6000 = vmatprep.subr.mxu0 0.0
      %6001 = vmatpush1.msra.mxu0 0.0
      %6002 = vmatprep.subr.mxu0 0.0
      %6003 = vmatpush1.msra.mxu0 0.0
      %6004 = vmatprep.subr.mxu0 0.0
      %6005 = vmatpush1.msra.mxu0 0.0
      %6006 = vmatprep.subr.mxu0 0.0
      %6007 = vmatpush1.msra.mxu0 0.0
      %6008 = vmatprep.subr.mxu0 0.0
      %6009 = vmatpush1.msra.mxu0 0.0
      %6010 = vmatprep.subr.mxu0 0.0
      %6011 = vmatpush1.msra.mxu0 0.0
      %6012 = vmatprep.subr.mxu0 0.0
      %6013 = vmatpush1.msra.mxu0 0.0
      %6014 = vmatprep.subr.mxu0 0.0
      %6015 = vmatpush1.msra.mxu0 0.0
      %6016 = vmatprep.subr.mxu0 0.0
      %6017 = vmatpush1.msra.mxu0 0.0
      %6018 = vmatprep.subr.mxu0 0.0
      %6019 = vmatpush1.msra.mxu0 0.0
      %6020 = vmatprep.subr.mxu0 0.0
      %6021 = vmatpush1.msra.mxu0 0.0
      %6022 = vmatprep.mubr.f32.mxu0 0.0
      %6023 = vmatmul.mubr.f32.gmra.mrb[0].mxu0 %v2517
      %v6024 = vpop.f32.mrb[0].mxu0
      %v6025 = vadd.f32 0.0, %v6024
      %v6026 = vpop.f32.mrb[0].mxu0
      %6027 = vmatprep.mubr.f32.mxu0 0.0
      %6028 = vmatmul.mubr.f32.gmra.mrb[0].mxu0 %v2519
      %v6029 = vpop.f32.mrb[0].mxu0
      %v6030 = vadd.f32 0.0, %v6029
      %v6031 = vpop.f32.mrb[0].mxu0
      %6032 = vmatprep.mubr.f32.mxu0 0.0
      %6033 = vmatmul.mubr.f32.gmra.mrb[0].mxu0 %v2521
      %v6034 = vpop.f32.mrb[0].mxu0
      %v6035 = vadd.f32 0.0, %v6034
      %v6036 = vpop.f32.mrb[0].mxu0
      %6037 = vmatprep.mubr.f32.mxu0 0.0
      %6038 = vmatmul.mubr.f32.gmra.mrb[0].mxu0 %v2523
      %v6039 = vpop.f32.mrb[0].mxu0
      %v6040 = vadd.f32 0.0, %v6039
      %v6041 = vpop.f32.mrb[0].mxu0
      %6042 = vmatprep.mubr.f32.mxu0 0.0
      %6043 = vmatmul.mubr.f32.gmra.mrb[0].mxu0 %v2525
      %v6044 = vpop.f32.mrb[0].mxu0
      %v6045 = vadd.f32 0.0, %v6044
      %v6046 = vpop.f32.mrb[0].mxu0
      %6047 = vmatprep.mubr.f32.mxu0 0.0
      %6048 = vmatmul.mubr.f32.gmra.mrb[0].mxu0 %v2527
      %v6049 = vpop.f32.mrb[0].mxu0
      %v6050 = vadd.f32 0.0, %v6049
      %v6051 = vpop.f32.mrb[0].mxu0
      %6052 = vmatprep.mubr.f32.mxu0 0.0
      %6053 = vmatmul.mubr.f32.gmra.mrb[0].mxu0 %v2529
      %v6054 = vpop.f32.mrb[0].mxu0
      %v6055 = vadd.f32 0.0, %v6054
      %v6056 = vpop.f32.mrb[0].mxu0
      %6057 = vmatprep.mubr.f32.mxu0 0.0
      %6058 = vmatmul.mubr.f32.gmra.mrb[0].mxu0 %v2531
      %v6059 = vpop.f32.mrb[0].mxu0
      %v6060 = vadd.f32 0.0, %v6059
      %v6061 = vpop.f32.mrb[0].mxu0
      %6062 = vmatprep.mubr.f32.mxu0 0.0
      %6063 = vmatmul.mubr.f32.gmra.mrb[0].mxu0 %v2533
      %v6064 = vpop.f32.mrb[0].mxu0
      %v6065 = vadd.f32 0.0, %v6064
      %v6066 = vpop.f32.mrb[0].mxu0
      %6067 = vmatprep.mubr.f32.mxu0 0.0
      %6068 = vmatmul.mubr.f32.gmra.mrb[0].mxu0 %v2535
      %v6069 = vpop.f32.mrb[0].mxu0
      %v6070 = vadd.f32 0.0, %v6069
      %v6071 = vpop.f32.mrb[0].mxu0
      %6072 = vmatprep.mubr.f32.mxu0 0.0
      %6073 = vmatmul.mubr.f32.gmra.mrb[0].mxu0 %v2537
      %v6074 = vpop.f32.mrb[0].mxu0
      %v6075 = vadd.f32 0.0, %v6074
      %v6076 = vpop.f32.mrb[0].mxu0
      %6077 = vmatprep.mubr.f32.mxu0 0.0
      %6078 = vmatmul.mubr.f32.gmra.mrb[0].mxu0 %v2539
      %v6079 = vpop.f32.mrb[0].mxu0
      %v6080 = vadd.f32 0.0, %v6079
      %v6081 = vpop.f32.mrb[0].mxu0
      %6082 = vmatprep.mubr.f32.mxu0 0.0
      %6083 = vmatmul.mubr.f32.gmra.mrb[0].mxu0 %v2541
      %v6084 = vpop.f32.mrb[0].mxu0
      %v6085 = vadd.f32 0.0, %v6084
      %v6086 = vpop.f32.mrb[0].mxu0
      %6087 = vmatprep.mubr.f32.mxu0 0.0
      %6088 = vmatmul.mubr.f32.gmra.mrb[0].mxu0 %v2543
      %v6089 = vpop.f32.mrb[0].mxu0
      %v6090 = vadd.f32 0.0, %v6089
      %v6091 = vpop.f32.mrb[0].mxu0
      %6092 = vmatprep.mubr.f32.mxu0 0.0
      %6093 = vmatmul.mubr.f32.gmra.mrb[0].mxu0 %v2545
      %v6094 = vpop.f32.mrb[0].mxu0
      %v6095 = vadd.f32 0.0, %v6094
      %v6096 = vpop.f32.mrb[0].mxu0
      %6097 = vmatprep.mubr.f32.mxu0 0.0
      %6098 = vmatmul.mubr.f32.gmra.mrb[0].mxu0 %v2547
      %v6099 = vpop.f32.mrb[0].mxu0
      %v6100 = vadd.f32 0.0, %v6099
      %v6101 = vpop.f32.mrb[0].mxu0
      %6102 = vmatprep.mubr.f32.mxu0 0.0
      %6103 = vmatmul.mubr.f32.gmra.mrb[0].mxu0 %v2549
      %v6104 = vpop.f32.mrb[0].mxu0
      %v6105 = vadd.f32 0.0, %v6104
      %v6106 = vpop.f32.mrb[0].mxu0
      %6107 = vmatprep.mubr.f32.mxu0 0.0
      %6108 = vmatmul.mubr.f32.gmra.mrb[0].mxu0 %v2551
      %v6109 = vpop.f32.mrb[0].mxu0
      %v6110 = vadd.f32 0.0, %v6109
      %v6111 = vpop.f32.mrb[0].mxu0
      %6112 = vmatprep.mubr.f32.mxu0 0.0
      %6113 = vmatmul.mubr.f32.gmra.mrb[0].mxu0 %v2553
      %v6114 = vpop.f32.mrb[0].mxu0
      %v6115 = vadd.f32 0.0, %v6114
      %v6116 = vpop.f32.mrb[0].mxu0
      %6117 = vmatprep.mubr.f32.mxu0 0.0
      %6118 = vmatmul.mubr.f32.gmra.mrb[0].mxu0 %v2555
      %v6119 = vpop.f32.mrb[0].mxu0
      %v6120 = vadd.f32 0.0, %v6119
      %v6121 = vpop.f32.mrb[0].mxu0
      %6122 = vmatprep.mubr.f32.mxu0 0.0
      %6123 = vmatmul.mubr.f32.gmra.mrb[0].mxu0 %v2557
      %v6124 = vpop.f32.mrb[0].mxu0
      %v6125 = vadd.f32 0.0, %v6124
      %v6126 = vpop.f32.mrb[0].mxu0
      %6127 = vmatprep.mubr.f32.mxu0 0.0
      %6128 = vmatmul.mubr.f32.gmra.mrb[0].mxu0 %v2559
      %v6129 = vpop.f32.mrb[0].mxu0
      %v6130 = vadd.f32 0.0, %v6129
      %v6131 = vpop.f32.mrb[0].mxu0
      %6132 = vmatprep.mubr.f32.mxu0 0.0
      %6133 = vmatmul.mubr.f32.gmra.mrb[0].mxu0 %v2561
      %v6134 = vpop.f32.mrb[0].mxu0
      %v6135 = vadd.f32 0.0, %v6134
      %v6136 = vpop.f32.mrb[0].mxu0
      %6137 = vmatprep.mubr.f32.mxu0 0.0
      %6138 = vmatmul.mubr.f32.gmra.mrb[0].mxu0 %v2563
      %v6139 = vpop.f32.mrb[0].mxu0
      %v6140 = vadd.f32 0.0, %v6139
      %v6141 = vpop.f32.mrb[0].mxu0
      %6142 = vmatprep.mubr.f32.mxu0 0.0
      %6143 = vmatmul.mubr.f32.gmra.mrb[0].mxu0 %v2565
      %v6144 = vpop.f32.mrb[0].mxu0
      %v6145 = vadd.f32 0.0, %v6144
      %v6146 = vpop.f32.mrb[0].mxu0
      %6147 = vmatprep.mubr.f32.mxu0 0.0
      %6148 = vmatmul.mubr.f32.gmra.mrb[0].mxu0 %v2567
      %v6149 = vpop.f32.mrb[0].mxu0
      %v6150 = vadd.f32 0.0, %v6149
      %v6151 = vpop.f32.mrb[0].mxu0
      %6152 = vmatprep.mubr.f32.mxu0 0.0
      %6153 = vmatmul.mubr.f32.gmra.mrb[0].mxu0 %v2569
      %v6154 = vpop.f32.mrb[0].mxu0
      %v6155 = vadd.f32 0.0, %v6154
      %v6156 = vpop.f32.mrb[0].mxu0
      %6157 = vmatprep.mubr.f32.mxu0 0.0
      %6158 = vmatmul.mubr.f32.gmra.mrb[0].mxu0 %v2571
      %v6159 = vpop.f32.mrb[0].mxu0
      %v6160 = vadd.f32 0.0, %v6159
      %v6161 = vpop.f32.mrb[0].mxu0
      %6162 = vmatprep.mubr.f32.mxu0 0.0
      %6163 = vmatmul.mubr.f32.gmra.mrb[0].mxu0 %v2573
      %v6164 = vpop.f32.mrb[0].mxu0
      %v6165 = vadd.f32 0.0, %v6164
      %v6166 = vpop.f32.mrb[0].mxu0
      %6167 = vmatprep.mubr.f32.mxu0 0.0
      %6168 = vmatmul.mubr.f32.gmra.mrb[0].mxu0 %v2575
      %v6169 = vpop.f32.mrb[0].mxu0
      %v6170 = vadd.f32 0.0, %v6169
      %v6171 = vpop.f32.mrb[0].mxu0
      %6172 = vmatprep.mubr.f32.mxu0 0.0
      %6173 = vmatmul.mubr.f32.gmra.mrb[0].mxu0 %v2577
      %v6174 = vpop.f32.mrb[0].mxu0
      %v6175 = vadd.f32 0.0, %v6174
      %v6176 = vpop.f32.mrb[0].mxu0
      %6177 = vmatprep.mubr.f32.mxu0 0.0
      %6178 = vmatmul.mubr.f32.gmra.mrb[0].mxu0 %v2579
      %v6179 = vpop.f32.mrb[0].mxu0
      %v6180 = vadd.f32 0.0, %v6179
      %v6181 = vpop.f32.mrb[0].mxu0
      %6182 = vmatprep.mubr.f32.mxu0 0.0
      %6183 = vmatmul.mubr.f32.gmra.mrb[0].mxu0 %v2581
      %v6184 = vpop.f32.mrb[0].mxu0
      %v6185 = vadd.f32 0.0, %v6184
      %v6186 = vpop.f32.mrb[0].mxu0
      %6187 = vmatprep.mubr.f32.mxu0 0.0
      %6188 = vmatmul.mubr.f32.gmra.mrb[0].mxu0 %v2583
      %v6189 = vpop.f32.mrb[0].mxu0
      %v6190 = vadd.f32 0.0, %v6189
      %v6191 = vpop.f32.mrb[0].mxu0
      %6192 = vmatprep.mubr.f32.mxu0 0.0
      %6193 = vmatmul.mubr.f32.gmra.mrb[0].mxu0 %v2585
      %v6194 = vpop.f32.mrb[0].mxu0
      %v6195 = vadd.f32 0.0, %v6194
      %v6196 = vpop.f32.mrb[0].mxu0
      %6197 = vmatprep.mubr.f32.mxu0 0.0
      %6198 = vmatmul.mubr.f32.gmra.mrb[0].mxu0 %v2587
      %v6199 = vpop.f32.mrb[0].mxu0
      %v6200 = vadd.f32 0.0, %v6199
      %v6201 = vpop.f32.mrb[0].mxu0
      %6202 = vmatprep.mubr.f32.mxu0 0.0
      %6203 = vmatmul.mubr.f32.gmra.mrb[0].mxu0 %v2589
      %v6204 = vpop.f32.mrb[0].mxu0
      %v6205 = vadd.f32 0.0, %v6204
      %v6206 = vpop.f32.mrb[0].mxu0
      %6207 = vmatprep.mubr.f32.mxu0 0.0
      %6208 = vmatmul.mubr.f32.gmra.mrb[0].mxu0 %v2591
      %v6209 = vpop.f32.mrb[0].mxu0
      %v6210 = vadd.f32 0.0, %v6209
      %v6211 = vpop.f32.mrb[0].mxu0
      %6212 = vmatprep.mubr.f32.mxu0 0.0
      %6213 = vmatmul.mubr.f32.gmra.mrb[0].mxu0 %v2593
      %v6214 = vpop.f32.mrb[0].mxu0
      %v6215 = vadd.f32 0.0, %v6214
      %v6216 = vpop.f32.mrb[0].mxu0
      %6217 = vmatprep.mubr.f32.mxu0 0.0
      %6218 = vmatmul.mubr.f32.gmra.mrb[0].mxu0 %v2595
      %v6219 = vpop.f32.mrb[0].mxu0
      %v6220 = vadd.f32 0.0, %v6219
      %v6221 = vpop.f32.mrb[0].mxu0
      %6222 = vmatprep.mubr.f32.mxu0 0.0
      %6223 = vmatmul.mubr.f32.gmra.mrb[0].mxu0 %v2597
      %v6224 = vpop.f32.mrb[0].mxu0
      %v6225 = vadd.f32 0.0, %v6224
      %v6226 = vpop.f32.mrb[0].mxu0
      %6227 = vmatprep.mubr.f32.mxu0 0.0
      %6228 = vmatmul.mubr.f32.gmra.mrb[0].mxu0 %v2599
      %v6229 = vpop.f32.mrb[0].mxu0
      %v6230 = vadd.f32 0.0, %v6229
      %v6231 = vpop.f32.mrb[0].mxu0
      %6232 = vmatprep.mubr.f32.mxu0 0.0
      %6233 = vmatmul.mubr.f32.gmra.mrb[0].mxu0 %v2601
      %v6234 = vpop.f32.mrb[0].mxu0
      %v6235 = vadd.f32 0.0, %v6234
      %v6236 = vpop.f32.mrb[0].mxu0
      %6237 = vmatprep.mubr.f32.mxu0 0.0
      %6238 = vmatmul.mubr.f32.gmra.mrb[0].mxu0 %v2603
      %v6239 = vpop.f32.mrb[0].mxu0
      %v6240 = vadd.f32 0.0, %v6239
      %v6241 = vpop.f32.mrb[0].mxu0
      %6242 = vmatprep.mubr.f32.mxu0 0.0
      %6243 = vmatmul.mubr.f32.gmra.mrb[0].mxu0 %v2605
      %v6244 = vpop.f32.mrb[0].mxu0
      %v6245 = vadd.f32 0.0, %v6244
      %v6246 = vpop.f32.mrb[0].mxu0
      %6247 = vmatprep.mubr.f32.mxu0 0.0
      %6248 = vmatmul.mubr.f32.gmra.mrb[0].mxu0 %v2607
      %v6249 = vpop.f32.mrb[0].mxu0
      %v6250 = vadd.f32 0.0, %v6249
      %v6251 = vpop.f32.mrb[0].mxu0
      %6252 = vmatprep.mubr.f32.mxu0 0.0
      %6253 = vmatmul.mubr.f32.gmra.mrb[0].mxu0 %v2609
      %v6254 = vpop.f32.mrb[0].mxu0
      %v6255 = vadd.f32 0.0, %v6254
      %v6256 = vpop.f32.mrb[0].mxu0
      %6257 = vmatprep.mubr.f32.mxu0 0.0
      %6258 = vmatmul.mubr.f32.gmra.mrb[0].mxu0 %v2611
      %v6259 = vpop.f32.mrb[0].mxu0
      %v6260 = vadd.f32 0.0, %v6259
      %v6261 = vpop.f32.mrb[0].mxu0
      %6262 = vmatprep.mubr.f32.mxu0 0.0
      %6263 = vmatmul.mubr.f32.gmra.mrb[0].mxu0 %v2613
      %v6264 = vpop.f32.mrb[0].mxu0
      %v6265 = vadd.f32 0.0, %v6264
      %v6266 = vpop.f32.mrb[0].mxu0
      %6267 = vmatprep.mubr.f32.mxu0 0.0
      %6268 = vmatmul.mubr.f32.gmra.mrb[0].mxu0 %v2615
      %v6269 = vpop.f32.mrb[0].mxu0
      %v6270 = vadd.f32 0.0, %v6269
      %v6271 = vpop.f32.mrb[0].mxu0
      %6272 = vmatprep.mubr.f32.mxu0 0.0
      %6273 = vmatmul.mubr.f32.gmra.mrb[0].mxu0 %v2617
      %v6274 = vpop.f32.mrb[0].mxu0
      %v6275 = vadd.f32 0.0, %v6274
      %v6276 = vpop.f32.mrb[0].mxu0
      %6277 = vmatprep.mubr.f32.mxu0 0.0
      %6278 = vmatmul.mubr.f32.gmra.mrb[0].mxu0 %v2619
      %v6279 = vpop.f32.mrb[0].mxu0
      %v6280 = vadd.f32 0.0, %v6279
      %v6281 = vpop.f32.mrb[0].mxu0
      %6282 = vmatprep.mubr.f32.mxu0 0.0
      %6283 = vmatmul.mubr.f32.gmra.mrb[0].mxu0 %v2621
      %v6284 = vpop.f32.mrb[0].mxu0
      %v6285 = vadd.f32 0.0, %v6284
      %v6286 = vpop.f32.mrb[0].mxu0
      %6287 = vmatprep.mubr.f32.mxu0 0.0
      %6288 = vmatmul.mubr.f32.gmra.mrb[0].mxu0 %v2623
      %v6289 = vpop.f32.mrb[0].mxu0
      %v6290 = vadd.f32 0.0, %v6289
      %v6291 = vpop.f32.mrb[0].mxu0
      %6292 = vmatprep.mubr.f32.mxu0 0.0
      %6293 = vmatmul.mubr.f32.gmra.mrb[0].mxu0 %v2625
      %v6294 = vpop.f32.mrb[0].mxu0
      %v6295 = vadd.f32 0.0, %v6294
      %v6296 = vpop.f32.mrb[0].mxu0
      %6297 = vmatprep.mubr.f32.mxu0 0.0
      %6298 = vmatmul.mubr.f32.gmra.mrb[0].mxu0 %v2627
      %v6299 = vpop.f32.mrb[0].mxu0
      %v6300 = vadd.f32 0.0, %v6299
      %v6301 = vpop.f32.mrb[0].mxu0
      %6302 = vmatprep.mubr.f32.mxu0 0.0
      %6303 = vmatmul.mubr.f32.gmra.mrb[0].mxu0 %v2629
      %v6304 = vpop.f32.mrb[0].mxu0
      %v6305 = vadd.f32 0.0, %v6304
      %v6306 = vpop.f32.mrb[0].mxu0
      %6307 = vmatprep.mubr.f32.mxu0 0.0
      %6308 = vmatmul.mubr.f32.gmra.mrb[0].mxu0 %v2631
      %v6309 = vpop.f32.mrb[0].mxu0
      %v6310 = vadd.f32 0.0, %v6309
      %v6311 = vpop.f32.mrb[0].mxu0
      %6312 = vmatprep.mubr.f32.mxu0 0.0
      %6313 = vmatmul.mubr.f32.gmra.mrb[0].mxu0 %v2633
      %v6314 = vpop.f32.mrb[0].mxu0
      %v6315 = vadd.f32 0.0, %v6314
      %v6316 = vpop.f32.mrb[0].mxu0
      %6317 = vmatprep.mubr.f32.mxu0 0.0
      %6318 = vmatmul.mubr.f32.gmra.mrb[0].mxu0 %v2635
      %v6319 = vpop.f32.mrb[0].mxu0
      %v6320 = vadd.f32 0.0, %v6319
      %v6321 = vpop.f32.mrb[0].mxu0
      %6322 = vmatprep.mubr.f32.mxu0 0.0
      %6323 = vmatmul.mubr.f32.gmra.mrb[0].mxu0 %v2637
      %v6324 = vpop.f32.mrb[0].mxu0
      %v6325 = vadd.f32 0.0, %v6324
      %v6326 = vpop.f32.mrb[0].mxu0
      %6327 = vmatprep.mubr.f32.mxu0 0.0
      %6328 = vmatmul.mubr.f32.gmra.mrb[0].mxu0 %v2639
      %v6329 = vpop.f32.mrb[0].mxu0
      %v6330 = vadd.f32 0.0, %v6329
      %v6331 = vpop.f32.mrb[0].mxu0
      %6332 = vmatprep.mubr.f32.mxu0 0.0
      %6333 = vmatmul.mubr.f32.gmra.mrb[0].mxu0 %v5951
      %v6334 = vpop.f32.mrb[0].mxu0
      %v6335 = vadd.f32 0.0, %v6334
      %v6336 = vpop.f32.mrb[0].mxu0
      %6337 = vmatprep.mubr.f32.mxu0 0.0
      %6338 = vmatmul.mubr.f32.gmra.mrb[0].mxu0 %v5953
      %v6339 = vpop.f32.mrb[0].mxu0
      %v6340 = vadd.f32 0.0, %v6339
      %v6341 = vpop.f32.mrb[0].mxu0
      %6342 = vdwg.mxu0
      %v6343 = vadd.f32 %v5885, %v6025
      %v6344 = vadd.f32 %v5886, %v6030
      %v6345 = vadd.f32 %v5887, %v6035
      %v6346 = vadd.f32 %v5888, %v6040
      %v6347 = vadd.f32 %v5889, %v6045
      %v6348 = vadd.f32 %v5890, %v6050
      %v6349 = vadd.f32 %v5891, %v6055
      %v6350 = vadd.f32 %v5892, %v6060
      %v6351 = vadd.f32 %v5893, %v6065
      %v6352 = vadd.f32 %v5894, %v6070
      %v6353 = vadd.f32 %v5895, %v6075
      %v6354 = vadd.f32 %v5896, %v6080
      %v6355 = vadd.f32 %v5897, %v6085
      %v6356 = vadd.f32 %v5898, %v6090
      %v6357 = vadd.f32 %v5899, %v6095
      %v6358 = vadd.f32 %v5900, %v6100
      %v6359 = vadd.f32 %v5901, %v6105
      %v6360 = vadd.f32 %v5902, %v6110
      %v6361 = vadd.f32 %v5903, %v6115
      %v6362 = vadd.f32 %v5904, %v6120
      %v6363 = vadd.f32 %v5905, %v6125
      %v6364 = vadd.f32 %v5906, %v6130
      %v6365 = vadd.f32 %v5907, %v6135
      %v6366 = vadd.f32 %v5908, %v6140
      %v6367 = vadd.f32 %v5909, %v6145
      %v6368 = vadd.f32 %v5910, %v6150
      %v6369 = vadd.f32 %v5911, %v6155
      %v6370 = vadd.f32 %v5912, %v6160
      %v6371 = vadd.f32 %v5913, %v6165
      %v6372 = vadd.f32 %v5914, %v6170
      %v6373 = vadd.f32 %v5915, %v6175
      %v6374 = vadd.f32 %v5916, %v6180
      %v6375 = vadd.f32 %v5917, %v6185
      %v6376 = vadd.f32 %v5918, %v6190
      %v6377 = vadd.f32 %v5919, %v6195
      %v6378 = vadd.f32 %v5920, %v6200
      %v6379 = vadd.f32 %v5921, %v6205
      %v6380 = vadd.f32 %v5922, %v6210
      %v6381 = vadd.f32 %v5923, %v6215
      %v6382 = vadd.f32 %v5924, %v6220
      %v6383 = vadd.f32 %v5925, %v6225
      %v6384 = vadd.f32 %v5926, %v6230
      %v6385 = vadd.f32 %v5927, %v6235
      %v6386 = vadd.f32 %v5928, %v6240
      %v6387 = vadd.f32 %v5929, %v6245
      %v6388 = vadd.f32 %v5930, %v6250
      %v6389 = vadd.f32 %v5931, %v6255
      %v6390 = vadd.f32 %v5932, %v6260
      %v6391 = vadd.f32 %v5933, %v6265
      %v6392 = vadd.f32 %v5934, %v6270
      %v6393 = vadd.f32 %v5935, %v6275
      %v6394 = vadd.f32 %v5936, %v6280
      %v6395 = vadd.f32 %v5937, %v6285
      %v6396 = vadd.f32 %v5938, %v6290
      %v6397 = vadd.f32 %v5939, %v6295
      %v6398 = vadd.f32 %v5940, %v6300
      %v6399 = vadd.f32 %v5941, %v6305
      %v6400 = vadd.f32 %v5942, %v6310
      %v6401 = vadd.f32 %v5943, %v6315
      %v6402 = vadd.f32 %v5944, %v6320
      %v6403 = vadd.f32 %v5945, %v6325
      %v6404 = vadd.f32 %v5946, %v6330
      %v6405 = vadd.f32 %v5947, %v6335
      %v6406 = vadd.f32 %v5948, %v6340
      %s6407 = scalar_lea.vmem %s1, 20
      %v6408 = vld [vmem:[%s6407] sm:$0xf]
      %v6409 = vsel %vm2512, %v5480, 0
      %v6411 = vsel %vm2512, %v5482, 0
      %v6414 = vsel %vm2641, %v6408, 0
      %6416 = vmatprep.subr.mxu0 0.0
      %6417 = vmatpush1.msra.mxu0 %v6414
      %6418 = vmatprep.subr.mxu0 0.0
      %6419 = vmatpush1.msra.mxu0 0.0
      %6420 = vmatprep.subr.mxu0 0.0
      %6421 = vmatpush1.msra.mxu0 0.0
      %6422 = vmatprep.subr.mxu0 0.0
      %6423 = vmatpush1.msra.mxu0 0.0
      %6424 = vmatprep.subr.mxu0 0.0
      %6425 = vmatpush1.msra.mxu0 0.0
      %6426 = vmatprep.subr.mxu0 0.0
      %6427 = vmatpush1.msra.mxu0 0.0
      %6428 = vmatprep.subr.mxu0 0.0
      %6429 = vmatpush1.msra.mxu0 0.0
      %6430 = vmatprep.subr.mxu0 0.0
      %6431 = vmatpush1.msra.mxu0 0.0
      %6432 = vmatprep.subr.mxu0 0.0
      %6433 = vmatpush1.msra.mxu0 0.0
      %6434 = vmatprep.subr.mxu0 0.0
      %6435 = vmatpush1.msra.mxu0 0.0
      %6436 = vmatprep.subr.mxu0 0.0
      %6437 = vmatpush1.msra.mxu0 0.0
      %6438 = vmatprep.subr.mxu0 0.0
      %6439 = vmatpush1.msra.mxu0 0.0
      %6440 = vmatprep.subr.mxu0 0.0
      %6441 = vmatpush1.msra.mxu0 0.0
      %6442 = vmatprep.subr.mxu0 0.0
      %6443 = vmatpush1.msra.mxu0 0.0
      %6444 = vmatprep.subr.mxu0 0.0
      %6445 = vmatpush1.msra.mxu0 0.0
      %6446 = vmatprep.subr.mxu0 0.0
      %6447 = vmatpush1.msra.mxu0 0.0
      %6448 = vmatprep.subr.mxu0 0.0
      %6449 = vmatpush1.msra.mxu0 0.0
      %6450 = vmatprep.subr.mxu0 0.0
      %6451 = vmatpush1.msra.mxu0 0.0
      %6452 = vmatprep.subr.mxu0 0.0
      %6453 = vmatpush1.msra.mxu0 0.0
      %6454 = vmatprep.subr.mxu0 0.0
      %6455 = vmatpush1.msra.mxu0 0.0
      %6456 = vmatprep.subr.mxu0 0.0
      %6457 = vmatpush1.msra.mxu0 0.0
      %6458 = vmatprep.subr.mxu0 0.0
      %6459 = vmatpush1.msra.mxu0 0.0
      %6460 = vmatprep.subr.mxu0 0.0
      %6461 = vmatpush1.msra.mxu0 0.0
      %6462 = vmatprep.subr.mxu0 0.0
      %6463 = vmatpush1.msra.mxu0 0.0
      %6464 = vmatprep.subr.mxu0 0.0
      %6465 = vmatpush1.msra.mxu0 0.0
      %6466 = vmatprep.subr.mxu0 0.0
      %6467 = vmatpush1.msra.mxu0 0.0
      %6468 = vmatprep.subr.mxu0 0.0
      %6469 = vmatpush1.msra.mxu0 0.0
      %6470 = vmatprep.subr.mxu0 0.0
      %6471 = vmatpush1.msra.mxu0 0.0
      %6472 = vmatprep.subr.mxu0 0.0
      %6473 = vmatpush1.msra.mxu0 0.0
      %6474 = vmatprep.subr.mxu0 0.0
      %6475 = vmatpush1.msra.mxu0 0.0
      %6476 = vmatprep.subr.mxu0 0.0
      %6477 = vmatpush1.msra.mxu0 0.0
      %6478 = vmatprep.subr.mxu0 0.0
      %6479 = vmatpush1.msra.mxu0 0.0
      %6480 = vmatprep.mubr.f32.mxu0 0.0
      %6481 = vmatmul.mubr.f32.gmra.mrb[0].mxu0 %v3552
      %v6482 = vpop.f32.mrb[0].mxu0
      %v6483 = vadd.f32 0.0, %v6482
      %v6484 = vpop.f32.mrb[0].mxu0
      %6485 = vmatprep.mubr.f32.mxu0 0.0
      %6486 = vmatmul.mubr.f32.gmra.mrb[0].mxu0 %v3554
      %v6487 = vpop.f32.mrb[0].mxu0
      %v6488 = vadd.f32 0.0, %v6487
      %v6489 = vpop.f32.mrb[0].mxu0
      %6490 = vmatprep.mubr.f32.mxu0 0.0
      %6491 = vmatmul.mubr.f32.gmra.mrb[0].mxu0 %v3556
      %v6492 = vpop.f32.mrb[0].mxu0
      %v6493 = vadd.f32 0.0, %v6492
      %v6494 = vpop.f32.mrb[0].mxu0
      %6495 = vmatprep.mubr.f32.mxu0 0.0
      %6496 = vmatmul.mubr.f32.gmra.mrb[0].mxu0 %v3558
      %v6497 = vpop.f32.mrb[0].mxu0
      %v6498 = vadd.f32 0.0, %v6497
      %v6499 = vpop.f32.mrb[0].mxu0
      %6500 = vmatprep.mubr.f32.mxu0 0.0
      %6501 = vmatmul.mubr.f32.gmra.mrb[0].mxu0 %v3560
      %v6502 = vpop.f32.mrb[0].mxu0
      %v6503 = vadd.f32 0.0, %v6502
      %v6504 = vpop.f32.mrb[0].mxu0
      %6505 = vmatprep.mubr.f32.mxu0 0.0
      %6506 = vmatmul.mubr.f32.gmra.mrb[0].mxu0 %v3562
      %v6507 = vpop.f32.mrb[0].mxu0
      %v6508 = vadd.f32 0.0, %v6507
      %v6509 = vpop.f32.mrb[0].mxu0
      %6510 = vmatprep.mubr.f32.mxu0 0.0
      %6511 = vmatmul.mubr.f32.gmra.mrb[0].mxu0 %v3564
      %v6512 = vpop.f32.mrb[0].mxu0
      %v6513 = vadd.f32 0.0, %v6512
      %v6514 = vpop.f32.mrb[0].mxu0
      %6515 = vmatprep.mubr.f32.mxu0 0.0
      %6516 = vmatmul.mubr.f32.gmra.mrb[0].mxu0 %v3566
      %v6517 = vpop.f32.mrb[0].mxu0
      %v6518 = vadd.f32 0.0, %v6517
      %v6519 = vpop.f32.mrb[0].mxu0
      %6520 = vmatprep.mubr.f32.mxu0 0.0
      %6521 = vmatmul.mubr.f32.gmra.mrb[0].mxu0 %v3568
      %v6522 = vpop.f32.mrb[0].mxu0
      %v6523 = vadd.f32 0.0, %v6522
      %v6524 = vpop.f32.mrb[0].mxu0
      %6525 = vmatprep.mubr.f32.mxu0 0.0
      %6526 = vmatmul.mubr.f32.gmra.mrb[0].mxu0 %v3570
      %v6527 = vpop.f32.mrb[0].mxu0
      %v6528 = vadd.f32 0.0, %v6527
      %v6529 = vpop.f32.mrb[0].mxu0
      %6530 = vmatprep.mubr.f32.mxu0 0.0
      %6531 = vmatmul.mubr.f32.gmra.mrb[0].mxu0 %v3572
      %v6532 = vpop.f32.mrb[0].mxu0
      %v6533 = vadd.f32 0.0, %v6532
      %v6534 = vpop.f32.mrb[0].mxu0
      %6535 = vmatprep.mubr.f32.mxu0 0.0
      %6536 = vmatmul.mubr.f32.gmra.mrb[0].mxu0 %v3574
      %v6537 = vpop.f32.mrb[0].mxu0
      %v6538 = vadd.f32 0.0, %v6537
      %v6539 = vpop.f32.mrb[0].mxu0
      %6540 = vmatprep.mubr.f32.mxu0 0.0
      %6541 = vmatmul.mubr.f32.gmra.mrb[0].mxu0 %v3576
      %v6542 = vpop.f32.mrb[0].mxu0
      %v6543 = vadd.f32 0.0, %v6542
      %v6544 = vpop.f32.mrb[0].mxu0
      %6545 = vmatprep.mubr.f32.mxu0 0.0
      %6546 = vmatmul.mubr.f32.gmra.mrb[0].mxu0 %v3578
      %v6547 = vpop.f32.mrb[0].mxu0
      %v6548 = vadd.f32 0.0, %v6547
      %v6549 = vpop.f32.mrb[0].mxu0
      %6550 = vmatprep.mubr.f32.mxu0 0.0
      %6551 = vmatmul.mubr.f32.gmra.mrb[0].mxu0 %v3580
      %v6552 = vpop.f32.mrb[0].mxu0
      %v6553 = vadd.f32 0.0, %v6552
      %v6554 = vpop.f32.mrb[0].mxu0
      %6555 = vmatprep.mubr.f32.mxu0 0.0
      %6556 = vmatmul.mubr.f32.gmra.mrb[0].mxu0 %v3582
      %v6557 = vpop.f32.mrb[0].mxu0
      %v6558 = vadd.f32 0.0, %v6557
      %v6559 = vpop.f32.mrb[0].mxu0
      %6560 = vmatprep.mubr.f32.mxu0 0.0
      %6561 = vmatmul.mubr.f32.gmra.mrb[0].mxu0 %v3584
      %v6562 = vpop.f32.mrb[0].mxu0
      %v6563 = vadd.f32 0.0, %v6562
      %v6564 = vpop.f32.mrb[0].mxu0
      %6565 = vmatprep.mubr.f32.mxu0 0.0
      %6566 = vmatmul.mubr.f32.gmra.mrb[0].mxu0 %v3586
      %v6567 = vpop.f32.mrb[0].mxu0
      %v6568 = vadd.f32 0.0, %v6567
      %v6569 = vpop.f32.mrb[0].mxu0
      %6570 = vmatprep.mubr.f32.mxu0 0.0
      %6571 = vmatmul.mubr.f32.gmra.mrb[0].mxu0 %v3588
      %v6572 = vpop.f32.mrb[0].mxu0
      %v6573 = vadd.f32 0.0, %v6572
      %v6574 = vpop.f32.mrb[0].mxu0
      %6575 = vmatprep.mubr.f32.mxu0 0.0
      %6576 = vmatmul.mubr.f32.gmra.mrb[0].mxu0 %v3590
      %v6577 = vpop.f32.mrb[0].mxu0
      %v6578 = vadd.f32 0.0, %v6577
      %v6579 = vpop.f32.mrb[0].mxu0
      %6580 = vmatprep.mubr.f32.mxu0 0.0
      %6581 = vmatmul.mubr.f32.gmra.mrb[0].mxu0 %v3592
      %v6582 = vpop.f32.mrb[0].mxu0
      %v6583 = vadd.f32 0.0, %v6582
      %v6584 = vpop.f32.mrb[0].mxu0
      %6585 = vmatprep.mubr.f32.mxu0 0.0
      %6586 = vmatmul.mubr.f32.gmra.mrb[0].mxu0 %v3594
      %v6587 = vpop.f32.mrb[0].mxu0
      %v6588 = vadd.f32 0.0, %v6587
      %v6589 = vpop.f32.mrb[0].mxu0
      %6590 = vmatprep.mubr.f32.mxu0 0.0
      %6591 = vmatmul.mubr.f32.gmra.mrb[0].mxu0 %v3596
      %v6592 = vpop.f32.mrb[0].mxu0
      %v6593 = vadd.f32 0.0, %v6592
      %v6594 = vpop.f32.mrb[0].mxu0
      %6595 = vmatprep.mubr.f32.mxu0 0.0
      %6596 = vmatmul.mubr.f32.gmra.mrb[0].mxu0 %v3598
      %v6597 = vpop.f32.mrb[0].mxu0
      %v6598 = vadd.f32 0.0, %v6597
      %v6599 = vpop.f32.mrb[0].mxu0
      %6600 = vmatprep.mubr.f32.mxu0 0.0
      %6601 = vmatmul.mubr.f32.gmra.mrb[0].mxu0 %v3600
      %v6602 = vpop.f32.mrb[0].mxu0
      %v6603 = vadd.f32 0.0, %v6602
      %v6604 = vpop.f32.mrb[0].mxu0
      %6605 = vmatprep.mubr.f32.mxu0 0.0
      %6606 = vmatmul.mubr.f32.gmra.mrb[0].mxu0 %v3602
      %v6607 = vpop.f32.mrb[0].mxu0
      %v6608 = vadd.f32 0.0, %v6607
      %v6609 = vpop.f32.mrb[0].mxu0
      %6610 = vmatprep.mubr.f32.mxu0 0.0
      %6611 = vmatmul.mubr.f32.gmra.mrb[0].mxu0 %v3604
      %v6612 = vpop.f32.mrb[0].mxu0
      %v6613 = vadd.f32 0.0, %v6612
      %v6614 = vpop.f32.mrb[0].mxu0
      %6615 = vmatprep.mubr.f32.mxu0 0.0
      %6616 = vmatmul.mubr.f32.gmra.mrb[0].mxu0 %v3606
      %v6617 = vpop.f32.mrb[0].mxu0
      %v6618 = vadd.f32 0.0, %v6617
      %v6619 = vpop.f32.mrb[0].mxu0
      %6620 = vmatprep.mubr.f32.mxu0 0.0
      %6621 = vmatmul.mubr.f32.gmra.mrb[0].mxu0 %v3608
      %v6622 = vpop.f32.mrb[0].mxu0
      %v6623 = vadd.f32 0.0, %v6622
      %v6624 = vpop.f32.mrb[0].mxu0
      %6625 = vmatprep.mubr.f32.mxu0 0.0
      %6626 = vmatmul.mubr.f32.gmra.mrb[0].mxu0 %v3610
      %v6627 = vpop.f32.mrb[0].mxu0
      %v6628 = vadd.f32 0.0, %v6627
      %v6629 = vpop.f32.mrb[0].mxu0
      %6630 = vmatprep.mubr.f32.mxu0 0.0
      %6631 = vmatmul.mubr.f32.gmra.mrb[0].mxu0 %v3612
      %v6632 = vpop.f32.mrb[0].mxu0
      %v6633 = vadd.f32 0.0, %v6632
      %v6634 = vpop.f32.mrb[0].mxu0
      %6635 = vmatprep.mubr.f32.mxu0 0.0
      %6636 = vmatmul.mubr.f32.gmra.mrb[0].mxu0 %v3614
      %v6637 = vpop.f32.mrb[0].mxu0
      %v6638 = vadd.f32 0.0, %v6637
      %v6639 = vpop.f32.mrb[0].mxu0
      %6640 = vmatprep.mubr.f32.mxu0 0.0
      %6641 = vmatmul.mubr.f32.gmra.mrb[0].mxu0 %v3616
      %v6642 = vpop.f32.mrb[0].mxu0
      %v6643 = vadd.f32 0.0, %v6642
      %v6644 = vpop.f32.mrb[0].mxu0
      %6645 = vmatprep.mubr.f32.mxu0 0.0
      %6646 = vmatmul.mubr.f32.gmra.mrb[0].mxu0 %v3618
      %v6647 = vpop.f32.mrb[0].mxu0
      %v6648 = vadd.f32 0.0, %v6647
      %v6649 = vpop.f32.mrb[0].mxu0
      %6650 = vmatprep.mubr.f32.mxu0 0.0
      %6651 = vmatmul.mubr.f32.gmra.mrb[0].mxu0 %v3620
      %v6652 = vpop.f32.mrb[0].mxu0
      %v6653 = vadd.f32 0.0, %v6652
      %v6654 = vpop.f32.mrb[0].mxu0
      %6655 = vmatprep.mubr.f32.mxu0 0.0
      %6656 = vmatmul.mubr.f32.gmra.mrb[0].mxu0 %v3622
      %v6657 = vpop.f32.mrb[0].mxu0
      %v6658 = vadd.f32 0.0, %v6657
      %v6659 = vpop.f32.mrb[0].mxu0
      %6660 = vmatprep.mubr.f32.mxu0 0.0
      %6661 = vmatmul.mubr.f32.gmra.mrb[0].mxu0 %v3624
      %v6662 = vpop.f32.mrb[0].mxu0
      %v6663 = vadd.f32 0.0, %v6662
      %v6664 = vpop.f32.mrb[0].mxu0
      %6665 = vmatprep.mubr.f32.mxu0 0.0
      %6666 = vmatmul.mubr.f32.gmra.mrb[0].mxu0 %v3626
      %v6667 = vpop.f32.mrb[0].mxu0
      %v6668 = vadd.f32 0.0, %v6667
      %v6669 = vpop.f32.mrb[0].mxu0
      %6670 = vmatprep.mubr.f32.mxu0 0.0
      %6671 = vmatmul.mubr.f32.gmra.mrb[0].mxu0 %v3628
      %v6672 = vpop.f32.mrb[0].mxu0
      %v6673 = vadd.f32 0.0, %v6672
      %v6674 = vpop.f32.mrb[0].mxu0
      %6675 = vmatprep.mubr.f32.mxu0 0.0
      %6676 = vmatmul.mubr.f32.gmra.mrb[0].mxu0 %v3630
      %v6677 = vpop.f32.mrb[0].mxu0
      %v6678 = vadd.f32 0.0, %v6677
      %v6679 = vpop.f32.mrb[0].mxu0
      %6680 = vmatprep.mubr.f32.mxu0 0.0
      %6681 = vmatmul.mubr.f32.gmra.mrb[0].mxu0 %v3632
      %v6682 = vpop.f32.mrb[0].mxu0
      %v6683 = vadd.f32 0.0, %v6682
      %v6684 = vpop.f32.mrb[0].mxu0
      %6685 = vmatprep.mubr.f32.mxu0 0.0
      %6686 = vmatmul.mubr.f32.gmra.mrb[0].mxu0 %v3634
      %v6687 = vpop.f32.mrb[0].mxu0
      %v6688 = vadd.f32 0.0, %v6687
      %v6689 = vpop.f32.mrb[0].mxu0
      %6690 = vmatprep.mubr.f32.mxu0 0.0
      %6691 = vmatmul.mubr.f32.gmra.mrb[0].mxu0 %v3636
      %v6692 = vpop.f32.mrb[0].mxu0
      %v6693 = vadd.f32 0.0, %v6692
      %v6694 = vpop.f32.mrb[0].mxu0
      %6695 = vmatprep.mubr.f32.mxu0 0.0
      %6696 = vmatmul.mubr.f32.gmra.mrb[0].mxu0 %v3638
      %v6697 = vpop.f32.mrb[0].mxu0
      %v6698 = vadd.f32 0.0, %v6697
      %v6699 = vpop.f32.mrb[0].mxu0
      %6700 = vmatprep.mubr.f32.mxu0 0.0
      %6701 = vmatmul.mubr.f32.gmra.mrb[0].mxu0 %v3640
      %v6702 = vpop.f32.mrb[0].mxu0
      %v6703 = vadd.f32 0.0, %v6702
      %v6704 = vpop.f32.mrb[0].mxu0
      %6705 = vmatprep.mubr.f32.mxu0 0.0
      %6706 = vmatmul.mubr.f32.gmra.mrb[0].mxu0 %v3642
      %v6707 = vpop.f32.mrb[0].mxu0
      %v6708 = vadd.f32 0.0, %v6707
      %v6709 = vpop.f32.mrb[0].mxu0
      %6710 = vmatprep.mubr.f32.mxu0 0.0
      %6711 = vmatmul.mubr.f32.gmra.mrb[0].mxu0 %v3644
      %v6712 = vpop.f32.mrb[0].mxu0
      %v6713 = vadd.f32 0.0, %v6712
      %v6714 = vpop.f32.mrb[0].mxu0
      %6715 = vmatprep.mubr.f32.mxu0 0.0
      %6716 = vmatmul.mubr.f32.gmra.mrb[0].mxu0 %v3646
      %v6717 = vpop.f32.mrb[0].mxu0
      %v6718 = vadd.f32 0.0, %v6717
      %v6719 = vpop.f32.mrb[0].mxu0
      %6720 = vmatprep.mubr.f32.mxu0 0.0
      %6721 = vmatmul.mubr.f32.gmra.mrb[0].mxu0 %v3648
      %v6722 = vpop.f32.mrb[0].mxu0
      %v6723 = vadd.f32 0.0, %v6722
      %v6724 = vpop.f32.mrb[0].mxu0
      %6725 = vmatprep.mubr.f32.mxu0 0.0
      %6726 = vmatmul.mubr.f32.gmra.mrb[0].mxu0 %v3650
      %v6727 = vpop.f32.mrb[0].mxu0
      %v6728 = vadd.f32 0.0, %v6727
      %v6729 = vpop.f32.mrb[0].mxu0
      %6730 = vmatprep.mubr.f32.mxu0 0.0
      %6731 = vmatmul.mubr.f32.gmra.mrb[0].mxu0 %v3652
      %v6732 = vpop.f32.mrb[0].mxu0
      %v6733 = vadd.f32 0.0, %v6732
      %v6734 = vpop.f32.mrb[0].mxu0
      %6735 = vmatprep.mubr.f32.mxu0 0.0
      %6736 = vmatmul.mubr.f32.gmra.mrb[0].mxu0 %v3654
      %v6737 = vpop.f32.mrb[0].mxu0
      %v6738 = vadd.f32 0.0, %v6737
      %v6739 = vpop.f32.mrb[0].mxu0
      %6740 = vmatprep.mubr.f32.mxu0 0.0
      %6741 = vmatmul.mubr.f32.gmra.mrb[0].mxu0 %v3656
      %v6742 = vpop.f32.mrb[0].mxu0
      %v6743 = vadd.f32 0.0, %v6742
      %v6744 = vpop.f32.mrb[0].mxu0
      %6745 = vmatprep.mubr.f32.mxu0 0.0
      %6746 = vmatmul.mubr.f32.gmra.mrb[0].mxu0 %v3658
      %v6747 = vpop.f32.mrb[0].mxu0
      %v6748 = vadd.f32 0.0, %v6747
      %v6749 = vpop.f32.mrb[0].mxu0
      %6750 = vmatprep.mubr.f32.mxu0 0.0
      %6751 = vmatmul.mubr.f32.gmra.mrb[0].mxu0 %v3660
      %v6752 = vpop.f32.mrb[0].mxu0
      %v6753 = vadd.f32 0.0, %v6752
      %v6754 = vpop.f32.mrb[0].mxu0
      %6755 = vmatprep.mubr.f32.mxu0 0.0
      %6756 = vmatmul.mubr.f32.gmra.mrb[0].mxu0 %v3662
      %v6757 = vpop.f32.mrb[0].mxu0
      %v6758 = vadd.f32 0.0, %v6757
      %v6759 = vpop.f32.mrb[0].mxu0
      %6760 = vmatprep.mubr.f32.mxu0 0.0
      %6761 = vmatmul.mubr.f32.gmra.mrb[0].mxu0 %v3664
      %v6762 = vpop.f32.mrb[0].mxu0
      %v6763 = vadd.f32 0.0, %v6762
      %v6764 = vpop.f32.mrb[0].mxu0
      %6765 = vmatprep.mubr.f32.mxu0 0.0
      %6766 = vmatmul.mubr.f32.gmra.mrb[0].mxu0 %v3666
      %v6767 = vpop.f32.mrb[0].mxu0
      %v6768 = vadd.f32 0.0, %v6767
      %v6769 = vpop.f32.mrb[0].mxu0
      %6770 = vmatprep.mubr.f32.mxu0 0.0
      %6771 = vmatmul.mubr.f32.gmra.mrb[0].mxu0 %v3668
      %v6772 = vpop.f32.mrb[0].mxu0
      %v6773 = vadd.f32 0.0, %v6772
      %v6774 = vpop.f32.mrb[0].mxu0
      %6775 = vmatprep.mubr.f32.mxu0 0.0
      %6776 = vmatmul.mubr.f32.gmra.mrb[0].mxu0 %v3670
      %v6777 = vpop.f32.mrb[0].mxu0
      %v6778 = vadd.f32 0.0, %v6777
      %v6779 = vpop.f32.mrb[0].mxu0
      %6780 = vmatprep.mubr.f32.mxu0 0.0
      %6781 = vmatmul.mubr.f32.gmra.mrb[0].mxu0 %v3672
      %v6782 = vpop.f32.mrb[0].mxu0
      %v6783 = vadd.f32 0.0, %v6782
      %v6784 = vpop.f32.mrb[0].mxu0
      %6785 = vmatprep.mubr.f32.mxu0 0.0
      %6786 = vmatmul.mubr.f32.gmra.mrb[0].mxu0 %v3674
      %v6787 = vpop.f32.mrb[0].mxu0
      %v6788 = vadd.f32 0.0, %v6787
      %v6789 = vpop.f32.mrb[0].mxu0
      %6790 = vmatprep.mubr.f32.mxu0 0.0
      %6791 = vmatmul.mubr.f32.gmra.mrb[0].mxu0 %v6409
      %v6792 = vpop.f32.mrb[0].mxu0
      %v6793 = vadd.f32 0.0, %v6792
      %v6794 = vpop.f32.mrb[0].mxu0
      %6795 = vmatprep.mubr.f32.mxu0 0.0
      %6796 = vmatmul.mubr.f32.gmra.mrb[0].mxu0 %v6411
      %v6797 = vpop.f32.mrb[0].mxu0
      %v6798 = vadd.f32 0.0, %v6797
      %v6799 = vpop.f32.mrb[0].mxu0
      %6800 = vdwg.mxu0
      %v6801 = vadd.f32 %v6343, %v6483
      %v6802 = vadd.f32 %v6344, %v6488
      %v6803 = vadd.f32 %v6345, %v6493
      %v6804 = vadd.f32 %v6346, %v6498
      %v6805 = vadd.f32 %v6347, %v6503
      %v6806 = vadd.f32 %v6348, %v6508
      %v6807 = vadd.f32 %v6349, %v6513
      %v6808 = vadd.f32 %v6350, %v6518
      %v6809 = vadd.f32 %v6351, %v6523
      %v6810 = vadd.f32 %v6352, %v6528
      %v6811 = vadd.f32 %v6353, %v6533
      %v6812 = vadd.f32 %v6354, %v6538
      %v6813 = vadd.f32 %v6355, %v6543
      %v6814 = vadd.f32 %v6356, %v6548
      %v6815 = vadd.f32 %v6357, %v6553
      %v6816 = vadd.f32 %v6358, %v6558
      %v6817 = vadd.f32 %v6359, %v6563
      %v6818 = vadd.f32 %v6360, %v6568
      %v6819 = vadd.f32 %v6361, %v6573
      %v6820 = vadd.f32 %v6362, %v6578
      %v6821 = vadd.f32 %v6363, %v6583
      %v6822 = vadd.f32 %v6364, %v6588
      %v6823 = vadd.f32 %v6365, %v6593
      %v6824 = vadd.f32 %v6366, %v6598
      %v6825 = vadd.f32 %v6367, %v6603
      %v6826 = vadd.f32 %v6368, %v6608
      %v6827 = vadd.f32 %v6369, %v6613
      %v6828 = vadd.f32 %v6370, %v6618
      %v6829 = vadd.f32 %v6371, %v6623
      %v6830 = vadd.f32 %v6372, %v6628
      %v6831 = vadd.f32 %v6373, %v6633
      %v6832 = vadd.f32 %v6374, %v6638
      %v6833 = vadd.f32 %v6375, %v6643
      %v6834 = vadd.f32 %v6376, %v6648
      %v6835 = vadd.f32 %v6377, %v6653
      %v6836 = vadd.f32 %v6378, %v6658
      %v6837 = vadd.f32 %v6379, %v6663
      %v6838 = vadd.f32 %v6380, %v6668
      %v6839 = vadd.f32 %v6381, %v6673
      %v6840 = vadd.f32 %v6382, %v6678
      %v6841 = vadd.f32 %v6383, %v6683
      %v6842 = vadd.f32 %v6384, %v6688
      %v6843 = vadd.f32 %v6385, %v6693
      %v6844 = vadd.f32 %v6386, %v6698
      %v6845 = vadd.f32 %v6387, %v6703
      %v6846 = vadd.f32 %v6388, %v6708
      %v6847 = vadd.f32 %v6389, %v6713
      %v6848 = vadd.f32 %v6390, %v6718
      %v6849 = vadd.f32 %v6391, %v6723
      %v6850 = vadd.f32 %v6392, %v6728
      %v6851 = vadd.f32 %v6393, %v6733
      %v6852 = vadd.f32 %v6394, %v6738
      %v6853 = vadd.f32 %v6395, %v6743
      %v6854 = vadd.f32 %v6396, %v6748
      %v6855 = vadd.f32 %v6397, %v6753
      %v6856 = vadd.f32 %v6398, %v6758
      %v6857 = vadd.f32 %v6399, %v6763
      %v6858 = vadd.f32 %v6400, %v6768
      %v6859 = vadd.f32 %v6401, %v6773
      %v6860 = vadd.f32 %v6402, %v6778
      %v6861 = vadd.f32 %v6403, %v6783
      %v6862 = vadd.f32 %v6404, %v6788
      %v6863 = vadd.f32 %v6405, %v6793
      %v6864 = vadd.f32 %v6406, %v6798
      %6865 = vmatprep.subr.mxu0 0.0
      %6866 = vmatpush1.msra.mxu0 %v5498
      %6867 = vmatprep.subr.mxu0 0.0
      %6868 = vmatpush1.msra.mxu0 0.0
      %6869 = vmatprep.subr.mxu0 0.0
      %6870 = vmatpush1.msra.mxu0 0.0
      %6871 = vmatprep.subr.mxu0 0.0
      %6872 = vmatpush1.msra.mxu0 0.0
      %6873 = vmatprep.subr.mxu0 0.0
      %6874 = vmatpush1.msra.mxu0 0.0
      %6875 = vmatprep.subr.mxu0 0.0
      %6876 = vmatpush1.msra.mxu0 0.0
      %6877 = vmatprep.subr.mxu0 0.0
      %6878 = vmatpush1.msra.mxu0 0.0
      %6879 = vmatprep.subr.mxu0 0.0
      %6880 = vmatpush1.msra.mxu0 0.0
      %6881 = vmatprep.subr.mxu0 0.0
      %6882 = vmatpush1.msra.mxu0 0.0
      %6883 = vmatprep.subr.mxu0 0.0
      %6884 = vmatpush1.msra.mxu0 0.0
      %6885 = vmatprep.subr.mxu0 0.0
      %6886 = vmatpush1.msra.mxu0 0.0
      %6887 = vmatprep.subr.mxu0 0.0
      %6888 = vmatpush1.msra.mxu0 0.0
      %6889 = vmatprep.subr.mxu0 0.0
      %6890 = vmatpush1.msra.mxu0 0.0
      %6891 = vmatprep.subr.mxu0 0.0
      %6892 = vmatpush1.msra.mxu0 0.0
      %6893 = vmatprep.subr.mxu0 0.0
      %6894 = vmatpush1.msra.mxu0 0.0
      %6895 = vmatprep.subr.mxu0 0.0
      %6896 = vmatpush1.msra.mxu0 0.0
      %6897 = vmatprep.subr.mxu0 0.0
      %6898 = vmatpush1.msra.mxu0 0.0
      %6899 = vmatprep.subr.mxu0 0.0
      %6900 = vmatpush1.msra.mxu0 0.0
      %6901 = vmatprep.subr.mxu0 0.0
      %6902 = vmatpush1.msra.mxu0 0.0
      %6903 = vmatprep.subr.mxu0 0.0
      %6904 = vmatpush1.msra.mxu0 0.0
      %6905 = vmatprep.subr.mxu0 0.0
      %6906 = vmatpush1.msra.mxu0 0.0
      %6907 = vmatprep.subr.mxu0 0.0
      %6908 = vmatpush1.msra.mxu0 0.0
      %6909 = vmatprep.subr.mxu0 0.0
      %6910 = vmatpush1.msra.mxu0 0.0
      %6911 = vmatprep.subr.mxu0 0.0
      %6912 = vmatpush1.msra.mxu0 0.0
      %6913 = vmatprep.subr.mxu0 0.0
      %6914 = vmatpush1.msra.mxu0 0.0
      %6915 = vmatprep.subr.mxu0 0.0
      %6916 = vmatpush1.msra.mxu0 0.0
      %6917 = vmatprep.subr.mxu0 0.0
      %6918 = vmatpush1.msra.mxu0 0.0
      %6919 = vmatprep.subr.mxu0 0.0
      %6920 = vmatpush1.msra.mxu0 0.0
      %6921 = vmatprep.subr.mxu0 0.0
      %6922 = vmatpush1.msra.mxu0 0.0
      %6923 = vmatprep.subr.mxu0 0.0
      %6924 = vmatpush1.msra.mxu0 0.0
      %6925 = vmatprep.subr.mxu0 0.0
      %6926 = vmatpush1.msra.mxu0 0.0
      %6927 = vmatprep.subr.mxu0 0.0
      %6928 = vmatpush1.msra.mxu0 0.0
      %6929 = vmatprep.mubr.f32.mxu0 0.0
      %6930 = vmatmul.mubr.f32.gmra.mrb[0].mxu0 %v2517
      %v6931 = vpop.f32.mrb[0].mxu0
      %v6932 = vadd.f32 0.0, %v6931
      %v6933 = vpop.f32.mrb[0].mxu0
      %6934 = vmatprep.mubr.f32.mxu0 0.0
      %6935 = vmatmul.mubr.f32.gmra.mrb[0].mxu0 %v2519
      %v6936 = vpop.f32.mrb[0].mxu0
      %v6937 = vadd.f32 0.0, %v6936
      %v6938 = vpop.f32.mrb[0].mxu0
      %6939 = vmatprep.mubr.f32.mxu0 0.0
      %6940 = vmatmul.mubr.f32.gmra.mrb[0].mxu0 %v2521
      %v6941 = vpop.f32.mrb[0].mxu0
      %v6942 = vadd.f32 0.0, %v6941
      %v6943 = vpop.f32.mrb[0].mxu0
      %6944 = vmatprep.mubr.f32.mxu0 0.0
      %6945 = vmatmul.mubr.f32.gmra.mrb[0].mxu0 %v2523
      %v6946 = vpop.f32.mrb[0].mxu0
      %v6947 = vadd.f32 0.0, %v6946
      %v6948 = vpop.f32.mrb[0].mxu0
      %6949 = vmatprep.mubr.f32.mxu0 0.0
      %6950 = vmatmul.mubr.f32.gmra.mrb[0].mxu0 %v2525
      %v6951 = vpop.f32.mrb[0].mxu0
      %v6952 = vadd.f32 0.0, %v6951
      %v6953 = vpop.f32.mrb[0].mxu0
      %6954 = vmatprep.mubr.f32.mxu0 0.0
      %6955 = vmatmul.mubr.f32.gmra.mrb[0].mxu0 %v2527
      %v6956 = vpop.f32.mrb[0].mxu0
      %v6957 = vadd.f32 0.0, %v6956
      %v6958 = vpop.f32.mrb[0].mxu0
      %6959 = vmatprep.mubr.f32.mxu0 0.0
      %6960 = vmatmul.mubr.f32.gmra.mrb[0].mxu0 %v2529
      %v6961 = vpop.f32.mrb[0].mxu0
      %v6962 = vadd.f32 0.0, %v6961
      %v6963 = vpop.f32.mrb[0].mxu0
      %6964 = vmatprep.mubr.f32.mxu0 0.0
      %6965 = vmatmul.mubr.f32.gmra.mrb[0].mxu0 %v2531
      %v6966 = vpop.f32.mrb[0].mxu0
      %v6967 = vadd.f32 0.0, %v6966
      %v6968 = vpop.f32.mrb[0].mxu0
      %6969 = vmatprep.mubr.f32.mxu0 0.0
      %6970 = vmatmul.mubr.f32.gmra.mrb[0].mxu0 %v2533
      %v6971 = vpop.f32.mrb[0].mxu0
      %v6972 = vadd.f32 0.0, %v6971
      %v6973 = vpop.f32.mrb[0].mxu0
      %6974 = vmatprep.mubr.f32.mxu0 0.0
      %6975 = vmatmul.mubr.f32.gmra.mrb[0].mxu0 %v2535
      %v6976 = vpop.f32.mrb[0].mxu0
      %v6977 = vadd.f32 0.0, %v6976
      %v6978 = vpop.f32.mrb[0].mxu0
      %6979 = vmatprep.mubr.f32.mxu0 0.0
      %6980 = vmatmul.mubr.f32.gmra.mrb[0].mxu0 %v2537
      %v6981 = vpop.f32.mrb[0].mxu0
      %v6982 = vadd.f32 0.0, %v6981
      %v6983 = vpop.f32.mrb[0].mxu0
      %6984 = vmatprep.mubr.f32.mxu0 0.0
      %6985 = vmatmul.mubr.f32.gmra.mrb[0].mxu0 %v2539
      %v6986 = vpop.f32.mrb[0].mxu0
      %v6987 = vadd.f32 0.0, %v6986
      %v6988 = vpop.f32.mrb[0].mxu0
      %6989 = vmatprep.mubr.f32.mxu0 0.0
      %6990 = vmatmul.mubr.f32.gmra.mrb[0].mxu0 %v2541
      %v6991 = vpop.f32.mrb[0].mxu0
      %v6992 = vadd.f32 0.0, %v6991
      %v6993 = vpop.f32.mrb[0].mxu0
      %6994 = vmatprep.mubr.f32.mxu0 0.0
      %6995 = vmatmul.mubr.f32.gmra.mrb[0].mxu0 %v2543
      %v6996 = vpop.f32.mrb[0].mxu0
      %v6997 = vadd.f32 0.0, %v6996
      %v6998 = vpop.f32.mrb[0].mxu0
      %6999 = vmatprep.mubr.f32.mxu0 0.0
      %7000 = vmatmul.mubr.f32.gmra.mrb[0].mxu0 %v2545
      %v7001 = vpop.f32.mrb[0].mxu0
      %v7002 = vadd.f32 0.0, %v7001
      %v7003 = vpop.f32.mrb[0].mxu0
      %7004 = vmatprep.mubr.f32.mxu0 0.0
      %7005 = vmatmul.mubr.f32.gmra.mrb[0].mxu0 %v2547
      %v7006 = vpop.f32.mrb[0].mxu0
      %v7007 = vadd.f32 0.0, %v7006
      %v7008 = vpop.f32.mrb[0].mxu0
      %7009 = vmatprep.mubr.f32.mxu0 0.0
      %7010 = vmatmul.mubr.f32.gmra.mrb[0].mxu0 %v2549
      %v7011 = vpop.f32.mrb[0].mxu0
      %v7012 = vadd.f32 0.0, %v7011
      %v7013 = vpop.f32.mrb[0].mxu0
      %7014 = vmatprep.mubr.f32.mxu0 0.0
      %7015 = vmatmul.mubr.f32.gmra.mrb[0].mxu0 %v2551
      %v7016 = vpop.f32.mrb[0].mxu0
      %v7017 = vadd.f32 0.0, %v7016
      %v7018 = vpop.f32.mrb[0].mxu0
      %7019 = vmatprep.mubr.f32.mxu0 0.0
      %7020 = vmatmul.mubr.f32.gmra.mrb[0].mxu0 %v2553
      %v7021 = vpop.f32.mrb[0].mxu0
      %v7022 = vadd.f32 0.0, %v7021
      %v7023 = vpop.f32.mrb[0].mxu0
      %7024 = vmatprep.mubr.f32.mxu0 0.0
      %7025 = vmatmul.mubr.f32.gmra.mrb[0].mxu0 %v2555
      %v7026 = vpop.f32.mrb[0].mxu0
      %v7027 = vadd.f32 0.0, %v7026
      %v7028 = vpop.f32.mrb[0].mxu0
      %7029 = vmatprep.mubr.f32.mxu0 0.0
      %7030 = vmatmul.mubr.f32.gmra.mrb[0].mxu0 %v2557
      %v7031 = vpop.f32.mrb[0].mxu0
      %v7032 = vadd.f32 0.0, %v7031
      %v7033 = vpop.f32.mrb[0].mxu0
      %7034 = vmatprep.mubr.f32.mxu0 0.0
      %7035 = vmatmul.mubr.f32.gmra.mrb[0].mxu0 %v2559
      %v7036 = vpop.f32.mrb[0].mxu0
      %v7037 = vadd.f32 0.0, %v7036
      %v7038 = vpop.f32.mrb[0].mxu0
      %7039 = vmatprep.mubr.f32.mxu0 0.0
      %7040 = vmatmul.mubr.f32.gmra.mrb[0].mxu0 %v2561
      %v7041 = vpop.f32.mrb[0].mxu0
      %v7042 = vadd.f32 0.0, %v7041
      %v7043 = vpop.f32.mrb[0].mxu0
      %7044 = vmatprep.mubr.f32.mxu0 0.0
      %7045 = vmatmul.mubr.f32.gmra.mrb[0].mxu0 %v2563
      %v7046 = vpop.f32.mrb[0].mxu0
      %v7047 = vadd.f32 0.0, %v7046
      %v7048 = vpop.f32.mrb[0].mxu0
      %7049 = vmatprep.mubr.f32.mxu0 0.0
      %7050 = vmatmul.mubr.f32.gmra.mrb[0].mxu0 %v2565
      %v7051 = vpop.f32.mrb[0].mxu0
      %v7052 = vadd.f32 0.0, %v7051
      %v7053 = vpop.f32.mrb[0].mxu0
      %7054 = vmatprep.mubr.f32.mxu0 0.0
      %7055 = vmatmul.mubr.f32.gmra.mrb[0].mxu0 %v2567
      %v7056 = vpop.f32.mrb[0].mxu0
      %v7057 = vadd.f32 0.0, %v7056
      %v7058 = vpop.f32.mrb[0].mxu0
      %7059 = vmatprep.mubr.f32.mxu0 0.0
      %7060 = vmatmul.mubr.f32.gmra.mrb[0].mxu0 %v2569
      %v7061 = vpop.f32.mrb[0].mxu0
      %v7062 = vadd.f32 0.0, %v7061
      %v7063 = vpop.f32.mrb[0].mxu0
      %7064 = vmatprep.mubr.f32.mxu0 0.0
      %7065 = vmatmul.mubr.f32.gmra.mrb[0].mxu0 %v2571
      %v7066 = vpop.f32.mrb[0].mxu0
      %v7067 = vadd.f32 0.0, %v7066
      %v7068 = vpop.f32.mrb[0].mxu0
      %7069 = vmatprep.mubr.f32.mxu0 0.0
      %7070 = vmatmul.mubr.f32.gmra.mrb[0].mxu0 %v2573
      %v7071 = vpop.f32.mrb[0].mxu0
      %v7072 = vadd.f32 0.0, %v7071
      %v7073 = vpop.f32.mrb[0].mxu0
      %7074 = vmatprep.mubr.f32.mxu0 0.0
      %7075 = vmatmul.mubr.f32.gmra.mrb[0].mxu0 %v2575
      %v7076 = vpop.f32.mrb[0].mxu0
      %v7077 = vadd.f32 0.0, %v7076
      %v7078 = vpop.f32.mrb[0].mxu0
      %7079 = vmatprep.mubr.f32.mxu0 0.0
      %7080 = vmatmul.mubr.f32.gmra.mrb[0].mxu0 %v2577
      %v7081 = vpop.f32.mrb[0].mxu0
      %v7082 = vadd.f32 0.0, %v7081
      %v7083 = vpop.f32.mrb[0].mxu0
      %7084 = vmatprep.mubr.f32.mxu0 0.0
      %7085 = vmatmul.mubr.f32.gmra.mrb[0].mxu0 %v2579
      %v7086 = vpop.f32.mrb[0].mxu0
      %v7087 = vadd.f32 0.0, %v7086
      %v7088 = vpop.f32.mrb[0].mxu0
      %7089 = vmatprep.mubr.f32.mxu0 0.0
      %7090 = vmatmul.mubr.f32.gmra.mrb[0].mxu0 %v2581
      %v7091 = vpop.f32.mrb[0].mxu0
      %v7092 = vadd.f32 0.0, %v7091
      %v7093 = vpop.f32.mrb[0].mxu0
      %7094 = vmatprep.mubr.f32.mxu0 0.0
      %7095 = vmatmul.mubr.f32.gmra.mrb[0].mxu0 %v2583
      %v7096 = vpop.f32.mrb[0].mxu0
      %v7097 = vadd.f32 0.0, %v7096
      %v7098 = vpop.f32.mrb[0].mxu0
      %7099 = vmatprep.mubr.f32.mxu0 0.0
      %7100 = vmatmul.mubr.f32.gmra.mrb[0].mxu0 %v2585
      %v7101 = vpop.f32.mrb[0].mxu0
      %v7102 = vadd.f32 0.0, %v7101
      %v7103 = vpop.f32.mrb[0].mxu0
      %7104 = vmatprep.mubr.f32.mxu0 0.0
      %7105 = vmatmul.mubr.f32.gmra.mrb[0].mxu0 %v2587
      %v7106 = vpop.f32.mrb[0].mxu0
      %v7107 = vadd.f32 0.0, %v7106
      %v7108 = vpop.f32.mrb[0].mxu0
      %7109 = vmatprep.mubr.f32.mxu0 0.0
      %7110 = vmatmul.mubr.f32.gmra.mrb[0].mxu0 %v2589
      %v7111 = vpop.f32.mrb[0].mxu0
      %v7112 = vadd.f32 0.0, %v7111
      %v7113 = vpop.f32.mrb[0].mxu0
      %7114 = vmatprep.mubr.f32.mxu0 0.0
      %7115 = vmatmul.mubr.f32.gmra.mrb[0].mxu0 %v2591
      %v7116 = vpop.f32.mrb[0].mxu0
      %v7117 = vadd.f32 0.0, %v7116
      %v7118 = vpop.f32.mrb[0].mxu0
      %7119 = vmatprep.mubr.f32.mxu0 0.0
      %7120 = vmatmul.mubr.f32.gmra.mrb[0].mxu0 %v2593
      %v7121 = vpop.f32.mrb[0].mxu0
      %v7122 = vadd.f32 0.0, %v7121
      %v7123 = vpop.f32.mrb[0].mxu0
      %7124 = vmatprep.mubr.f32.mxu0 0.0
      %7125 = vmatmul.mubr.f32.gmra.mrb[0].mxu0 %v2595
      %v7126 = vpop.f32.mrb[0].mxu0
      %v7127 = vadd.f32 0.0, %v7126
      %v7128 = vpop.f32.mrb[0].mxu0
      %7129 = vmatprep.mubr.f32.mxu0 0.0
      %7130 = vmatmul.mubr.f32.gmra.mrb[0].mxu0 %v2597
      %v7131 = vpop.f32.mrb[0].mxu0
      %v7132 = vadd.f32 0.0, %v7131
      %v7133 = vpop.f32.mrb[0].mxu0
      %7134 = vmatprep.mubr.f32.mxu0 0.0
      %7135 = vmatmul.mubr.f32.gmra.mrb[0].mxu0 %v2599
      %v7136 = vpop.f32.mrb[0].mxu0
      %v7137 = vadd.f32 0.0, %v7136
      %v7138 = vpop.f32.mrb[0].mxu0
      %7139 = vmatprep.mubr.f32.mxu0 0.0
      %7140 = vmatmul.mubr.f32.gmra.mrb[0].mxu0 %v2601
      %v7141 = vpop.f32.mrb[0].mxu0
      %v7142 = vadd.f32 0.0, %v7141
      %v7143 = vpop.f32.mrb[0].mxu0
      %7144 = vmatprep.mubr.f32.mxu0 0.0
      %7145 = vmatmul.mubr.f32.gmra.mrb[0].mxu0 %v2603
      %v7146 = vpop.f32.mrb[0].mxu0
      %v7147 = vadd.f32 0.0, %v7146
      %v7148 = vpop.f32.mrb[0].mxu0
      %7149 = vmatprep.mubr.f32.mxu0 0.0
      %7150 = vmatmul.mubr.f32.gmra.mrb[0].mxu0 %v2605
      %v7151 = vpop.f32.mrb[0].mxu0
      %v7152 = vadd.f32 0.0, %v7151
      %v7153 = vpop.f32.mrb[0].mxu0
      %7154 = vmatprep.mubr.f32.mxu0 0.0
      %7155 = vmatmul.mubr.f32.gmra.mrb[0].mxu0 %v2607
      %v7156 = vpop.f32.mrb[0].mxu0
      %v7157 = vadd.f32 0.0, %v7156
      %v7158 = vpop.f32.mrb[0].mxu0
      %7159 = vmatprep.mubr.f32.mxu0 0.0
      %7160 = vmatmul.mubr.f32.gmra.mrb[0].mxu0 %v2609
      %v7161 = vpop.f32.mrb[0].mxu0
      %v7162 = vadd.f32 0.0, %v7161
      %v7163 = vpop.f32.mrb[0].mxu0
      %7164 = vmatprep.mubr.f32.mxu0 0.0
      %7165 = vmatmul.mubr.f32.gmra.mrb[0].mxu0 %v2611
      %v7166 = vpop.f32.mrb[0].mxu0
      %v7167 = vadd.f32 0.0, %v7166
      %v7168 = vpop.f32.mrb[0].mxu0
      %7169 = vmatprep.mubr.f32.mxu0 0.0
      %7170 = vmatmul.mubr.f32.gmra.mrb[0].mxu0 %v2613
      %v7171 = vpop.f32.mrb[0].mxu0
      %v7172 = vadd.f32 0.0, %v7171
      %v7173 = vpop.f32.mrb[0].mxu0
      %7174 = vmatprep.mubr.f32.mxu0 0.0
      %7175 = vmatmul.mubr.f32.gmra.mrb[0].mxu0 %v2615
      %v7176 = vpop.f32.mrb[0].mxu0
      %v7177 = vadd.f32 0.0, %v7176
      %v7178 = vpop.f32.mrb[0].mxu0
      %7179 = vmatprep.mubr.f32.mxu0 0.0
      %7180 = vmatmul.mubr.f32.gmra.mrb[0].mxu0 %v2617
      %v7181 = vpop.f32.mrb[0].mxu0
      %v7182 = vadd.f32 0.0, %v7181
      %v7183 = vpop.f32.mrb[0].mxu0
      %7184 = vmatprep.mubr.f32.mxu0 0.0
      %7185 = vmatmul.mubr.f32.gmra.mrb[0].mxu0 %v2619
      %v7186 = vpop.f32.mrb[0].mxu0
      %v7187 = vadd.f32 0.0, %v7186
      %v7188 = vpop.f32.mrb[0].mxu0
      %7189 = vmatprep.mubr.f32.mxu0 0.0
      %7190 = vmatmul.mubr.f32.gmra.mrb[0].mxu0 %v2621
      %v7191 = vpop.f32.mrb[0].mxu0
      %v7192 = vadd.f32 0.0, %v7191
      %v7193 = vpop.f32.mrb[0].mxu0
      %7194 = vmatprep.mubr.f32.mxu0 0.0
      %7195 = vmatmul.mubr.f32.gmra.mrb[0].mxu0 %v2623
      %v7196 = vpop.f32.mrb[0].mxu0
      %v7197 = vadd.f32 0.0, %v7196
      %v7198 = vpop.f32.mrb[0].mxu0
      %7199 = vmatprep.mubr.f32.mxu0 0.0
      %7200 = vmatmul.mubr.f32.gmra.mrb[0].mxu0 %v2625
      %v7201 = vpop.f32.mrb[0].mxu0
      %v7202 = vadd.f32 0.0, %v7201
      %v7203 = vpop.f32.mrb[0].mxu0
      %7204 = vmatprep.mubr.f32.mxu0 0.0
      %7205 = vmatmul.mubr.f32.gmra.mrb[0].mxu0 %v2627
      %v7206 = vpop.f32.mrb[0].mxu0
      %v7207 = vadd.f32 0.0, %v7206
      %v7208 = vpop.f32.mrb[0].mxu0
      %7209 = vmatprep.mubr.f32.mxu0 0.0
      %7210 = vmatmul.mubr.f32.gmra.mrb[0].mxu0 %v2629
      %v7211 = vpop.f32.mrb[0].mxu0
      %v7212 = vadd.f32 0.0, %v7211
      %v7213 = vpop.f32.mrb[0].mxu0
      %7214 = vmatprep.mubr.f32.mxu0 0.0
      %7215 = vmatmul.mubr.f32.gmra.mrb[0].mxu0 %v2631
      %v7216 = vpop.f32.mrb[0].mxu0
      %v7217 = vadd.f32 0.0, %v7216
      %v7218 = vpop.f32.mrb[0].mxu0
      %7219 = vmatprep.mubr.f32.mxu0 0.0
      %7220 = vmatmul.mubr.f32.gmra.mrb[0].mxu0 %v2633
      %v7221 = vpop.f32.mrb[0].mxu0
      %v7222 = vadd.f32 0.0, %v7221
      %v7223 = vpop.f32.mrb[0].mxu0
      %7224 = vmatprep.mubr.f32.mxu0 0.0
      %7225 = vmatmul.mubr.f32.gmra.mrb[0].mxu0 %v2635
      %v7226 = vpop.f32.mrb[0].mxu0
      %v7227 = vadd.f32 0.0, %v7226
      %v7228 = vpop.f32.mrb[0].mxu0
      %7229 = vmatprep.mubr.f32.mxu0 0.0
      %7230 = vmatmul.mubr.f32.gmra.mrb[0].mxu0 %v2637
      %v7231 = vpop.f32.mrb[0].mxu0
      %v7232 = vadd.f32 0.0, %v7231
      %v7233 = vpop.f32.mrb[0].mxu0
      %7234 = vmatprep.mubr.f32.mxu0 0.0
      %7235 = vmatmul.mubr.f32.gmra.mrb[0].mxu0 %v2639
      %v7236 = vpop.f32.mrb[0].mxu0
      %v7237 = vadd.f32 0.0, %v7236
      %v7238 = vpop.f32.mrb[0].mxu0
      %7239 = vmatprep.mubr.f32.mxu0 0.0
      %7240 = vmatmul.mubr.f32.gmra.mrb[0].mxu0 %v5951
      %v7241 = vpop.f32.mrb[0].mxu0
      %v7242 = vadd.f32 0.0, %v7241
      %v7243 = vpop.f32.mrb[0].mxu0
      %7244 = vmatprep.mubr.f32.mxu0 0.0
      %7245 = vmatmul.mubr.f32.gmra.mrb[0].mxu0 %v5953
      %v7246 = vpop.f32.mrb[0].mxu0
      %v7247 = vadd.f32 0.0, %v7246
      %v7248 = vpop.f32.mrb[0].mxu0
      %7249 = vdwg.mxu0
      %v7250 = vadd.f32 %v5411, %v6932
      %v7251 = vadd.f32 %v5412, %v6937
      %v7252 = vadd.f32 %v5413, %v6942
      %v7253 = vadd.f32 %v5414, %v6947
      %v7254 = vadd.f32 %v5415, %v6952
      %v7255 = vadd.f32 %v5416, %v6957
      %v7256 = vadd.f32 %v5417, %v6962
      %v7257 = vadd.f32 %v5418, %v6967
      %v7258 = vadd.f32 %v5419, %v6972
      %v7259 = vadd.f32 %v5420, %v6977
      %v7260 = vadd.f32 %v5421, %v6982
      %v7261 = vadd.f32 %v5422, %v6987
      %v7262 = vadd.f32 %v5423, %v6992
      %v7263 = vadd.f32 %v5424, %v6997
      %v7264 = vadd.f32 %v5425, %v7002
      %v7265 = vadd.f32 %v5426, %v7007
      %v7266 = vadd.f32 %v5427, %v7012
      %v7267 = vadd.f32 %v5428, %v7017
      %v7268 = vadd.f32 %v5429, %v7022
      %v7269 = vadd.f32 %v5430, %v7027
      %v7270 = vadd.f32 %v5431, %v7032
      %v7271 = vadd.f32 %v5432, %v7037
      %v7272 = vadd.f32 %v5433, %v7042
      %v7273 = vadd.f32 %v5434, %v7047
      %v7274 = vadd.f32 %v5435, %v7052
      %v7275 = vadd.f32 %v5436, %v7057
      %v7276 = vadd.f32 %v5437, %v7062
      %v7277 = vadd.f32 %v5438, %v7067
      %v7278 = vadd.f32 %v5439, %v7072
      %v7279 = vadd.f32 %v5440, %v7077
      %v7280 = vadd.f32 %v5441, %v7082
      %v7281 = vadd.f32 %v5442, %v7087
      %v7282 = vadd.f32 %v5443, %v7092
      %v7283 = vadd.f32 %v5444, %v7097
      %v7284 = vadd.f32 %v5445, %v7102
      %v7285 = vadd.f32 %v5446, %v7107
      %v7286 = vadd.f32 %v5447, %v7112
      %v7287 = vadd.f32 %v5448, %v7117
      %v7288 = vadd.f32 %v5449, %v7122
      %v7289 = vadd.f32 %v5450, %v7127
      %v7290 = vadd.f32 %v5451, %v7132
      %v7291 = vadd.f32 %v5452, %v7137
      %v7292 = vadd.f32 %v5453, %v7142
      %v7293 = vadd.f32 %v5454, %v7147
      %v7294 = vadd.f32 %v5455, %v7152
      %v7295 = vadd.f32 %v5456, %v7157
      %v7296 = vadd.f32 %v5457, %v7162
      %v7297 = vadd.f32 %v5458, %v7167
      %v7298 = vadd.f32 %v5459, %v7172
      %v7299 = vadd.f32 %v5460, %v7177
      %v7300 = vadd.f32 %v5461, %v7182
      %v7301 = vadd.f32 %v5462, %v7187
      %v7302 = vadd.f32 %v5463, %v7192
      %v7303 = vadd.f32 %v5464, %v7197
      %v7304 = vadd.f32 %v5465, %v7202
      %v7305 = vadd.f32 %v5466, %v7207
      %v7306 = vadd.f32 %v5467, %v7212
      %v7307 = vadd.f32 %v5468, %v7217
      %v7308 = vadd.f32 %v5469, %v7222
      %v7309 = vadd.f32 %v5470, %v7227
      %v7310 = vadd.f32 %v5471, %v7232
      %v7311 = vadd.f32 %v5472, %v7237
      %v7312 = vadd.f32 %v5473, %v7242
      %v7313 = vadd.f32 %v5474, %v7247
      %7314 = vmatprep.subr.mxu0 0.0
      %7315 = vmatpush1.msra.mxu0 %v5956
      %7316 = vmatprep.subr.mxu0 0.0
      %7317 = vmatpush1.msra.mxu0 0.0
      %7318 = vmatprep.subr.mxu0 0.0
      %7319 = vmatpush1.msra.mxu0 0.0
      %7320 = vmatprep.subr.mxu0 0.0
      %7321 = vmatpush1.msra.mxu0 0.0
      %7322 = vmatprep.subr.mxu0 0.0
      %7323 = vmatpush1.msra.mxu0 0.0
      %7324 = vmatprep.subr.mxu0 0.0
      %7325 = vmatpush1.msra.mxu0 0.0
      %7326 = vmatprep.subr.mxu0 0.0
      %7327 = vmatpush1.msra.mxu0 0.0
      %7328 = vmatprep.subr.mxu0 0.0
      %7329 = vmatpush1.msra.mxu0 0.0
      %7330 = vmatprep.subr.mxu0 0.0
      %7331 = vmatpush1.msra.mxu0 0.0
      %7332 = vmatprep.subr.mxu0 0.0
      %7333 = vmatpush1.msra.mxu0 0.0
      %7334 = vmatprep.subr.mxu0 0.0
      %7335 = vmatpush1.msra.mxu0 0.0
      %7336 = vmatprep.subr.mxu0 0.0
      %7337 = vmatpush1.msra.mxu0 0.0
      %7338 = vmatprep.subr.mxu0 0.0
      %7339 = vmatpush1.msra.mxu0 0.0
      %7340 = vmatprep.subr.mxu0 0.0
      %7341 = vmatpush1.msra.mxu0 0.0
      %7342 = vmatprep.subr.mxu0 0.0
      %7343 = vmatpush1.msra.mxu0 0.0
      %7344 = vmatprep.subr.mxu0 0.0
      %7345 = vmatpush1.msra.mxu0 0.0
      %7346 = vmatprep.subr.mxu0 0.0
      %7347 = vmatpush1.msra.mxu0 0.0
      %7348 = vmatprep.subr.mxu0 0.0
      %7349 = vmatpush1.msra.mxu0 0.0
      %7350 = vmatprep.subr.mxu0 0.0
      %7351 = vmatpush1.msra.mxu0 0.0
      %7352 = vmatprep.subr.mxu0 0.0
      %7353 = vmatpush1.msra.mxu0 0.0
      %7354 = vmatprep.subr.mxu0 0.0
      %7355 = vmatpush1.msra.mxu0 0.0
      %7356 = vmatprep.subr.mxu0 0.0
      %7357 = vmatpush1.msra.mxu0 0.0
      %7358 = vmatprep.subr.mxu0 0.0
      %7359 = vmatpush1.msra.mxu0 0.0
      %7360 = vmatprep.subr.mxu0 0.0
      %7361 = vmatpush1.msra.mxu0 0.0
      %7362 = vmatprep.subr.mxu0 0.0
      %7363 = vmatpush1.msra.mxu0 0.0
      %7364 = vmatprep.subr.mxu0 0.0
      %7365 = vmatpush1.msra.mxu0 0.0
      %7366 = vmatprep.subr.mxu0 0.0
      %7367 = vmatpush1.msra.mxu0 0.0
      %7368 = vmatprep.subr.mxu0 0.0
      %7369 = vmatpush1.msra.mxu0 0.0
      %7370 = vmatprep.subr.mxu0 0.0
      %7371 = vmatpush1.msra.mxu0 0.0
      %7372 = vmatprep.subr.mxu0 0.0
      %7373 = vmatpush1.msra.mxu0 0.0
      %7374 = vmatprep.subr.mxu0 0.0
      %7375 = vmatpush1.msra.mxu0 0.0
      %7376 = vmatprep.subr.mxu0 0.0
      %7377 = vmatpush1.msra.mxu0 0.0
      %7378 = vmatprep.mubr.f32.mxu0 0.0
      %7379 = vmatmul.mubr.f32.gmra.mrb[0].mxu0 %v3552
      %v7380 = vpop.f32.mrb[0].mxu0
      %v7381 = vadd.f32 0.0, %v7380
      %v7382 = vpop.f32.mrb[0].mxu0
      %7383 = vmatprep.mubr.f32.mxu0 0.0
      %7384 = vmatmul.mubr.f32.gmra.mrb[0].mxu0 %v3554
      %v7385 = vpop.f32.mrb[0].mxu0
      %v7386 = vadd.f32 0.0, %v7385
      %v7387 = vpop.f32.mrb[0].mxu0
      %7388 = vmatprep.mubr.f32.mxu0 0.0
      %7389 = vmatmul.mubr.f32.gmra.mrb[0].mxu0 %v3556
      %v7390 = vpop.f32.mrb[0].mxu0
      %v7391 = vadd.f32 0.0, %v7390
      %v7392 = vpop.f32.mrb[0].mxu0
      %7393 = vmatprep.mubr.f32.mxu0 0.0
      %7394 = vmatmul.mubr.f32.gmra.mrb[0].mxu0 %v3558
      %v7395 = vpop.f32.mrb[0].mxu0
      %v7396 = vadd.f32 0.0, %v7395
      %v7397 = vpop.f32.mrb[0].mxu0
      %7398 = vmatprep.mubr.f32.mxu0 0.0
      %7399 = vmatmul.mubr.f32.gmra.mrb[0].mxu0 %v3560
      %v7400 = vpop.f32.mrb[0].mxu0
      %v7401 = vadd.f32 0.0, %v7400
      %v7402 = vpop.f32.mrb[0].mxu0
      %7403 = vmatprep.mubr.f32.mxu0 0.0
      %7404 = vmatmul.mubr.f32.gmra.mrb[0].mxu0 %v3562
      %v7405 = vpop.f32.mrb[0].mxu0
      %v7406 = vadd.f32 0.0, %v7405
      %v7407 = vpop.f32.mrb[0].mxu0
      %7408 = vmatprep.mubr.f32.mxu0 0.0
      %7409 = vmatmul.mubr.f32.gmra.mrb[0].mxu0 %v3564
      %v7410 = vpop.f32.mrb[0].mxu0
      %v7411 = vadd.f32 0.0, %v7410
      %v7412 = vpop.f32.mrb[0].mxu0
      %7413 = vmatprep.mubr.f32.mxu0 0.0
      %7414 = vmatmul.mubr.f32.gmra.mrb[0].mxu0 %v3566
      %v7415 = vpop.f32.mrb[0].mxu0
      %v7416 = vadd.f32 0.0, %v7415
      %v7417 = vpop.f32.mrb[0].mxu0
      %7418 = vmatprep.mubr.f32.mxu0 0.0
      %7419 = vmatmul.mubr.f32.gmra.mrb[0].mxu0 %v3568
      %v7420 = vpop.f32.mrb[0].mxu0
      %v7421 = vadd.f32 0.0, %v7420
      %v7422 = vpop.f32.mrb[0].mxu0
      %7423 = vmatprep.mubr.f32.mxu0 0.0
      %7424 = vmatmul.mubr.f32.gmra.mrb[0].mxu0 %v3570
      %v7425 = vpop.f32.mrb[0].mxu0
      %v7426 = vadd.f32 0.0, %v7425
      %v7427 = vpop.f32.mrb[0].mxu0
      %7428 = vmatprep.mubr.f32.mxu0 0.0
      %7429 = vmatmul.mubr.f32.gmra.mrb[0].mxu0 %v3572
      %v7430 = vpop.f32.mrb[0].mxu0
      %v7431 = vadd.f32 0.0, %v7430
      %v7432 = vpop.f32.mrb[0].mxu0
      %7433 = vmatprep.mubr.f32.mxu0 0.0
      %7434 = vmatmul.mubr.f32.gmra.mrb[0].mxu0 %v3574
      %v7435 = vpop.f32.mrb[0].mxu0
      %v7436 = vadd.f32 0.0, %v7435
      %v7437 = vpop.f32.mrb[0].mxu0
      %7438 = vmatprep.mubr.f32.mxu0 0.0
      %7439 = vmatmul.mubr.f32.gmra.mrb[0].mxu0 %v3576
      %v7440 = vpop.f32.mrb[0].mxu0
      %v7441 = vadd.f32 0.0, %v7440
      %v7442 = vpop.f32.mrb[0].mxu0
      %7443 = vmatprep.mubr.f32.mxu0 0.0
      %7444 = vmatmul.mubr.f32.gmra.mrb[0].mxu0 %v3578
      %v7445 = vpop.f32.mrb[0].mxu0
      %v7446 = vadd.f32 0.0, %v7445
      %v7447 = vpop.f32.mrb[0].mxu0
      %7448 = vmatprep.mubr.f32.mxu0 0.0
      %7449 = vmatmul.mubr.f32.gmra.mrb[0].mxu0 %v3580
      %v7450 = vpop.f32.mrb[0].mxu0
      %v7451 = vadd.f32 0.0, %v7450
      %v7452 = vpop.f32.mrb[0].mxu0
      %7453 = vmatprep.mubr.f32.mxu0 0.0
      %7454 = vmatmul.mubr.f32.gmra.mrb[0].mxu0 %v3582
      %v7455 = vpop.f32.mrb[0].mxu0
      %v7456 = vadd.f32 0.0, %v7455
      %v7457 = vpop.f32.mrb[0].mxu0
      %7458 = vmatprep.mubr.f32.mxu0 0.0
      %7459 = vmatmul.mubr.f32.gmra.mrb[0].mxu0 %v3584
      %v7460 = vpop.f32.mrb[0].mxu0
      %v7461 = vadd.f32 0.0, %v7460
      %v7462 = vpop.f32.mrb[0].mxu0
      %7463 = vmatprep.mubr.f32.mxu0 0.0
      %7464 = vmatmul.mubr.f32.gmra.mrb[0].mxu0 %v3586
      %v7465 = vpop.f32.mrb[0].mxu0
      %v7466 = vadd.f32 0.0, %v7465
      %v7467 = vpop.f32.mrb[0].mxu0
      %7468 = vmatprep.mubr.f32.mxu0 0.0
      %7469 = vmatmul.mubr.f32.gmra.mrb[0].mxu0 %v3588
      %v7470 = vpop.f32.mrb[0].mxu0
      %v7471 = vadd.f32 0.0, %v7470
      %v7472 = vpop.f32.mrb[0].mxu0
      %7473 = vmatprep.mubr.f32.mxu0 0.0
      %7474 = vmatmul.mubr.f32.gmra.mrb[0].mxu0 %v3590
      %v7475 = vpop.f32.mrb[0].mxu0
      %v7476 = vadd.f32 0.0, %v7475
      %v7477 = vpop.f32.mrb[0].mxu0
      %7478 = vmatprep.mubr.f32.mxu0 0.0
      %7479 = vmatmul.mubr.f32.gmra.mrb[0].mxu0 %v3592
      %v7480 = vpop.f32.mrb[0].mxu0
      %v7481 = vadd.f32 0.0, %v7480
      %v7482 = vpop.f32.mrb[0].mxu0
      %7483 = vmatprep.mubr.f32.mxu0 0.0
      %7484 = vmatmul.mubr.f32.gmra.mrb[0].mxu0 %v3594
      %v7485 = vpop.f32.mrb[0].mxu0
      %v7486 = vadd.f32 0.0, %v7485
      %v7487 = vpop.f32.mrb[0].mxu0
      %7488 = vmatprep.mubr.f32.mxu0 0.0
      %7489 = vmatmul.mubr.f32.gmra.mrb[0].mxu0 %v3596
      %v7490 = vpop.f32.mrb[0].mxu0
      %v7491 = vadd.f32 0.0, %v7490
      %v7492 = vpop.f32.mrb[0].mxu0
      %7493 = vmatprep.mubr.f32.mxu0 0.0
      %7494 = vmatmul.mubr.f32.gmra.mrb[0].mxu0 %v3598
      %v7495 = vpop.f32.mrb[0].mxu0
      %v7496 = vadd.f32 0.0, %v7495
      %v7497 = vpop.f32.mrb[0].mxu0
      %7498 = vmatprep.mubr.f32.mxu0 0.0
      %7499 = vmatmul.mubr.f32.gmra.mrb[0].mxu0 %v3600
      %v7500 = vpop.f32.mrb[0].mxu0
      %v7501 = vadd.f32 0.0, %v7500
      %v7502 = vpop.f32.mrb[0].mxu0
      %7503 = vmatprep.mubr.f32.mxu0 0.0
      %7504 = vmatmul.mubr.f32.gmra.mrb[0].mxu0 %v3602
      %v7505 = vpop.f32.mrb[0].mxu0
      %v7506 = vadd.f32 0.0, %v7505
      %v7507 = vpop.f32.mrb[0].mxu0
      %7508 = vmatprep.mubr.f32.mxu0 0.0
      %7509 = vmatmul.mubr.f32.gmra.mrb[0].mxu0 %v3604
      %v7510 = vpop.f32.mrb[0].mxu0
      %v7511 = vadd.f32 0.0, %v7510
      %v7512 = vpop.f32.mrb[0].mxu0
      %7513 = vmatprep.mubr.f32.mxu0 0.0
      %7514 = vmatmul.mubr.f32.gmra.mrb[0].mxu0 %v3606
      %v7515 = vpop.f32.mrb[0].mxu0
      %v7516 = vadd.f32 0.0, %v7515
      %v7517 = vpop.f32.mrb[0].mxu0
      %7518 = vmatprep.mubr.f32.mxu0 0.0
      %7519 = vmatmul.mubr.f32.gmra.mrb[0].mxu0 %v3608
      %v7520 = vpop.f32.mrb[0].mxu0
      %v7521 = vadd.f32 0.0, %v7520
      %v7522 = vpop.f32.mrb[0].mxu0
      %7523 = vmatprep.mubr.f32.mxu0 0.0
      %7524 = vmatmul.mubr.f32.gmra.mrb[0].mxu0 %v3610
      %v7525 = vpop.f32.mrb[0].mxu0
      %v7526 = vadd.f32 0.0, %v7525
      %v7527 = vpop.f32.mrb[0].mxu0
      %7528 = vmatprep.mubr.f32.mxu0 0.0
      %7529 = vmatmul.mubr.f32.gmra.mrb[0].mxu0 %v3612
      %v7530 = vpop.f32.mrb[0].mxu0
      %v7531 = vadd.f32 0.0, %v7530
      %v7532 = vpop.f32.mrb[0].mxu0
      %7533 = vmatprep.mubr.f32.mxu0 0.0
      %7534 = vmatmul.mubr.f32.gmra.mrb[0].mxu0 %v3614
      %v7535 = vpop.f32.mrb[0].mxu0
      %v7536 = vadd.f32 0.0, %v7535
      %v7537 = vpop.f32.mrb[0].mxu0
      %7538 = vmatprep.mubr.f32.mxu0 0.0
      %7539 = vmatmul.mubr.f32.gmra.mrb[0].mxu0 %v3616
      %v7540 = vpop.f32.mrb[0].mxu0
      %v7541 = vadd.f32 0.0, %v7540
      %v7542 = vpop.f32.mrb[0].mxu0
      %7543 = vmatprep.mubr.f32.mxu0 0.0
      %7544 = vmatmul.mubr.f32.gmra.mrb[0].mxu0 %v3618
      %v7545 = vpop.f32.mrb[0].mxu0
      %v7546 = vadd.f32 0.0, %v7545
      %v7547 = vpop.f32.mrb[0].mxu0
      %7548 = vmatprep.mubr.f32.mxu0 0.0
      %7549 = vmatmul.mubr.f32.gmra.mrb[0].mxu0 %v3620
      %v7550 = vpop.f32.mrb[0].mxu0
      %v7551 = vadd.f32 0.0, %v7550
      %v7552 = vpop.f32.mrb[0].mxu0
      %7553 = vmatprep.mubr.f32.mxu0 0.0
      %7554 = vmatmul.mubr.f32.gmra.mrb[0].mxu0 %v3622
      %v7555 = vpop.f32.mrb[0].mxu0
      %v7556 = vadd.f32 0.0, %v7555
      %v7557 = vpop.f32.mrb[0].mxu0
      %7558 = vmatprep.mubr.f32.mxu0 0.0
      %7559 = vmatmul.mubr.f32.gmra.mrb[0].mxu0 %v3624
      %v7560 = vpop.f32.mrb[0].mxu0
      %v7561 = vadd.f32 0.0, %v7560
      %v7562 = vpop.f32.mrb[0].mxu0
      %7563 = vmatprep.mubr.f32.mxu0 0.0
      %7564 = vmatmul.mubr.f32.gmra.mrb[0].mxu0 %v3626
      %v7565 = vpop.f32.mrb[0].mxu0
      %v7566 = vadd.f32 0.0, %v7565
      %v7567 = vpop.f32.mrb[0].mxu0
      %7568 = vmatprep.mubr.f32.mxu0 0.0
      %7569 = vmatmul.mubr.f32.gmra.mrb[0].mxu0 %v3628
      %v7570 = vpop.f32.mrb[0].mxu0
      %v7571 = vadd.f32 0.0, %v7570
      %v7572 = vpop.f32.mrb[0].mxu0
      %7573 = vmatprep.mubr.f32.mxu0 0.0
      %7574 = vmatmul.mubr.f32.gmra.mrb[0].mxu0 %v3630
      %v7575 = vpop.f32.mrb[0].mxu0
      %v7576 = vadd.f32 0.0, %v7575
      %v7577 = vpop.f32.mrb[0].mxu0
      %7578 = vmatprep.mubr.f32.mxu0 0.0
      %7579 = vmatmul.mubr.f32.gmra.mrb[0].mxu0 %v3632
      %v7580 = vpop.f32.mrb[0].mxu0
      %v7581 = vadd.f32 0.0, %v7580
      %v7582 = vpop.f32.mrb[0].mxu0
      %7583 = vmatprep.mubr.f32.mxu0 0.0
      %7584 = vmatmul.mubr.f32.gmra.mrb[0].mxu0 %v3634
      %v7585 = vpop.f32.mrb[0].mxu0
      %v7586 = vadd.f32 0.0, %v7585
      %v7587 = vpop.f32.mrb[0].mxu0
      %7588 = vmatprep.mubr.f32.mxu0 0.0
      %7589 = vmatmul.mubr.f32.gmra.mrb[0].mxu0 %v3636
      %v7590 = vpop.f32.mrb[0].mxu0
      %v7591 = vadd.f32 0.0, %v7590
      %v7592 = vpop.f32.mrb[0].mxu0
      %7593 = vmatprep.mubr.f32.mxu0 0.0
      %7594 = vmatmul.mubr.f32.gmra.mrb[0].mxu0 %v3638
      %v7595 = vpop.f32.mrb[0].mxu0
      %v7596 = vadd.f32 0.0, %v7595
      %v7597 = vpop.f32.mrb[0].mxu0
      %7598 = vmatprep.mubr.f32.mxu0 0.0
      %7599 = vmatmul.mubr.f32.gmra.mrb[0].mxu0 %v3640
      %v7600 = vpop.f32.mrb[0].mxu0
      %v7601 = vadd.f32 0.0, %v7600
      %v7602 = vpop.f32.mrb[0].mxu0
      %7603 = vmatprep.mubr.f32.mxu0 0.0
      %7604 = vmatmul.mubr.f32.gmra.mrb[0].mxu0 %v3642
      %v7605 = vpop.f32.mrb[0].mxu0
      %v7606 = vadd.f32 0.0, %v7605
      %v7607 = vpop.f32.mrb[0].mxu0
      %7608 = vmatprep.mubr.f32.mxu0 0.0
      %7609 = vmatmul.mubr.f32.gmra.mrb[0].mxu0 %v3644
      %v7610 = vpop.f32.mrb[0].mxu0
      %v7611 = vadd.f32 0.0, %v7610
      %v7612 = vpop.f32.mrb[0].mxu0
      %7613 = vmatprep.mubr.f32.mxu0 0.0
      %7614 = vmatmul.mubr.f32.gmra.mrb[0].mxu0 %v3646
      %v7615 = vpop.f32.mrb[0].mxu0
      %v7616 = vadd.f32 0.0, %v7615
      %v7617 = vpop.f32.mrb[0].mxu0
      %7618 = vmatprep.mubr.f32.mxu0 0.0
      %7619 = vmatmul.mubr.f32.gmra.mrb[0].mxu0 %v3648
      %v7620 = vpop.f32.mrb[0].mxu0
      %v7621 = vadd.f32 0.0, %v7620
      %v7622 = vpop.f32.mrb[0].mxu0
      %7623 = vmatprep.mubr.f32.mxu0 0.0
      %7624 = vmatmul.mubr.f32.gmra.mrb[0].mxu0 %v3650
      %v7625 = vpop.f32.mrb[0].mxu0
      %v7626 = vadd.f32 0.0, %v7625
      %v7627 = vpop.f32.mrb[0].mxu0
      %7628 = vmatprep.mubr.f32.mxu0 0.0
      %7629 = vmatmul.mubr.f32.gmra.mrb[0].mxu0 %v3652
      %v7630 = vpop.f32.mrb[0].mxu0
      %v7631 = vadd.f32 0.0, %v7630
      %v7632 = vpop.f32.mrb[0].mxu0
      %7633 = vmatprep.mubr.f32.mxu0 0.0
      %7634 = vmatmul.mubr.f32.gmra.mrb[0].mxu0 %v3654
      %v7635 = vpop.f32.mrb[0].mxu0
      %v7636 = vadd.f32 0.0, %v7635
      %v7637 = vpop.f32.mrb[0].mxu0
      %7638 = vmatprep.mubr.f32.mxu0 0.0
      %7639 = vmatmul.mubr.f32.gmra.mrb[0].mxu0 %v3656
      %v7640 = vpop.f32.mrb[0].mxu0
      %v7641 = vadd.f32 0.0, %v7640
      %v7642 = vpop.f32.mrb[0].mxu0
      %7643 = vmatprep.mubr.f32.mxu0 0.0
      %7644 = vmatmul.mubr.f32.gmra.mrb[0].mxu0 %v3658
      %v7645 = vpop.f32.mrb[0].mxu0
      %v7646 = vadd.f32 0.0, %v7645
      %v7647 = vpop.f32.mrb[0].mxu0
      %7648 = vmatprep.mubr.f32.mxu0 0.0
      %7649 = vmatmul.mubr.f32.gmra.mrb[0].mxu0 %v3660
      %v7650 = vpop.f32.mrb[0].mxu0
      %v7651 = vadd.f32 0.0, %v7650
      %v7652 = vpop.f32.mrb[0].mxu0
      %7653 = vmatprep.mubr.f32.mxu0 0.0
      %7654 = vmatmul.mubr.f32.gmra.mrb[0].mxu0 %v3662
      %v7655 = vpop.f32.mrb[0].mxu0
      %v7656 = vadd.f32 0.0, %v7655
      %v7657 = vpop.f32.mrb[0].mxu0
      %7658 = vmatprep.mubr.f32.mxu0 0.0
      %7659 = vmatmul.mubr.f32.gmra.mrb[0].mxu0 %v3664
      %v7660 = vpop.f32.mrb[0].mxu0
      %v7661 = vadd.f32 0.0, %v7660
      %v7662 = vpop.f32.mrb[0].mxu0
      %7663 = vmatprep.mubr.f32.mxu0 0.0
      %7664 = vmatmul.mubr.f32.gmra.mrb[0].mxu0 %v3666
      %v7665 = vpop.f32.mrb[0].mxu0
      %v7666 = vadd.f32 0.0, %v7665
      %v7667 = vpop.f32.mrb[0].mxu0
      %7668 = vmatprep.mubr.f32.mxu0 0.0
      %7669 = vmatmul.mubr.f32.gmra.mrb[0].mxu0 %v3668
      %v7670 = vpop.f32.mrb[0].mxu0
      %v7671 = vadd.f32 0.0, %v7670
      %v7672 = vpop.f32.mrb[0].mxu0
      %7673 = vmatprep.mubr.f32.mxu0 0.0
      %7674 = vmatmul.mubr.f32.gmra.mrb[0].mxu0 %v3670
      %v7675 = vpop.f32.mrb[0].mxu0
      %v7676 = vadd.f32 0.0, %v7675
      %v7677 = vpop.f32.mrb[0].mxu0
      %7678 = vmatprep.mubr.f32.mxu0 0.0
      %7679 = vmatmul.mubr.f32.gmra.mrb[0].mxu0 %v3672
      %v7680 = vpop.f32.mrb[0].mxu0
      %v7681 = vadd.f32 0.0, %v7680
      %v7682 = vpop.f32.mrb[0].mxu0
      %7683 = vmatprep.mubr.f32.mxu0 0.0
      %7684 = vmatmul.mubr.f32.gmra.mrb[0].mxu0 %v3674
      %v7685 = vpop.f32.mrb[0].mxu0
      %v7686 = vadd.f32 0.0, %v7685
      %v7687 = vpop.f32.mrb[0].mxu0
      %7688 = vmatprep.mubr.f32.mxu0 0.0
      %7689 = vmatmul.mubr.f32.gmra.mrb[0].mxu0 %v6409
      %v7690 = vpop.f32.mrb[0].mxu0
      %v7691 = vadd.f32 0.0, %v7690
      %v7692 = vpop.f32.mrb[0].mxu0
      %7693 = vmatprep.mubr.f32.mxu0 0.0
      %7694 = vmatmul.mubr.f32.gmra.mrb[0].mxu0 %v6411
      %v7695 = vpop.f32.mrb[0].mxu0
      %v7696 = vadd.f32 0.0, %v7695
      %v7697 = vpop.f32.mrb[0].mxu0
      %7698 = vdwg.mxu0
      %v7699 = vadd.f32 %v7250, %v7381
      %v7700 = vadd.f32 %v7251, %v7386
      %v7701 = vadd.f32 %v7252, %v7391
      %v7702 = vadd.f32 %v7253, %v7396
      %v7703 = vadd.f32 %v7254, %v7401
      %v7704 = vadd.f32 %v7255, %v7406
      %v7705 = vadd.f32 %v7256, %v7411
      %v7706 = vadd.f32 %v7257, %v7416
      %v7707 = vadd.f32 %v7258, %v7421
      %v7708 = vadd.f32 %v7259, %v7426
      %v7709 = vadd.f32 %v7260, %v7431
      %v7710 = vadd.f32 %v7261, %v7436
      %v7711 = vadd.f32 %v7262, %v7441
      %v7712 = vadd.f32 %v7263, %v7446
      %v7713 = vadd.f32 %v7264, %v7451
      %v7714 = vadd.f32 %v7265, %v7456
      %v7715 = vadd.f32 %v7266, %v7461
      %v7716 = vadd.f32 %v7267, %v7466
      %v7717 = vadd.f32 %v7268, %v7471
      %v7718 = vadd.f32 %v7269, %v7476
      %v7719 = vadd.f32 %v7270, %v7481
      %v7720 = vadd.f32 %v7271, %v7486
      %v7721 = vadd.f32 %v7272, %v7491
      %v7722 = vadd.f32 %v7273, %v7496
      %v7723 = vadd.f32 %v7274, %v7501
      %v7724 = vadd.f32 %v7275, %v7506
      %v7725 = vadd.f32 %v7276, %v7511
      %v7726 = vadd.f32 %v7277, %v7516
      %v7727 = vadd.f32 %v7278, %v7521
      %v7728 = vadd.f32 %v7279, %v7526
      %v7729 = vadd.f32 %v7280, %v7531
      %v7730 = vadd.f32 %v7281, %v7536
      %v7731 = vadd.f32 %v7282, %v7541
      %v7732 = vadd.f32 %v7283, %v7546
      %v7733 = vadd.f32 %v7284, %v7551
      %v7734 = vadd.f32 %v7285, %v7556
      %v7735 = vadd.f32 %v7286, %v7561
      %v7736 = vadd.f32 %v7287, %v7566
      %v7737 = vadd.f32 %v7288, %v7571
      %v7738 = vadd.f32 %v7289, %v7576
      %v7739 = vadd.f32 %v7290, %v7581
      %v7740 = vadd.f32 %v7291, %v7586
      %v7741 = vadd.f32 %v7292, %v7591
      %v7742 = vadd.f32 %v7293, %v7596
      %v7743 = vadd.f32 %v7294, %v7601
      %v7744 = vadd.f32 %v7295, %v7606
      %v7745 = vadd.f32 %v7296, %v7611
      %v7746 = vadd.f32 %v7297, %v7616
      %v7747 = vadd.f32 %v7298, %v7621
      %v7748 = vadd.f32 %v7299, %v7626
      %v7749 = vadd.f32 %v7300, %v7631
      %v7750 = vadd.f32 %v7301, %v7636
      %v7751 = vadd.f32 %v7302, %v7641
      %v7752 = vadd.f32 %v7303, %v7646
      %v7753 = vadd.f32 %v7304, %v7651
      %v7754 = vadd.f32 %v7305, %v7656
      %v7755 = vadd.f32 %v7306, %v7661
      %v7756 = vadd.f32 %v7307, %v7666
      %v7757 = vadd.f32 %v7308, %v7671
      %v7758 = vadd.f32 %v7309, %v7676
      %v7759 = vadd.f32 %v7310, %v7681
      %v7760 = vadd.f32 %v7311, %v7686
      %v7761 = vadd.f32 %v7312, %v7691
      %v7762 = vadd.f32 %v7313, %v7696
      %v7763 = vsel %vm2512, %v5488, 0
      %v7765 = vsel %vm2512, %v5490, 0
      %7767 = vmatprep.subr.mxu0 0.0
      %7768 = vmatpush1.msra.mxu0 %v6414
      %7769 = vmatprep.subr.mxu0 0.0
      %7770 = vmatpush1.msra.mxu0 0.0
      %7771 = vmatprep.subr.mxu0 0.0
      %7772 = vmatpush1.msra.mxu0 0.0
      %7773 = vmatprep.subr.mxu0 0.0
      %7774 = vmatpush1.msra.mxu0 0.0
      %7775 = vmatprep.subr.mxu0 0.0
      %7776 = vmatpush1.msra.mxu0 0.0
      %7777 = vmatprep.subr.mxu0 0.0
      %7778 = vmatpush1.msra.mxu0 0.0
      %7779 = vmatprep.subr.mxu0 0.0
      %7780 = vmatpush1.msra.mxu0 0.0
      %7781 = vmatprep.subr.mxu0 0.0
      %7782 = vmatpush1.msra.mxu0 0.0
      %7783 = vmatprep.subr.mxu0 0.0
      %7784 = vmatpush1.msra.mxu0 0.0
      %7785 = vmatprep.subr.mxu0 0.0
      %7786 = vmatpush1.msra.mxu0 0.0
      %7787 = vmatprep.subr.mxu0 0.0
      %7788 = vmatpush1.msra.mxu0 0.0
      %7789 = vmatprep.subr.mxu0 0.0
      %7790 = vmatpush1.msra.mxu0 0.0
      %7791 = vmatprep.subr.mxu0 0.0
      %7792 = vmatpush1.msra.mxu0 0.0
      %7793 = vmatprep.subr.mxu0 0.0
      %7794 = vmatpush1.msra.mxu0 0.0
      %7795 = vmatprep.subr.mxu0 0.0
      %7796 = vmatpush1.msra.mxu0 0.0
      %7797 = vmatprep.subr.mxu0 0.0
      %7798 = vmatpush1.msra.mxu0 0.0
      %7799 = vmatprep.subr.mxu0 0.0
      %7800 = vmatpush1.msra.mxu0 0.0
      %7801 = vmatprep.subr.mxu0 0.0
      %7802 = vmatpush1.msra.mxu0 0.0
      %7803 = vmatprep.subr.mxu0 0.0
      %7804 = vmatpush1.msra.mxu0 0.0
      %7805 = vmatprep.subr.mxu0 0.0
      %7806 = vmatpush1.msra.mxu0 0.0
      %7807 = vmatprep.subr.mxu0 0.0
      %7808 = vmatpush1.msra.mxu0 0.0
      %7809 = vmatprep.subr.mxu0 0.0
      %7810 = vmatpush1.msra.mxu0 0.0
      %7811 = vmatprep.subr.mxu0 0.0
      %7812 = vmatpush1.msra.mxu0 0.0
      %7813 = vmatprep.subr.mxu0 0.0
      %7814 = vmatpush1.msra.mxu0 0.0
      %7815 = vmatprep.subr.mxu0 0.0
      %7816 = vmatpush1.msra.mxu0 0.0
      %7817 = vmatprep.subr.mxu0 0.0
      %7818 = vmatpush1.msra.mxu0 0.0
      %7819 = vmatprep.subr.mxu0 0.0
      %7820 = vmatpush1.msra.mxu0 0.0
      %7821 = vmatprep.subr.mxu0 0.0
      %7822 = vmatpush1.msra.mxu0 0.0
      %7823 = vmatprep.subr.mxu0 0.0
      %7824 = vmatpush1.msra.mxu0 0.0
      %7825 = vmatprep.subr.mxu0 0.0
      %7826 = vmatpush1.msra.mxu0 0.0
      %7827 = vmatprep.subr.mxu0 0.0
      %7828 = vmatpush1.msra.mxu0 0.0
      %7829 = vmatprep.subr.mxu0 0.0
      %7830 = vmatpush1.msra.mxu0 0.0
      %7831 = vmatprep.mubr.f32.mxu0 0.0
      %7832 = vmatmul.mubr.f32.gmra.mrb[0].mxu0 %v4902
      %v7833 = vpop.f32.mrb[0].mxu0
      %v7834 = vadd.f32 0.0, %v7833
      %v7835 = vpop.f32.mrb[0].mxu0
      %7836 = vmatprep.mubr.f32.mxu0 0.0
      %7837 = vmatmul.mubr.f32.gmra.mrb[0].mxu0 %v4904
      %v7838 = vpop.f32.mrb[0].mxu0
      %v7839 = vadd.f32 0.0, %v7838
      %v7840 = vpop.f32.mrb[0].mxu0
      %7841 = vmatprep.mubr.f32.mxu0 0.0
      %7842 = vmatmul.mubr.f32.gmra.mrb[0].mxu0 %v4906
      %v7843 = vpop.f32.mrb[0].mxu0
      %v7844 = vadd.f32 0.0, %v7843
      %v7845 = vpop.f32.mrb[0].mxu0
      %7846 = vmatprep.mubr.f32.mxu0 0.0
      %7847 = vmatmul.mubr.f32.gmra.mrb[0].mxu0 %v4908
      %v7848 = vpop.f32.mrb[0].mxu0
      %v7849 = vadd.f32 0.0, %v7848
      %v7850 = vpop.f32.mrb[0].mxu0
      %7851 = vmatprep.mubr.f32.mxu0 0.0
      %7852 = vmatmul.mubr.f32.gmra.mrb[0].mxu0 %v4910
      %v7853 = vpop.f32.mrb[0].mxu0
      %v7854 = vadd.f32 0.0, %v7853
      %v7855 = vpop.f32.mrb[0].mxu0
      %7856 = vmatprep.mubr.f32.mxu0 0.0
      %7857 = vmatmul.mubr.f32.gmra.mrb[0].mxu0 %v4912
      %v7858 = vpop.f32.mrb[0].mxu0
      %v7859 = vadd.f32 0.0, %v7858
      %v7860 = vpop.f32.mrb[0].mxu0
      %7861 = vmatprep.mubr.f32.mxu0 0.0
      %7862 = vmatmul.mubr.f32.gmra.mrb[0].mxu0 %v4914
      %v7863 = vpop.f32.mrb[0].mxu0
      %v7864 = vadd.f32 0.0, %v7863
      %v7865 = vpop.f32.mrb[0].mxu0
      %7866 = vmatprep.mubr.f32.mxu0 0.0
      %7867 = vmatmul.mubr.f32.gmra.mrb[0].mxu0 %v4916
      %v7868 = vpop.f32.mrb[0].mxu0
      %v7869 = vadd.f32 0.0, %v7868
      %v7870 = vpop.f32.mrb[0].mxu0
      %7871 = vmatprep.mubr.f32.mxu0 0.0
      %7872 = vmatmul.mubr.f32.gmra.mrb[0].mxu0 %v4918
      %v7873 = vpop.f32.mrb[0].mxu0
      %v7874 = vadd.f32 0.0, %v7873
      %v7875 = vpop.f32.mrb[0].mxu0
      %7876 = vmatprep.mubr.f32.mxu0 0.0
      %7877 = vmatmul.mubr.f32.gmra.mrb[0].mxu0 %v4920
      %v7878 = vpop.f32.mrb[0].mxu0
      %v7879 = vadd.f32 0.0, %v7878
      %v7880 = vpop.f32.mrb[0].mxu0
      %7881 = vmatprep.mubr.f32.mxu0 0.0
      %7882 = vmatmul.mubr.f32.gmra.mrb[0].mxu0 %v4922
      %v7883 = vpop.f32.mrb[0].mxu0
      %v7884 = vadd.f32 0.0, %v7883
      %v7885 = vpop.f32.mrb[0].mxu0
      %7886 = vmatprep.mubr.f32.mxu0 0.0
      %7887 = vmatmul.mubr.f32.gmra.mrb[0].mxu0 %v4924
      %v7888 = vpop.f32.mrb[0].mxu0
      %v7889 = vadd.f32 0.0, %v7888
      %v7890 = vpop.f32.mrb[0].mxu0
      %7891 = vmatprep.mubr.f32.mxu0 0.0
      %7892 = vmatmul.mubr.f32.gmra.mrb[0].mxu0 %v4926
      %v7893 = vpop.f32.mrb[0].mxu0
      %v7894 = vadd.f32 0.0, %v7893
      %v7895 = vpop.f32.mrb[0].mxu0
      %7896 = vmatprep.mubr.f32.mxu0 0.0
      %7897 = vmatmul.mubr.f32.gmra.mrb[0].mxu0 %v4928
      %v7898 = vpop.f32.mrb[0].mxu0
      %v7899 = vadd.f32 0.0, %v7898
      %v7900 = vpop.f32.mrb[0].mxu0
      %7901 = vmatprep.mubr.f32.mxu0 0.0
      %7902 = vmatmul.mubr.f32.gmra.mrb[0].mxu0 %v4930
      %v7903 = vpop.f32.mrb[0].mxu0
      %v7904 = vadd.f32 0.0, %v7903
      %v7905 = vpop.f32.mrb[0].mxu0
      %7906 = vmatprep.mubr.f32.mxu0 0.0
      %7907 = vmatmul.mubr.f32.gmra.mrb[0].mxu0 %v4932
      %v7908 = vpop.f32.mrb[0].mxu0
      %v7909 = vadd.f32 0.0, %v7908
      %v7910 = vpop.f32.mrb[0].mxu0
      %7911 = vmatprep.mubr.f32.mxu0 0.0
      %7912 = vmatmul.mubr.f32.gmra.mrb[0].mxu0 %v4934
      %v7913 = vpop.f32.mrb[0].mxu0
      %v7914 = vadd.f32 0.0, %v7913
      %v7915 = vpop.f32.mrb[0].mxu0
      %7916 = vmatprep.mubr.f32.mxu0 0.0
      %7917 = vmatmul.mubr.f32.gmra.mrb[0].mxu0 %v4936
      %v7918 = vpop.f32.mrb[0].mxu0
      %v7919 = vadd.f32 0.0, %v7918
      %v7920 = vpop.f32.mrb[0].mxu0
      %7921 = vmatprep.mubr.f32.mxu0 0.0
      %7922 = vmatmul.mubr.f32.gmra.mrb[0].mxu0 %v4938
      %v7923 = vpop.f32.mrb[0].mxu0
      %v7924 = vadd.f32 0.0, %v7923
      %v7925 = vpop.f32.mrb[0].mxu0
      %7926 = vmatprep.mubr.f32.mxu0 0.0
      %7927 = vmatmul.mubr.f32.gmra.mrb[0].mxu0 %v4940
      %v7928 = vpop.f32.mrb[0].mxu0
      %v7929 = vadd.f32 0.0, %v7928
      %v7930 = vpop.f32.mrb[0].mxu0
      %7931 = vmatprep.mubr.f32.mxu0 0.0
      %7932 = vmatmul.mubr.f32.gmra.mrb[0].mxu0 %v4942
      %v7933 = vpop.f32.mrb[0].mxu0
      %v7934 = vadd.f32 0.0, %v7933
      %v7935 = vpop.f32.mrb[0].mxu0
      %7936 = vmatprep.mubr.f32.mxu0 0.0
      %7937 = vmatmul.mubr.f32.gmra.mrb[0].mxu0 %v4944
      %v7938 = vpop.f32.mrb[0].mxu0
      %v7939 = vadd.f32 0.0, %v7938
      %v7940 = vpop.f32.mrb[0].mxu0
      %7941 = vmatprep.mubr.f32.mxu0 0.0
      %7942 = vmatmul.mubr.f32.gmra.mrb[0].mxu0 %v4946
      %v7943 = vpop.f32.mrb[0].mxu0
      %v7944 = vadd.f32 0.0, %v7943
      %v7945 = vpop.f32.mrb[0].mxu0
      %7946 = vmatprep.mubr.f32.mxu0 0.0
      %7947 = vmatmul.mubr.f32.gmra.mrb[0].mxu0 %v4948
      %v7948 = vpop.f32.mrb[0].mxu0
      %v7949 = vadd.f32 0.0, %v7948
      %v7950 = vpop.f32.mrb[0].mxu0
      %7951 = vmatprep.mubr.f32.mxu0 0.0
      %7952 = vmatmul.mubr.f32.gmra.mrb[0].mxu0 %v4950
      %v7953 = vpop.f32.mrb[0].mxu0
      %v7954 = vadd.f32 0.0, %v7953
      %v7955 = vpop.f32.mrb[0].mxu0
      %7956 = vmatprep.mubr.f32.mxu0 0.0
      %7957 = vmatmul.mubr.f32.gmra.mrb[0].mxu0 %v4952
      %v7958 = vpop.f32.mrb[0].mxu0
      %v7959 = vadd.f32 0.0, %v7958
      %v7960 = vpop.f32.mrb[0].mxu0
      %7961 = vmatprep.mubr.f32.mxu0 0.0
      %7962 = vmatmul.mubr.f32.gmra.mrb[0].mxu0 %v4954
      %v7963 = vpop.f32.mrb[0].mxu0
      %v7964 = vadd.f32 0.0, %v7963
      %v7965 = vpop.f32.mrb[0].mxu0
      %7966 = vmatprep.mubr.f32.mxu0 0.0
      %7967 = vmatmul.mubr.f32.gmra.mrb[0].mxu0 %v4956
      %v7968 = vpop.f32.mrb[0].mxu0
      %v7969 = vadd.f32 0.0, %v7968
      %v7970 = vpop.f32.mrb[0].mxu0
      %7971 = vmatprep.mubr.f32.mxu0 0.0
      %7972 = vmatmul.mubr.f32.gmra.mrb[0].mxu0 %v4958
      %v7973 = vpop.f32.mrb[0].mxu0
      %v7974 = vadd.f32 0.0, %v7973
      %v7975 = vpop.f32.mrb[0].mxu0
      %7976 = vmatprep.mubr.f32.mxu0 0.0
      %7977 = vmatmul.mubr.f32.gmra.mrb[0].mxu0 %v4960
      %v7978 = vpop.f32.mrb[0].mxu0
      %v7979 = vadd.f32 0.0, %v7978
      %v7980 = vpop.f32.mrb[0].mxu0
      %7981 = vmatprep.mubr.f32.mxu0 0.0
      %7982 = vmatmul.mubr.f32.gmra.mrb[0].mxu0 %v4962
      %v7983 = vpop.f32.mrb[0].mxu0
      %v7984 = vadd.f32 0.0, %v7983
      %v7985 = vpop.f32.mrb[0].mxu0
      %7986 = vmatprep.mubr.f32.mxu0 0.0
      %7987 = vmatmul.mubr.f32.gmra.mrb[0].mxu0 %v4964
      %v7988 = vpop.f32.mrb[0].mxu0
      %v7989 = vadd.f32 0.0, %v7988
      %v7990 = vpop.f32.mrb[0].mxu0
      %7991 = vmatprep.mubr.f32.mxu0 0.0
      %7992 = vmatmul.mubr.f32.gmra.mrb[0].mxu0 %v4966
      %v7993 = vpop.f32.mrb[0].mxu0
      %v7994 = vadd.f32 0.0, %v7993
      %v7995 = vpop.f32.mrb[0].mxu0
      %7996 = vmatprep.mubr.f32.mxu0 0.0
      %7997 = vmatmul.mubr.f32.gmra.mrb[0].mxu0 %v4968
      %v7998 = vpop.f32.mrb[0].mxu0
      %v7999 = vadd.f32 0.0, %v7998
      %v8000 = vpop.f32.mrb[0].mxu0
      %8001 = vmatprep.mubr.f32.mxu0 0.0
      %8002 = vmatmul.mubr.f32.gmra.mrb[0].mxu0 %v4970
      %v8003 = vpop.f32.mrb[0].mxu0
      %v8004 = vadd.f32 0.0, %v8003
      %v8005 = vpop.f32.mrb[0].mxu0
      %8006 = vmatprep.mubr.f32.mxu0 0.0
      %8007 = vmatmul.mubr.f32.gmra.mrb[0].mxu0 %v4972
      %v8008 = vpop.f32.mrb[0].mxu0
      %v8009 = vadd.f32 0.0, %v8008
      %v8010 = vpop.f32.mrb[0].mxu0
      %8011 = vmatprep.mubr.f32.mxu0 0.0
      %8012 = vmatmul.mubr.f32.gmra.mrb[0].mxu0 %v4974
      %v8013 = vpop.f32.mrb[0].mxu0
      %v8014 = vadd.f32 0.0, %v8013
      %v8015 = vpop.f32.mrb[0].mxu0
      %8016 = vmatprep.mubr.f32.mxu0 0.0
      %8017 = vmatmul.mubr.f32.gmra.mrb[0].mxu0 %v4976
      %v8018 = vpop.f32.mrb[0].mxu0
      %v8019 = vadd.f32 0.0, %v8018
      %v8020 = vpop.f32.mrb[0].mxu0
      %8021 = vmatprep.mubr.f32.mxu0 0.0
      %8022 = vmatmul.mubr.f32.gmra.mrb[0].mxu0 %v4978
      %v8023 = vpop.f32.mrb[0].mxu0
      %v8024 = vadd.f32 0.0, %v8023
      %v8025 = vpop.f32.mrb[0].mxu0
      %8026 = vmatprep.mubr.f32.mxu0 0.0
      %8027 = vmatmul.mubr.f32.gmra.mrb[0].mxu0 %v4980
      %v8028 = vpop.f32.mrb[0].mxu0
      %v8029 = vadd.f32 0.0, %v8028
      %v8030 = vpop.f32.mrb[0].mxu0
      %8031 = vmatprep.mubr.f32.mxu0 0.0
      %8032 = vmatmul.mubr.f32.gmra.mrb[0].mxu0 %v4982
      %v8033 = vpop.f32.mrb[0].mxu0
      %v8034 = vadd.f32 0.0, %v8033
      %v8035 = vpop.f32.mrb[0].mxu0
      %8036 = vmatprep.mubr.f32.mxu0 0.0
      %8037 = vmatmul.mubr.f32.gmra.mrb[0].mxu0 %v4984
      %v8038 = vpop.f32.mrb[0].mxu0
      %v8039 = vadd.f32 0.0, %v8038
      %v8040 = vpop.f32.mrb[0].mxu0
      %8041 = vmatprep.mubr.f32.mxu0 0.0
      %8042 = vmatmul.mubr.f32.gmra.mrb[0].mxu0 %v4986
      %v8043 = vpop.f32.mrb[0].mxu0
      %v8044 = vadd.f32 0.0, %v8043
      %v8045 = vpop.f32.mrb[0].mxu0
      %8046 = vmatprep.mubr.f32.mxu0 0.0
      %8047 = vmatmul.mubr.f32.gmra.mrb[0].mxu0 %v4988
      %v8048 = vpop.f32.mrb[0].mxu0
      %v8049 = vadd.f32 0.0, %v8048
      %v8050 = vpop.f32.mrb[0].mxu0
      %8051 = vmatprep.mubr.f32.mxu0 0.0
      %8052 = vmatmul.mubr.f32.gmra.mrb[0].mxu0 %v4990
      %v8053 = vpop.f32.mrb[0].mxu0
      %v8054 = vadd.f32 0.0, %v8053
      %v8055 = vpop.f32.mrb[0].mxu0
      %8056 = vmatprep.mubr.f32.mxu0 0.0
      %8057 = vmatmul.mubr.f32.gmra.mrb[0].mxu0 %v4992
      %v8058 = vpop.f32.mrb[0].mxu0
      %v8059 = vadd.f32 0.0, %v8058
      %v8060 = vpop.f32.mrb[0].mxu0
      %8061 = vmatprep.mubr.f32.mxu0 0.0
      %8062 = vmatmul.mubr.f32.gmra.mrb[0].mxu0 %v4994
      %v8063 = vpop.f32.mrb[0].mxu0
      %v8064 = vadd.f32 0.0, %v8063
      %v8065 = vpop.f32.mrb[0].mxu0
      %8066 = vmatprep.mubr.f32.mxu0 0.0
      %8067 = vmatmul.mubr.f32.gmra.mrb[0].mxu0 %v4996
      %v8068 = vpop.f32.mrb[0].mxu0
      %v8069 = vadd.f32 0.0, %v8068
      %v8070 = vpop.f32.mrb[0].mxu0
      %8071 = vmatprep.mubr.f32.mxu0 0.0
      %8072 = vmatmul.mubr.f32.gmra.mrb[0].mxu0 %v4998
      %v8073 = vpop.f32.mrb[0].mxu0
      %v8074 = vadd.f32 0.0, %v8073
      %v8075 = vpop.f32.mrb[0].mxu0
      %8076 = vmatprep.mubr.f32.mxu0 0.0
      %8077 = vmatmul.mubr.f32.gmra.mrb[0].mxu0 %v5000
      %v8078 = vpop.f32.mrb[0].mxu0
      %v8079 = vadd.f32 0.0, %v8078
      %v8080 = vpop.f32.mrb[0].mxu0
      %8081 = vmatprep.mubr.f32.mxu0 0.0
      %8082 = vmatmul.mubr.f32.gmra.mrb[0].mxu0 %v5002
      %v8083 = vpop.f32.mrb[0].mxu0
      %v8084 = vadd.f32 0.0, %v8083
      %v8085 = vpop.f32.mrb[0].mxu0
      %8086 = vmatprep.mubr.f32.mxu0 0.0
      %8087 = vmatmul.mubr.f32.gmra.mrb[0].mxu0 %v5004
      %v8088 = vpop.f32.mrb[0].mxu0
      %v8089 = vadd.f32 0.0, %v8088
      %v8090 = vpop.f32.mrb[0].mxu0
      %8091 = vmatprep.mubr.f32.mxu0 0.0
      %8092 = vmatmul.mubr.f32.gmra.mrb[0].mxu0 %v5006
      %v8093 = vpop.f32.mrb[0].mxu0
      %v8094 = vadd.f32 0.0, %v8093
      %v8095 = vpop.f32.mrb[0].mxu0
      %8096 = vmatprep.mubr.f32.mxu0 0.0
      %8097 = vmatmul.mubr.f32.gmra.mrb[0].mxu0 %v5008
      %v8098 = vpop.f32.mrb[0].mxu0
      %v8099 = vadd.f32 0.0, %v8098
      %v8100 = vpop.f32.mrb[0].mxu0
      %8101 = vmatprep.mubr.f32.mxu0 0.0
      %8102 = vmatmul.mubr.f32.gmra.mrb[0].mxu0 %v5010
      %v8103 = vpop.f32.mrb[0].mxu0
      %v8104 = vadd.f32 0.0, %v8103
      %v8105 = vpop.f32.mrb[0].mxu0
      %8106 = vmatprep.mubr.f32.mxu0 0.0
      %8107 = vmatmul.mubr.f32.gmra.mrb[0].mxu0 %v5012
      %v8108 = vpop.f32.mrb[0].mxu0
      %v8109 = vadd.f32 0.0, %v8108
      %v8110 = vpop.f32.mrb[0].mxu0
      %8111 = vmatprep.mubr.f32.mxu0 0.0
      %8112 = vmatmul.mubr.f32.gmra.mrb[0].mxu0 %v5014
      %v8113 = vpop.f32.mrb[0].mxu0
      %v8114 = vadd.f32 0.0, %v8113
      %v8115 = vpop.f32.mrb[0].mxu0
      %8116 = vmatprep.mubr.f32.mxu0 0.0
      %8117 = vmatmul.mubr.f32.gmra.mrb[0].mxu0 %v5016
      %v8118 = vpop.f32.mrb[0].mxu0
      %v8119 = vadd.f32 0.0, %v8118
      %v8120 = vpop.f32.mrb[0].mxu0
      %8121 = vmatprep.mubr.f32.mxu0 0.0
      %8122 = vmatmul.mubr.f32.gmra.mrb[0].mxu0 %v5018
      %v8123 = vpop.f32.mrb[0].mxu0
      %v8124 = vadd.f32 0.0, %v8123
      %v8125 = vpop.f32.mrb[0].mxu0
      %8126 = vmatprep.mubr.f32.mxu0 0.0
      %8127 = vmatmul.mubr.f32.gmra.mrb[0].mxu0 %v5020
      %v8128 = vpop.f32.mrb[0].mxu0
      %v8129 = vadd.f32 0.0, %v8128
      %v8130 = vpop.f32.mrb[0].mxu0
      %8131 = vmatprep.mubr.f32.mxu0 0.0
      %8132 = vmatmul.mubr.f32.gmra.mrb[0].mxu0 %v5022
      %v8133 = vpop.f32.mrb[0].mxu0
      %v8134 = vadd.f32 0.0, %v8133
      %v8135 = vpop.f32.mrb[0].mxu0
      %8136 = vmatprep.mubr.f32.mxu0 0.0
      %8137 = vmatmul.mubr.f32.gmra.mrb[0].mxu0 %v5024
      %v8138 = vpop.f32.mrb[0].mxu0
      %v8139 = vadd.f32 0.0, %v8138
      %v8140 = vpop.f32.mrb[0].mxu0
      %8141 = vmatprep.mubr.f32.mxu0 0.0
      %8142 = vmatmul.mubr.f32.gmra.mrb[0].mxu0 %v7763
      %v8143 = vpop.f32.mrb[0].mxu0
      %v8144 = vadd.f32 0.0, %v8143
      %v8145 = vpop.f32.mrb[0].mxu0
      %8146 = vmatprep.mubr.f32.mxu0 0.0
      %8147 = vmatmul.mubr.f32.gmra.mrb[0].mxu0 %v7765
      %v8148 = vpop.f32.mrb[0].mxu0
      %v8149 = vadd.f32 0.0, %v8148
      %v8150 = vpop.f32.mrb[0].mxu0
      %8151 = vdwg.mxu0
      %v8152 = vadd.f32 %v7699, %v7834
      %v8153 = vadd.f32 %v7700, %v7839
      %v8154 = vadd.f32 %v7701, %v7844
      %v8155 = vadd.f32 %v7702, %v7849
      %v8156 = vadd.f32 %v7703, %v7854
      %v8157 = vadd.f32 %v7704, %v7859
      %v8158 = vadd.f32 %v7705, %v7864
      %v8159 = vadd.f32 %v7706, %v7869
      %v8160 = vadd.f32 %v7707, %v7874
      %v8161 = vadd.f32 %v7708, %v7879
      %v8162 = vadd.f32 %v7709, %v7884
      %v8163 = vadd.f32 %v7710, %v7889
      %v8164 = vadd.f32 %v7711, %v7894
      %v8165 = vadd.f32 %v7712, %v7899
      %v8166 = vadd.f32 %v7713, %v7904
      %v8167 = vadd.f32 %v7714, %v7909
      %v8168 = vadd.f32 %v7715, %v7914
      %v8169 = vadd.f32 %v7716, %v7919
      %v8170 = vadd.f32 %v7717, %v7924
      %v8171 = vadd.f32 %v7718, %v7929
      %v8172 = vadd.f32 %v7719, %v7934
      %v8173 = vadd.f32 %v7720, %v7939
      %v8174 = vadd.f32 %v7721, %v7944
      %v8175 = vadd.f32 %v7722, %v7949
      %v8176 = vadd.f32 %v7723, %v7954
      %v8177 = vadd.f32 %v7724, %v7959
      %v8178 = vadd.f32 %v7725, %v7964
      %v8179 = vadd.f32 %v7726, %v7969
      %v8180 = vadd.f32 %v7727, %v7974
      %v8181 = vadd.f32 %v7728, %v7979
      %v8182 = vadd.f32 %v7729, %v7984
      %v8183 = vadd.f32 %v7730, %v7989
      %v8184 = vadd.f32 %v7731, %v7994
      %v8185 = vadd.f32 %v7732, %v7999
      %v8186 = vadd.f32 %v7733, %v8004
      %v8187 = vadd.f32 %v7734, %v8009
      %v8188 = vadd.f32 %v7735, %v8014
      %v8189 = vadd.f32 %v7736, %v8019
      %v8190 = vadd.f32 %v7737, %v8024
      %v8191 = vadd.f32 %v7738, %v8029
      %v8192 = vadd.f32 %v7739, %v8034
      %v8193 = vadd.f32 %v7740, %v8039
      %v8194 = vadd.f32 %v7741, %v8044
      %v8195 = vadd.f32 %v7742, %v8049
      %v8196 = vadd.f32 %v7743, %v8054
      %v8197 = vadd.f32 %v7744, %v8059
      %v8198 = vadd.f32 %v7745, %v8064
      %v8199 = vadd.f32 %v7746, %v8069
      %v8200 = vadd.f32 %v7747, %v8074
      %v8201 = vadd.f32 %v7748, %v8079
      %v8202 = vadd.f32 %v7749, %v8084
      %v8203 = vadd.f32 %v7750, %v8089
      %v8204 = vadd.f32 %v7751, %v8094
      %v8205 = vadd.f32 %v7752, %v8099
      %v8206 = vadd.f32 %v7753, %v8104
      %v8207 = vadd.f32 %v7754, %v8109
      %v8208 = vadd.f32 %v7755, %v8114
      %v8209 = vadd.f32 %v7756, %v8119
      %v8210 = vadd.f32 %v7757, %v8124
      %v8211 = vadd.f32 %v7758, %v8129
      %v8212 = vadd.f32 %v7759, %v8134
      %v8213 = vadd.f32 %v7760, %v8139
      %v8214 = vadd.f32 %v7761, %v8144
      %v8215 = vadd.f32 %v7762, %v8149
      %v8219 = vrot.slane %v1889, 1
      %v8220 = vrot.slane %v1890, 1
      %v8221 = vsel %vm932, %v8219, %v8220
      %v8222 = vrot.slane %v1891, 1
      %v8223 = vsel %vm932, %v8220, %v8222
      %v8227 = vrot.slane %v1994, 1
      %v8228 = vrot.slane %v1995, 1
      %v8229 = vsel %vm932, %v8227, %v8228
      %v8230 = vrot.slane %v1996, 1
      %v8231 = vsel %vm932, %v8228, %v8230
      %s8232 = scalar_lea.vmem %s1, 24
      %v8233 = vld [vmem:[%s8232] sm:$0xf]
      %v8234 = vsel %vm2512, %v1889, 0
      %v8236 = vsel %vm2512, %v1890, 0
      %v8239 = vsel %vm2641, %v8233, 0
      %8241 = vmatprep.subr.mxu0 0.0
      %8242 = vmatpush1.msra.mxu0 %v8239
      %8243 = vmatprep.subr.mxu0 0.0
      %8244 = vmatpush1.msra.mxu0 0.0
      %8245 = vmatprep.subr.mxu0 0.0
      %8246 = vmatpush1.msra.mxu0 0.0
      %8247 = vmatprep.subr.mxu0 0.0
      %8248 = vmatpush1.msra.mxu0 0.0
      %8249 = vmatprep.subr.mxu0 0.0
      %8250 = vmatpush1.msra.mxu0 0.0
      %8251 = vmatprep.subr.mxu0 0.0
      %8252 = vmatpush1.msra.mxu0 0.0
      %8253 = vmatprep.subr.mxu0 0.0
      %8254 = vmatpush1.msra.mxu0 0.0
      %8255 = vmatprep.subr.mxu0 0.0
      %8256 = vmatpush1.msra.mxu0 0.0
      %8257 = vmatprep.subr.mxu0 0.0
      %8258 = vmatpush1.msra.mxu0 0.0
      %8259 = vmatprep.subr.mxu0 0.0
      %8260 = vmatpush1.msra.mxu0 0.0
      %8261 = vmatprep.subr.mxu0 0.0
      %8262 = vmatpush1.msra.mxu0 0.0
      %8263 = vmatprep.subr.mxu0 0.0
      %8264 = vmatpush1.msra.mxu0 0.0
      %8265 = vmatprep.subr.mxu0 0.0
      %8266 = vmatpush1.msra.mxu0 0.0
      %8267 = vmatprep.subr.mxu0 0.0
      %8268 = vmatpush1.msra.mxu0 0.0
      %8269 = vmatprep.subr.mxu0 0.0
      %8270 = vmatpush1.msra.mxu0 0.0
      %8271 = vmatprep.subr.mxu0 0.0
      %8272 = vmatpush1.msra.mxu0 0.0
      %8273 = vmatprep.subr.mxu0 0.0
      %8274 = vmatpush1.msra.mxu0 0.0
      %8275 = vmatprep.subr.mxu0 0.0
      %8276 = vmatpush1.msra.mxu0 0.0
      %8277 = vmatprep.subr.mxu0 0.0
      %8278 = vmatpush1.msra.mxu0 0.0
      %8279 = vmatprep.subr.mxu0 0.0
      %8280 = vmatpush1.msra.mxu0 0.0
      %8281 = vmatprep.subr.mxu0 0.0
      %8282 = vmatpush1.msra.mxu0 0.0
      %8283 = vmatprep.subr.mxu0 0.0
      %8284 = vmatpush1.msra.mxu0 0.0
      %8285 = vmatprep.subr.mxu0 0.0
      %8286 = vmatpush1.msra.mxu0 0.0
      %8287 = vmatprep.subr.mxu0 0.0
      %8288 = vmatpush1.msra.mxu0 0.0
      %8289 = vmatprep.subr.mxu0 0.0
      %8290 = vmatpush1.msra.mxu0 0.0
      %8291 = vmatprep.subr.mxu0 0.0
      %8292 = vmatpush1.msra.mxu0 0.0
      %8293 = vmatprep.subr.mxu0 0.0
      %8294 = vmatpush1.msra.mxu0 0.0
      %8295 = vmatprep.subr.mxu0 0.0
      %8296 = vmatpush1.msra.mxu0 0.0
      %8297 = vmatprep.subr.mxu0 0.0
      %8298 = vmatpush1.msra.mxu0 0.0
      %8299 = vmatprep.subr.mxu0 0.0
      %8300 = vmatpush1.msra.mxu0 0.0
      %8301 = vmatprep.subr.mxu0 0.0
      %8302 = vmatpush1.msra.mxu0 0.0
      %8303 = vmatprep.subr.mxu0 0.0
      %8304 = vmatpush1.msra.mxu0 0.0
      %8305 = vmatprep.mubr.f32.mxu0 0.0
      %8306 = vmatmul.mubr.f32.gmra.mrb[0].mxu0 %v3038
      %v8307 = vpop.f32.mrb[0].mxu0
      %v8308 = vadd.f32 0.0, %v8307
      %v8309 = vpop.f32.mrb[0].mxu0
      %8310 = vmatprep.mubr.f32.mxu0 0.0
      %8311 = vmatmul.mubr.f32.gmra.mrb[0].mxu0 %v3040
      %v8312 = vpop.f32.mrb[0].mxu0
      %v8313 = vadd.f32 0.0, %v8312
      %v8314 = vpop.f32.mrb[0].mxu0
      %8315 = vmatprep.mubr.f32.mxu0 0.0
      %8316 = vmatmul.mubr.f32.gmra.mrb[0].mxu0 %v3042
      %v8317 = vpop.f32.mrb[0].mxu0
      %v8318 = vadd.f32 0.0, %v8317
      %v8319 = vpop.f32.mrb[0].mxu0
      %8320 = vmatprep.mubr.f32.mxu0 0.0
      %8321 = vmatmul.mubr.f32.gmra.mrb[0].mxu0 %v3044
      %v8322 = vpop.f32.mrb[0].mxu0
      %v8323 = vadd.f32 0.0, %v8322
      %v8324 = vpop.f32.mrb[0].mxu0
      %8325 = vmatprep.mubr.f32.mxu0 0.0
      %8326 = vmatmul.mubr.f32.gmra.mrb[0].mxu0 %v3046
      %v8327 = vpop.f32.mrb[0].mxu0
      %v8328 = vadd.f32 0.0, %v8327
      %v8329 = vpop.f32.mrb[0].mxu0
      %8330 = vmatprep.mubr.f32.mxu0 0.0
      %8331 = vmatmul.mubr.f32.gmra.mrb[0].mxu0 %v3048
      %v8332 = vpop.f32.mrb[0].mxu0
      %v8333 = vadd.f32 0.0, %v8332
      %v8334 = vpop.f32.mrb[0].mxu0
      %8335 = vmatprep.mubr.f32.mxu0 0.0
      %8336 = vmatmul.mubr.f32.gmra.mrb[0].mxu0 %v3050
      %v8337 = vpop.f32.mrb[0].mxu0
      %v8338 = vadd.f32 0.0, %v8337
      %v8339 = vpop.f32.mrb[0].mxu0
      %8340 = vmatprep.mubr.f32.mxu0 0.0
      %8341 = vmatmul.mubr.f32.gmra.mrb[0].mxu0 %v3052
      %v8342 = vpop.f32.mrb[0].mxu0
      %v8343 = vadd.f32 0.0, %v8342
      %v8344 = vpop.f32.mrb[0].mxu0
      %8345 = vmatprep.mubr.f32.mxu0 0.0
      %8346 = vmatmul.mubr.f32.gmra.mrb[0].mxu0 %v3054
      %v8347 = vpop.f32.mrb[0].mxu0
      %v8348 = vadd.f32 0.0, %v8347
      %v8349 = vpop.f32.mrb[0].mxu0
      %8350 = vmatprep.mubr.f32.mxu0 0.0
      %8351 = vmatmul.mubr.f32.gmra.mrb[0].mxu0 %v3056
      %v8352 = vpop.f32.mrb[0].mxu0
      %v8353 = vadd.f32 0.0, %v8352
      %v8354 = vpop.f32.mrb[0].mxu0
      %8355 = vmatprep.mubr.f32.mxu0 0.0
      %8356 = vmatmul.mubr.f32.gmra.mrb[0].mxu0 %v3058
      %v8357 = vpop.f32.mrb[0].mxu0
      %v8358 = vadd.f32 0.0, %v8357
      %v8359 = vpop.f32.mrb[0].mxu0
      %8360 = vmatprep.mubr.f32.mxu0 0.0
      %8361 = vmatmul.mubr.f32.gmra.mrb[0].mxu0 %v3060
      %v8362 = vpop.f32.mrb[0].mxu0
      %v8363 = vadd.f32 0.0, %v8362
      %v8364 = vpop.f32.mrb[0].mxu0
      %8365 = vmatprep.mubr.f32.mxu0 0.0
      %8366 = vmatmul.mubr.f32.gmra.mrb[0].mxu0 %v3062
      %v8367 = vpop.f32.mrb[0].mxu0
      %v8368 = vadd.f32 0.0, %v8367
      %v8369 = vpop.f32.mrb[0].mxu0
      %8370 = vmatprep.mubr.f32.mxu0 0.0
      %8371 = vmatmul.mubr.f32.gmra.mrb[0].mxu0 %v3064
      %v8372 = vpop.f32.mrb[0].mxu0
      %v8373 = vadd.f32 0.0, %v8372
      %v8374 = vpop.f32.mrb[0].mxu0
      %8375 = vmatprep.mubr.f32.mxu0 0.0
      %8376 = vmatmul.mubr.f32.gmra.mrb[0].mxu0 %v3066
      %v8377 = vpop.f32.mrb[0].mxu0
      %v8378 = vadd.f32 0.0, %v8377
      %v8379 = vpop.f32.mrb[0].mxu0
      %8380 = vmatprep.mubr.f32.mxu0 0.0
      %8381 = vmatmul.mubr.f32.gmra.mrb[0].mxu0 %v3068
      %v8382 = vpop.f32.mrb[0].mxu0
      %v8383 = vadd.f32 0.0, %v8382
      %v8384 = vpop.f32.mrb[0].mxu0
      %8385 = vmatprep.mubr.f32.mxu0 0.0
      %8386 = vmatmul.mubr.f32.gmra.mrb[0].mxu0 %v3070
      %v8387 = vpop.f32.mrb[0].mxu0
      %v8388 = vadd.f32 0.0, %v8387
      %v8389 = vpop.f32.mrb[0].mxu0
      %8390 = vmatprep.mubr.f32.mxu0 0.0
      %8391 = vmatmul.mubr.f32.gmra.mrb[0].mxu0 %v3072
      %v8392 = vpop.f32.mrb[0].mxu0
      %v8393 = vadd.f32 0.0, %v8392
      %v8394 = vpop.f32.mrb[0].mxu0
      %8395 = vmatprep.mubr.f32.mxu0 0.0
      %8396 = vmatmul.mubr.f32.gmra.mrb[0].mxu0 %v3074
      %v8397 = vpop.f32.mrb[0].mxu0
      %v8398 = vadd.f32 0.0, %v8397
      %v8399 = vpop.f32.mrb[0].mxu0
      %8400 = vmatprep.mubr.f32.mxu0 0.0
      %8401 = vmatmul.mubr.f32.gmra.mrb[0].mxu0 %v3076
      %v8402 = vpop.f32.mrb[0].mxu0
      %v8403 = vadd.f32 0.0, %v8402
      %v8404 = vpop.f32.mrb[0].mxu0
      %8405 = vmatprep.mubr.f32.mxu0 0.0
      %8406 = vmatmul.mubr.f32.gmra.mrb[0].mxu0 %v3078
      %v8407 = vpop.f32.mrb[0].mxu0
      %v8408 = vadd.f32 0.0, %v8407
      %v8409 = vpop.f32.mrb[0].mxu0
      %8410 = vmatprep.mubr.f32.mxu0 0.0
      %8411 = vmatmul.mubr.f32.gmra.mrb[0].mxu0 %v3080
      %v8412 = vpop.f32.mrb[0].mxu0
      %v8413 = vadd.f32 0.0, %v8412
      %v8414 = vpop.f32.mrb[0].mxu0
      %8415 = vmatprep.mubr.f32.mxu0 0.0
      %8416 = vmatmul.mubr.f32.gmra.mrb[0].mxu0 %v3082
      %v8417 = vpop.f32.mrb[0].mxu0
      %v8418 = vadd.f32 0.0, %v8417
      %v8419 = vpop.f32.mrb[0].mxu0
      %8420 = vmatprep.mubr.f32.mxu0 0.0
      %8421 = vmatmul.mubr.f32.gmra.mrb[0].mxu0 %v3084
      %v8422 = vpop.f32.mrb[0].mxu0
      %v8423 = vadd.f32 0.0, %v8422
      %v8424 = vpop.f32.mrb[0].mxu0
      %8425 = vmatprep.mubr.f32.mxu0 0.0
      %8426 = vmatmul.mubr.f32.gmra.mrb[0].mxu0 %v3086
      %v8427 = vpop.f32.mrb[0].mxu0
      %v8428 = vadd.f32 0.0, %v8427
      %v8429 = vpop.f32.mrb[0].mxu0
      %8430 = vmatprep.mubr.f32.mxu0 0.0
      %8431 = vmatmul.mubr.f32.gmra.mrb[0].mxu0 %v3088
      %v8432 = vpop.f32.mrb[0].mxu0
      %v8433 = vadd.f32 0.0, %v8432
      %v8434 = vpop.f32.mrb[0].mxu0
      %8435 = vmatprep.mubr.f32.mxu0 0.0
      %8436 = vmatmul.mubr.f32.gmra.mrb[0].mxu0 %v3090
      %v8437 = vpop.f32.mrb[0].mxu0
      %v8438 = vadd.f32 0.0, %v8437
      %v8439 = vpop.f32.mrb[0].mxu0
      %8440 = vmatprep.mubr.f32.mxu0 0.0
      %8441 = vmatmul.mubr.f32.gmra.mrb[0].mxu0 %v3092
      %v8442 = vpop.f32.mrb[0].mxu0
      %v8443 = vadd.f32 0.0, %v8442
      %v8444 = vpop.f32.mrb[0].mxu0
      %8445 = vmatprep.mubr.f32.mxu0 0.0
      %8446 = vmatmul.mubr.f32.gmra.mrb[0].mxu0 %v3094
      %v8447 = vpop.f32.mrb[0].mxu0
      %v8448 = vadd.f32 0.0, %v8447
      %v8449 = vpop.f32.mrb[0].mxu0
      %8450 = vmatprep.mubr.f32.mxu0 0.0
      %8451 = vmatmul.mubr.f32.gmra.mrb[0].mxu0 %v3096
      %v8452 = vpop.f32.mrb[0].mxu0
      %v8453 = vadd.f32 0.0, %v8452
      %v8454 = vpop.f32.mrb[0].mxu0
      %8455 = vmatprep.mubr.f32.mxu0 0.0
      %8456 = vmatmul.mubr.f32.gmra.mrb[0].mxu0 %v3098
      %v8457 = vpop.f32.mrb[0].mxu0
      %v8458 = vadd.f32 0.0, %v8457
      %v8459 = vpop.f32.mrb[0].mxu0
      %8460 = vmatprep.mubr.f32.mxu0 0.0
      %8461 = vmatmul.mubr.f32.gmra.mrb[0].mxu0 %v3100
      %v8462 = vpop.f32.mrb[0].mxu0
      %v8463 = vadd.f32 0.0, %v8462
      %v8464 = vpop.f32.mrb[0].mxu0
      %8465 = vmatprep.mubr.f32.mxu0 0.0
      %8466 = vmatmul.mubr.f32.gmra.mrb[0].mxu0 %v3102
      %v8467 = vpop.f32.mrb[0].mxu0
      %v8468 = vadd.f32 0.0, %v8467
      %v8469 = vpop.f32.mrb[0].mxu0
      %8470 = vmatprep.mubr.f32.mxu0 0.0
      %8471 = vmatmul.mubr.f32.gmra.mrb[0].mxu0 %v3104
      %v8472 = vpop.f32.mrb[0].mxu0
      %v8473 = vadd.f32 0.0, %v8472
      %v8474 = vpop.f32.mrb[0].mxu0
      %8475 = vmatprep.mubr.f32.mxu0 0.0
      %8476 = vmatmul.mubr.f32.gmra.mrb[0].mxu0 %v3106
      %v8477 = vpop.f32.mrb[0].mxu0
      %v8478 = vadd.f32 0.0, %v8477
      %v8479 = vpop.f32.mrb[0].mxu0
      %8480 = vmatprep.mubr.f32.mxu0 0.0
      %8481 = vmatmul.mubr.f32.gmra.mrb[0].mxu0 %v3108
      %v8482 = vpop.f32.mrb[0].mxu0
      %v8483 = vadd.f32 0.0, %v8482
      %v8484 = vpop.f32.mrb[0].mxu0
      %8485 = vmatprep.mubr.f32.mxu0 0.0
      %8486 = vmatmul.mubr.f32.gmra.mrb[0].mxu0 %v3110
      %v8487 = vpop.f32.mrb[0].mxu0
      %v8488 = vadd.f32 0.0, %v8487
      %v8489 = vpop.f32.mrb[0].mxu0
      %8490 = vmatprep.mubr.f32.mxu0 0.0
      %8491 = vmatmul.mubr.f32.gmra.mrb[0].mxu0 %v3112
      %v8492 = vpop.f32.mrb[0].mxu0
      %v8493 = vadd.f32 0.0, %v8492
      %v8494 = vpop.f32.mrb[0].mxu0
      %8495 = vmatprep.mubr.f32.mxu0 0.0
      %8496 = vmatmul.mubr.f32.gmra.mrb[0].mxu0 %v3114
      %v8497 = vpop.f32.mrb[0].mxu0
      %v8498 = vadd.f32 0.0, %v8497
      %v8499 = vpop.f32.mrb[0].mxu0
      %8500 = vmatprep.mubr.f32.mxu0 0.0
      %8501 = vmatmul.mubr.f32.gmra.mrb[0].mxu0 %v3116
      %v8502 = vpop.f32.mrb[0].mxu0
      %v8503 = vadd.f32 0.0, %v8502
      %v8504 = vpop.f32.mrb[0].mxu0
      %8505 = vmatprep.mubr.f32.mxu0 0.0
      %8506 = vmatmul.mubr.f32.gmra.mrb[0].mxu0 %v3118
      %v8507 = vpop.f32.mrb[0].mxu0
      %v8508 = vadd.f32 0.0, %v8507
      %v8509 = vpop.f32.mrb[0].mxu0
      %8510 = vmatprep.mubr.f32.mxu0 0.0
      %8511 = vmatmul.mubr.f32.gmra.mrb[0].mxu0 %v3120
      %v8512 = vpop.f32.mrb[0].mxu0
      %v8513 = vadd.f32 0.0, %v8512
      %v8514 = vpop.f32.mrb[0].mxu0
      %8515 = vmatprep.mubr.f32.mxu0 0.0
      %8516 = vmatmul.mubr.f32.gmra.mrb[0].mxu0 %v3122
      %v8517 = vpop.f32.mrb[0].mxu0
      %v8518 = vadd.f32 0.0, %v8517
      %v8519 = vpop.f32.mrb[0].mxu0
      %8520 = vmatprep.mubr.f32.mxu0 0.0
      %8521 = vmatmul.mubr.f32.gmra.mrb[0].mxu0 %v3124
      %v8522 = vpop.f32.mrb[0].mxu0
      %v8523 = vadd.f32 0.0, %v8522
      %v8524 = vpop.f32.mrb[0].mxu0
      %8525 = vmatprep.mubr.f32.mxu0 0.0
      %8526 = vmatmul.mubr.f32.gmra.mrb[0].mxu0 %v3126
      %v8527 = vpop.f32.mrb[0].mxu0
      %v8528 = vadd.f32 0.0, %v8527
      %v8529 = vpop.f32.mrb[0].mxu0
      %8530 = vmatprep.mubr.f32.mxu0 0.0
      %8531 = vmatmul.mubr.f32.gmra.mrb[0].mxu0 %v3128
      %v8532 = vpop.f32.mrb[0].mxu0
      %v8533 = vadd.f32 0.0, %v8532
      %v8534 = vpop.f32.mrb[0].mxu0
      %8535 = vmatprep.mubr.f32.mxu0 0.0
      %8536 = vmatmul.mubr.f32.gmra.mrb[0].mxu0 %v3130
      %v8537 = vpop.f32.mrb[0].mxu0
      %v8538 = vadd.f32 0.0, %v8537
      %v8539 = vpop.f32.mrb[0].mxu0
      %8540 = vmatprep.mubr.f32.mxu0 0.0
      %8541 = vmatmul.mubr.f32.gmra.mrb[0].mxu0 %v3132
      %v8542 = vpop.f32.mrb[0].mxu0
      %v8543 = vadd.f32 0.0, %v8542
      %v8544 = vpop.f32.mrb[0].mxu0
      %8545 = vmatprep.mubr.f32.mxu0 0.0
      %8546 = vmatmul.mubr.f32.gmra.mrb[0].mxu0 %v3134
      %v8547 = vpop.f32.mrb[0].mxu0
      %v8548 = vadd.f32 0.0, %v8547
      %v8549 = vpop.f32.mrb[0].mxu0
      %8550 = vmatprep.mubr.f32.mxu0 0.0
      %8551 = vmatmul.mubr.f32.gmra.mrb[0].mxu0 %v3136
      %v8552 = vpop.f32.mrb[0].mxu0
      %v8553 = vadd.f32 0.0, %v8552
      %v8554 = vpop.f32.mrb[0].mxu0
      %8555 = vmatprep.mubr.f32.mxu0 0.0
      %8556 = vmatmul.mubr.f32.gmra.mrb[0].mxu0 %v3138
      %v8557 = vpop.f32.mrb[0].mxu0
      %v8558 = vadd.f32 0.0, %v8557
      %v8559 = vpop.f32.mrb[0].mxu0
      %8560 = vmatprep.mubr.f32.mxu0 0.0
      %8561 = vmatmul.mubr.f32.gmra.mrb[0].mxu0 %v3140
      %v8562 = vpop.f32.mrb[0].mxu0
      %v8563 = vadd.f32 0.0, %v8562
      %v8564 = vpop.f32.mrb[0].mxu0
      %8565 = vmatprep.mubr.f32.mxu0 0.0
      %8566 = vmatmul.mubr.f32.gmra.mrb[0].mxu0 %v3142
      %v8567 = vpop.f32.mrb[0].mxu0
      %v8568 = vadd.f32 0.0, %v8567
      %v8569 = vpop.f32.mrb[0].mxu0
      %8570 = vmatprep.mubr.f32.mxu0 0.0
      %8571 = vmatmul.mubr.f32.gmra.mrb[0].mxu0 %v3144
      %v8572 = vpop.f32.mrb[0].mxu0
      %v8573 = vadd.f32 0.0, %v8572
      %v8574 = vpop.f32.mrb[0].mxu0
      %8575 = vmatprep.mubr.f32.mxu0 0.0
      %8576 = vmatmul.mubr.f32.gmra.mrb[0].mxu0 %v3146
      %v8577 = vpop.f32.mrb[0].mxu0
      %v8578 = vadd.f32 0.0, %v8577
      %v8579 = vpop.f32.mrb[0].mxu0
      %8580 = vmatprep.mubr.f32.mxu0 0.0
      %8581 = vmatmul.mubr.f32.gmra.mrb[0].mxu0 %v3148
      %v8582 = vpop.f32.mrb[0].mxu0
      %v8583 = vadd.f32 0.0, %v8582
      %v8584 = vpop.f32.mrb[0].mxu0
      %8585 = vmatprep.mubr.f32.mxu0 0.0
      %8586 = vmatmul.mubr.f32.gmra.mrb[0].mxu0 %v3150
      %v8587 = vpop.f32.mrb[0].mxu0
      %v8588 = vadd.f32 0.0, %v8587
      %v8589 = vpop.f32.mrb[0].mxu0
      %8590 = vmatprep.mubr.f32.mxu0 0.0
      %8591 = vmatmul.mubr.f32.gmra.mrb[0].mxu0 %v3152
      %v8592 = vpop.f32.mrb[0].mxu0
      %v8593 = vadd.f32 0.0, %v8592
      %v8594 = vpop.f32.mrb[0].mxu0
      %8595 = vmatprep.mubr.f32.mxu0 0.0
      %8596 = vmatmul.mubr.f32.gmra.mrb[0].mxu0 %v3154
      %v8597 = vpop.f32.mrb[0].mxu0
      %v8598 = vadd.f32 0.0, %v8597
      %v8599 = vpop.f32.mrb[0].mxu0
      %8600 = vmatprep.mubr.f32.mxu0 0.0
      %8601 = vmatmul.mubr.f32.gmra.mrb[0].mxu0 %v3156
      %v8602 = vpop.f32.mrb[0].mxu0
      %v8603 = vadd.f32 0.0, %v8602
      %v8604 = vpop.f32.mrb[0].mxu0
      %8605 = vmatprep.mubr.f32.mxu0 0.0
      %8606 = vmatmul.mubr.f32.gmra.mrb[0].mxu0 %v5493
      %v8607 = vpop.f32.mrb[0].mxu0
      %v8608 = vadd.f32 0.0, %v8607
      %v8609 = vpop.f32.mrb[0].mxu0
      %8610 = vmatprep.mubr.f32.mxu0 0.0
      %8611 = vmatmul.mubr.f32.gmra.mrb[0].mxu0 %v5495
      %v8612 = vpop.f32.mrb[0].mxu0
      %v8613 = vadd.f32 0.0, %v8612
      %v8614 = vpop.f32.mrb[0].mxu0
      %8615 = vmatprep.mubr.f32.mxu0 0.0
      %8616 = vmatmul.mubr.f32.gmra.mrb[0].mxu0 %v8234
      %v8617 = vpop.f32.mrb[0].mxu0
      %v8618 = vadd.f32 0.0, %v8617
      %v8619 = vpop.f32.mrb[0].mxu0
      %8620 = vmatprep.mubr.f32.mxu0 0.0
      %8621 = vmatmul.mubr.f32.gmra.mrb[0].mxu0 %v8236
      %v8622 = vpop.f32.mrb[0].mxu0
      %v8623 = vadd.f32 0.0, %v8622
      %v8624 = vpop.f32.mrb[0].mxu0
      %8625 = vdwg.mxu0
      %v8626 = vadd.f32 %v6801, %v8308
      %v8627 = vadd.f32 %v6802, %v8313
      %v8628 = vadd.f32 %v6803, %v8318
      %v8629 = vadd.f32 %v6804, %v8323
      %v8630 = vadd.f32 %v6805, %v8328
      %v8631 = vadd.f32 %v6806, %v8333
      %v8632 = vadd.f32 %v6807, %v8338
      %v8633 = vadd.f32 %v6808, %v8343
      %v8634 = vadd.f32 %v6809, %v8348
      %v8635 = vadd.f32 %v6810, %v8353
      %v8636 = vadd.f32 %v6811, %v8358
      %v8637 = vadd.f32 %v6812, %v8363
      %v8638 = vadd.f32 %v6813, %v8368
      %v8639 = vadd.f32 %v6814, %v8373
      %v8640 = vadd.f32 %v6815, %v8378
      %v8641 = vadd.f32 %v6816, %v8383
      %v8642 = vadd.f32 %v6817, %v8388
      %v8643 = vadd.f32 %v6818, %v8393
      %v8644 = vadd.f32 %v6819, %v8398
      %v8645 = vadd.f32 %v6820, %v8403
      %v8646 = vadd.f32 %v6821, %v8408
      %v8647 = vadd.f32 %v6822, %v8413
      %v8648 = vadd.f32 %v6823, %v8418
      %v8649 = vadd.f32 %v6824, %v8423
      %v8650 = vadd.f32 %v6825, %v8428
      %v8651 = vadd.f32 %v6826, %v8433
      %v8652 = vadd.f32 %v6827, %v8438
      %v8653 = vadd.f32 %v6828, %v8443
      %v8654 = vadd.f32 %v6829, %v8448
      %v8655 = vadd.f32 %v6830, %v8453
      %v8656 = vadd.f32 %v6831, %v8458
      %v8657 = vadd.f32 %v6832, %v8463
      %v8658 = vadd.f32 %v6833, %v8468
      %v8659 = vadd.f32 %v6834, %v8473
      %v8660 = vadd.f32 %v6835, %v8478
      %v8661 = vadd.f32 %v6836, %v8483
      %v8662 = vadd.f32 %v6837, %v8488
      %v8663 = vadd.f32 %v6838, %v8493
      %v8664 = vadd.f32 %v6839, %v8498
      %v8665 = vadd.f32 %v6840, %v8503
      %v8666 = vadd.f32 %v6841, %v8508
      %v8667 = vadd.f32 %v6842, %v8513
      %v8668 = vadd.f32 %v6843, %v8518
      %v8669 = vadd.f32 %v6844, %v8523
      %v8670 = vadd.f32 %v6845, %v8528
      %v8671 = vadd.f32 %v6846, %v8533
      %v8672 = vadd.f32 %v6847, %v8538
      %v8673 = vadd.f32 %v6848, %v8543
      %v8674 = vadd.f32 %v6849, %v8548
      %v8675 = vadd.f32 %v6850, %v8553
      %v8676 = vadd.f32 %v6851, %v8558
      %v8677 = vadd.f32 %v6852, %v8563
      %v8678 = vadd.f32 %v6853, %v8568
      %v8679 = vadd.f32 %v6854, %v8573
      %v8680 = vadd.f32 %v6855, %v8578
      %v8681 = vadd.f32 %v6856, %v8583
      %v8682 = vadd.f32 %v6857, %v8588
      %v8683 = vadd.f32 %v6858, %v8593
      %v8684 = vadd.f32 %v6859, %v8598
      %v8685 = vadd.f32 %v6860, %v8603
      %v8686 = vadd.f32 %v6861, %v8608
      %v8687 = vadd.f32 %v6862, %v8613
      %v8688 = vadd.f32 %v6863, %v8618
      %v8689 = vadd.f32 %v6864, %v8623
      %s8690 = scalar_lea.vmem %s1, 28
      %v8691 = vld [vmem:[%s8690] sm:$0xf]
      %v8692 = vsel %vm2512, %v1994, 0
      %v8694 = vsel %vm2512, %v1995, 0
      %v8697 = vsel %vm2641, %v8691, 0
      %8699 = vmatprep.subr.mxu0 0.0
      %8700 = vmatpush1.msra.mxu0 %v8697
      %8701 = vmatprep.subr.mxu0 0.0
      %8702 = vmatpush1.msra.mxu0 0.0
      %8703 = vmatprep.subr.mxu0 0.0
      %8704 = vmatpush1.msra.mxu0 0.0
      %8705 = vmatprep.subr.mxu0 0.0
      %8706 = vmatpush1.msra.mxu0 0.0
      %8707 = vmatprep.subr.mxu0 0.0
      %8708 = vmatpush1.msra.mxu0 0.0
      %8709 = vmatprep.subr.mxu0 0.0
      %8710 = vmatpush1.msra.mxu0 0.0
      %8711 = vmatprep.subr.mxu0 0.0
      %8712 = vmatpush1.msra.mxu0 0.0
      %8713 = vmatprep.subr.mxu0 0.0
      %8714 = vmatpush1.msra.mxu0 0.0
      %8715 = vmatprep.subr.mxu0 0.0
      %8716 = vmatpush1.msra.mxu0 0.0
      %8717 = vmatprep.subr.mxu0 0.0
      %8718 = vmatpush1.msra.mxu0 0.0
      %8719 = vmatprep.subr.mxu0 0.0
      %8720 = vmatpush1.msra.mxu0 0.0
      %8721 = vmatprep.subr.mxu0 0.0
      %8722 = vmatpush1.msra.mxu0 0.0
      %8723 = vmatprep.subr.mxu0 0.0
      %8724 = vmatpush1.msra.mxu0 0.0
      %8725 = vmatprep.subr.mxu0 0.0
      %8726 = vmatpush1.msra.mxu0 0.0
      %8727 = vmatprep.subr.mxu0 0.0
      %8728 = vmatpush1.msra.mxu0 0.0
      %8729 = vmatprep.subr.mxu0 0.0
      %8730 = vmatpush1.msra.mxu0 0.0
      %8731 = vmatprep.subr.mxu0 0.0
      %8732 = vmatpush1.msra.mxu0 0.0
      %8733 = vmatprep.subr.mxu0 0.0
      %8734 = vmatpush1.msra.mxu0 0.0
      %8735 = vmatprep.subr.mxu0 0.0
      %8736 = vmatpush1.msra.mxu0 0.0
      %8737 = vmatprep.subr.mxu0 0.0
      %8738 = vmatpush1.msra.mxu0 0.0
      %8739 = vmatprep.subr.mxu0 0.0
      %8740 = vmatpush1.msra.mxu0 0.0
      %8741 = vmatprep.subr.mxu0 0.0
      %8742 = vmatpush1.msra.mxu0 0.0
      %8743 = vmatprep.subr.mxu0 0.0
      %8744 = vmatpush1.msra.mxu0 0.0
      %8745 = vmatprep.subr.mxu0 0.0
      %8746 = vmatpush1.msra.mxu0 0.0
      %8747 = vmatprep.subr.mxu0 0.0
      %8748 = vmatpush1.msra.mxu0 0.0
      %8749 = vmatprep.subr.mxu0 0.0
      %8750 = vmatpush1.msra.mxu0 0.0
      %8751 = vmatprep.subr.mxu0 0.0
      %8752 = vmatpush1.msra.mxu0 0.0
      %8753 = vmatprep.subr.mxu0 0.0
      %8754 = vmatpush1.msra.mxu0 0.0
      %8755 = vmatprep.subr.mxu0 0.0
      %8756 = vmatpush1.msra.mxu0 0.0
      %8757 = vmatprep.subr.mxu0 0.0
      %8758 = vmatpush1.msra.mxu0 0.0
      %8759 = vmatprep.subr.mxu0 0.0
      %8760 = vmatpush1.msra.mxu0 0.0
      %8761 = vmatprep.subr.mxu0 0.0
      %8762 = vmatpush1.msra.mxu0 0.0
      %8763 = vmatprep.mubr.f32.mxu0 0.0
      %8764 = vmatmul.mubr.f32.gmra.mrb[0].mxu0 %v2521
      %v8765 = vpop.f32.mrb[0].mxu0
      %v8766 = vadd.f32 0.0, %v8765
      %v8767 = vpop.f32.mrb[0].mxu0
      %8768 = vmatprep.mubr.f32.mxu0 0.0
      %8769 = vmatmul.mubr.f32.gmra.mrb[0].mxu0 %v2523
      %v8770 = vpop.f32.mrb[0].mxu0
      %v8771 = vadd.f32 0.0, %v8770
      %v8772 = vpop.f32.mrb[0].mxu0
      %8773 = vmatprep.mubr.f32.mxu0 0.0
      %8774 = vmatmul.mubr.f32.gmra.mrb[0].mxu0 %v2525
      %v8775 = vpop.f32.mrb[0].mxu0
      %v8776 = vadd.f32 0.0, %v8775
      %v8777 = vpop.f32.mrb[0].mxu0
      %8778 = vmatprep.mubr.f32.mxu0 0.0
      %8779 = vmatmul.mubr.f32.gmra.mrb[0].mxu0 %v2527
      %v8780 = vpop.f32.mrb[0].mxu0
      %v8781 = vadd.f32 0.0, %v8780
      %v8782 = vpop.f32.mrb[0].mxu0
      %8783 = vmatprep.mubr.f32.mxu0 0.0
      %8784 = vmatmul.mubr.f32.gmra.mrb[0].mxu0 %v2529
      %v8785 = vpop.f32.mrb[0].mxu0
      %v8786 = vadd.f32 0.0, %v8785
      %v8787 = vpop.f32.mrb[0].mxu0
      %8788 = vmatprep.mubr.f32.mxu0 0.0
      %8789 = vmatmul.mubr.f32.gmra.mrb[0].mxu0 %v2531
      %v8790 = vpop.f32.mrb[0].mxu0
      %v8791 = vadd.f32 0.0, %v8790
      %v8792 = vpop.f32.mrb[0].mxu0
      %8793 = vmatprep.mubr.f32.mxu0 0.0
      %8794 = vmatmul.mubr.f32.gmra.mrb[0].mxu0 %v2533
      %v8795 = vpop.f32.mrb[0].mxu0
      %v8796 = vadd.f32 0.0, %v8795
      %v8797 = vpop.f32.mrb[0].mxu0
      %8798 = vmatprep.mubr.f32.mxu0 0.0
      %8799 = vmatmul.mubr.f32.gmra.mrb[0].mxu0 %v2535
      %v8800 = vpop.f32.mrb[0].mxu0
      %v8801 = vadd.f32 0.0, %v8800
      %v8802 = vpop.f32.mrb[0].mxu0
      %8803 = vmatprep.mubr.f32.mxu0 0.0
      %8804 = vmatmul.mubr.f32.gmra.mrb[0].mxu0 %v2537
      %v8805 = vpop.f32.mrb[0].mxu0
      %v8806 = vadd.f32 0.0, %v8805
      %v8807 = vpop.f32.mrb[0].mxu0
      %8808 = vmatprep.mubr.f32.mxu0 0.0
      %8809 = vmatmul.mubr.f32.gmra.mrb[0].mxu0 %v2539
      %v8810 = vpop.f32.mrb[0].mxu0
      %v8811 = vadd.f32 0.0, %v8810
      %v8812 = vpop.f32.mrb[0].mxu0
      %8813 = vmatprep.mubr.f32.mxu0 0.0
      %8814 = vmatmul.mubr.f32.gmra.mrb[0].mxu0 %v2541
      %v8815 = vpop.f32.mrb[0].mxu0
      %v8816 = vadd.f32 0.0, %v8815
      %v8817 = vpop.f32.mrb[0].mxu0
      %8818 = vmatprep.mubr.f32.mxu0 0.0
      %8819 = vmatmul.mubr.f32.gmra.mrb[0].mxu0 %v2543
      %v8820 = vpop.f32.mrb[0].mxu0
      %v8821 = vadd.f32 0.0, %v8820
      %v8822 = vpop.f32.mrb[0].mxu0
      %8823 = vmatprep.mubr.f32.mxu0 0.0
      %8824 = vmatmul.mubr.f32.gmra.mrb[0].mxu0 %v2545
      %v8825 = vpop.f32.mrb[0].mxu0
      %v8826 = vadd.f32 0.0, %v8825
      %v8827 = vpop.f32.mrb[0].mxu0
      %8828 = vmatprep.mubr.f32.mxu0 0.0
      %8829 = vmatmul.mubr.f32.gmra.mrb[0].mxu0 %v2547
      %v8830 = vpop.f32.mrb[0].mxu0
      %v8831 = vadd.f32 0.0, %v8830
      %v8832 = vpop.f32.mrb[0].mxu0
      %8833 = vmatprep.mubr.f32.mxu0 0.0
      %8834 = vmatmul.mubr.f32.gmra.mrb[0].mxu0 %v2549
      %v8835 = vpop.f32.mrb[0].mxu0
      %v8836 = vadd.f32 0.0, %v8835
      %v8837 = vpop.f32.mrb[0].mxu0
      %8838 = vmatprep.mubr.f32.mxu0 0.0
      %8839 = vmatmul.mubr.f32.gmra.mrb[0].mxu0 %v2551
      %v8840 = vpop.f32.mrb[0].mxu0
      %v8841 = vadd.f32 0.0, %v8840
      %v8842 = vpop.f32.mrb[0].mxu0
      %8843 = vmatprep.mubr.f32.mxu0 0.0
      %8844 = vmatmul.mubr.f32.gmra.mrb[0].mxu0 %v2553
      %v8845 = vpop.f32.mrb[0].mxu0
      %v8846 = vadd.f32 0.0, %v8845
      %v8847 = vpop.f32.mrb[0].mxu0
      %8848 = vmatprep.mubr.f32.mxu0 0.0
      %8849 = vmatmul.mubr.f32.gmra.mrb[0].mxu0 %v2555
      %v8850 = vpop.f32.mrb[0].mxu0
      %v8851 = vadd.f32 0.0, %v8850
      %v8852 = vpop.f32.mrb[0].mxu0
      %8853 = vmatprep.mubr.f32.mxu0 0.0
      %8854 = vmatmul.mubr.f32.gmra.mrb[0].mxu0 %v2557
      %v8855 = vpop.f32.mrb[0].mxu0
      %v8856 = vadd.f32 0.0, %v8855
      %v8857 = vpop.f32.mrb[0].mxu0
      %8858 = vmatprep.mubr.f32.mxu0 0.0
      %8859 = vmatmul.mubr.f32.gmra.mrb[0].mxu0 %v2559
      %v8860 = vpop.f32.mrb[0].mxu0
      %v8861 = vadd.f32 0.0, %v8860
      %v8862 = vpop.f32.mrb[0].mxu0
      %8863 = vmatprep.mubr.f32.mxu0 0.0
      %8864 = vmatmul.mubr.f32.gmra.mrb[0].mxu0 %v2561
      %v8865 = vpop.f32.mrb[0].mxu0
      %v8866 = vadd.f32 0.0, %v8865
      %v8867 = vpop.f32.mrb[0].mxu0
      %8868 = vmatprep.mubr.f32.mxu0 0.0
      %8869 = vmatmul.mubr.f32.gmra.mrb[0].mxu0 %v2563
      %v8870 = vpop.f32.mrb[0].mxu0
      %v8871 = vadd.f32 0.0, %v8870
      %v8872 = vpop.f32.mrb[0].mxu0
      %8873 = vmatprep.mubr.f32.mxu0 0.0
      %8874 = vmatmul.mubr.f32.gmra.mrb[0].mxu0 %v2565
      %v8875 = vpop.f32.mrb[0].mxu0
      %v8876 = vadd.f32 0.0, %v8875
      %v8877 = vpop.f32.mrb[0].mxu0
      %8878 = vmatprep.mubr.f32.mxu0 0.0
      %8879 = vmatmul.mubr.f32.gmra.mrb[0].mxu0 %v2567
      %v8880 = vpop.f32.mrb[0].mxu0
      %v8881 = vadd.f32 0.0, %v8880
      %v8882 = vpop.f32.mrb[0].mxu0
      %8883 = vmatprep.mubr.f32.mxu0 0.0
      %8884 = vmatmul.mubr.f32.gmra.mrb[0].mxu0 %v2569
      %v8885 = vpop.f32.mrb[0].mxu0
      %v8886 = vadd.f32 0.0, %v8885
      %v8887 = vpop.f32.mrb[0].mxu0
      %8888 = vmatprep.mubr.f32.mxu0 0.0
      %8889 = vmatmul.mubr.f32.gmra.mrb[0].mxu0 %v2571
      %v8890 = vpop.f32.mrb[0].mxu0
      %v8891 = vadd.f32 0.0, %v8890
      %v8892 = vpop.f32.mrb[0].mxu0
      %8893 = vmatprep.mubr.f32.mxu0 0.0
      %8894 = vmatmul.mubr.f32.gmra.mrb[0].mxu0 %v2573
      %v8895 = vpop.f32.mrb[0].mxu0
      %v8896 = vadd.f32 0.0, %v8895
      %v8897 = vpop.f32.mrb[0].mxu0
      %8898 = vmatprep.mubr.f32.mxu0 0.0
      %8899 = vmatmul.mubr.f32.gmra.mrb[0].mxu0 %v2575
      %v8900 = vpop.f32.mrb[0].mxu0
      %v8901 = vadd.f32 0.0, %v8900
      %v8902 = vpop.f32.mrb[0].mxu0
      %8903 = vmatprep.mubr.f32.mxu0 0.0
      %8904 = vmatmul.mubr.f32.gmra.mrb[0].mxu0 %v2577
      %v8905 = vpop.f32.mrb[0].mxu0
      %v8906 = vadd.f32 0.0, %v8905
      %v8907 = vpop.f32.mrb[0].mxu0
      %8908 = vmatprep.mubr.f32.mxu0 0.0
      %8909 = vmatmul.mubr.f32.gmra.mrb[0].mxu0 %v2579
      %v8910 = vpop.f32.mrb[0].mxu0
      %v8911 = vadd.f32 0.0, %v8910
      %v8912 = vpop.f32.mrb[0].mxu0
      %8913 = vmatprep.mubr.f32.mxu0 0.0
      %8914 = vmatmul.mubr.f32.gmra.mrb[0].mxu0 %v2581
      %v8915 = vpop.f32.mrb[0].mxu0
      %v8916 = vadd.f32 0.0, %v8915
      %v8917 = vpop.f32.mrb[0].mxu0
      %8918 = vmatprep.mubr.f32.mxu0 0.0
      %8919 = vmatmul.mubr.f32.gmra.mrb[0].mxu0 %v2583
      %v8920 = vpop.f32.mrb[0].mxu0
      %v8921 = vadd.f32 0.0, %v8920
      %v8922 = vpop.f32.mrb[0].mxu0
      %8923 = vmatprep.mubr.f32.mxu0 0.0
      %8924 = vmatmul.mubr.f32.gmra.mrb[0].mxu0 %v2585
      %v8925 = vpop.f32.mrb[0].mxu0
      %v8926 = vadd.f32 0.0, %v8925
      %v8927 = vpop.f32.mrb[0].mxu0
      %8928 = vmatprep.mubr.f32.mxu0 0.0
      %8929 = vmatmul.mubr.f32.gmra.mrb[0].mxu0 %v2587
      %v8930 = vpop.f32.mrb[0].mxu0
      %v8931 = vadd.f32 0.0, %v8930
      %v8932 = vpop.f32.mrb[0].mxu0
      %8933 = vmatprep.mubr.f32.mxu0 0.0
      %8934 = vmatmul.mubr.f32.gmra.mrb[0].mxu0 %v2589
      %v8935 = vpop.f32.mrb[0].mxu0
      %v8936 = vadd.f32 0.0, %v8935
      %v8937 = vpop.f32.mrb[0].mxu0
      %8938 = vmatprep.mubr.f32.mxu0 0.0
      %8939 = vmatmul.mubr.f32.gmra.mrb[0].mxu0 %v2591
      %v8940 = vpop.f32.mrb[0].mxu0
      %v8941 = vadd.f32 0.0, %v8940
      %v8942 = vpop.f32.mrb[0].mxu0
      %8943 = vmatprep.mubr.f32.mxu0 0.0
      %8944 = vmatmul.mubr.f32.gmra.mrb[0].mxu0 %v2593
      %v8945 = vpop.f32.mrb[0].mxu0
      %v8946 = vadd.f32 0.0, %v8945
      %v8947 = vpop.f32.mrb[0].mxu0
      %8948 = vmatprep.mubr.f32.mxu0 0.0
      %8949 = vmatmul.mubr.f32.gmra.mrb[0].mxu0 %v2595
      %v8950 = vpop.f32.mrb[0].mxu0
      %v8951 = vadd.f32 0.0, %v8950
      %v8952 = vpop.f32.mrb[0].mxu0
      %8953 = vmatprep.mubr.f32.mxu0 0.0
      %8954 = vmatmul.mubr.f32.gmra.mrb[0].mxu0 %v2597
      %v8955 = vpop.f32.mrb[0].mxu0
      %v8956 = vadd.f32 0.0, %v8955
      %v8957 = vpop.f32.mrb[0].mxu0
      %8958 = vmatprep.mubr.f32.mxu0 0.0
      %8959 = vmatmul.mubr.f32.gmra.mrb[0].mxu0 %v2599
      %v8960 = vpop.f32.mrb[0].mxu0
      %v8961 = vadd.f32 0.0, %v8960
      %v8962 = vpop.f32.mrb[0].mxu0
      %8963 = vmatprep.mubr.f32.mxu0 0.0
      %8964 = vmatmul.mubr.f32.gmra.mrb[0].mxu0 %v2601
      %v8965 = vpop.f32.mrb[0].mxu0
      %v8966 = vadd.f32 0.0, %v8965
      %v8967 = vpop.f32.mrb[0].mxu0
      %8968 = vmatprep.mubr.f32.mxu0 0.0
      %8969 = vmatmul.mubr.f32.gmra.mrb[0].mxu0 %v2603
      %v8970 = vpop.f32.mrb[0].mxu0
      %v8971 = vadd.f32 0.0, %v8970
      %v8972 = vpop.f32.mrb[0].mxu0
      %8973 = vmatprep.mubr.f32.mxu0 0.0
      %8974 = vmatmul.mubr.f32.gmra.mrb[0].mxu0 %v2605
      %v8975 = vpop.f32.mrb[0].mxu0
      %v8976 = vadd.f32 0.0, %v8975
      %v8977 = vpop.f32.mrb[0].mxu0
      %8978 = vmatprep.mubr.f32.mxu0 0.0
      %8979 = vmatmul.mubr.f32.gmra.mrb[0].mxu0 %v2607
      %v8980 = vpop.f32.mrb[0].mxu0
      %v8981 = vadd.f32 0.0, %v8980
      %v8982 = vpop.f32.mrb[0].mxu0
      %8983 = vmatprep.mubr.f32.mxu0 0.0
      %8984 = vmatmul.mubr.f32.gmra.mrb[0].mxu0 %v2609
      %v8985 = vpop.f32.mrb[0].mxu0
      %v8986 = vadd.f32 0.0, %v8985
      %v8987 = vpop.f32.mrb[0].mxu0
      %8988 = vmatprep.mubr.f32.mxu0 0.0
      %8989 = vmatmul.mubr.f32.gmra.mrb[0].mxu0 %v2611
      %v8990 = vpop.f32.mrb[0].mxu0
      %v8991 = vadd.f32 0.0, %v8990
      %v8992 = vpop.f32.mrb[0].mxu0
      %8993 = vmatprep.mubr.f32.mxu0 0.0
      %8994 = vmatmul.mubr.f32.gmra.mrb[0].mxu0 %v2613
      %v8995 = vpop.f32.mrb[0].mxu0
      %v8996 = vadd.f32 0.0, %v8995
      %v8997 = vpop.f32.mrb[0].mxu0
      %8998 = vmatprep.mubr.f32.mxu0 0.0
      %8999 = vmatmul.mubr.f32.gmra.mrb[0].mxu0 %v2615
      %v9000 = vpop.f32.mrb[0].mxu0
      %v9001 = vadd.f32 0.0, %v9000
      %v9002 = vpop.f32.mrb[0].mxu0
      %9003 = vmatprep.mubr.f32.mxu0 0.0
      %9004 = vmatmul.mubr.f32.gmra.mrb[0].mxu0 %v2617
      %v9005 = vpop.f32.mrb[0].mxu0
      %v9006 = vadd.f32 0.0, %v9005
      %v9007 = vpop.f32.mrb[0].mxu0
      %9008 = vmatprep.mubr.f32.mxu0 0.0
      %9009 = vmatmul.mubr.f32.gmra.mrb[0].mxu0 %v2619
      %v9010 = vpop.f32.mrb[0].mxu0
      %v9011 = vadd.f32 0.0, %v9010
      %v9012 = vpop.f32.mrb[0].mxu0
      %9013 = vmatprep.mubr.f32.mxu0 0.0
      %9014 = vmatmul.mubr.f32.gmra.mrb[0].mxu0 %v2621
      %v9015 = vpop.f32.mrb[0].mxu0
      %v9016 = vadd.f32 0.0, %v9015
      %v9017 = vpop.f32.mrb[0].mxu0
      %9018 = vmatprep.mubr.f32.mxu0 0.0
      %9019 = vmatmul.mubr.f32.gmra.mrb[0].mxu0 %v2623
      %v9020 = vpop.f32.mrb[0].mxu0
      %v9021 = vadd.f32 0.0, %v9020
      %v9022 = vpop.f32.mrb[0].mxu0
      %9023 = vmatprep.mubr.f32.mxu0 0.0
      %9024 = vmatmul.mubr.f32.gmra.mrb[0].mxu0 %v2625
      %v9025 = vpop.f32.mrb[0].mxu0
      %v9026 = vadd.f32 0.0, %v9025
      %v9027 = vpop.f32.mrb[0].mxu0
      %9028 = vmatprep.mubr.f32.mxu0 0.0
      %9029 = vmatmul.mubr.f32.gmra.mrb[0].mxu0 %v2627
      %v9030 = vpop.f32.mrb[0].mxu0
      %v9031 = vadd.f32 0.0, %v9030
      %v9032 = vpop.f32.mrb[0].mxu0
      %9033 = vmatprep.mubr.f32.mxu0 0.0
      %9034 = vmatmul.mubr.f32.gmra.mrb[0].mxu0 %v2629
      %v9035 = vpop.f32.mrb[0].mxu0
      %v9036 = vadd.f32 0.0, %v9035
      %v9037 = vpop.f32.mrb[0].mxu0
      %9038 = vmatprep.mubr.f32.mxu0 0.0
      %9039 = vmatmul.mubr.f32.gmra.mrb[0].mxu0 %v2631
      %v9040 = vpop.f32.mrb[0].mxu0
      %v9041 = vadd.f32 0.0, %v9040
      %v9042 = vpop.f32.mrb[0].mxu0
      %9043 = vmatprep.mubr.f32.mxu0 0.0
      %9044 = vmatmul.mubr.f32.gmra.mrb[0].mxu0 %v2633
      %v9045 = vpop.f32.mrb[0].mxu0
      %v9046 = vadd.f32 0.0, %v9045
      %v9047 = vpop.f32.mrb[0].mxu0
      %9048 = vmatprep.mubr.f32.mxu0 0.0
      %9049 = vmatmul.mubr.f32.gmra.mrb[0].mxu0 %v2635
      %v9050 = vpop.f32.mrb[0].mxu0
      %v9051 = vadd.f32 0.0, %v9050
      %v9052 = vpop.f32.mrb[0].mxu0
      %9053 = vmatprep.mubr.f32.mxu0 0.0
      %9054 = vmatmul.mubr.f32.gmra.mrb[0].mxu0 %v2637
      %v9055 = vpop.f32.mrb[0].mxu0
      %v9056 = vadd.f32 0.0, %v9055
      %v9057 = vpop.f32.mrb[0].mxu0
      %9058 = vmatprep.mubr.f32.mxu0 0.0
      %9059 = vmatmul.mubr.f32.gmra.mrb[0].mxu0 %v2639
      %v9060 = vpop.f32.mrb[0].mxu0
      %v9061 = vadd.f32 0.0, %v9060
      %v9062 = vpop.f32.mrb[0].mxu0
      %9063 = vmatprep.mubr.f32.mxu0 0.0
      %9064 = vmatmul.mubr.f32.gmra.mrb[0].mxu0 %v5951
      %v9065 = vpop.f32.mrb[0].mxu0
      %v9066 = vadd.f32 0.0, %v9065
      %v9067 = vpop.f32.mrb[0].mxu0
      %9068 = vmatprep.mubr.f32.mxu0 0.0
      %9069 = vmatmul.mubr.f32.gmra.mrb[0].mxu0 %v5953
      %v9070 = vpop.f32.mrb[0].mxu0
      %v9071 = vadd.f32 0.0, %v9070
      %v9072 = vpop.f32.mrb[0].mxu0
      %9073 = vmatprep.mubr.f32.mxu0 0.0
      %9074 = vmatmul.mubr.f32.gmra.mrb[0].mxu0 %v8692
      %v9075 = vpop.f32.mrb[0].mxu0
      %v9076 = vadd.f32 0.0, %v9075
      %v9077 = vpop.f32.mrb[0].mxu0
      %9078 = vmatprep.mubr.f32.mxu0 0.0
      %9079 = vmatmul.mubr.f32.gmra.mrb[0].mxu0 %v8694
      %v9080 = vpop.f32.mrb[0].mxu0
      %v9081 = vadd.f32 0.0, %v9080
      %v9082 = vpop.f32.mrb[0].mxu0
      %9083 = vdwg.mxu0
      %v9084 = vadd.f32 %v8626, %v8766
      %v9085 = vadd.f32 %v8627, %v8771
      %v9086 = vadd.f32 %v8628, %v8776
      %v9087 = vadd.f32 %v8629, %v8781
      %v9088 = vadd.f32 %v8630, %v8786
      %v9089 = vadd.f32 %v8631, %v8791
      %v9090 = vadd.f32 %v8632, %v8796
      %v9091 = vadd.f32 %v8633, %v8801
      %v9092 = vadd.f32 %v8634, %v8806
      %v9093 = vadd.f32 %v8635, %v8811
      %v9094 = vadd.f32 %v8636, %v8816
      %v9095 = vadd.f32 %v8637, %v8821
      %v9096 = vadd.f32 %v8638, %v8826
      %v9097 = vadd.f32 %v8639, %v8831
      %v9098 = vadd.f32 %v8640, %v8836
      %v9099 = vadd.f32 %v8641, %v8841
      %v9100 = vadd.f32 %v8642, %v8846
      %v9101 = vadd.f32 %v8643, %v8851
      %v9102 = vadd.f32 %v8644, %v8856
      %v9103 = vadd.f32 %v8645, %v8861
      %v9104 = vadd.f32 %v8646, %v8866
      %v9105 = vadd.f32 %v8647, %v8871
      %v9106 = vadd.f32 %v8648, %v8876
      %v9107 = vadd.f32 %v8649, %v8881
      %v9108 = vadd.f32 %v8650, %v8886
      %v9109 = vadd.f32 %v8651, %v8891
      %v9110 = vadd.f32 %v8652, %v8896
      %v9111 = vadd.f32 %v8653, %v8901
      %v9112 = vadd.f32 %v8654, %v8906
      %v9113 = vadd.f32 %v8655, %v8911
      %v9114 = vadd.f32 %v8656, %v8916
      %v9115 = vadd.f32 %v8657, %v8921
      %v9116 = vadd.f32 %v8658, %v8926
      %v9117 = vadd.f32 %v8659, %v8931
      %v9118 = vadd.f32 %v8660, %v8936
      %v9119 = vadd.f32 %v8661, %v8941
      %v9120 = vadd.f32 %v8662, %v8946
      %v9121 = vadd.f32 %v8663, %v8951
      %v9122 = vadd.f32 %v8664, %v8956
      %v9123 = vadd.f32 %v8665, %v8961
      %v9124 = vadd.f32 %v8666, %v8966
      %v9125 = vadd.f32 %v8667, %v8971
      %v9126 = vadd.f32 %v8668, %v8976
      %v9127 = vadd.f32 %v8669, %v8981
      %v9128 = vadd.f32 %v8670, %v8986
      %v9129 = vadd.f32 %v8671, %v8991
      %v9130 = vadd.f32 %v8672, %v8996
      %v9131 = vadd.f32 %v8673, %v9001
      %v9132 = vadd.f32 %v8674, %v9006
      %v9133 = vadd.f32 %v8675, %v9011
      %v9134 = vadd.f32 %v8676, %v9016
      %v9135 = vadd.f32 %v8677, %v9021
      %v9136 = vadd.f32 %v8678, %v9026
      %v9137 = vadd.f32 %v8679, %v9031
      %v9138 = vadd.f32 %v8680, %v9036
      %v9139 = vadd.f32 %v8681, %v9041
      %v9140 = vadd.f32 %v8682, %v9046
      %v9141 = vadd.f32 %v8683, %v9051
      %v9142 = vadd.f32 %v8684, %v9056
      %v9143 = vadd.f32 %v8685, %v9061
      %v9144 = vadd.f32 %v8686, %v9066
      %v9145 = vadd.f32 %v8687, %v9071
      %v9146 = vadd.f32 %v8688, %v9076
      %v9147 = vadd.f32 %v8689, %v9081
      %s9148 = scalar_lea.vmem %s1, 32
      %v9149 = vld [vmem:[%s9148] sm:$0xf]
      %v9150 = vsel %vm2512, %v8221, 0
      %v9152 = vsel %vm2512, %v8223, 0
      %v9155 = vsel %vm2641, %v9149, 0
      %9157 = vmatprep.subr.mxu0 0.0
      %9158 = vmatpush1.msra.mxu0 %v9155
      %9159 = vmatprep.subr.mxu0 0.0
      %9160 = vmatpush1.msra.mxu0 0.0
      %9161 = vmatprep.subr.mxu0 0.0
      %9162 = vmatpush1.msra.mxu0 0.0
      %9163 = vmatprep.subr.mxu0 0.0
      %9164 = vmatpush1.msra.mxu0 0.0
      %9165 = vmatprep.subr.mxu0 0.0
      %9166 = vmatpush1.msra.mxu0 0.0
      %9167 = vmatprep.subr.mxu0 0.0
      %9168 = vmatpush1.msra.mxu0 0.0
      %9169 = vmatprep.subr.mxu0 0.0
      %9170 = vmatpush1.msra.mxu0 0.0
      %9171 = vmatprep.subr.mxu0 0.0
      %9172 = vmatpush1.msra.mxu0 0.0
      %9173 = vmatprep.subr.mxu0 0.0
      %9174 = vmatpush1.msra.mxu0 0.0
      %9175 = vmatprep.subr.mxu0 0.0
      %9176 = vmatpush1.msra.mxu0 0.0
      %9177 = vmatprep.subr.mxu0 0.0
      %9178 = vmatpush1.msra.mxu0 0.0
      %9179 = vmatprep.subr.mxu0 0.0
      %9180 = vmatpush1.msra.mxu0 0.0
      %9181 = vmatprep.subr.mxu0 0.0
      %9182 = vmatpush1.msra.mxu0 0.0
      %9183 = vmatprep.subr.mxu0 0.0
      %9184 = vmatpush1.msra.mxu0 0.0
      %9185 = vmatprep.subr.mxu0 0.0
      %9186 = vmatpush1.msra.mxu0 0.0
      %9187 = vmatprep.subr.mxu0 0.0
      %9188 = vmatpush1.msra.mxu0 0.0
      %9189 = vmatprep.subr.mxu0 0.0
      %9190 = vmatpush1.msra.mxu0 0.0
      %9191 = vmatprep.subr.mxu0 0.0
      %9192 = vmatpush1.msra.mxu0 0.0
      %9193 = vmatprep.subr.mxu0 0.0
      %9194 = vmatpush1.msra.mxu0 0.0
      %9195 = vmatprep.subr.mxu0 0.0
      %9196 = vmatpush1.msra.mxu0 0.0
      %9197 = vmatprep.subr.mxu0 0.0
      %9198 = vmatpush1.msra.mxu0 0.0
      %9199 = vmatprep.subr.mxu0 0.0
      %9200 = vmatpush1.msra.mxu0 0.0
      %9201 = vmatprep.subr.mxu0 0.0
      %9202 = vmatpush1.msra.mxu0 0.0
      %9203 = vmatprep.subr.mxu0 0.0
      %9204 = vmatpush1.msra.mxu0 0.0
      %9205 = vmatprep.subr.mxu0 0.0
      %9206 = vmatpush1.msra.mxu0 0.0
      %9207 = vmatprep.subr.mxu0 0.0
      %9208 = vmatpush1.msra.mxu0 0.0
      %9209 = vmatprep.subr.mxu0 0.0
      %9210 = vmatpush1.msra.mxu0 0.0
      %9211 = vmatprep.subr.mxu0 0.0
      %9212 = vmatpush1.msra.mxu0 0.0
      %9213 = vmatprep.subr.mxu0 0.0
      %9214 = vmatpush1.msra.mxu0 0.0
      %9215 = vmatprep.subr.mxu0 0.0
      %9216 = vmatpush1.msra.mxu0 0.0
      %9217 = vmatprep.subr.mxu0 0.0
      %9218 = vmatpush1.msra.mxu0 0.0
      %9219 = vmatprep.subr.mxu0 0.0
      %9220 = vmatpush1.msra.mxu0 0.0
      %9221 = vmatprep.mubr.f32.mxu0 0.0
      %9222 = vmatmul.mubr.f32.gmra.mrb[0].mxu0 %v3556
      %v9223 = vpop.f32.mrb[0].mxu0
      %v9224 = vadd.f32 0.0, %v9223
      %v9225 = vpop.f32.mrb[0].mxu0
      %9226 = vmatprep.mubr.f32.mxu0 0.0
      %9227 = vmatmul.mubr.f32.gmra.mrb[0].mxu0 %v3558
      %v9228 = vpop.f32.mrb[0].mxu0
      %v9229 = vadd.f32 0.0, %v9228
      %v9230 = vpop.f32.mrb[0].mxu0
      %9231 = vmatprep.mubr.f32.mxu0 0.0
      %9232 = vmatmul.mubr.f32.gmra.mrb[0].mxu0 %v3560
      %v9233 = vpop.f32.mrb[0].mxu0
      %v9234 = vadd.f32 0.0, %v9233
      %v9235 = vpop.f32.mrb[0].mxu0
      %9236 = vmatprep.mubr.f32.mxu0 0.0
      %9237 = vmatmul.mubr.f32.gmra.mrb[0].mxu0 %v3562
      %v9238 = vpop.f32.mrb[0].mxu0
      %v9239 = vadd.f32 0.0, %v9238
      %v9240 = vpop.f32.mrb[0].mxu0
      %9241 = vmatprep.mubr.f32.mxu0 0.0
      %9242 = vmatmul.mubr.f32.gmra.mrb[0].mxu0 %v3564
      %v9243 = vpop.f32.mrb[0].mxu0
      %v9244 = vadd.f32 0.0, %v9243
      %v9245 = vpop.f32.mrb[0].mxu0
      %9246 = vmatprep.mubr.f32.mxu0 0.0
      %9247 = vmatmul.mubr.f32.gmra.mrb[0].mxu0 %v3566
      %v9248 = vpop.f32.mrb[0].mxu0
      %v9249 = vadd.f32 0.0, %v9248
      %v9250 = vpop.f32.mrb[0].mxu0
      %9251 = vmatprep.mubr.f32.mxu0 0.0
      %9252 = vmatmul.mubr.f32.gmra.mrb[0].mxu0 %v3568
      %v9253 = vpop.f32.mrb[0].mxu0
      %v9254 = vadd.f32 0.0, %v9253
      %v9255 = vpop.f32.mrb[0].mxu0
      %9256 = vmatprep.mubr.f32.mxu0 0.0
      %9257 = vmatmul.mubr.f32.gmra.mrb[0].mxu0 %v3570
      %v9258 = vpop.f32.mrb[0].mxu0
      %v9259 = vadd.f32 0.0, %v9258
      %v9260 = vpop.f32.mrb[0].mxu0
      %9261 = vmatprep.mubr.f32.mxu0 0.0
      %9262 = vmatmul.mubr.f32.gmra.mrb[0].mxu0 %v3572
      %v9263 = vpop.f32.mrb[0].mxu0
      %v9264 = vadd.f32 0.0, %v9263
      %v9265 = vpop.f32.mrb[0].mxu0
      %9266 = vmatprep.mubr.f32.mxu0 0.0
      %9267 = vmatmul.mubr.f32.gmra.mrb[0].mxu0 %v3574
      %v9268 = vpop.f32.mrb[0].mxu0
      %v9269 = vadd.f32 0.0, %v9268
      %v9270 = vpop.f32.mrb[0].mxu0
      %9271 = vmatprep.mubr.f32.mxu0 0.0
      %9272 = vmatmul.mubr.f32.gmra.mrb[0].mxu0 %v3576
      %v9273 = vpop.f32.mrb[0].mxu0
      %v9274 = vadd.f32 0.0, %v9273
      %v9275 = vpop.f32.mrb[0].mxu0
      %9276 = vmatprep.mubr.f32.mxu0 0.0
      %9277 = vmatmul.mubr.f32.gmra.mrb[0].mxu0 %v3578
      %v9278 = vpop.f32.mrb[0].mxu0
      %v9279 = vadd.f32 0.0, %v9278
      %v9280 = vpop.f32.mrb[0].mxu0
      %9281 = vmatprep.mubr.f32.mxu0 0.0
      %9282 = vmatmul.mubr.f32.gmra.mrb[0].mxu0 %v3580
      %v9283 = vpop.f32.mrb[0].mxu0
      %v9284 = vadd.f32 0.0, %v9283
      %v9285 = vpop.f32.mrb[0].mxu0
      %9286 = vmatprep.mubr.f32.mxu0 0.0
      %9287 = vmatmul.mubr.f32.gmra.mrb[0].mxu0 %v3582
      %v9288 = vpop.f32.mrb[0].mxu0
      %v9289 = vadd.f32 0.0, %v9288
      %v9290 = vpop.f32.mrb[0].mxu0
      %9291 = vmatprep.mubr.f32.mxu0 0.0
      %9292 = vmatmul.mubr.f32.gmra.mrb[0].mxu0 %v3584
      %v9293 = vpop.f32.mrb[0].mxu0
      %v9294 = vadd.f32 0.0, %v9293
      %v9295 = vpop.f32.mrb[0].mxu0
      %9296 = vmatprep.mubr.f32.mxu0 0.0
      %9297 = vmatmul.mubr.f32.gmra.mrb[0].mxu0 %v3586
      %v9298 = vpop.f32.mrb[0].mxu0
      %v9299 = vadd.f32 0.0, %v9298
      %v9300 = vpop.f32.mrb[0].mxu0
      %9301 = vmatprep.mubr.f32.mxu0 0.0
      %9302 = vmatmul.mubr.f32.gmra.mrb[0].mxu0 %v3588
      %v9303 = vpop.f32.mrb[0].mxu0
      %v9304 = vadd.f32 0.0, %v9303
      %v9305 = vpop.f32.mrb[0].mxu0
      %9306 = vmatprep.mubr.f32.mxu0 0.0
      %9307 = vmatmul.mubr.f32.gmra.mrb[0].mxu0 %v3590
      %v9308 = vpop.f32.mrb[0].mxu0
      %v9309 = vadd.f32 0.0, %v9308
      %v9310 = vpop.f32.mrb[0].mxu0
      %9311 = vmatprep.mubr.f32.mxu0 0.0
      %9312 = vmatmul.mubr.f32.gmra.mrb[0].mxu0 %v3592
      %v9313 = vpop.f32.mrb[0].mxu0
      %v9314 = vadd.f32 0.0, %v9313
      %v9315 = vpop.f32.mrb[0].mxu0
      %9316 = vmatprep.mubr.f32.mxu0 0.0
      %9317 = vmatmul.mubr.f32.gmra.mrb[0].mxu0 %v3594
      %v9318 = vpop.f32.mrb[0].mxu0
      %v9319 = vadd.f32 0.0, %v9318
      %v9320 = vpop.f32.mrb[0].mxu0
      %9321 = vmatprep.mubr.f32.mxu0 0.0
      %9322 = vmatmul.mubr.f32.gmra.mrb[0].mxu0 %v3596
      %v9323 = vpop.f32.mrb[0].mxu0
      %v9324 = vadd.f32 0.0, %v9323
      %v9325 = vpop.f32.mrb[0].mxu0
      %9326 = vmatprep.mubr.f32.mxu0 0.0
      %9327 = vmatmul.mubr.f32.gmra.mrb[0].mxu0 %v3598
      %v9328 = vpop.f32.mrb[0].mxu0
      %v9329 = vadd.f32 0.0, %v9328
      %v9330 = vpop.f32.mrb[0].mxu0
      %9331 = vmatprep.mubr.f32.mxu0 0.0
      %9332 = vmatmul.mubr.f32.gmra.mrb[0].mxu0 %v3600
      %v9333 = vpop.f32.mrb[0].mxu0
      %v9334 = vadd.f32 0.0, %v9333
      %v9335 = vpop.f32.mrb[0].mxu0
      %9336 = vmatprep.mubr.f32.mxu0 0.0
      %9337 = vmatmul.mubr.f32.gmra.mrb[0].mxu0 %v3602
      %v9338 = vpop.f32.mrb[0].mxu0
      %v9339 = vadd.f32 0.0, %v9338
      %v9340 = vpop.f32.mrb[0].mxu0
      %9341 = vmatprep.mubr.f32.mxu0 0.0
      %9342 = vmatmul.mubr.f32.gmra.mrb[0].mxu0 %v3604
      %v9343 = vpop.f32.mrb[0].mxu0
      %v9344 = vadd.f32 0.0, %v9343
      %v9345 = vpop.f32.mrb[0].mxu0
      %9346 = vmatprep.mubr.f32.mxu0 0.0
      %9347 = vmatmul.mubr.f32.gmra.mrb[0].mxu0 %v3606
      %v9348 = vpop.f32.mrb[0].mxu0
      %v9349 = vadd.f32 0.0, %v9348
      %v9350 = vpop.f32.mrb[0].mxu0
      %9351 = vmatprep.mubr.f32.mxu0 0.0
      %9352 = vmatmul.mubr.f32.gmra.mrb[0].mxu0 %v3608
      %v9353 = vpop.f32.mrb[0].mxu0
      %v9354 = vadd.f32 0.0, %v9353
      %v9355 = vpop.f32.mrb[0].mxu0
      %9356 = vmatprep.mubr.f32.mxu0 0.0
      %9357 = vmatmul.mubr.f32.gmra.mrb[0].mxu0 %v3610
      %v9358 = vpop.f32.mrb[0].mxu0
      %v9359 = vadd.f32 0.0, %v9358
      %v9360 = vpop.f32.mrb[0].mxu0
      %9361 = vmatprep.mubr.f32.mxu0 0.0
      %9362 = vmatmul.mubr.f32.gmra.mrb[0].mxu0 %v3612
      %v9363 = vpop.f32.mrb[0].mxu0
      %v9364 = vadd.f32 0.0, %v9363
      %v9365 = vpop.f32.mrb[0].mxu0
      %9366 = vmatprep.mubr.f32.mxu0 0.0
      %9367 = vmatmul.mubr.f32.gmra.mrb[0].mxu0 %v3614
      %v9368 = vpop.f32.mrb[0].mxu0
      %v9369 = vadd.f32 0.0, %v9368
      %v9370 = vpop.f32.mrb[0].mxu0
      %9371 = vmatprep.mubr.f32.mxu0 0.0
      %9372 = vmatmul.mubr.f32.gmra.mrb[0].mxu0 %v3616
      %v9373 = vpop.f32.mrb[0].mxu0
      %v9374 = vadd.f32 0.0, %v9373
      %v9375 = vpop.f32.mrb[0].mxu0
      %9376 = vmatprep.mubr.f32.mxu0 0.0
      %9377 = vmatmul.mubr.f32.gmra.mrb[0].mxu0 %v3618
      %v9378 = vpop.f32.mrb[0].mxu0
      %v9379 = vadd.f32 0.0, %v9378
      %v9380 = vpop.f32.mrb[0].mxu0
      %9381 = vmatprep.mubr.f32.mxu0 0.0
      %9382 = vmatmul.mubr.f32.gmra.mrb[0].mxu0 %v3620
      %v9383 = vpop.f32.mrb[0].mxu0
      %v9384 = vadd.f32 0.0, %v9383
      %v9385 = vpop.f32.mrb[0].mxu0
      %9386 = vmatprep.mubr.f32.mxu0 0.0
      %9387 = vmatmul.mubr.f32.gmra.mrb[0].mxu0 %v3622
      %v9388 = vpop.f32.mrb[0].mxu0
      %v9389 = vadd.f32 0.0, %v9388
      %v9390 = vpop.f32.mrb[0].mxu0
      %9391 = vmatprep.mubr.f32.mxu0 0.0
      %9392 = vmatmul.mubr.f32.gmra.mrb[0].mxu0 %v3624
      %v9393 = vpop.f32.mrb[0].mxu0
      %v9394 = vadd.f32 0.0, %v9393
      %v9395 = vpop.f32.mrb[0].mxu0
      %9396 = vmatprep.mubr.f32.mxu0 0.0
      %9397 = vmatmul.mubr.f32.gmra.mrb[0].mxu0 %v3626
      %v9398 = vpop.f32.mrb[0].mxu0
      %v9399 = vadd.f32 0.0, %v9398
      %v9400 = vpop.f32.mrb[0].mxu0
      %9401 = vmatprep.mubr.f32.mxu0 0.0
      %9402 = vmatmul.mubr.f32.gmra.mrb[0].mxu0 %v3628
      %v9403 = vpop.f32.mrb[0].mxu0
      %v9404 = vadd.f32 0.0, %v9403
      %v9405 = vpop.f32.mrb[0].mxu0
      %9406 = vmatprep.mubr.f32.mxu0 0.0
      %9407 = vmatmul.mubr.f32.gmra.mrb[0].mxu0 %v3630
      %v9408 = vpop.f32.mrb[0].mxu0
      %v9409 = vadd.f32 0.0, %v9408
      %v9410 = vpop.f32.mrb[0].mxu0
      %9411 = vmatprep.mubr.f32.mxu0 0.0
      %9412 = vmatmul.mubr.f32.gmra.mrb[0].mxu0 %v3632
      %v9413 = vpop.f32.mrb[0].mxu0
      %v9414 = vadd.f32 0.0, %v9413
      %v9415 = vpop.f32.mrb[0].mxu0
      %9416 = vmatprep.mubr.f32.mxu0 0.0
      %9417 = vmatmul.mubr.f32.gmra.mrb[0].mxu0 %v3634
      %v9418 = vpop.f32.mrb[0].mxu0
      %v9419 = vadd.f32 0.0, %v9418
      %v9420 = vpop.f32.mrb[0].mxu0
      %9421 = vmatprep.mubr.f32.mxu0 0.0
      %9422 = vmatmul.mubr.f32.gmra.mrb[0].mxu0 %v3636
      %v9423 = vpop.f32.mrb[0].mxu0
      %v9424 = vadd.f32 0.0, %v9423
      %v9425 = vpop.f32.mrb[0].mxu0
      %9426 = vmatprep.mubr.f32.mxu0 0.0
      %9427 = vmatmul.mubr.f32.gmra.mrb[0].mxu0 %v3638
      %v9428 = vpop.f32.mrb[0].mxu0
      %v9429 = vadd.f32 0.0, %v9428
      %v9430 = vpop.f32.mrb[0].mxu0
      %9431 = vmatprep.mubr.f32.mxu0 0.0
      %9432 = vmatmul.mubr.f32.gmra.mrb[0].mxu0 %v3640
      %v9433 = vpop.f32.mrb[0].mxu0
      %v9434 = vadd.f32 0.0, %v9433
      %v9435 = vpop.f32.mrb[0].mxu0
      %9436 = vmatprep.mubr.f32.mxu0 0.0
      %9437 = vmatmul.mubr.f32.gmra.mrb[0].mxu0 %v3642
      %v9438 = vpop.f32.mrb[0].mxu0
      %v9439 = vadd.f32 0.0, %v9438
      %v9440 = vpop.f32.mrb[0].mxu0
      %9441 = vmatprep.mubr.f32.mxu0 0.0
      %9442 = vmatmul.mubr.f32.gmra.mrb[0].mxu0 %v3644
      %v9443 = vpop.f32.mrb[0].mxu0
      %v9444 = vadd.f32 0.0, %v9443
      %v9445 = vpop.f32.mrb[0].mxu0
      %9446 = vmatprep.mubr.f32.mxu0 0.0
      %9447 = vmatmul.mubr.f32.gmra.mrb[0].mxu0 %v3646
      %v9448 = vpop.f32.mrb[0].mxu0
      %v9449 = vadd.f32 0.0, %v9448
      %v9450 = vpop.f32.mrb[0].mxu0
      %9451 = vmatprep.mubr.f32.mxu0 0.0
      %9452 = vmatmul.mubr.f32.gmra.mrb[0].mxu0 %v3648
      %v9453 = vpop.f32.mrb[0].mxu0
      %v9454 = vadd.f32 0.0, %v9453
      %v9455 = vpop.f32.mrb[0].mxu0
      %9456 = vmatprep.mubr.f32.mxu0 0.0
      %9457 = vmatmul.mubr.f32.gmra.mrb[0].mxu0 %v3650
      %v9458 = vpop.f32.mrb[0].mxu0
      %v9459 = vadd.f32 0.0, %v9458
      %v9460 = vpop.f32.mrb[0].mxu0
      %9461 = vmatprep.mubr.f32.mxu0 0.0
      %9462 = vmatmul.mubr.f32.gmra.mrb[0].mxu0 %v3652
      %v9463 = vpop.f32.mrb[0].mxu0
      %v9464 = vadd.f32 0.0, %v9463
      %v9465 = vpop.f32.mrb[0].mxu0
      %9466 = vmatprep.mubr.f32.mxu0 0.0
      %9467 = vmatmul.mubr.f32.gmra.mrb[0].mxu0 %v3654
      %v9468 = vpop.f32.mrb[0].mxu0
      %v9469 = vadd.f32 0.0, %v9468
      %v9470 = vpop.f32.mrb[0].mxu0
      %9471 = vmatprep.mubr.f32.mxu0 0.0
      %9472 = vmatmul.mubr.f32.gmra.mrb[0].mxu0 %v3656
      %v9473 = vpop.f32.mrb[0].mxu0
      %v9474 = vadd.f32 0.0, %v9473
      %v9475 = vpop.f32.mrb[0].mxu0
      %9476 = vmatprep.mubr.f32.mxu0 0.0
      %9477 = vmatmul.mubr.f32.gmra.mrb[0].mxu0 %v3658
      %v9478 = vpop.f32.mrb[0].mxu0
      %v9479 = vadd.f32 0.0, %v9478
      %v9480 = vpop.f32.mrb[0].mxu0
      %9481 = vmatprep.mubr.f32.mxu0 0.0
      %9482 = vmatmul.mubr.f32.gmra.mrb[0].mxu0 %v3660
      %v9483 = vpop.f32.mrb[0].mxu0
      %v9484 = vadd.f32 0.0, %v9483
      %v9485 = vpop.f32.mrb[0].mxu0
      %9486 = vmatprep.mubr.f32.mxu0 0.0
      %9487 = vmatmul.mubr.f32.gmra.mrb[0].mxu0 %v3662
      %v9488 = vpop.f32.mrb[0].mxu0
      %v9489 = vadd.f32 0.0, %v9488
      %v9490 = vpop.f32.mrb[0].mxu0
      %9491 = vmatprep.mubr.f32.mxu0 0.0
      %9492 = vmatmul.mubr.f32.gmra.mrb[0].mxu0 %v3664
      %v9493 = vpop.f32.mrb[0].mxu0
      %v9494 = vadd.f32 0.0, %v9493
      %v9495 = vpop.f32.mrb[0].mxu0
      %9496 = vmatprep.mubr.f32.mxu0 0.0
      %9497 = vmatmul.mubr.f32.gmra.mrb[0].mxu0 %v3666
      %v9498 = vpop.f32.mrb[0].mxu0
      %v9499 = vadd.f32 0.0, %v9498
      %v9500 = vpop.f32.mrb[0].mxu0
      %9501 = vmatprep.mubr.f32.mxu0 0.0
      %9502 = vmatmul.mubr.f32.gmra.mrb[0].mxu0 %v3668
      %v9503 = vpop.f32.mrb[0].mxu0
      %v9504 = vadd.f32 0.0, %v9503
      %v9505 = vpop.f32.mrb[0].mxu0
      %9506 = vmatprep.mubr.f32.mxu0 0.0
      %9507 = vmatmul.mubr.f32.gmra.mrb[0].mxu0 %v3670
      %v9508 = vpop.f32.mrb[0].mxu0
      %v9509 = vadd.f32 0.0, %v9508
      %v9510 = vpop.f32.mrb[0].mxu0
      %9511 = vmatprep.mubr.f32.mxu0 0.0
      %9512 = vmatmul.mubr.f32.gmra.mrb[0].mxu0 %v3672
      %v9513 = vpop.f32.mrb[0].mxu0
      %v9514 = vadd.f32 0.0, %v9513
      %v9515 = vpop.f32.mrb[0].mxu0
      %9516 = vmatprep.mubr.f32.mxu0 0.0
      %9517 = vmatmul.mubr.f32.gmra.mrb[0].mxu0 %v3674
      %v9518 = vpop.f32.mrb[0].mxu0
      %v9519 = vadd.f32 0.0, %v9518
      %v9520 = vpop.f32.mrb[0].mxu0
      %9521 = vmatprep.mubr.f32.mxu0 0.0
      %9522 = vmatmul.mubr.f32.gmra.mrb[0].mxu0 %v6409
      %v9523 = vpop.f32.mrb[0].mxu0
      %v9524 = vadd.f32 0.0, %v9523
      %v9525 = vpop.f32.mrb[0].mxu0
      %9526 = vmatprep.mubr.f32.mxu0 0.0
      %9527 = vmatmul.mubr.f32.gmra.mrb[0].mxu0 %v6411
      %v9528 = vpop.f32.mrb[0].mxu0
      %v9529 = vadd.f32 0.0, %v9528
      %v9530 = vpop.f32.mrb[0].mxu0
      %9531 = vmatprep.mubr.f32.mxu0 0.0
      %9532 = vmatmul.mubr.f32.gmra.mrb[0].mxu0 %v9150
      %v9533 = vpop.f32.mrb[0].mxu0
      %v9534 = vadd.f32 0.0, %v9533
      %v9535 = vpop.f32.mrb[0].mxu0
      %9536 = vmatprep.mubr.f32.mxu0 0.0
      %9537 = vmatmul.mubr.f32.gmra.mrb[0].mxu0 %v9152
      %v9538 = vpop.f32.mrb[0].mxu0
      %v9539 = vadd.f32 0.0, %v9538
      %v9540 = vpop.f32.mrb[0].mxu0
      %9541 = vdwg.mxu0
      %v9542 = vadd.f32 %v9084, %v9224
      %v9543 = vadd.f32 %v9085, %v9229
      %v9544 = vadd.f32 %v9086, %v9234
      %v9545 = vadd.f32 %v9087, %v9239
      %v9546 = vadd.f32 %v9088, %v9244
      %v9547 = vadd.f32 %v9089, %v9249
      %v9548 = vadd.f32 %v9090, %v9254
      %v9549 = vadd.f32 %v9091, %v9259
      %v9550 = vadd.f32 %v9092, %v9264
      %v9551 = vadd.f32 %v9093, %v9269
      %v9552 = vadd.f32 %v9094, %v9274
      %v9553 = vadd.f32 %v9095, %v9279
      %v9554 = vadd.f32 %v9096, %v9284
      %v9555 = vadd.f32 %v9097, %v9289
      %v9556 = vadd.f32 %v9098, %v9294
      %v9557 = vadd.f32 %v9099, %v9299
      %v9558 = vadd.f32 %v9100, %v9304
      %v9559 = vadd.f32 %v9101, %v9309
      %v9560 = vadd.f32 %v9102, %v9314
      %v9561 = vadd.f32 %v9103, %v9319
      %v9562 = vadd.f32 %v9104, %v9324
      %v9563 = vadd.f32 %v9105, %v9329
      %v9564 = vadd.f32 %v9106, %v9334
      %v9565 = vadd.f32 %v9107, %v9339
      %v9566 = vadd.f32 %v9108, %v9344
      %v9567 = vadd.f32 %v9109, %v9349
      %v9568 = vadd.f32 %v9110, %v9354
      %v9569 = vadd.f32 %v9111, %v9359
      %v9570 = vadd.f32 %v9112, %v9364
      %v9571 = vadd.f32 %v9113, %v9369
      %v9572 = vadd.f32 %v9114, %v9374
      %v9573 = vadd.f32 %v9115, %v9379
      %v9574 = vadd.f32 %v9116, %v9384
      %v9575 = vadd.f32 %v9117, %v9389
      %v9576 = vadd.f32 %v9118, %v9394
      %v9577 = vadd.f32 %v9119, %v9399
      %v9578 = vadd.f32 %v9120, %v9404
      %v9579 = vadd.f32 %v9121, %v9409
      %v9580 = vadd.f32 %v9122, %v9414
      %v9581 = vadd.f32 %v9123, %v9419
      %v9582 = vadd.f32 %v9124, %v9424
      %v9583 = vadd.f32 %v9125, %v9429
      %v9584 = vadd.f32 %v9126, %v9434
      %v9585 = vadd.f32 %v9127, %v9439
      %v9586 = vadd.f32 %v9128, %v9444
      %v9587 = vadd.f32 %v9129, %v9449
      %v9588 = vadd.f32 %v9130, %v9454
      %v9589 = vadd.f32 %v9131, %v9459
      %v9590 = vadd.f32 %v9132, %v9464
      %v9591 = vadd.f32 %v9133, %v9469
      %v9592 = vadd.f32 %v9134, %v9474
      %v9593 = vadd.f32 %v9135, %v9479
      %v9594 = vadd.f32 %v9136, %v9484
      %v9595 = vadd.f32 %v9137, %v9489
      %v9596 = vadd.f32 %v9138, %v9494
      %v9597 = vadd.f32 %v9139, %v9499
      %v9598 = vadd.f32 %v9140, %v9504
      %v9599 = vadd.f32 %v9141, %v9509
      %v9600 = vadd.f32 %v9142, %v9514
      %v9601 = vadd.f32 %v9143, %v9519
      %v9602 = vadd.f32 %v9144, %v9524
      %v9603 = vadd.f32 %v9145, %v9529
      %v9604 = vadd.f32 %v9146, %v9534
      %v9605 = vadd.f32 %v9147, %v9539
      %9606 = vmatprep.subr.mxu0 0.0
      %9607 = vmatpush1.msra.mxu0 %v8239
      %9608 = vmatprep.subr.mxu0 0.0
      %9609 = vmatpush1.msra.mxu0 0.0
      %9610 = vmatprep.subr.mxu0 0.0
      %9611 = vmatpush1.msra.mxu0 0.0
      %9612 = vmatprep.subr.mxu0 0.0
      %9613 = vmatpush1.msra.mxu0 0.0
      %9614 = vmatprep.subr.mxu0 0.0
      %9615 = vmatpush1.msra.mxu0 0.0
      %9616 = vmatprep.subr.mxu0 0.0
      %9617 = vmatpush1.msra.mxu0 0.0
      %9618 = vmatprep.subr.mxu0 0.0
      %9619 = vmatpush1.msra.mxu0 0.0
      %9620 = vmatprep.subr.mxu0 0.0
      %9621 = vmatpush1.msra.mxu0 0.0
      %9622 = vmatprep.subr.mxu0 0.0
      %9623 = vmatpush1.msra.mxu0 0.0
      %9624 = vmatprep.subr.mxu0 0.0
      %9625 = vmatpush1.msra.mxu0 0.0
      %9626 = vmatprep.subr.mxu0 0.0
      %9627 = vmatpush1.msra.mxu0 0.0
      %9628 = vmatprep.subr.mxu0 0.0
      %9629 = vmatpush1.msra.mxu0 0.0
      %9630 = vmatprep.subr.mxu0 0.0
      %9631 = vmatpush1.msra.mxu0 0.0
      %9632 = vmatprep.subr.mxu0 0.0
      %9633 = vmatpush1.msra.mxu0 0.0
      %9634 = vmatprep.subr.mxu0 0.0
      %9635 = vmatpush1.msra.mxu0 0.0
      %9636 = vmatprep.subr.mxu0 0.0
      %9637 = vmatpush1.msra.mxu0 0.0
      %9638 = vmatprep.subr.mxu0 0.0
      %9639 = vmatpush1.msra.mxu0 0.0
      %9640 = vmatprep.subr.mxu0 0.0
      %9641 = vmatpush1.msra.mxu0 0.0
      %9642 = vmatprep.subr.mxu0 0.0
      %9643 = vmatpush1.msra.mxu0 0.0
      %9644 = vmatprep.subr.mxu0 0.0
      %9645 = vmatpush1.msra.mxu0 0.0
      %9646 = vmatprep.subr.mxu0 0.0
      %9647 = vmatpush1.msra.mxu0 0.0
      %9648 = vmatprep.subr.mxu0 0.0
      %9649 = vmatpush1.msra.mxu0 0.0
      %9650 = vmatprep.subr.mxu0 0.0
      %9651 = vmatpush1.msra.mxu0 0.0
      %9652 = vmatprep.subr.mxu0 0.0
      %9653 = vmatpush1.msra.mxu0 0.0
      %9654 = vmatprep.subr.mxu0 0.0
      %9655 = vmatpush1.msra.mxu0 0.0
      %9656 = vmatprep.subr.mxu0 0.0
      %9657 = vmatpush1.msra.mxu0 0.0
      %9658 = vmatprep.subr.mxu0 0.0
      %9659 = vmatpush1.msra.mxu0 0.0
      %9660 = vmatprep.subr.mxu0 0.0
      %9661 = vmatpush1.msra.mxu0 0.0
      %9662 = vmatprep.subr.mxu0 0.0
      %9663 = vmatpush1.msra.mxu0 0.0
      %9664 = vmatprep.subr.mxu0 0.0
      %9665 = vmatpush1.msra.mxu0 0.0
      %9666 = vmatprep.subr.mxu0 0.0
      %9667 = vmatpush1.msra.mxu0 0.0
      %9668 = vmatprep.subr.mxu0 0.0
      %9669 = vmatpush1.msra.mxu0 0.0
      %9670 = vmatprep.mubr.f32.mxu0 0.0
      %9671 = vmatmul.mubr.f32.gmra.mrb[0].mxu0 %v2521
      %v9672 = vpop.f32.mrb[0].mxu0
      %v9673 = vadd.f32 0.0, %v9672
      %v9674 = vpop.f32.mrb[0].mxu0
      %9675 = vmatprep.mubr.f32.mxu0 0.0
      %9676 = vmatmul.mubr.f32.gmra.mrb[0].mxu0 %v2523
      %v9677 = vpop.f32.mrb[0].mxu0
      %v9678 = vadd.f32 0.0, %v9677
      %v9679 = vpop.f32.mrb[0].mxu0
      %9680 = vmatprep.mubr.f32.mxu0 0.0
      %9681 = vmatmul.mubr.f32.gmra.mrb[0].mxu0 %v2525
      %v9682 = vpop.f32.mrb[0].mxu0
      %v9683 = vadd.f32 0.0, %v9682
      %v9684 = vpop.f32.mrb[0].mxu0
      %9685 = vmatprep.mubr.f32.mxu0 0.0
      %9686 = vmatmul.mubr.f32.gmra.mrb[0].mxu0 %v2527
      %v9687 = vpop.f32.mrb[0].mxu0
      %v9688 = vadd.f32 0.0, %v9687
      %v9689 = vpop.f32.mrb[0].mxu0
      %9690 = vmatprep.mubr.f32.mxu0 0.0
      %9691 = vmatmul.mubr.f32.gmra.mrb[0].mxu0 %v2529
      %v9692 = vpop.f32.mrb[0].mxu0
      %v9693 = vadd.f32 0.0, %v9692
      %v9694 = vpop.f32.mrb[0].mxu0
      %9695 = vmatprep.mubr.f32.mxu0 0.0
      %9696 = vmatmul.mubr.f32.gmra.mrb[0].mxu0 %v2531
      %v9697 = vpop.f32.mrb[0].mxu0
      %v9698 = vadd.f32 0.0, %v9697
      %v9699 = vpop.f32.mrb[0].mxu0
      %9700 = vmatprep.mubr.f32.mxu0 0.0
      %9701 = vmatmul.mubr.f32.gmra.mrb[0].mxu0 %v2533
      %v9702 = vpop.f32.mrb[0].mxu0
      %v9703 = vadd.f32 0.0, %v9702
      %v9704 = vpop.f32.mrb[0].mxu0
      %9705 = vmatprep.mubr.f32.mxu0 0.0
      %9706 = vmatmul.mubr.f32.gmra.mrb[0].mxu0 %v2535
      %v9707 = vpop.f32.mrb[0].mxu0
      %v9708 = vadd.f32 0.0, %v9707
      %v9709 = vpop.f32.mrb[0].mxu0
      %9710 = vmatprep.mubr.f32.mxu0 0.0
      %9711 = vmatmul.mubr.f32.gmra.mrb[0].mxu0 %v2537
      %v9712 = vpop.f32.mrb[0].mxu0
      %v9713 = vadd.f32 0.0, %v9712
      %v9714 = vpop.f32.mrb[0].mxu0
      %9715 = vmatprep.mubr.f32.mxu0 0.0
      %9716 = vmatmul.mubr.f32.gmra.mrb[0].mxu0 %v2539
      %v9717 = vpop.f32.mrb[0].mxu0
      %v9718 = vadd.f32 0.0, %v9717
      %v9719 = vpop.f32.mrb[0].mxu0
      %9720 = vmatprep.mubr.f32.mxu0 0.0
      %9721 = vmatmul.mubr.f32.gmra.mrb[0].mxu0 %v2541
      %v9722 = vpop.f32.mrb[0].mxu0
      %v9723 = vadd.f32 0.0, %v9722
      %v9724 = vpop.f32.mrb[0].mxu0
      %9725 = vmatprep.mubr.f32.mxu0 0.0
      %9726 = vmatmul.mubr.f32.gmra.mrb[0].mxu0 %v2543
      %v9727 = vpop.f32.mrb[0].mxu0
      %v9728 = vadd.f32 0.0, %v9727
      %v9729 = vpop.f32.mrb[0].mxu0
      %9730 = vmatprep.mubr.f32.mxu0 0.0
      %9731 = vmatmul.mubr.f32.gmra.mrb[0].mxu0 %v2545
      %v9732 = vpop.f32.mrb[0].mxu0
      %v9733 = vadd.f32 0.0, %v9732
      %v9734 = vpop.f32.mrb[0].mxu0
      %9735 = vmatprep.mubr.f32.mxu0 0.0
      %9736 = vmatmul.mubr.f32.gmra.mrb[0].mxu0 %v2547
      %v9737 = vpop.f32.mrb[0].mxu0
      %v9738 = vadd.f32 0.0, %v9737
      %v9739 = vpop.f32.mrb[0].mxu0
      %9740 = vmatprep.mubr.f32.mxu0 0.0
      %9741 = vmatmul.mubr.f32.gmra.mrb[0].mxu0 %v2549
      %v9742 = vpop.f32.mrb[0].mxu0
      %v9743 = vadd.f32 0.0, %v9742
      %v9744 = vpop.f32.mrb[0].mxu0
      %9745 = vmatprep.mubr.f32.mxu0 0.0
      %9746 = vmatmul.mubr.f32.gmra.mrb[0].mxu0 %v2551
      %v9747 = vpop.f32.mrb[0].mxu0
      %v9748 = vadd.f32 0.0, %v9747
      %v9749 = vpop.f32.mrb[0].mxu0
      %9750 = vmatprep.mubr.f32.mxu0 0.0
      %9751 = vmatmul.mubr.f32.gmra.mrb[0].mxu0 %v2553
      %v9752 = vpop.f32.mrb[0].mxu0
      %v9753 = vadd.f32 0.0, %v9752
      %v9754 = vpop.f32.mrb[0].mxu0
      %9755 = vmatprep.mubr.f32.mxu0 0.0
      %9756 = vmatmul.mubr.f32.gmra.mrb[0].mxu0 %v2555
      %v9757 = vpop.f32.mrb[0].mxu0
      %v9758 = vadd.f32 0.0, %v9757
      %v9759 = vpop.f32.mrb[0].mxu0
      %9760 = vmatprep.mubr.f32.mxu0 0.0
      %9761 = vmatmul.mubr.f32.gmra.mrb[0].mxu0 %v2557
      %v9762 = vpop.f32.mrb[0].mxu0
      %v9763 = vadd.f32 0.0, %v9762
      %v9764 = vpop.f32.mrb[0].mxu0
      %9765 = vmatprep.mubr.f32.mxu0 0.0
      %9766 = vmatmul.mubr.f32.gmra.mrb[0].mxu0 %v2559
      %v9767 = vpop.f32.mrb[0].mxu0
      %v9768 = vadd.f32 0.0, %v9767
      %v9769 = vpop.f32.mrb[0].mxu0
      %9770 = vmatprep.mubr.f32.mxu0 0.0
      %9771 = vmatmul.mubr.f32.gmra.mrb[0].mxu0 %v2561
      %v9772 = vpop.f32.mrb[0].mxu0
      %v9773 = vadd.f32 0.0, %v9772
      %v9774 = vpop.f32.mrb[0].mxu0
      %9775 = vmatprep.mubr.f32.mxu0 0.0
      %9776 = vmatmul.mubr.f32.gmra.mrb[0].mxu0 %v2563
      %v9777 = vpop.f32.mrb[0].mxu0
      %v9778 = vadd.f32 0.0, %v9777
      %v9779 = vpop.f32.mrb[0].mxu0
      %9780 = vmatprep.mubr.f32.mxu0 0.0
      %9781 = vmatmul.mubr.f32.gmra.mrb[0].mxu0 %v2565
      %v9782 = vpop.f32.mrb[0].mxu0
      %v9783 = vadd.f32 0.0, %v9782
      %v9784 = vpop.f32.mrb[0].mxu0
      %9785 = vmatprep.mubr.f32.mxu0 0.0
      %9786 = vmatmul.mubr.f32.gmra.mrb[0].mxu0 %v2567
      %v9787 = vpop.f32.mrb[0].mxu0
      %v9788 = vadd.f32 0.0, %v9787
      %v9789 = vpop.f32.mrb[0].mxu0
      %9790 = vmatprep.mubr.f32.mxu0 0.0
      %9791 = vmatmul.mubr.f32.gmra.mrb[0].mxu0 %v2569
      %v9792 = vpop.f32.mrb[0].mxu0
      %v9793 = vadd.f32 0.0, %v9792
      %v9794 = vpop.f32.mrb[0].mxu0
      %9795 = vmatprep.mubr.f32.mxu0 0.0
      %9796 = vmatmul.mubr.f32.gmra.mrb[0].mxu0 %v2571
      %v9797 = vpop.f32.mrb[0].mxu0
      %v9798 = vadd.f32 0.0, %v9797
      %v9799 = vpop.f32.mrb[0].mxu0
      %9800 = vmatprep.mubr.f32.mxu0 0.0
      %9801 = vmatmul.mubr.f32.gmra.mrb[0].mxu0 %v2573
      %v9802 = vpop.f32.mrb[0].mxu0
      %v9803 = vadd.f32 0.0, %v9802
      %v9804 = vpop.f32.mrb[0].mxu0
      %9805 = vmatprep.mubr.f32.mxu0 0.0
      %9806 = vmatmul.mubr.f32.gmra.mrb[0].mxu0 %v2575
      %v9807 = vpop.f32.mrb[0].mxu0
      %v9808 = vadd.f32 0.0, %v9807
      %v9809 = vpop.f32.mrb[0].mxu0
      %9810 = vmatprep.mubr.f32.mxu0 0.0
      %9811 = vmatmul.mubr.f32.gmra.mrb[0].mxu0 %v2577
      %v9812 = vpop.f32.mrb[0].mxu0
      %v9813 = vadd.f32 0.0, %v9812
      %v9814 = vpop.f32.mrb[0].mxu0
      %9815 = vmatprep.mubr.f32.mxu0 0.0
      %9816 = vmatmul.mubr.f32.gmra.mrb[0].mxu0 %v2579
      %v9817 = vpop.f32.mrb[0].mxu0
      %v9818 = vadd.f32 0.0, %v9817
      %v9819 = vpop.f32.mrb[0].mxu0
      %9820 = vmatprep.mubr.f32.mxu0 0.0
      %9821 = vmatmul.mubr.f32.gmra.mrb[0].mxu0 %v2581
      %v9822 = vpop.f32.mrb[0].mxu0
      %v9823 = vadd.f32 0.0, %v9822
      %v9824 = vpop.f32.mrb[0].mxu0
      %9825 = vmatprep.mubr.f32.mxu0 0.0
      %9826 = vmatmul.mubr.f32.gmra.mrb[0].mxu0 %v2583
      %v9827 = vpop.f32.mrb[0].mxu0
      %v9828 = vadd.f32 0.0, %v9827
      %v9829 = vpop.f32.mrb[0].mxu0
      %9830 = vmatprep.mubr.f32.mxu0 0.0
      %9831 = vmatmul.mubr.f32.gmra.mrb[0].mxu0 %v2585
      %v9832 = vpop.f32.mrb[0].mxu0
      %v9833 = vadd.f32 0.0, %v9832
      %v9834 = vpop.f32.mrb[0].mxu0
      %9835 = vmatprep.mubr.f32.mxu0 0.0
      %9836 = vmatmul.mubr.f32.gmra.mrb[0].mxu0 %v2587
      %v9837 = vpop.f32.mrb[0].mxu0
      %v9838 = vadd.f32 0.0, %v9837
      %v9839 = vpop.f32.mrb[0].mxu0
      %9840 = vmatprep.mubr.f32.mxu0 0.0
      %9841 = vmatmul.mubr.f32.gmra.mrb[0].mxu0 %v2589
      %v9842 = vpop.f32.mrb[0].mxu0
      %v9843 = vadd.f32 0.0, %v9842
      %v9844 = vpop.f32.mrb[0].mxu0
      %9845 = vmatprep.mubr.f32.mxu0 0.0
      %9846 = vmatmul.mubr.f32.gmra.mrb[0].mxu0 %v2591
      %v9847 = vpop.f32.mrb[0].mxu0
      %v9848 = vadd.f32 0.0, %v9847
      %v9849 = vpop.f32.mrb[0].mxu0
      %9850 = vmatprep.mubr.f32.mxu0 0.0
      %9851 = vmatmul.mubr.f32.gmra.mrb[0].mxu0 %v2593
      %v9852 = vpop.f32.mrb[0].mxu0
      %v9853 = vadd.f32 0.0, %v9852
      %v9854 = vpop.f32.mrb[0].mxu0
      %9855 = vmatprep.mubr.f32.mxu0 0.0
      %9856 = vmatmul.mubr.f32.gmra.mrb[0].mxu0 %v2595
      %v9857 = vpop.f32.mrb[0].mxu0
      %v9858 = vadd.f32 0.0, %v9857
      %v9859 = vpop.f32.mrb[0].mxu0
      %9860 = vmatprep.mubr.f32.mxu0 0.0
      %9861 = vmatmul.mubr.f32.gmra.mrb[0].mxu0 %v2597
      %v9862 = vpop.f32.mrb[0].mxu0
      %v9863 = vadd.f32 0.0, %v9862
      %v9864 = vpop.f32.mrb[0].mxu0
      %9865 = vmatprep.mubr.f32.mxu0 0.0
      %9866 = vmatmul.mubr.f32.gmra.mrb[0].mxu0 %v2599
      %v9867 = vpop.f32.mrb[0].mxu0
      %v9868 = vadd.f32 0.0, %v9867
      %v9869 = vpop.f32.mrb[0].mxu0
      %9870 = vmatprep.mubr.f32.mxu0 0.0
      %9871 = vmatmul.mubr.f32.gmra.mrb[0].mxu0 %v2601
      %v9872 = vpop.f32.mrb[0].mxu0
      %v9873 = vadd.f32 0.0, %v9872
      %v9874 = vpop.f32.mrb[0].mxu0
      %9875 = vmatprep.mubr.f32.mxu0 0.0
      %9876 = vmatmul.mubr.f32.gmra.mrb[0].mxu0 %v2603
      %v9877 = vpop.f32.mrb[0].mxu0
      %v9878 = vadd.f32 0.0, %v9877
      %v9879 = vpop.f32.mrb[0].mxu0
      %9880 = vmatprep.mubr.f32.mxu0 0.0
      %9881 = vmatmul.mubr.f32.gmra.mrb[0].mxu0 %v2605
      %v9882 = vpop.f32.mrb[0].mxu0
      %v9883 = vadd.f32 0.0, %v9882
      %v9884 = vpop.f32.mrb[0].mxu0
      %9885 = vmatprep.mubr.f32.mxu0 0.0
      %9886 = vmatmul.mubr.f32.gmra.mrb[0].mxu0 %v2607
      %v9887 = vpop.f32.mrb[0].mxu0
      %v9888 = vadd.f32 0.0, %v9887
      %v9889 = vpop.f32.mrb[0].mxu0
      %9890 = vmatprep.mubr.f32.mxu0 0.0
      %9891 = vmatmul.mubr.f32.gmra.mrb[0].mxu0 %v2609
      %v9892 = vpop.f32.mrb[0].mxu0
      %v9893 = vadd.f32 0.0, %v9892
      %v9894 = vpop.f32.mrb[0].mxu0
      %9895 = vmatprep.mubr.f32.mxu0 0.0
      %9896 = vmatmul.mubr.f32.gmra.mrb[0].mxu0 %v2611
      %v9897 = vpop.f32.mrb[0].mxu0
      %v9898 = vadd.f32 0.0, %v9897
      %v9899 = vpop.f32.mrb[0].mxu0
      %9900 = vmatprep.mubr.f32.mxu0 0.0
      %9901 = vmatmul.mubr.f32.gmra.mrb[0].mxu0 %v2613
      %v9902 = vpop.f32.mrb[0].mxu0
      %v9903 = vadd.f32 0.0, %v9902
      %v9904 = vpop.f32.mrb[0].mxu0
      %9905 = vmatprep.mubr.f32.mxu0 0.0
      %9906 = vmatmul.mubr.f32.gmra.mrb[0].mxu0 %v2615
      %v9907 = vpop.f32.mrb[0].mxu0
      %v9908 = vadd.f32 0.0, %v9907
      %v9909 = vpop.f32.mrb[0].mxu0
      %9910 = vmatprep.mubr.f32.mxu0 0.0
      %9911 = vmatmul.mubr.f32.gmra.mrb[0].mxu0 %v2617
      %v9912 = vpop.f32.mrb[0].mxu0
      %v9913 = vadd.f32 0.0, %v9912
      %v9914 = vpop.f32.mrb[0].mxu0
      %9915 = vmatprep.mubr.f32.mxu0 0.0
      %9916 = vmatmul.mubr.f32.gmra.mrb[0].mxu0 %v2619
      %v9917 = vpop.f32.mrb[0].mxu0
      %v9918 = vadd.f32 0.0, %v9917
      %v9919 = vpop.f32.mrb[0].mxu0
      %9920 = vmatprep.mubr.f32.mxu0 0.0
      %9921 = vmatmul.mubr.f32.gmra.mrb[0].mxu0 %v2621
      %v9922 = vpop.f32.mrb[0].mxu0
      %v9923 = vadd.f32 0.0, %v9922
      %v9924 = vpop.f32.mrb[0].mxu0
      %9925 = vmatprep.mubr.f32.mxu0 0.0
      %9926 = vmatmul.mubr.f32.gmra.mrb[0].mxu0 %v2623
      %v9927 = vpop.f32.mrb[0].mxu0
      %v9928 = vadd.f32 0.0, %v9927
      %v9929 = vpop.f32.mrb[0].mxu0
      %9930 = vmatprep.mubr.f32.mxu0 0.0
      %9931 = vmatmul.mubr.f32.gmra.mrb[0].mxu0 %v2625
      %v9932 = vpop.f32.mrb[0].mxu0
      %v9933 = vadd.f32 0.0, %v9932
      %v9934 = vpop.f32.mrb[0].mxu0
      %9935 = vmatprep.mubr.f32.mxu0 0.0
      %9936 = vmatmul.mubr.f32.gmra.mrb[0].mxu0 %v2627
      %v9937 = vpop.f32.mrb[0].mxu0
      %v9938 = vadd.f32 0.0, %v9937
      %v9939 = vpop.f32.mrb[0].mxu0
      %9940 = vmatprep.mubr.f32.mxu0 0.0
      %9941 = vmatmul.mubr.f32.gmra.mrb[0].mxu0 %v2629
      %v9942 = vpop.f32.mrb[0].mxu0
      %v9943 = vadd.f32 0.0, %v9942
      %v9944 = vpop.f32.mrb[0].mxu0
      %9945 = vmatprep.mubr.f32.mxu0 0.0
      %9946 = vmatmul.mubr.f32.gmra.mrb[0].mxu0 %v2631
      %v9947 = vpop.f32.mrb[0].mxu0
      %v9948 = vadd.f32 0.0, %v9947
      %v9949 = vpop.f32.mrb[0].mxu0
      %9950 = vmatprep.mubr.f32.mxu0 0.0
      %9951 = vmatmul.mubr.f32.gmra.mrb[0].mxu0 %v2633
      %v9952 = vpop.f32.mrb[0].mxu0
      %v9953 = vadd.f32 0.0, %v9952
      %v9954 = vpop.f32.mrb[0].mxu0
      %9955 = vmatprep.mubr.f32.mxu0 0.0
      %9956 = vmatmul.mubr.f32.gmra.mrb[0].mxu0 %v2635
      %v9957 = vpop.f32.mrb[0].mxu0
      %v9958 = vadd.f32 0.0, %v9957
      %v9959 = vpop.f32.mrb[0].mxu0
      %9960 = vmatprep.mubr.f32.mxu0 0.0
      %9961 = vmatmul.mubr.f32.gmra.mrb[0].mxu0 %v2637
      %v9962 = vpop.f32.mrb[0].mxu0
      %v9963 = vadd.f32 0.0, %v9962
      %v9964 = vpop.f32.mrb[0].mxu0
      %9965 = vmatprep.mubr.f32.mxu0 0.0
      %9966 = vmatmul.mubr.f32.gmra.mrb[0].mxu0 %v2639
      %v9967 = vpop.f32.mrb[0].mxu0
      %v9968 = vadd.f32 0.0, %v9967
      %v9969 = vpop.f32.mrb[0].mxu0
      %9970 = vmatprep.mubr.f32.mxu0 0.0
      %9971 = vmatmul.mubr.f32.gmra.mrb[0].mxu0 %v5951
      %v9972 = vpop.f32.mrb[0].mxu0
      %v9973 = vadd.f32 0.0, %v9972
      %v9974 = vpop.f32.mrb[0].mxu0
      %9975 = vmatprep.mubr.f32.mxu0 0.0
      %9976 = vmatmul.mubr.f32.gmra.mrb[0].mxu0 %v5953
      %v9977 = vpop.f32.mrb[0].mxu0
      %v9978 = vadd.f32 0.0, %v9977
      %v9979 = vpop.f32.mrb[0].mxu0
      %9980 = vmatprep.mubr.f32.mxu0 0.0
      %9981 = vmatmul.mubr.f32.gmra.mrb[0].mxu0 %v8692
      %v9982 = vpop.f32.mrb[0].mxu0
      %v9983 = vadd.f32 0.0, %v9982
      %v9984 = vpop.f32.mrb[0].mxu0
      %9985 = vmatprep.mubr.f32.mxu0 0.0
      %9986 = vmatmul.mubr.f32.gmra.mrb[0].mxu0 %v8694
      %v9987 = vpop.f32.mrb[0].mxu0
      %v9988 = vadd.f32 0.0, %v9987
      %v9989 = vpop.f32.mrb[0].mxu0
      %9990 = vdwg.mxu0
      %v9991 = vadd.f32 %v8152, %v9673
      %v9992 = vadd.f32 %v8153, %v9678
      %v9993 = vadd.f32 %v8154, %v9683
      %v9994 = vadd.f32 %v8155, %v9688
      %v9995 = vadd.f32 %v8156, %v9693
      %v9996 = vadd.f32 %v8157, %v9698
      %v9997 = vadd.f32 %v8158, %v9703
      %v9998 = vadd.f32 %v8159, %v9708
      %v9999 = vadd.f32 %v8160, %v9713
      %v10000 = vadd.f32 %v8161, %v9718
      %v10001 = vadd.f32 %v8162, %v9723
      %v10002 = vadd.f32 %v8163, %v9728
      %v10003 = vadd.f32 %v8164, %v9733
      %v10004 = vadd.f32 %v8165, %v9738
      %v10005 = vadd.f32 %v8166, %v9743
      %v10006 = vadd.f32 %v8167, %v9748
      %v10007 = vadd.f32 %v8168, %v9753
      %v10008 = vadd.f32 %v8169, %v9758
      %v10009 = vadd.f32 %v8170, %v9763
      %v10010 = vadd.f32 %v8171, %v9768
      %v10011 = vadd.f32 %v8172, %v9773
      %v10012 = vadd.f32 %v8173, %v9778
      %v10013 = vadd.f32 %v8174, %v9783
      %v10014 = vadd.f32 %v8175, %v9788
      %v10015 = vadd.f32 %v8176, %v9793
      %v10016 = vadd.f32 %v8177, %v9798
      %v10017 = vadd.f32 %v8178, %v9803
      %v10018 = vadd.f32 %v8179, %v9808
      %v10019 = vadd.f32 %v8180, %v9813
      %v10020 = vadd.f32 %v8181, %v9818
      %v10021 = vadd.f32 %v8182, %v9823
      %v10022 = vadd.f32 %v8183, %v9828
      %v10023 = vadd.f32 %v8184, %v9833
      %v10024 = vadd.f32 %v8185, %v9838
      %v10025 = vadd.f32 %v8186, %v9843
      %v10026 = vadd.f32 %v8187, %v9848
      %v10027 = vadd.f32 %v8188, %v9853
      %v10028 = vadd.f32 %v8189, %v9858
      %v10029 = vadd.f32 %v8190, %v9863
      %v10030 = vadd.f32 %v8191, %v9868
      %v10031 = vadd.f32 %v8192, %v9873
      %v10032 = vadd.f32 %v8193, %v9878
      %v10033 = vadd.f32 %v8194, %v9883
      %v10034 = vadd.f32 %v8195, %v9888
      %v10035 = vadd.f32 %v8196, %v9893
      %v10036 = vadd.f32 %v8197, %v9898
      %v10037 = vadd.f32 %v8198, %v9903
      %v10038 = vadd.f32 %v8199, %v9908
      %v10039 = vadd.f32 %v8200, %v9913
      %v10040 = vadd.f32 %v8201, %v9918
      %v10041 = vadd.f32 %v8202, %v9923
      %v10042 = vadd.f32 %v8203, %v9928
      %v10043 = vadd.f32 %v8204, %v9933
      %v10044 = vadd.f32 %v8205, %v9938
      %v10045 = vadd.f32 %v8206, %v9943
      %v10046 = vadd.f32 %v8207, %v9948
      %v10047 = vadd.f32 %v8208, %v9953
      %v10048 = vadd.f32 %v8209, %v9958
      %v10049 = vadd.f32 %v8210, %v9963
      %v10050 = vadd.f32 %v8211, %v9968
      %v10051 = vadd.f32 %v8212, %v9973
      %v10052 = vadd.f32 %v8213, %v9978
      %v10053 = vadd.f32 %v8214, %v9983
      %v10054 = vadd.f32 %v8215, %v9988
      %10055 = vmatprep.subr.mxu0 0.0
      %10056 = vmatpush1.msra.mxu0 %v8697
      %10057 = vmatprep.subr.mxu0 0.0
      %10058 = vmatpush1.msra.mxu0 0.0
      %10059 = vmatprep.subr.mxu0 0.0
      %10060 = vmatpush1.msra.mxu0 0.0
      %10061 = vmatprep.subr.mxu0 0.0
      %10062 = vmatpush1.msra.mxu0 0.0
      %10063 = vmatprep.subr.mxu0 0.0
      %10064 = vmatpush1.msra.mxu0 0.0
      %10065 = vmatprep.subr.mxu0 0.0
      %10066 = vmatpush1.msra.mxu0 0.0
      %10067 = vmatprep.subr.mxu0 0.0
      %10068 = vmatpush1.msra.mxu0 0.0
      %10069 = vmatprep.subr.mxu0 0.0
      %10070 = vmatpush1.msra.mxu0 0.0
      %10071 = vmatprep.subr.mxu0 0.0
      %10072 = vmatpush1.msra.mxu0 0.0
      %10073 = vmatprep.subr.mxu0 0.0
      %10074 = vmatpush1.msra.mxu0 0.0
      %10075 = vmatprep.subr.mxu0 0.0
      %10076 = vmatpush1.msra.mxu0 0.0
      %10077 = vmatprep.subr.mxu0 0.0
      %10078 = vmatpush1.msra.mxu0 0.0
      %10079 = vmatprep.subr.mxu0 0.0
      %10080 = vmatpush1.msra.mxu0 0.0
      %10081 = vmatprep.subr.mxu0 0.0
      %10082 = vmatpush1.msra.mxu0 0.0
      %10083 = vmatprep.subr.mxu0 0.0
      %10084 = vmatpush1.msra.mxu0 0.0
      %10085 = vmatprep.subr.mxu0 0.0
      %10086 = vmatpush1.msra.mxu0 0.0
      %10087 = vmatprep.subr.mxu0 0.0
      %10088 = vmatpush1.msra.mxu0 0.0
      %10089 = vmatprep.subr.mxu0 0.0
      %10090 = vmatpush1.msra.mxu0 0.0
      %10091 = vmatprep.subr.mxu0 0.0
      %10092 = vmatpush1.msra.mxu0 0.0
      %10093 = vmatprep.subr.mxu0 0.0
      %10094 = vmatpush1.msra.mxu0 0.0
      %10095 = vmatprep.subr.mxu0 0.0
      %10096 = vmatpush1.msra.mxu0 0.0
      %10097 = vmatprep.subr.mxu0 0.0
      %10098 = vmatpush1.msra.mxu0 0.0
      %10099 = vmatprep.subr.mxu0 0.0
      %10100 = vmatpush1.msra.mxu0 0.0
      %10101 = vmatprep.subr.mxu0 0.0
      %10102 = vmatpush1.msra.mxu0 0.0
      %10103 = vmatprep.subr.mxu0 0.0
      %10104 = vmatpush1.msra.mxu0 0.0
      %10105 = vmatprep.subr.mxu0 0.0
      %10106 = vmatpush1.msra.mxu0 0.0
      %10107 = vmatprep.subr.mxu0 0.0
      %10108 = vmatpush1.msra.mxu0 0.0
      %10109 = vmatprep.subr.mxu0 0.0
      %10110 = vmatpush1.msra.mxu0 0.0
      %10111 = vmatprep.subr.mxu0 0.0
      %10112 = vmatpush1.msra.mxu0 0.0
      %10113 = vmatprep.subr.mxu0 0.0
      %10114 = vmatpush1.msra.mxu0 0.0
      %10115 = vmatprep.subr.mxu0 0.0
      %10116 = vmatpush1.msra.mxu0 0.0
      %10117 = vmatprep.subr.mxu0 0.0
      %10118 = vmatpush1.msra.mxu0 0.0
      %10119 = vmatprep.mubr.f32.mxu0 0.0
      %10120 = vmatmul.mubr.f32.gmra.mrb[0].mxu0 %v3556
      %v10121 = vpop.f32.mrb[0].mxu0
      %v10122 = vadd.f32 0.0, %v10121
      %v10123 = vpop.f32.mrb[0].mxu0
      %10124 = vmatprep.mubr.f32.mxu0 0.0
      %10125 = vmatmul.mubr.f32.gmra.mrb[0].mxu0 %v3558
      %v10126 = vpop.f32.mrb[0].mxu0
      %v10127 = vadd.f32 0.0, %v10126
      %v10128 = vpop.f32.mrb[0].mxu0
      %10129 = vmatprep.mubr.f32.mxu0 0.0
      %10130 = vmatmul.mubr.f32.gmra.mrb[0].mxu0 %v3560
      %v10131 = vpop.f32.mrb[0].mxu0
      %v10132 = vadd.f32 0.0, %v10131
      %v10133 = vpop.f32.mrb[0].mxu0
      %10134 = vmatprep.mubr.f32.mxu0 0.0
      %10135 = vmatmul.mubr.f32.gmra.mrb[0].mxu0 %v3562
      %v10136 = vpop.f32.mrb[0].mxu0
      %v10137 = vadd.f32 0.0, %v10136
      %v10138 = vpop.f32.mrb[0].mxu0
      %10139 = vmatprep.mubr.f32.mxu0 0.0
      %10140 = vmatmul.mubr.f32.gmra.mrb[0].mxu0 %v3564
      %v10141 = vpop.f32.mrb[0].mxu0
      %v10142 = vadd.f32 0.0, %v10141
      %v10143 = vpop.f32.mrb[0].mxu0
      %10144 = vmatprep.mubr.f32.mxu0 0.0
      %10145 = vmatmul.mubr.f32.gmra.mrb[0].mxu0 %v3566
      %v10146 = vpop.f32.mrb[0].mxu0
      %v10147 = vadd.f32 0.0, %v10146
      %v10148 = vpop.f32.mrb[0].mxu0
      %10149 = vmatprep.mubr.f32.mxu0 0.0
      %10150 = vmatmul.mubr.f32.gmra.mrb[0].mxu0 %v3568
      %v10151 = vpop.f32.mrb[0].mxu0
      %v10152 = vadd.f32 0.0, %v10151
      %v10153 = vpop.f32.mrb[0].mxu0
      %10154 = vmatprep.mubr.f32.mxu0 0.0
      %10155 = vmatmul.mubr.f32.gmra.mrb[0].mxu0 %v3570
      %v10156 = vpop.f32.mrb[0].mxu0
      %v10157 = vadd.f32 0.0, %v10156
      %v10158 = vpop.f32.mrb[0].mxu0
      %10159 = vmatprep.mubr.f32.mxu0 0.0
      %10160 = vmatmul.mubr.f32.gmra.mrb[0].mxu0 %v3572
      %v10161 = vpop.f32.mrb[0].mxu0
      %v10162 = vadd.f32 0.0, %v10161
      %v10163 = vpop.f32.mrb[0].mxu0
      %10164 = vmatprep.mubr.f32.mxu0 0.0
      %10165 = vmatmul.mubr.f32.gmra.mrb[0].mxu0 %v3574
      %v10166 = vpop.f32.mrb[0].mxu0
      %v10167 = vadd.f32 0.0, %v10166
      %v10168 = vpop.f32.mrb[0].mxu0
      %10169 = vmatprep.mubr.f32.mxu0 0.0
      %10170 = vmatmul.mubr.f32.gmra.mrb[0].mxu0 %v3576
      %v10171 = vpop.f32.mrb[0].mxu0
      %v10172 = vadd.f32 0.0, %v10171
      %v10173 = vpop.f32.mrb[0].mxu0
      %10174 = vmatprep.mubr.f32.mxu0 0.0
      %10175 = vmatmul.mubr.f32.gmra.mrb[0].mxu0 %v3578
      %v10176 = vpop.f32.mrb[0].mxu0
      %v10177 = vadd.f32 0.0, %v10176
      %v10178 = vpop.f32.mrb[0].mxu0
      %10179 = vmatprep.mubr.f32.mxu0 0.0
      %10180 = vmatmul.mubr.f32.gmra.mrb[0].mxu0 %v3580
      %v10181 = vpop.f32.mrb[0].mxu0
      %v10182 = vadd.f32 0.0, %v10181
      %v10183 = vpop.f32.mrb[0].mxu0
      %10184 = vmatprep.mubr.f32.mxu0 0.0
      %10185 = vmatmul.mubr.f32.gmra.mrb[0].mxu0 %v3582
      %v10186 = vpop.f32.mrb[0].mxu0
      %v10187 = vadd.f32 0.0, %v10186
      %v10188 = vpop.f32.mrb[0].mxu0
      %10189 = vmatprep.mubr.f32.mxu0 0.0
      %10190 = vmatmul.mubr.f32.gmra.mrb[0].mxu0 %v3584
      %v10191 = vpop.f32.mrb[0].mxu0
      %v10192 = vadd.f32 0.0, %v10191
      %v10193 = vpop.f32.mrb[0].mxu0
      %10194 = vmatprep.mubr.f32.mxu0 0.0
      %10195 = vmatmul.mubr.f32.gmra.mrb[0].mxu0 %v3586
      %v10196 = vpop.f32.mrb[0].mxu0
      %v10197 = vadd.f32 0.0, %v10196
      %v10198 = vpop.f32.mrb[0].mxu0
      %10199 = vmatprep.mubr.f32.mxu0 0.0
      %10200 = vmatmul.mubr.f32.gmra.mrb[0].mxu0 %v3588
      %v10201 = vpop.f32.mrb[0].mxu0
      %v10202 = vadd.f32 0.0, %v10201
      %v10203 = vpop.f32.mrb[0].mxu0
      %10204 = vmatprep.mubr.f32.mxu0 0.0
      %10205 = vmatmul.mubr.f32.gmra.mrb[0].mxu0 %v3590
      %v10206 = vpop.f32.mrb[0].mxu0
      %v10207 = vadd.f32 0.0, %v10206
      %v10208 = vpop.f32.mrb[0].mxu0
      %10209 = vmatprep.mubr.f32.mxu0 0.0
      %10210 = vmatmul.mubr.f32.gmra.mrb[0].mxu0 %v3592
      %v10211 = vpop.f32.mrb[0].mxu0
      %v10212 = vadd.f32 0.0, %v10211
      %v10213 = vpop.f32.mrb[0].mxu0
      %10214 = vmatprep.mubr.f32.mxu0 0.0
      %10215 = vmatmul.mubr.f32.gmra.mrb[0].mxu0 %v3594
      %v10216 = vpop.f32.mrb[0].mxu0
      %v10217 = vadd.f32 0.0, %v10216
      %v10218 = vpop.f32.mrb[0].mxu0
      %10219 = vmatprep.mubr.f32.mxu0 0.0
      %10220 = vmatmul.mubr.f32.gmra.mrb[0].mxu0 %v3596
      %v10221 = vpop.f32.mrb[0].mxu0
      %v10222 = vadd.f32 0.0, %v10221
      %v10223 = vpop.f32.mrb[0].mxu0
      %10224 = vmatprep.mubr.f32.mxu0 0.0
      %10225 = vmatmul.mubr.f32.gmra.mrb[0].mxu0 %v3598
      %v10226 = vpop.f32.mrb[0].mxu0
      %v10227 = vadd.f32 0.0, %v10226
      %v10228 = vpop.f32.mrb[0].mxu0
      %10229 = vmatprep.mubr.f32.mxu0 0.0
      %10230 = vmatmul.mubr.f32.gmra.mrb[0].mxu0 %v3600
      %v10231 = vpop.f32.mrb[0].mxu0
      %v10232 = vadd.f32 0.0, %v10231
      %v10233 = vpop.f32.mrb[0].mxu0
      %10234 = vmatprep.mubr.f32.mxu0 0.0
      %10235 = vmatmul.mubr.f32.gmra.mrb[0].mxu0 %v3602
      %v10236 = vpop.f32.mrb[0].mxu0
      %v10237 = vadd.f32 0.0, %v10236
      %v10238 = vpop.f32.mrb[0].mxu0
      %10239 = vmatprep.mubr.f32.mxu0 0.0
      %10240 = vmatmul.mubr.f32.gmra.mrb[0].mxu0 %v3604
      %v10241 = vpop.f32.mrb[0].mxu0
      %v10242 = vadd.f32 0.0, %v10241
      %v10243 = vpop.f32.mrb[0].mxu0
      %10244 = vmatprep.mubr.f32.mxu0 0.0
      %10245 = vmatmul.mubr.f32.gmra.mrb[0].mxu0 %v3606
      %v10246 = vpop.f32.mrb[0].mxu0
      %v10247 = vadd.f32 0.0, %v10246
      %v10248 = vpop.f32.mrb[0].mxu0
      %10249 = vmatprep.mubr.f32.mxu0 0.0
      %10250 = vmatmul.mubr.f32.gmra.mrb[0].mxu0 %v3608
      %v10251 = vpop.f32.mrb[0].mxu0
      %v10252 = vadd.f32 0.0, %v10251
      %v10253 = vpop.f32.mrb[0].mxu0
      %10254 = vmatprep.mubr.f32.mxu0 0.0
      %10255 = vmatmul.mubr.f32.gmra.mrb[0].mxu0 %v3610
      %v10256 = vpop.f32.mrb[0].mxu0
      %v10257 = vadd.f32 0.0, %v10256
      %v10258 = vpop.f32.mrb[0].mxu0
      %10259 = vmatprep.mubr.f32.mxu0 0.0
      %10260 = vmatmul.mubr.f32.gmra.mrb[0].mxu0 %v3612
      %v10261 = vpop.f32.mrb[0].mxu0
      %v10262 = vadd.f32 0.0, %v10261
      %v10263 = vpop.f32.mrb[0].mxu0
      %10264 = vmatprep.mubr.f32.mxu0 0.0
      %10265 = vmatmul.mubr.f32.gmra.mrb[0].mxu0 %v3614
      %v10266 = vpop.f32.mrb[0].mxu0
      %v10267 = vadd.f32 0.0, %v10266
      %v10268 = vpop.f32.mrb[0].mxu0
      %10269 = vmatprep.mubr.f32.mxu0 0.0
      %10270 = vmatmul.mubr.f32.gmra.mrb[0].mxu0 %v3616
      %v10271 = vpop.f32.mrb[0].mxu0
      %v10272 = vadd.f32 0.0, %v10271
      %v10273 = vpop.f32.mrb[0].mxu0
      %10274 = vmatprep.mubr.f32.mxu0 0.0
      %10275 = vmatmul.mubr.f32.gmra.mrb[0].mxu0 %v3618
      %v10276 = vpop.f32.mrb[0].mxu0
      %v10277 = vadd.f32 0.0, %v10276
      %v10278 = vpop.f32.mrb[0].mxu0
      %10279 = vmatprep.mubr.f32.mxu0 0.0
      %10280 = vmatmul.mubr.f32.gmra.mrb[0].mxu0 %v3620
      %v10281 = vpop.f32.mrb[0].mxu0
      %v10282 = vadd.f32 0.0, %v10281
      %v10283 = vpop.f32.mrb[0].mxu0
      %10284 = vmatprep.mubr.f32.mxu0 0.0
      %10285 = vmatmul.mubr.f32.gmra.mrb[0].mxu0 %v3622
      %v10286 = vpop.f32.mrb[0].mxu0
      %v10287 = vadd.f32 0.0, %v10286
      %v10288 = vpop.f32.mrb[0].mxu0
      %10289 = vmatprep.mubr.f32.mxu0 0.0
      %10290 = vmatmul.mubr.f32.gmra.mrb[0].mxu0 %v3624
      %v10291 = vpop.f32.mrb[0].mxu0
      %v10292 = vadd.f32 0.0, %v10291
      %v10293 = vpop.f32.mrb[0].mxu0
      %10294 = vmatprep.mubr.f32.mxu0 0.0
      %10295 = vmatmul.mubr.f32.gmra.mrb[0].mxu0 %v3626
      %v10296 = vpop.f32.mrb[0].mxu0
      %v10297 = vadd.f32 0.0, %v10296
      %v10298 = vpop.f32.mrb[0].mxu0
      %10299 = vmatprep.mubr.f32.mxu0 0.0
      %10300 = vmatmul.mubr.f32.gmra.mrb[0].mxu0 %v3628
      %v10301 = vpop.f32.mrb[0].mxu0
      %v10302 = vadd.f32 0.0, %v10301
      %v10303 = vpop.f32.mrb[0].mxu0
      %10304 = vmatprep.mubr.f32.mxu0 0.0
      %10305 = vmatmul.mubr.f32.gmra.mrb[0].mxu0 %v3630
      %v10306 = vpop.f32.mrb[0].mxu0
      %v10307 = vadd.f32 0.0, %v10306
      %v10308 = vpop.f32.mrb[0].mxu0
      %10309 = vmatprep.mubr.f32.mxu0 0.0
      %10310 = vmatmul.mubr.f32.gmra.mrb[0].mxu0 %v3632
      %v10311 = vpop.f32.mrb[0].mxu0
      %v10312 = vadd.f32 0.0, %v10311
      %v10313 = vpop.f32.mrb[0].mxu0
      %10314 = vmatprep.mubr.f32.mxu0 0.0
      %10315 = vmatmul.mubr.f32.gmra.mrb[0].mxu0 %v3634
      %v10316 = vpop.f32.mrb[0].mxu0
      %v10317 = vadd.f32 0.0, %v10316
      %v10318 = vpop.f32.mrb[0].mxu0
      %10319 = vmatprep.mubr.f32.mxu0 0.0
      %10320 = vmatmul.mubr.f32.gmra.mrb[0].mxu0 %v3636
      %v10321 = vpop.f32.mrb[0].mxu0
      %v10322 = vadd.f32 0.0, %v10321
      %v10323 = vpop.f32.mrb[0].mxu0
      %10324 = vmatprep.mubr.f32.mxu0 0.0
      %10325 = vmatmul.mubr.f32.gmra.mrb[0].mxu0 %v3638
      %v10326 = vpop.f32.mrb[0].mxu0
      %v10327 = vadd.f32 0.0, %v10326
      %v10328 = vpop.f32.mrb[0].mxu0
      %10329 = vmatprep.mubr.f32.mxu0 0.0
      %10330 = vmatmul.mubr.f32.gmra.mrb[0].mxu0 %v3640
      %v10331 = vpop.f32.mrb[0].mxu0
      %v10332 = vadd.f32 0.0, %v10331
      %v10333 = vpop.f32.mrb[0].mxu0
      %10334 = vmatprep.mubr.f32.mxu0 0.0
      %10335 = vmatmul.mubr.f32.gmra.mrb[0].mxu0 %v3642
      %v10336 = vpop.f32.mrb[0].mxu0
      %v10337 = vadd.f32 0.0, %v10336
      %v10338 = vpop.f32.mrb[0].mxu0
      %10339 = vmatprep.mubr.f32.mxu0 0.0
      %10340 = vmatmul.mubr.f32.gmra.mrb[0].mxu0 %v3644
      %v10341 = vpop.f32.mrb[0].mxu0
      %v10342 = vadd.f32 0.0, %v10341
      %v10343 = vpop.f32.mrb[0].mxu0
      %10344 = vmatprep.mubr.f32.mxu0 0.0
      %10345 = vmatmul.mubr.f32.gmra.mrb[0].mxu0 %v3646
      %v10346 = vpop.f32.mrb[0].mxu0
      %v10347 = vadd.f32 0.0, %v10346
      %v10348 = vpop.f32.mrb[0].mxu0
      %10349 = vmatprep.mubr.f32.mxu0 0.0
      %10350 = vmatmul.mubr.f32.gmra.mrb[0].mxu0 %v3648
      %v10351 = vpop.f32.mrb[0].mxu0
      %v10352 = vadd.f32 0.0, %v10351
      %v10353 = vpop.f32.mrb[0].mxu0
      %10354 = vmatprep.mubr.f32.mxu0 0.0
      %10355 = vmatmul.mubr.f32.gmra.mrb[0].mxu0 %v3650
      %v10356 = vpop.f32.mrb[0].mxu0
      %v10357 = vadd.f32 0.0, %v10356
      %v10358 = vpop.f32.mrb[0].mxu0
      %10359 = vmatprep.mubr.f32.mxu0 0.0
      %10360 = vmatmul.mubr.f32.gmra.mrb[0].mxu0 %v3652
      %v10361 = vpop.f32.mrb[0].mxu0
      %v10362 = vadd.f32 0.0, %v10361
      %v10363 = vpop.f32.mrb[0].mxu0
      %10364 = vmatprep.mubr.f32.mxu0 0.0
      %10365 = vmatmul.mubr.f32.gmra.mrb[0].mxu0 %v3654
      %v10366 = vpop.f32.mrb[0].mxu0
      %v10367 = vadd.f32 0.0, %v10366
      %v10368 = vpop.f32.mrb[0].mxu0
      %10369 = vmatprep.mubr.f32.mxu0 0.0
      %10370 = vmatmul.mubr.f32.gmra.mrb[0].mxu0 %v3656
      %v10371 = vpop.f32.mrb[0].mxu0
      %v10372 = vadd.f32 0.0, %v10371
      %v10373 = vpop.f32.mrb[0].mxu0
      %10374 = vmatprep.mubr.f32.mxu0 0.0
      %10375 = vmatmul.mubr.f32.gmra.mrb[0].mxu0 %v3658
      %v10376 = vpop.f32.mrb[0].mxu0
      %v10377 = vadd.f32 0.0, %v10376
      %v10378 = vpop.f32.mrb[0].mxu0
      %10379 = vmatprep.mubr.f32.mxu0 0.0
      %10380 = vmatmul.mubr.f32.gmra.mrb[0].mxu0 %v3660
      %v10381 = vpop.f32.mrb[0].mxu0
      %v10382 = vadd.f32 0.0, %v10381
      %v10383 = vpop.f32.mrb[0].mxu0
      %10384 = vmatprep.mubr.f32.mxu0 0.0
      %10385 = vmatmul.mubr.f32.gmra.mrb[0].mxu0 %v3662
      %v10386 = vpop.f32.mrb[0].mxu0
      %v10387 = vadd.f32 0.0, %v10386
      %v10388 = vpop.f32.mrb[0].mxu0
      %10389 = vmatprep.mubr.f32.mxu0 0.0
      %10390 = vmatmul.mubr.f32.gmra.mrb[0].mxu0 %v3664
      %v10391 = vpop.f32.mrb[0].mxu0
      %v10392 = vadd.f32 0.0, %v10391
      %v10393 = vpop.f32.mrb[0].mxu0
      %10394 = vmatprep.mubr.f32.mxu0 0.0
      %10395 = vmatmul.mubr.f32.gmra.mrb[0].mxu0 %v3666
      %v10396 = vpop.f32.mrb[0].mxu0
      %v10397 = vadd.f32 0.0, %v10396
      %v10398 = vpop.f32.mrb[0].mxu0
      %10399 = vmatprep.mubr.f32.mxu0 0.0
      %10400 = vmatmul.mubr.f32.gmra.mrb[0].mxu0 %v3668
      %v10401 = vpop.f32.mrb[0].mxu0
      %v10402 = vadd.f32 0.0, %v10401
      %v10403 = vpop.f32.mrb[0].mxu0
      %10404 = vmatprep.mubr.f32.mxu0 0.0
      %10405 = vmatmul.mubr.f32.gmra.mrb[0].mxu0 %v3670
      %v10406 = vpop.f32.mrb[0].mxu0
      %v10407 = vadd.f32 0.0, %v10406
      %v10408 = vpop.f32.mrb[0].mxu0
      %10409 = vmatprep.mubr.f32.mxu0 0.0
      %10410 = vmatmul.mubr.f32.gmra.mrb[0].mxu0 %v3672
      %v10411 = vpop.f32.mrb[0].mxu0
      %v10412 = vadd.f32 0.0, %v10411
      %v10413 = vpop.f32.mrb[0].mxu0
      %10414 = vmatprep.mubr.f32.mxu0 0.0
      %10415 = vmatmul.mubr.f32.gmra.mrb[0].mxu0 %v3674
      %v10416 = vpop.f32.mrb[0].mxu0
      %v10417 = vadd.f32 0.0, %v10416
      %v10418 = vpop.f32.mrb[0].mxu0
      %10419 = vmatprep.mubr.f32.mxu0 0.0
      %10420 = vmatmul.mubr.f32.gmra.mrb[0].mxu0 %v6409
      %v10421 = vpop.f32.mrb[0].mxu0
      %v10422 = vadd.f32 0.0, %v10421
      %v10423 = vpop.f32.mrb[0].mxu0
      %10424 = vmatprep.mubr.f32.mxu0 0.0
      %10425 = vmatmul.mubr.f32.gmra.mrb[0].mxu0 %v6411
      %v10426 = vpop.f32.mrb[0].mxu0
      %v10427 = vadd.f32 0.0, %v10426
      %v10428 = vpop.f32.mrb[0].mxu0
      %10429 = vmatprep.mubr.f32.mxu0 0.0
      %10430 = vmatmul.mubr.f32.gmra.mrb[0].mxu0 %v9150
      %v10431 = vpop.f32.mrb[0].mxu0
      %v10432 = vadd.f32 0.0, %v10431
      %v10433 = vpop.f32.mrb[0].mxu0
      %10434 = vmatprep.mubr.f32.mxu0 0.0
      %10435 = vmatmul.mubr.f32.gmra.mrb[0].mxu0 %v9152
      %v10436 = vpop.f32.mrb[0].mxu0
      %v10437 = vadd.f32 0.0, %v10436
      %v10438 = vpop.f32.mrb[0].mxu0
      %10439 = vdwg.mxu0
      %v10440 = vadd.f32 %v9991, %v10122
      %v10441 = vadd.f32 %v9992, %v10127
      %v10442 = vadd.f32 %v9993, %v10132
      %v10443 = vadd.f32 %v9994, %v10137
      %v10444 = vadd.f32 %v9995, %v10142
      %v10445 = vadd.f32 %v9996, %v10147
      %v10446 = vadd.f32 %v9997, %v10152
      %v10447 = vadd.f32 %v9998, %v10157
      %v10448 = vadd.f32 %v9999, %v10162
      %v10449 = vadd.f32 %v10000, %v10167
      %v10450 = vadd.f32 %v10001, %v10172
      %v10451 = vadd.f32 %v10002, %v10177
      %v10452 = vadd.f32 %v10003, %v10182
      %v10453 = vadd.f32 %v10004, %v10187
      %v10454 = vadd.f32 %v10005, %v10192
      %v10455 = vadd.f32 %v10006, %v10197
      %v10456 = vadd.f32 %v10007, %v10202
      %v10457 = vadd.f32 %v10008, %v10207
      %v10458 = vadd.f32 %v10009, %v10212
      %v10459 = vadd.f32 %v10010, %v10217
      %v10460 = vadd.f32 %v10011, %v10222
      %v10461 = vadd.f32 %v10012, %v10227
      %v10462 = vadd.f32 %v10013, %v10232
      %v10463 = vadd.f32 %v10014, %v10237
      %v10464 = vadd.f32 %v10015, %v10242
      %v10465 = vadd.f32 %v10016, %v10247
      %v10466 = vadd.f32 %v10017, %v10252
      %v10467 = vadd.f32 %v10018, %v10257
      %v10468 = vadd.f32 %v10019, %v10262
      %v10469 = vadd.f32 %v10020, %v10267
      %v10470 = vadd.f32 %v10021, %v10272
      %v10471 = vadd.f32 %v10022, %v10277
      %v10472 = vadd.f32 %v10023, %v10282
      %v10473 = vadd.f32 %v10024, %v10287
      %v10474 = vadd.f32 %v10025, %v10292
      %v10475 = vadd.f32 %v10026, %v10297
      %v10476 = vadd.f32 %v10027, %v10302
      %v10477 = vadd.f32 %v10028, %v10307
      %v10478 = vadd.f32 %v10029, %v10312
      %v10479 = vadd.f32 %v10030, %v10317
      %v10480 = vadd.f32 %v10031, %v10322
      %v10481 = vadd.f32 %v10032, %v10327
      %v10482 = vadd.f32 %v10033, %v10332
      %v10483 = vadd.f32 %v10034, %v10337
      %v10484 = vadd.f32 %v10035, %v10342
      %v10485 = vadd.f32 %v10036, %v10347
      %v10486 = vadd.f32 %v10037, %v10352
      %v10487 = vadd.f32 %v10038, %v10357
      %v10488 = vadd.f32 %v10039, %v10362
      %v10489 = vadd.f32 %v10040, %v10367
      %v10490 = vadd.f32 %v10041, %v10372
      %v10491 = vadd.f32 %v10042, %v10377
      %v10492 = vadd.f32 %v10043, %v10382
      %v10493 = vadd.f32 %v10044, %v10387
      %v10494 = vadd.f32 %v10045, %v10392
      %v10495 = vadd.f32 %v10046, %v10397
      %v10496 = vadd.f32 %v10047, %v10402
      %v10497 = vadd.f32 %v10048, %v10407
      %v10498 = vadd.f32 %v10049, %v10412
      %v10499 = vadd.f32 %v10050, %v10417
      %v10500 = vadd.f32 %v10051, %v10422
      %v10501 = vadd.f32 %v10052, %v10427
      %v10502 = vadd.f32 %v10053, %v10432
      %v10503 = vadd.f32 %v10054, %v10437
      %v10504 = vsel %vm2512, %v8229, 0
      %v10506 = vsel %vm2512, %v8231, 0
      %10508 = vmatprep.subr.mxu0 0.0
      %10509 = vmatpush1.msra.mxu0 %v9155
      %10510 = vmatprep.subr.mxu0 0.0
      %10511 = vmatpush1.msra.mxu0 0.0
      %10512 = vmatprep.subr.mxu0 0.0
      %10513 = vmatpush1.msra.mxu0 0.0
      %10514 = vmatprep.subr.mxu0 0.0
      %10515 = vmatpush1.msra.mxu0 0.0
      %10516 = vmatprep.subr.mxu0 0.0
      %10517 = vmatpush1.msra.mxu0 0.0
      %10518 = vmatprep.subr.mxu0 0.0
      %10519 = vmatpush1.msra.mxu0 0.0
      %10520 = vmatprep.subr.mxu0 0.0
      %10521 = vmatpush1.msra.mxu0 0.0
      %10522 = vmatprep.subr.mxu0 0.0
      %10523 = vmatpush1.msra.mxu0 0.0
      %10524 = vmatprep.subr.mxu0 0.0
      %10525 = vmatpush1.msra.mxu0 0.0
      %10526 = vmatprep.subr.mxu0 0.0
      %10527 = vmatpush1.msra.mxu0 0.0
      %10528 = vmatprep.subr.mxu0 0.0
      %10529 = vmatpush1.msra.mxu0 0.0
      %10530 = vmatprep.subr.mxu0 0.0
      %10531 = vmatpush1.msra.mxu0 0.0
      %10532 = vmatprep.subr.mxu0 0.0
      %10533 = vmatpush1.msra.mxu0 0.0
      %10534 = vmatprep.subr.mxu0 0.0
      %10535 = vmatpush1.msra.mxu0 0.0
      %10536 = vmatprep.subr.mxu0 0.0
      %10537 = vmatpush1.msra.mxu0 0.0
      %10538 = vmatprep.subr.mxu0 0.0
      %10539 = vmatpush1.msra.mxu0 0.0
      %10540 = vmatprep.subr.mxu0 0.0
      %10541 = vmatpush1.msra.mxu0 0.0
      %10542 = vmatprep.subr.mxu0 0.0
      %10543 = vmatpush1.msra.mxu0 0.0
      %10544 = vmatprep.subr.mxu0 0.0
      %10545 = vmatpush1.msra.mxu0 0.0
      %10546 = vmatprep.subr.mxu0 0.0
      %10547 = vmatpush1.msra.mxu0 0.0
      %10548 = vmatprep.subr.mxu0 0.0
      %10549 = vmatpush1.msra.mxu0 0.0
      %10550 = vmatprep.subr.mxu0 0.0
      %10551 = vmatpush1.msra.mxu0 0.0
      %10552 = vmatprep.subr.mxu0 0.0
      %10553 = vmatpush1.msra.mxu0 0.0
      %10554 = vmatprep.subr.mxu0 0.0
      %10555 = vmatpush1.msra.mxu0 0.0
      %10556 = vmatprep.subr.mxu0 0.0
      %10557 = vmatpush1.msra.mxu0 0.0
      %10558 = vmatprep.subr.mxu0 0.0
      %10559 = vmatpush1.msra.mxu0 0.0
      %10560 = vmatprep.subr.mxu0 0.0
      %10561 = vmatpush1.msra.mxu0 0.0
      %10562 = vmatprep.subr.mxu0 0.0
      %10563 = vmatpush1.msra.mxu0 0.0
      %10564 = vmatprep.subr.mxu0 0.0
      %10565 = vmatpush1.msra.mxu0 0.0
      %10566 = vmatprep.subr.mxu0 0.0
      %10567 = vmatpush1.msra.mxu0 0.0
      %10568 = vmatprep.subr.mxu0 0.0
      %10569 = vmatpush1.msra.mxu0 0.0
      %10570 = vmatprep.subr.mxu0 0.0
      %10571 = vmatpush1.msra.mxu0 0.0
      %10572 = vmatprep.mubr.f32.mxu0 0.0
      %10573 = vmatmul.mubr.f32.gmra.mrb[0].mxu0 %v4906
      %v10574 = vpop.f32.mrb[0].mxu0
      %v10575 = vadd.f32 0.0, %v10574
      %v10576 = vpop.f32.mrb[0].mxu0
      %10577 = vmatprep.mubr.f32.mxu0 0.0
      %10578 = vmatmul.mubr.f32.gmra.mrb[0].mxu0 %v4908
      %v10579 = vpop.f32.mrb[0].mxu0
      %v10580 = vadd.f32 0.0, %v10579
      %v10581 = vpop.f32.mrb[0].mxu0
      %10582 = vmatprep.mubr.f32.mxu0 0.0
      %10583 = vmatmul.mubr.f32.gmra.mrb[0].mxu0 %v4910
      %v10584 = vpop.f32.mrb[0].mxu0
      %v10585 = vadd.f32 0.0, %v10584
      %v10586 = vpop.f32.mrb[0].mxu0
      %10587 = vmatprep.mubr.f32.mxu0 0.0
      %10588 = vmatmul.mubr.f32.gmra.mrb[0].mxu0 %v4912
      %v10589 = vpop.f32.mrb[0].mxu0
      %v10590 = vadd.f32 0.0, %v10589
      %v10591 = vpop.f32.mrb[0].mxu0
      %10592 = vmatprep.mubr.f32.mxu0 0.0
      %10593 = vmatmul.mubr.f32.gmra.mrb[0].mxu0 %v4914
      %v10594 = vpop.f32.mrb[0].mxu0
      %v10595 = vadd.f32 0.0, %v10594
      %v10596 = vpop.f32.mrb[0].mxu0
      %10597 = vmatprep.mubr.f32.mxu0 0.0
      %10598 = vmatmul.mubr.f32.gmra.mrb[0].mxu0 %v4916
      %v10599 = vpop.f32.mrb[0].mxu0
      %v10600 = vadd.f32 0.0, %v10599
      %v10601 = vpop.f32.mrb[0].mxu0
      %10602 = vmatprep.mubr.f32.mxu0 0.0
      %10603 = vmatmul.mubr.f32.gmra.mrb[0].mxu0 %v4918
      %v10604 = vpop.f32.mrb[0].mxu0
      %v10605 = vadd.f32 0.0, %v10604
      %v10606 = vpop.f32.mrb[0].mxu0
      %10607 = vmatprep.mubr.f32.mxu0 0.0
      %10608 = vmatmul.mubr.f32.gmra.mrb[0].mxu0 %v4920
      %v10609 = vpop.f32.mrb[0].mxu0
      %v10610 = vadd.f32 0.0, %v10609
      %v10611 = vpop.f32.mrb[0].mxu0
      %10612 = vmatprep.mubr.f32.mxu0 0.0
      %10613 = vmatmul.mubr.f32.gmra.mrb[0].mxu0 %v4922
      %v10614 = vpop.f32.mrb[0].mxu0
      %v10615 = vadd.f32 0.0, %v10614
      %v10616 = vpop.f32.mrb[0].mxu0
      %10617 = vmatprep.mubr.f32.mxu0 0.0
      %10618 = vmatmul.mubr.f32.gmra.mrb[0].mxu0 %v4924
      %v10619 = vpop.f32.mrb[0].mxu0
      %v10620 = vadd.f32 0.0, %v10619
      %v10621 = vpop.f32.mrb[0].mxu0
      %10622 = vmatprep.mubr.f32.mxu0 0.0
      %10623 = vmatmul.mubr.f32.gmra.mrb[0].mxu0 %v4926
      %v10624 = vpop.f32.mrb[0].mxu0
      %v10625 = vadd.f32 0.0, %v10624
      %v10626 = vpop.f32.mrb[0].mxu0
      %10627 = vmatprep.mubr.f32.mxu0 0.0
      %10628 = vmatmul.mubr.f32.gmra.mrb[0].mxu0 %v4928
      %v10629 = vpop.f32.mrb[0].mxu0
      %v10630 = vadd.f32 0.0, %v10629
      %v10631 = vpop.f32.mrb[0].mxu0
      %10632 = vmatprep.mubr.f32.mxu0 0.0
      %10633 = vmatmul.mubr.f32.gmra.mrb[0].mxu0 %v4930
      %v10634 = vpop.f32.mrb[0].mxu0
      %v10635 = vadd.f32 0.0, %v10634
      %v10636 = vpop.f32.mrb[0].mxu0
      %10637 = vmatprep.mubr.f32.mxu0 0.0
      %10638 = vmatmul.mubr.f32.gmra.mrb[0].mxu0 %v4932
      %v10639 = vpop.f32.mrb[0].mxu0
      %v10640 = vadd.f32 0.0, %v10639
      %v10641 = vpop.f32.mrb[0].mxu0
      %10642 = vmatprep.mubr.f32.mxu0 0.0
      %10643 = vmatmul.mubr.f32.gmra.mrb[0].mxu0 %v4934
      %v10644 = vpop.f32.mrb[0].mxu0
      %v10645 = vadd.f32 0.0, %v10644
      %v10646 = vpop.f32.mrb[0].mxu0
      %10647 = vmatprep.mubr.f32.mxu0 0.0
      %10648 = vmatmul.mubr.f32.gmra.mrb[0].mxu0 %v4936
      %v10649 = vpop.f32.mrb[0].mxu0
      %v10650 = vadd.f32 0.0, %v10649
      %v10651 = vpop.f32.mrb[0].mxu0
      %10652 = vmatprep.mubr.f32.mxu0 0.0
      %10653 = vmatmul.mubr.f32.gmra.mrb[0].mxu0 %v4938
      %v10654 = vpop.f32.mrb[0].mxu0
      %v10655 = vadd.f32 0.0, %v10654
      %v10656 = vpop.f32.mrb[0].mxu0
      %10657 = vmatprep.mubr.f32.mxu0 0.0
      %10658 = vmatmul.mubr.f32.gmra.mrb[0].mxu0 %v4940
      %v10659 = vpop.f32.mrb[0].mxu0
      %v10660 = vadd.f32 0.0, %v10659
      %v10661 = vpop.f32.mrb[0].mxu0
      %10662 = vmatprep.mubr.f32.mxu0 0.0
      %10663 = vmatmul.mubr.f32.gmra.mrb[0].mxu0 %v4942
      %v10664 = vpop.f32.mrb[0].mxu0
      %v10665 = vadd.f32 0.0, %v10664
      %v10666 = vpop.f32.mrb[0].mxu0
      %10667 = vmatprep.mubr.f32.mxu0 0.0
      %10668 = vmatmul.mubr.f32.gmra.mrb[0].mxu0 %v4944
      %v10669 = vpop.f32.mrb[0].mxu0
      %v10670 = vadd.f32 0.0, %v10669
      %v10671 = vpop.f32.mrb[0].mxu0
      %10672 = vmatprep.mubr.f32.mxu0 0.0
      %10673 = vmatmul.mubr.f32.gmra.mrb[0].mxu0 %v4946
      %v10674 = vpop.f32.mrb[0].mxu0
      %v10675 = vadd.f32 0.0, %v10674
      %v10676 = vpop.f32.mrb[0].mxu0
      %10677 = vmatprep.mubr.f32.mxu0 0.0
      %10678 = vmatmul.mubr.f32.gmra.mrb[0].mxu0 %v4948
      %v10679 = vpop.f32.mrb[0].mxu0
      %v10680 = vadd.f32 0.0, %v10679
      %v10681 = vpop.f32.mrb[0].mxu0
      %10682 = vmatprep.mubr.f32.mxu0 0.0
      %10683 = vmatmul.mubr.f32.gmra.mrb[0].mxu0 %v4950
      %v10684 = vpop.f32.mrb[0].mxu0
      %v10685 = vadd.f32 0.0, %v10684
      %v10686 = vpop.f32.mrb[0].mxu0
      %10687 = vmatprep.mubr.f32.mxu0 0.0
      %10688 = vmatmul.mubr.f32.gmra.mrb[0].mxu0 %v4952
      %v10689 = vpop.f32.mrb[0].mxu0
      %v10690 = vadd.f32 0.0, %v10689
      %v10691 = vpop.f32.mrb[0].mxu0
      %10692 = vmatprep.mubr.f32.mxu0 0.0
      %10693 = vmatmul.mubr.f32.gmra.mrb[0].mxu0 %v4954
      %v10694 = vpop.f32.mrb[0].mxu0
      %v10695 = vadd.f32 0.0, %v10694
      %v10696 = vpop.f32.mrb[0].mxu0
      %10697 = vmatprep.mubr.f32.mxu0 0.0
      %10698 = vmatmul.mubr.f32.gmra.mrb[0].mxu0 %v4956
      %v10699 = vpop.f32.mrb[0].mxu0
      %v10700 = vadd.f32 0.0, %v10699
      %v10701 = vpop.f32.mrb[0].mxu0
      %10702 = vmatprep.mubr.f32.mxu0 0.0
      %10703 = vmatmul.mubr.f32.gmra.mrb[0].mxu0 %v4958
      %v10704 = vpop.f32.mrb[0].mxu0
      %v10705 = vadd.f32 0.0, %v10704
      %v10706 = vpop.f32.mrb[0].mxu0
      %10707 = vmatprep.mubr.f32.mxu0 0.0
      %10708 = vmatmul.mubr.f32.gmra.mrb[0].mxu0 %v4960
      %v10709 = vpop.f32.mrb[0].mxu0
      %v10710 = vadd.f32 0.0, %v10709
      %v10711 = vpop.f32.mrb[0].mxu0
      %10712 = vmatprep.mubr.f32.mxu0 0.0
      %10713 = vmatmul.mubr.f32.gmra.mrb[0].mxu0 %v4962
      %v10714 = vpop.f32.mrb[0].mxu0
      %v10715 = vadd.f32 0.0, %v10714
      %v10716 = vpop.f32.mrb[0].mxu0
      %10717 = vmatprep.mubr.f32.mxu0 0.0
      %10718 = vmatmul.mubr.f32.gmra.mrb[0].mxu0 %v4964
      %v10719 = vpop.f32.mrb[0].mxu0
      %v10720 = vadd.f32 0.0, %v10719
      %v10721 = vpop.f32.mrb[0].mxu0
      %10722 = vmatprep.mubr.f32.mxu0 0.0
      %10723 = vmatmul.mubr.f32.gmra.mrb[0].mxu0 %v4966
      %v10724 = vpop.f32.mrb[0].mxu0
      %v10725 = vadd.f32 0.0, %v10724
      %v10726 = vpop.f32.mrb[0].mxu0
      %10727 = vmatprep.mubr.f32.mxu0 0.0
      %10728 = vmatmul.mubr.f32.gmra.mrb[0].mxu0 %v4968
      %v10729 = vpop.f32.mrb[0].mxu0
      %v10730 = vadd.f32 0.0, %v10729
      %v10731 = vpop.f32.mrb[0].mxu0
      %10732 = vmatprep.mubr.f32.mxu0 0.0
      %10733 = vmatmul.mubr.f32.gmra.mrb[0].mxu0 %v4970
      %v10734 = vpop.f32.mrb[0].mxu0
      %v10735 = vadd.f32 0.0, %v10734
      %v10736 = vpop.f32.mrb[0].mxu0
      %10737 = vmatprep.mubr.f32.mxu0 0.0
      %10738 = vmatmul.mubr.f32.gmra.mrb[0].mxu0 %v4972
      %v10739 = vpop.f32.mrb[0].mxu0
      %v10740 = vadd.f32 0.0, %v10739
      %v10741 = vpop.f32.mrb[0].mxu0
      %10742 = vmatprep.mubr.f32.mxu0 0.0
      %10743 = vmatmul.mubr.f32.gmra.mrb[0].mxu0 %v4974
      %v10744 = vpop.f32.mrb[0].mxu0
      %v10745 = vadd.f32 0.0, %v10744
      %v10746 = vpop.f32.mrb[0].mxu0
      %10747 = vmatprep.mubr.f32.mxu0 0.0
      %10748 = vmatmul.mubr.f32.gmra.mrb[0].mxu0 %v4976
      %v10749 = vpop.f32.mrb[0].mxu0
      %v10750 = vadd.f32 0.0, %v10749
      %v10751 = vpop.f32.mrb[0].mxu0
      %10752 = vmatprep.mubr.f32.mxu0 0.0
      %10753 = vmatmul.mubr.f32.gmra.mrb[0].mxu0 %v4978
      %v10754 = vpop.f32.mrb[0].mxu0
      %v10755 = vadd.f32 0.0, %v10754
      %v10756 = vpop.f32.mrb[0].mxu0
      %10757 = vmatprep.mubr.f32.mxu0 0.0
      %10758 = vmatmul.mubr.f32.gmra.mrb[0].mxu0 %v4980
      %v10759 = vpop.f32.mrb[0].mxu0
      %v10760 = vadd.f32 0.0, %v10759
      %v10761 = vpop.f32.mrb[0].mxu0
      %10762 = vmatprep.mubr.f32.mxu0 0.0
      %10763 = vmatmul.mubr.f32.gmra.mrb[0].mxu0 %v4982
      %v10764 = vpop.f32.mrb[0].mxu0
      %v10765 = vadd.f32 0.0, %v10764
      %v10766 = vpop.f32.mrb[0].mxu0
      %10767 = vmatprep.mubr.f32.mxu0 0.0
      %10768 = vmatmul.mubr.f32.gmra.mrb[0].mxu0 %v4984
      %v10769 = vpop.f32.mrb[0].mxu0
      %v10770 = vadd.f32 0.0, %v10769
      %v10771 = vpop.f32.mrb[0].mxu0
      %10772 = vmatprep.mubr.f32.mxu0 0.0
      %10773 = vmatmul.mubr.f32.gmra.mrb[0].mxu0 %v4986
      %v10774 = vpop.f32.mrb[0].mxu0
      %v10775 = vadd.f32 0.0, %v10774
      %v10776 = vpop.f32.mrb[0].mxu0
      %10777 = vmatprep.mubr.f32.mxu0 0.0
      %10778 = vmatmul.mubr.f32.gmra.mrb[0].mxu0 %v4988
      %v10779 = vpop.f32.mrb[0].mxu0
      %v10780 = vadd.f32 0.0, %v10779
      %v10781 = vpop.f32.mrb[0].mxu0
      %10782 = vmatprep.mubr.f32.mxu0 0.0
      %10783 = vmatmul.mubr.f32.gmra.mrb[0].mxu0 %v4990
      %v10784 = vpop.f32.mrb[0].mxu0
      %v10785 = vadd.f32 0.0, %v10784
      %v10786 = vpop.f32.mrb[0].mxu0
      %10787 = vmatprep.mubr.f32.mxu0 0.0
      %10788 = vmatmul.mubr.f32.gmra.mrb[0].mxu0 %v4992
      %v10789 = vpop.f32.mrb[0].mxu0
      %v10790 = vadd.f32 0.0, %v10789
      %v10791 = vpop.f32.mrb[0].mxu0
      %10792 = vmatprep.mubr.f32.mxu0 0.0
      %10793 = vmatmul.mubr.f32.gmra.mrb[0].mxu0 %v4994
      %v10794 = vpop.f32.mrb[0].mxu0
      %v10795 = vadd.f32 0.0, %v10794
      %v10796 = vpop.f32.mrb[0].mxu0
      %10797 = vmatprep.mubr.f32.mxu0 0.0
      %10798 = vmatmul.mubr.f32.gmra.mrb[0].mxu0 %v4996
      %v10799 = vpop.f32.mrb[0].mxu0
      %v10800 = vadd.f32 0.0, %v10799
      %v10801 = vpop.f32.mrb[0].mxu0
      %10802 = vmatprep.mubr.f32.mxu0 0.0
      %10803 = vmatmul.mubr.f32.gmra.mrb[0].mxu0 %v4998
      %v10804 = vpop.f32.mrb[0].mxu0
      %v10805 = vadd.f32 0.0, %v10804
      %v10806 = vpop.f32.mrb[0].mxu0
      %10807 = vmatprep.mubr.f32.mxu0 0.0
      %10808 = vmatmul.mubr.f32.gmra.mrb[0].mxu0 %v5000
      %v10809 = vpop.f32.mrb[0].mxu0
      %v10810 = vadd.f32 0.0, %v10809
      %v10811 = vpop.f32.mrb[0].mxu0
      %10812 = vmatprep.mubr.f32.mxu0 0.0
      %10813 = vmatmul.mubr.f32.gmra.mrb[0].mxu0 %v5002
      %v10814 = vpop.f32.mrb[0].mxu0
      %v10815 = vadd.f32 0.0, %v10814
      %v10816 = vpop.f32.mrb[0].mxu0
      %10817 = vmatprep.mubr.f32.mxu0 0.0
      %10818 = vmatmul.mubr.f32.gmra.mrb[0].mxu0 %v5004
      %v10819 = vpop.f32.mrb[0].mxu0
      %v10820 = vadd.f32 0.0, %v10819
      %v10821 = vpop.f32.mrb[0].mxu0
      %10822 = vmatprep.mubr.f32.mxu0 0.0
      %10823 = vmatmul.mubr.f32.gmra.mrb[0].mxu0 %v5006
      %v10824 = vpop.f32.mrb[0].mxu0
      %v10825 = vadd.f32 0.0, %v10824
      %v10826 = vpop.f32.mrb[0].mxu0
      %10827 = vmatprep.mubr.f32.mxu0 0.0
      %10828 = vmatmul.mubr.f32.gmra.mrb[0].mxu0 %v5008
      %v10829 = vpop.f32.mrb[0].mxu0
      %v10830 = vadd.f32 0.0, %v10829
      %v10831 = vpop.f32.mrb[0].mxu0
      %10832 = vmatprep.mubr.f32.mxu0 0.0
      %10833 = vmatmul.mubr.f32.gmra.mrb[0].mxu0 %v5010
      %v10834 = vpop.f32.mrb[0].mxu0
      %v10835 = vadd.f32 0.0, %v10834
      %v10836 = vpop.f32.mrb[0].mxu0
      %10837 = vmatprep.mubr.f32.mxu0 0.0
      %10838 = vmatmul.mubr.f32.gmra.mrb[0].mxu0 %v5012
      %v10839 = vpop.f32.mrb[0].mxu0
      %v10840 = vadd.f32 0.0, %v10839
      %v10841 = vpop.f32.mrb[0].mxu0
      %10842 = vmatprep.mubr.f32.mxu0 0.0
      %10843 = vmatmul.mubr.f32.gmra.mrb[0].mxu0 %v5014
      %v10844 = vpop.f32.mrb[0].mxu0
      %v10845 = vadd.f32 0.0, %v10844
      %v10846 = vpop.f32.mrb[0].mxu0
      %10847 = vmatprep.mubr.f32.mxu0 0.0
      %10848 = vmatmul.mubr.f32.gmra.mrb[0].mxu0 %v5016
      %v10849 = vpop.f32.mrb[0].mxu0
      %v10850 = vadd.f32 0.0, %v10849
      %v10851 = vpop.f32.mrb[0].mxu0
      %10852 = vmatprep.mubr.f32.mxu0 0.0
      %10853 = vmatmul.mubr.f32.gmra.mrb[0].mxu0 %v5018
      %v10854 = vpop.f32.mrb[0].mxu0
      %v10855 = vadd.f32 0.0, %v10854
      %v10856 = vpop.f32.mrb[0].mxu0
      %10857 = vmatprep.mubr.f32.mxu0 0.0
      %10858 = vmatmul.mubr.f32.gmra.mrb[0].mxu0 %v5020
      %v10859 = vpop.f32.mrb[0].mxu0
      %v10860 = vadd.f32 0.0, %v10859
      %v10861 = vpop.f32.mrb[0].mxu0
      %10862 = vmatprep.mubr.f32.mxu0 0.0
      %10863 = vmatmul.mubr.f32.gmra.mrb[0].mxu0 %v5022
      %v10864 = vpop.f32.mrb[0].mxu0
      %v10865 = vadd.f32 0.0, %v10864
      %v10866 = vpop.f32.mrb[0].mxu0
      %10867 = vmatprep.mubr.f32.mxu0 0.0
      %10868 = vmatmul.mubr.f32.gmra.mrb[0].mxu0 %v5024
      %v10869 = vpop.f32.mrb[0].mxu0
      %v10870 = vadd.f32 0.0, %v10869
      %v10871 = vpop.f32.mrb[0].mxu0
      %10872 = vmatprep.mubr.f32.mxu0 0.0
      %10873 = vmatmul.mubr.f32.gmra.mrb[0].mxu0 %v7763
      %v10874 = vpop.f32.mrb[0].mxu0
      %v10875 = vadd.f32 0.0, %v10874
      %v10876 = vpop.f32.mrb[0].mxu0
      %10877 = vmatprep.mubr.f32.mxu0 0.0
      %10878 = vmatmul.mubr.f32.gmra.mrb[0].mxu0 %v7765
      %v10879 = vpop.f32.mrb[0].mxu0
      %v10880 = vadd.f32 0.0, %v10879
      %v10881 = vpop.f32.mrb[0].mxu0
      %10882 = vmatprep.mubr.f32.mxu0 0.0
      %10883 = vmatmul.mubr.f32.gmra.mrb[0].mxu0 %v10504
      %v10884 = vpop.f32.mrb[0].mxu0
      %v10885 = vadd.f32 0.0, %v10884
      %v10886 = vpop.f32.mrb[0].mxu0
      %10887 = vmatprep.mubr.f32.mxu0 0.0
      %10888 = vmatmul.mubr.f32.gmra.mrb[0].mxu0 %v10506
      %v10889 = vpop.f32.mrb[0].mxu0
      %v10890 = vadd.f32 0.0, %v10889
      %v10891 = vpop.f32.mrb[0].mxu0
      %10892 = vdwg.mxu0
      %v10893 = vadd.f32 %v10440, %v10575
      %v10894 = vadd.f32 %v10441, %v10580
      %v10895 = vadd.f32 %v10442, %v10585
      %v10896 = vadd.f32 %v10443, %v10590
      %v10897 = vadd.f32 %v10444, %v10595
      %v10898 = vadd.f32 %v10445, %v10600
      %v10899 = vadd.f32 %v10446, %v10605
      %v10900 = vadd.f32 %v10447, %v10610
      %v10901 = vadd.f32 %v10448, %v10615
      %v10902 = vadd.f32 %v10449, %v10620
      %v10903 = vadd.f32 %v10450, %v10625
      %v10904 = vadd.f32 %v10451, %v10630
      %v10905 = vadd.f32 %v10452, %v10635
      %v10906 = vadd.f32 %v10453, %v10640
      %v10907 = vadd.f32 %v10454, %v10645
      %v10908 = vadd.f32 %v10455, %v10650
      %v10909 = vadd.f32 %v10456, %v10655
      %v10910 = vadd.f32 %v10457, %v10660
      %v10911 = vadd.f32 %v10458, %v10665
      %v10912 = vadd.f32 %v10459, %v10670
      %v10913 = vadd.f32 %v10460, %v10675
      %v10914 = vadd.f32 %v10461, %v10680
      %v10915 = vadd.f32 %v10462, %v10685
      %v10916 = vadd.f32 %v10463, %v10690
      %v10917 = vadd.f32 %v10464, %v10695
      %v10918 = vadd.f32 %v10465, %v10700
      %v10919 = vadd.f32 %v10466, %v10705
      %v10920 = vadd.f32 %v10467, %v10710
      %v10921 = vadd.f32 %v10468, %v10715
      %v10922 = vadd.f32 %v10469, %v10720
      %v10923 = vadd.f32 %v10470, %v10725
      %v10924 = vadd.f32 %v10471, %v10730
      %v10925 = vadd.f32 %v10472, %v10735
      %v10926 = vadd.f32 %v10473, %v10740
      %v10927 = vadd.f32 %v10474, %v10745
      %v10928 = vadd.f32 %v10475, %v10750
      %v10929 = vadd.f32 %v10476, %v10755
      %v10930 = vadd.f32 %v10477, %v10760
      %v10931 = vadd.f32 %v10478, %v10765
      %v10932 = vadd.f32 %v10479, %v10770
      %v10933 = vadd.f32 %v10480, %v10775
      %v10934 = vadd.f32 %v10481, %v10780
      %v10935 = vadd.f32 %v10482, %v10785
      %v10936 = vadd.f32 %v10483, %v10790
      %v10937 = vadd.f32 %v10484, %v10795
      %v10938 = vadd.f32 %v10485, %v10800
      %v10939 = vadd.f32 %v10486, %v10805
      %v10940 = vadd.f32 %v10487, %v10810
      %v10941 = vadd.f32 %v10488, %v10815
      %v10942 = vadd.f32 %v10489, %v10820
      %v10943 = vadd.f32 %v10490, %v10825
      %v10944 = vadd.f32 %v10491, %v10830
      %v10945 = vadd.f32 %v10492, %v10835
      %v10946 = vadd.f32 %v10493, %v10840
      %v10947 = vadd.f32 %v10494, %v10845
      %v10948 = vadd.f32 %v10495, %v10850
      %v10949 = vadd.f32 %v10496, %v10855
      %v10950 = vadd.f32 %v10497, %v10860
      %v10951 = vadd.f32 %v10498, %v10865
      %v10952 = vadd.f32 %v10499, %v10870
      %v10953 = vadd.f32 %v10500, %v10875
      %v10954 = vadd.f32 %v10501, %v10880
      %v10955 = vadd.f32 %v10502, %v10885
      %v10956 = vadd.f32 %v10503, %v10890
      %v10957 = vld [vmem:[%s2] sm:$0x1]
      %v10959 = vlaneseq
      %v10960 = vshrl.u32 %v10959, 7
      %v10961 = vsub.s32 0, %v10960
      %v10962 = vrot.slane %v10957, %v10961
      %v10964 = vadd.f32 %v9542, %v10962
      %v10965 = vadd.f32 %v9543, %v10962
      %v10966 = vadd.f32 %v9544, %v10962
      %v10967 = vadd.f32 %v9545, %v10962
      %v10968 = vadd.f32 %v9546, %v10962
      %v10969 = vadd.f32 %v9547, %v10962
      %v10970 = vadd.f32 %v9548, %v10962
      %v10971 = vadd.f32 %v9549, %v10962
      %v10972 = vadd.f32 %v9550, %v10962
      %v10973 = vadd.f32 %v9551, %v10962
      %v10974 = vadd.f32 %v9552, %v10962
      %v10975 = vadd.f32 %v9553, %v10962
      %v10976 = vadd.f32 %v9554, %v10962
      %v10977 = vadd.f32 %v9555, %v10962
      %v10978 = vadd.f32 %v9556, %v10962
      %v10979 = vadd.f32 %v9557, %v10962
      %v10980 = vadd.f32 %v9558, %v10962
      %v10981 = vadd.f32 %v9559, %v10962
      %v10982 = vadd.f32 %v9560, %v10962
      %v10983 = vadd.f32 %v9561, %v10962
      %v10984 = vadd.f32 %v9562, %v10962
      %v10985 = vadd.f32 %v9563, %v10962
      %v10986 = vadd.f32 %v9564, %v10962
      %v10987 = vadd.f32 %v9565, %v10962
      %v10988 = vadd.f32 %v9566, %v10962
      %v10989 = vadd.f32 %v9567, %v10962
      %v10990 = vadd.f32 %v9568, %v10962
      %v10991 = vadd.f32 %v9569, %v10962
      %v10992 = vadd.f32 %v9570, %v10962
      %v10993 = vadd.f32 %v9571, %v10962
      %v10994 = vadd.f32 %v9572, %v10962
      %v10995 = vadd.f32 %v9573, %v10962
      %v10996 = vadd.f32 %v9574, %v10962
      %v10997 = vadd.f32 %v9575, %v10962
      %v10998 = vadd.f32 %v9576, %v10962
      %v10999 = vadd.f32 %v9577, %v10962
      %v11000 = vadd.f32 %v9578, %v10962
      %v11001 = vadd.f32 %v9579, %v10962
      %v11002 = vadd.f32 %v9580, %v10962
      %v11003 = vadd.f32 %v9581, %v10962
      %v11004 = vadd.f32 %v9582, %v10962
      %v11005 = vadd.f32 %v9583, %v10962
      %v11006 = vadd.f32 %v9584, %v10962
      %v11007 = vadd.f32 %v9585, %v10962
      %v11008 = vadd.f32 %v9586, %v10962
      %v11009 = vadd.f32 %v9587, %v10962
      %v11010 = vadd.f32 %v9588, %v10962
      %v11011 = vadd.f32 %v9589, %v10962
      %v11012 = vadd.f32 %v9590, %v10962
      %v11013 = vadd.f32 %v9591, %v10962
      %v11014 = vadd.f32 %v9592, %v10962
      %v11015 = vadd.f32 %v9593, %v10962
      %v11016 = vadd.f32 %v9594, %v10962
      %v11017 = vadd.f32 %v9595, %v10962
      %v11018 = vadd.f32 %v9596, %v10962
      %v11019 = vadd.f32 %v9597, %v10962
      %v11020 = vadd.f32 %v9598, %v10962
      %v11021 = vadd.f32 %v9599, %v10962
      %v11022 = vadd.f32 %v9600, %v10962
      %v11023 = vadd.f32 %v9601, %v10962
      %v11024 = vadd.f32 %v9602, %v10962
      %v11025 = vadd.f32 %v9603, %v10962
      %v11026 = vadd.f32 %v9604, %v10962
      %v11027 = vadd.f32 %v9605, %v10962
      %vm11028 = vcmask 64512
      %11029 = vst.msk [vmem:[%s243] sm:$0xff] %vm11028, %v10964
      %11030 = vst.msk [vmem:[%s243 + $0x8] sm:$0xff] %vm11028, %v10965
      %11031 = vst.msk [vmem:[%s243 + $0x10] sm:$0xff] %vm11028, %v10966
      %11032 = vst.msk [vmem:[%s243 + $0x18] sm:$0xff] %vm11028, %v10967
      %11033 = vst.msk [vmem:[%s243 + $0x20] sm:$0xff] %vm11028, %v10968
      %11034 = vst.msk [vmem:[%s243 + $0x28] sm:$0xff] %vm11028, %v10969
      %11035 = vst.msk [vmem:[%s243 + $0x30] sm:$0xff] %vm11028, %v10970
      %11036 = vst.msk [vmem:[%s243 + $0x38] sm:$0xff] %vm11028, %v10971
      %11037 = vst.msk [vmem:[%s243 + $0x40] sm:$0xff] %vm11028, %v10972
      %11038 = vst.msk [vmem:[%s243 + $0x48] sm:$0xff] %vm11028, %v10973
      %11039 = vst.msk [vmem:[%s243 + $0x50] sm:$0xff] %vm11028, %v10974
      %11040 = vst.msk [vmem:[%s243 + $0x58] sm:$0xff] %vm11028, %v10975
      %11041 = vst.msk [vmem:[%s243 + $0x60] sm:$0xff] %vm11028, %v10976
      %11042 = vst.msk [vmem:[%s243 + $0x68] sm:$0xff] %vm11028, %v10977
      %11043 = vst.msk [vmem:[%s243 + $0x70] sm:$0xff] %vm11028, %v10978
      %11044 = vst.msk [vmem:[%s243 + $0x78] sm:$0xff] %vm11028, %v10979
      %11045 = vst.msk [vmem:[%s243 + $0x80] sm:$0xff] %vm11028, %v10980
      %11046 = vst.msk [vmem:[%s243 + $0x88] sm:$0xff] %vm11028, %v10981
      %11047 = vst.msk [vmem:[%s243 + $0x90] sm:$0xff] %vm11028, %v10982
      %11048 = vst.msk [vmem:[%s243 + $0x98] sm:$0xff] %vm11028, %v10983
      %11049 = vst.msk [vmem:[%s243 + $0xa0] sm:$0xff] %vm11028, %v10984
      %11050 = vst.msk [vmem:[%s243 + $0xa8] sm:$0xff] %vm11028, %v10985
      %11051 = vst.msk [vmem:[%s243 + $0xb0] sm:$0xff] %vm11028, %v10986
      %11052 = vst.msk [vmem:[%s243 + $0xb8] sm:$0xff] %vm11028, %v10987
      %11053 = vst.msk [vmem:[%s243 + $0xc0] sm:$0xff] %vm11028, %v10988
      %11054 = vst.msk [vmem:[%s243 + $0xc8] sm:$0xff] %vm11028, %v10989
      %11055 = vst.msk [vmem:[%s243 + $0xd0] sm:$0xff] %vm11028, %v10990
      %11056 = vst.msk [vmem:[%s243 + $0xd8] sm:$0xff] %vm11028, %v10991
      %11057 = vst.msk [vmem:[%s243 + $0xe0] sm:$0xff] %vm11028, %v10992
      %11058 = vst.msk [vmem:[%s243 + $0xe8] sm:$0xff] %vm11028, %v10993
      %11059 = vst.msk [vmem:[%s243 + $0xf0] sm:$0xff] %vm11028, %v10994
      %11060 = vst.msk [vmem:[%s243 + $0xf8] sm:$0xff] %vm11028, %v10995
      %11061 = vst.msk [vmem:[%s243 + $0x100] sm:$0xff] %vm11028, %v10996
      %11062 = vst.msk [vmem:[%s243 + $0x108] sm:$0xff] %vm11028, %v10997
      %11063 = vst.msk [vmem:[%s243 + $0x110] sm:$0xff] %vm11028, %v10998
      %11064 = vst.msk [vmem:[%s243 + $0x118] sm:$0xff] %vm11028, %v10999
      %11065 = vst.msk [vmem:[%s243 + $0x120] sm:$0xff] %vm11028, %v11000
      %11066 = vst.msk [vmem:[%s243 + $0x128] sm:$0xff] %vm11028, %v11001
      %11067 = vst.msk [vmem:[%s243 + $0x130] sm:$0xff] %vm11028, %v11002
      %11068 = vst.msk [vmem:[%s243 + $0x138] sm:$0xff] %vm11028, %v11003
      %11069 = vst.msk [vmem:[%s243 + $0x140] sm:$0xff] %vm11028, %v11004
      %11070 = vst.msk [vmem:[%s243 + $0x148] sm:$0xff] %vm11028, %v11005
      %11071 = vst.msk [vmem:[%s243 + $0x150] sm:$0xff] %vm11028, %v11006
      %11072 = vst.msk [vmem:[%s243 + $0x158] sm:$0xff] %vm11028, %v11007
      %11073 = vst.msk [vmem:[%s243 + $0x160] sm:$0xff] %vm11028, %v11008
      %11074 = vst.msk [vmem:[%s243 + $0x168] sm:$0xff] %vm11028, %v11009
      %11075 = vst.msk [vmem:[%s243 + $0x170] sm:$0xff] %vm11028, %v11010
      %11076 = vst.msk [vmem:[%s243 + $0x178] sm:$0xff] %vm11028, %v11011
      %11077 = vst.msk [vmem:[%s243 + $0x180] sm:$0xff] %vm11028, %v11012
      %11078 = vst.msk [vmem:[%s243 + $0x188] sm:$0xff] %vm11028, %v11013
      %11079 = vst.msk [vmem:[%s243 + $0x190] sm:$0xff] %vm11028, %v11014
      %11080 = vst.msk [vmem:[%s243 + $0x198] sm:$0xff] %vm11028, %v11015
      %11081 = vst.msk [vmem:[%s243 + $0x1a0] sm:$0xff] %vm11028, %v11016
      %11082 = vst.msk [vmem:[%s243 + $0x1a8] sm:$0xff] %vm11028, %v11017
      %11083 = vst.msk [vmem:[%s243 + $0x1b0] sm:$0xff] %vm11028, %v11018
      %11084 = vst.msk [vmem:[%s243 + $0x1b8] sm:$0xff] %vm11028, %v11019
      %11085 = vst.msk [vmem:[%s243 + $0x1c0] sm:$0xff] %vm11028, %v11020
      %11086 = vst.msk [vmem:[%s243 + $0x1c8] sm:$0xff] %vm11028, %v11021
      %11087 = vst.msk [vmem:[%s243 + $0x1d0] sm:$0xff] %vm11028, %v11022
      %11088 = vst.msk [vmem:[%s243 + $0x1d8] sm:$0xff] %vm11028, %v11023
      %11089 = vst.msk [vmem:[%s243 + $0x1e0] sm:$0xff] %vm11028, %v11024
      %11090 = vst.msk [vmem:[%s243 + $0x1e8] sm:$0xff] %vm11028, %v11025
      %11091 = vst.msk [vmem:[%s243 + $0x1f0] sm:$0xff] %vm11028, %v11026
      %11092 = vst.msk [vmem:[%s243 + $0x1f8] sm:$0xff] %vm11028, %v11027
      %v11093 = vadd.f32 %v10893, %v10962
      %v11094 = vadd.f32 %v10894, %v10962
      %v11095 = vadd.f32 %v10895, %v10962
      %v11096 = vadd.f32 %v10896, %v10962
      %v11097 = vadd.f32 %v10897, %v10962
      %v11098 = vadd.f32 %v10898, %v10962
      %v11099 = vadd.f32 %v10899, %v10962
      %v11100 = vadd.f32 %v10900, %v10962
      %v11101 = vadd.f32 %v10901, %v10962
      %v11102 = vadd.f32 %v10902, %v10962
      %v11103 = vadd.f32 %v10903, %v10962
      %v11104 = vadd.f32 %v10904, %v10962
      %v11105 = vadd.f32 %v10905, %v10962
      %v11106 = vadd.f32 %v10906, %v10962
      %v11107 = vadd.f32 %v10907, %v10962
      %v11108 = vadd.f32 %v10908, %v10962
      %v11109 = vadd.f32 %v10909, %v10962
      %v11110 = vadd.f32 %v10910, %v10962
      %v11111 = vadd.f32 %v10911, %v10962
      %v11112 = vadd.f32 %v10912, %v10962
      %v11113 = vadd.f32 %v10913, %v10962
      %v11114 = vadd.f32 %v10914, %v10962
      %v11115 = vadd.f32 %v10915, %v10962
      %v11116 = vadd.f32 %v10916, %v10962
      %v11117 = vadd.f32 %v10917, %v10962
      %v11118 = vadd.f32 %v10918, %v10962
      %v11119 = vadd.f32 %v10919, %v10962
      %v11120 = vadd.f32 %v10920, %v10962
      %v11121 = vadd.f32 %v10921, %v10962
      %v11122 = vadd.f32 %v10922, %v10962
      %v11123 = vadd.f32 %v10923, %v10962
      %v11124 = vadd.f32 %v10924, %v10962
      %v11125 = vadd.f32 %v10925, %v10962
      %v11126 = vadd.f32 %v10926, %v10962
      %v11127 = vadd.f32 %v10927, %v10962
      %v11128 = vadd.f32 %v10928, %v10962
      %v11129 = vadd.f32 %v10929, %v10962
      %v11130 = vadd.f32 %v10930, %v10962
      %v11131 = vadd.f32 %v10931, %v10962
      %v11132 = vadd.f32 %v10932, %v10962
      %v11133 = vadd.f32 %v10933, %v10962
      %v11134 = vadd.f32 %v10934, %v10962
      %v11135 = vadd.f32 %v10935, %v10962
      %v11136 = vadd.f32 %v10936, %v10962
      %v11137 = vadd.f32 %v10937, %v10962
      %v11138 = vadd.f32 %v10938, %v10962
      %v11139 = vadd.f32 %v10939, %v10962
      %v11140 = vadd.f32 %v10940, %v10962
      %v11141 = vadd.f32 %v10941, %v10962
      %v11142 = vadd.f32 %v10942, %v10962
      %v11143 = vadd.f32 %v10943, %v10962
      %v11144 = vadd.f32 %v10944, %v10962
      %v11145 = vadd.f32 %v10945, %v10962
      %v11146 = vadd.f32 %v10946, %v10962
      %v11147 = vadd.f32 %v10947, %v10962
      %v11148 = vadd.f32 %v10948, %v10962
      %v11149 = vadd.f32 %v10949, %v10962
      %v11150 = vadd.f32 %v10950, %v10962
      %v11151 = vadd.f32 %v10951, %v10962
      %v11152 = vadd.f32 %v10952, %v10962
      %v11153 = vadd.f32 %v10953, %v10962
      %v11154 = vadd.f32 %v10954, %v10962
      %v11155 = vadd.f32 %v10955, %v10962
      %v11156 = vadd.f32 %v10956, %v10962
      %11157 = vst.msk [vmem:[%s254] sm:$0xff] %vm11028, %v11093
      %11158 = vst.msk [vmem:[%s254 + $0x8] sm:$0xff] %vm11028, %v11094
      %11159 = vst.msk [vmem:[%s254 + $0x10] sm:$0xff] %vm11028, %v11095
      %11160 = vst.msk [vmem:[%s254 + $0x18] sm:$0xff] %vm11028, %v11096
      %11161 = vst.msk [vmem:[%s254 + $0x20] sm:$0xff] %vm11028, %v11097
      %11162 = vst.msk [vmem:[%s254 + $0x28] sm:$0xff] %vm11028, %v11098
      %11163 = vst.msk [vmem:[%s254 + $0x30] sm:$0xff] %vm11028, %v11099
      %11164 = vst.msk [vmem:[%s254 + $0x38] sm:$0xff] %vm11028, %v11100
      %11165 = vst.msk [vmem:[%s254 + $0x40] sm:$0xff] %vm11028, %v11101
      %11166 = vst.msk [vmem:[%s254 + $0x48] sm:$0xff] %vm11028, %v11102
      %11167 = vst.msk [vmem:[%s254 + $0x50] sm:$0xff] %vm11028, %v11103
      %11168 = vst.msk [vmem:[%s254 + $0x58] sm:$0xff] %vm11028, %v11104
      %11169 = vst.msk [vmem:[%s254 + $0x60] sm:$0xff] %vm11028, %v11105
      %11170 = vst.msk [vmem:[%s254 + $0x68] sm:$0xff] %vm11028, %v11106
      %11171 = vst.msk [vmem:[%s254 + $0x70] sm:$0xff] %vm11028, %v11107
      %11172 = vst.msk [vmem:[%s254 + $0x78] sm:$0xff] %vm11028, %v11108
      %11173 = vst.msk [vmem:[%s254 + $0x80] sm:$0xff] %vm11028, %v11109
      %11174 = vst.msk [vmem:[%s254 + $0x88] sm:$0xff] %vm11028, %v11110
      %11175 = vst.msk [vmem:[%s254 + $0x90] sm:$0xff] %vm11028, %v11111
      %11176 = vst.msk [vmem:[%s254 + $0x98] sm:$0xff] %vm11028, %v11112
      %11177 = vst.msk [vmem:[%s254 + $0xa0] sm:$0xff] %vm11028, %v11113
      %11178 = vst.msk [vmem:[%s254 + $0xa8] sm:$0xff] %vm11028, %v11114
      %11179 = vst.msk [vmem:[%s254 + $0xb0] sm:$0xff] %vm11028, %v11115
      %11180 = vst.msk [vmem:[%s254 + $0xb8] sm:$0xff] %vm11028, %v11116
      %11181 = vst.msk [vmem:[%s254 + $0xc0] sm:$0xff] %vm11028, %v11117
      %11182 = vst.msk [vmem:[%s254 + $0xc8] sm:$0xff] %vm11028, %v11118
      %11183 = vst.msk [vmem:[%s254 + $0xd0] sm:$0xff] %vm11028, %v11119
      %11184 = vst.msk [vmem:[%s254 + $0xd8] sm:$0xff] %vm11028, %v11120
      %11185 = vst.msk [vmem:[%s254 + $0xe0] sm:$0xff] %vm11028, %v11121
      %11186 = vst.msk [vmem:[%s254 + $0xe8] sm:$0xff] %vm11028, %v11122
      %11187 = vst.msk [vmem:[%s254 + $0xf0] sm:$0xff] %vm11028, %v11123
      %11188 = vst.msk [vmem:[%s254 + $0xf8] sm:$0xff] %vm11028, %v11124
      %11189 = vst.msk [vmem:[%s254 + $0x100] sm:$0xff] %vm11028, %v11125
      %11190 = vst.msk [vmem:[%s254 + $0x108] sm:$0xff] %vm11028, %v11126
      %11191 = vst.msk [vmem:[%s254 + $0x110] sm:$0xff] %vm11028, %v11127
      %11192 = vst.msk [vmem:[%s254 + $0x118] sm:$0xff] %vm11028, %v11128
      %11193 = vst.msk [vmem:[%s254 + $0x120] sm:$0xff] %vm11028, %v11129
      %11194 = vst.msk [vmem:[%s254 + $0x128] sm:$0xff] %vm11028, %v11130
      %11195 = vst.msk [vmem:[%s254 + $0x130] sm:$0xff] %vm11028, %v11131
      %11196 = vst.msk [vmem:[%s254 + $0x138] sm:$0xff] %vm11028, %v11132
      %11197 = vst.msk [vmem:[%s254 + $0x140] sm:$0xff] %vm11028, %v11133
      %11198 = vst.msk [vmem:[%s254 + $0x148] sm:$0xff] %vm11028, %v11134
      %11199 = vst.msk [vmem:[%s254 + $0x150] sm:$0xff] %vm11028, %v11135
      %11200 = vst.msk [vmem:[%s254 + $0x158] sm:$0xff] %vm11028, %v11136
      %11201 = vst.msk [vmem:[%s254 + $0x160] sm:$0xff] %vm11028, %v11137
      %11202 = vst.msk [vmem:[%s254 + $0x168] sm:$0xff] %vm11028, %v11138
      %11203 = vst.msk [vmem:[%s254 + $0x170] sm:$0xff] %vm11028, %v11139
      %11204 = vst.msk [vmem:[%s254 + $0x178] sm:$0xff] %vm11028, %v11140
      %11205 = vst.msk [vmem:[%s254 + $0x180] sm:$0xff] %vm11028, %v11141
      %11206 = vst.msk [vmem:[%s254 + $0x188] sm:$0xff] %vm11028, %v11142
      %11207 = vst.msk [vmem:[%s254 + $0x190] sm:$0xff] %vm11028, %v11143
      %11208 = vst.msk [vmem:[%s254 + $0x198] sm:$0xff] %vm11028, %v11144
      %11209 = vst.msk [vmem:[%s254 + $0x1a0] sm:$0xff] %vm11028, %v11145
      %11210 = vst.msk [vmem:[%s254 + $0x1a8] sm:$0xff] %vm11028, %v11146
      %11211 = vst.msk [vmem:[%s254 + $0x1b0] sm:$0xff] %vm11028, %v11147
      %11212 = vst.msk [vmem:[%s254 + $0x1b8] sm:$0xff] %vm11028, %v11148
      %11213 = vst.msk [vmem:[%s254 + $0x1c0] sm:$0xff] %vm11028, %v11149
      %11214 = vst.msk [vmem:[%s254 + $0x1c8] sm:$0xff] %vm11028, %v11150
      %11215 = vst.msk [vmem:[%s254 + $0x1d0] sm:$0xff] %vm11028, %v11151
      %11216 = vst.msk [vmem:[%s254 + $0x1d8] sm:$0xff] %vm11028, %v11152
      %11217 = vst.msk [vmem:[%s254 + $0x1e0] sm:$0xff] %vm11028, %v11153
      %11218 = vst.msk [vmem:[%s254 + $0x1e8] sm:$0xff] %vm11028, %v11154
      %11219 = vst.msk [vmem:[%s254 + $0x1f0] sm:$0xff] %vm11028, %v11155
      %11220 = vst.msk [vmem:[%s254 + $0x1f8] sm:$0xff] %vm11028, %v11156
      %s11221 = smul.u32 32, %s21
      %p11222 = scmp.lt.s32.totalorder %s20, 1
      %s11223 = scalar_select %p11222, %s20, 1
      %p11224 = scmp.lt.s32.totalorder %s11221, 31
      %s11225 = scalar_select %p11224, %s11221, 31
      %s11226 = smul.addr %s11225, 2
      %s11227 = smul.addr %s11223, 64
      %s11228 = sadd.s32 %s11226, %s11227
      %s11229 = smul.addr %s11228, 8
      %s11230 = scalar_lea.vmem %s3, %s11229
      %s11231 = smul.u32 32, %s21
      %p11232 = scmp.lt.s32.totalorder %s20, 1
      %s11233 = scalar_select %p11232, %s20, 1
      %p11234 = scmp.lt.s32.totalorder %s11231, 31
      %s11235 = scalar_select %p11234, %s11231, 31
      %s11236 = smul.addr %s11235, 2
      %s11237 = smul.addr %s11233, 64
      %s11238 = sadd.s32 %s11236, %s11237
      %s11239 = smul.addr %s11238, 8
      %s11240 = scalar_lea.vmem %s4, %s11239
      // Predicated region
      $region33: #{tpu_custom_call.1} parent=31 // pred_check
        %p11241 = pneg %p118
      $region34: #{tpu_custom_call.1} parent=31 // pred_check_branch
        %11243 = sbr.rel (%p11241) target = $region36
      $region35: #{tpu_custom_call.1} parent=31 // pred_region
        %s11244 = smul.u32 32, %s21
      $region36: #{tpu_custom_call.1} parent=31 // pred_fallthru
        _
      // Predicated region
      $region37: #{tpu_custom_call.1} parent=31 // pred_check
        %p11245 = pneg %p146
      $region38: #{tpu_custom_call.1} parent=31 // pred_check_branch
        %11247 = sbr.rel (%p11245) target = $region40
      $region39: #{tpu_custom_call.1} parent=31 // pred_region
        %s11248 = smul.u32 32, %s21
      $region40: #{tpu_custom_call.1} parent=31 // pred_fallthru
        _
    $region32: #{tpu_custom_call.1} parent=5 // pred_fallthru
      _
    %p11249 = scmp.le.s32.totalorder 2, %s11
    // Predicated region
    $region41: #{tpu_custom_call.1} parent=5 // pred_check
      %p11250 = pneg %p11249
    $region42: #{tpu_custom_call.1} parent=5 // pred_check_branch
      %11252 = sbr.rel (%p11250) target = $region44
    $region43: #{tpu_custom_call.1} parent=5 // pred_region
      %s11253 = ssub.s32 %s11, 2
      // Predicated region
      $region45: #{tpu_custom_call.1} parent=43 // pred_check
        %p11254 = pneg %p124
      $region46: #{tpu_custom_call.1} parent=43 // pred_check_branch
        %11256 = sbr.rel (%p11254) target = $region48
      $region47: #{tpu_custom_call.1} parent=43 // pred_region
        %s11257 = smul.u32 32, %s23
        %p11258 = scmp.lt.s32.totalorder %s22, 1
        %s11259 = scalar_select %p11258, %s22, 1
        %p11260 = scmp.lt.s32.totalorder %s11257, 31
        %s11261 = scalar_select %p11260, %s11257, 31
        %s11262 = smul.addr %s11261, 2
        %s11263 = smul.addr %s11259, 64
        %s11264 = sadd.s32 %s11262, %s11263
        %s11265 = smul.addr %s11264, 8
        %s11266 = scalar_lea.vmem %s3, %s11265
      $region48: #{tpu_custom_call.1} parent=43 // pred_fallthru
        _
      // Predicated region
      $region49: #{tpu_custom_call.1} parent=43 // pred_check
        %p11267 = pneg %p152
      $region50: #{tpu_custom_call.1} parent=43 // pred_check_branch
        %11269 = sbr.rel (%p11267) target = $region52
      $region51: #{tpu_custom_call.1} parent=43 // pred_region
        %s11270 = smul.u32 32, %s23
        %p11271 = scmp.lt.s32.totalorder %s22, 1
        %s11272 = scalar_select %p11271, %s22, 1
        %p11273 = scmp.lt.s32.totalorder %s11270, 31
        %s11274 = scalar_select %p11273, %s11270, 31
        %s11275 = smul.addr %s11274, 2
        %s11276 = smul.addr %s11272, 64
        %s11277 = sadd.s32 %s11275, %s11276
        %s11278 = smul.addr %s11277, 8
        %s11279 = scalar_lea.vmem %s4, %s11278
      $region52: #{tpu_custom_call.1} parent=43 // pred_fallthru
        _
    $region44: #{tpu_custom_call.1} parent=5 // pred_fallthru
      _
  $region6: #{tpu_custom_call.1} parent=0 // loop_footer
    %s15 = sadd.s32 1, %s11
  $region7: #{tpu_custom_call.1} parent=0 // loop_footer_branch
    %10 = sbr.rel target = $region3
  $region8: #{tpu_custom_call.1} parent=0 // loop_exit
    _

</llo_original>
